<compile_context>
chip_gen: v6e
topology: v6e:2x2x1
jax: 0.10.0
libtpu: 0.0.40
codegen_flags: <defaults>
</compile_context>

<pallas_src>
import numpy as np
import jax
import jax.numpy as jnp
from jax.experimental import pallas as pl
from jax.experimental.pallas import tpu as pltpu

BT = 128          # images per grid step (lane dimension)
KSZ = 5           # conv kernel size
NOUT = 10         # number of classes


# ------------------------------ Pallas kernel -------------------------------

def lenet_kernel(x_ref, w1_ref, b1_ref, w2_ref, b2_ref,
                 wf1_ref, bf1_ref, wf2_ref, bf2_ref, wf3_ref, bf3_ref,
                 out_ref, p1_ref, p2_ref):
    f32 = jnp.float32
    bf16 = jnp.bfloat16

    # ---------------- conv1 + bias + ReLU + 2x2 max-pool (MXU, f32) ----------
    # LHS rows = wo*8 + c  (c padded 6->8, pad rows are zero weights)
    # LHS cols = kh*32 + wi (x is W-padded 28->32 with zeros)
    w1t = w1_ref[...]                                     # (192, 160) f32
    b1 = b1_ref[...]                                      # (8, BT)    f32

    def conv1_row(r):
        xs = x_ref[0, pl.ds(r, KSZ), :, :]                # (5, 32, BT)
        xs = xs.reshape(KSZ * 32, BT)                     # (160, BT)
        return jnp.dot(w1t, xs, preferred_element_type=f32)   # (192, BT)

    for rp in range(12):                                  # pooled output rows
        m = jnp.maximum(conv1_row(2 * rp), conv1_row(2 * rp + 1))   # pool over h
        m = m.reshape(12, 2, 8, BT)
        m = jnp.maximum(m[:, 0], m[:, 1])                 # pool over w -> (12, 8, BT)
        a = jnp.maximum(m + b1, 0.0)                      # bias + ReLU (pad c rows stay 0)
        p1_ref[rp] = a.reshape(96, BT).astype(bf16)       # rows = wp*8 + c

    # ---------------- conv2 + bias + ReLU + 2x2 max-pool (MXU, bf16) ---------
    # LHS rows = wo*16 + co ; LHS cols = dh*96 + wi*8 + ci
    w2p = w2_ref[...]                                     # (128, 480) bf16
    b2 = b2_ref[...]                                      # (16, BT)   f32

    def conv2_row(ho):
        rhs = p1_ref[pl.ds(ho, KSZ)]                      # (5, 96, BT) bf16
        rhs = rhs.reshape(KSZ * 96, BT)                   # (480, BT)
        return jnp.dot(w2p, rhs, preferred_element_type=f32)   # (128, BT)

    for hp in range(4):                                   # pooled output rows
        m = jnp.maximum(conv2_row(2 * hp), conv2_row(2 * hp + 1))
        m = m.reshape(4, 2, 16, BT)
        m = jnp.maximum(m[:, 0], m[:, 1])                 # (4, 16, BT): (wp, co)
        a = jnp.maximum(m + b2, 0.0)
        p2_ref[hp] = a.reshape(64, BT).astype(bf16)       # rows = wp*16 + co

    # ---------------- fc1 -> fc2 -> fc3 (weight-stationary, batch on N) ------
    p2 = p2_ref[...].reshape(256, BT)                     # k = hp*64 + wp*16 + co
    h1 = jnp.dot(wf1_ref[...], p2, preferred_element_type=f32) + bf1_ref[...]
    h1 = jnp.maximum(h1, 0.0).astype(bf16)                # (128, BT)
    h2 = jnp.dot(wf2_ref[...], h1, preferred_element_type=f32) + bf2_ref[...]
    h2 = jnp.maximum(h2, 0.0).astype(bf16)                # (64, BT)
    out = jnp.dot(wf3_ref[...], h2, preferred_element_type=f32) + bf3_ref[...]
    out_ref[0] = out                                      # (16, BT), rows >= 10 are pad


# ------------------------------ host wrapper ---------------------------------

def _rep(arr):
    nd = arr.ndim
    return pl.BlockSpec(arr.shape, lambda i, _nd=nd: (0,) * _nd)


@jax.jit
def lenet_forward(x_nchw, kp):
    """x_nchw: (B, 1, 28, 28) float32; kp: packed params from pack_params()."""
    B, C, H, W = x_nchw.shape
    assert C == 1 and H == 28 and W == 28, "LeNet-5 expects (B, 1, 28, 28) input"
    nb = (B + BT - 1) // BT
    Bp = nb * BT

    x = x_nchw.astype(jnp.float32).reshape(B, H, W)
    x = jnp.pad(x, ((0, Bp - B), (0, 0), (0, 0)))
    x = x.reshape(nb, BT, H, W).transpose(0, 2, 3, 1)     # (nb, 28, 28, BT) batch->lanes
    x = jnp.pad(x, ((0, 0), (0, 0), (0, 4), (0, 0)))      # (nb, 28, 32, BT) W pad 28->32

    out = pl.pallas_call(
        lenet_kernel,
        out_shape=jax.ShapeDtypeStruct((nb, 16, BT), jnp.float32),
        grid=(nb,),
        in_specs=[
            pl.BlockSpec((1, 28, 32, BT), lambda i: (i, 0, 0, 0)),
            _rep(kp["w1t"]), _rep(kp["b1"]),
            _rep(kp["w2p"]), _rep(kp["b2"]),
            _rep(kp["wf1"]), _rep(kp["bf1"]),
            _rep(kp["wf2"]), _rep(kp["bf2"]),
            _rep(kp["wf3"]), _rep(kp["bf3"]),
        ],
        out_specs=pl.BlockSpec((1, 16, BT), lambda i: (i, 0, 0)),
        scratch_shapes=[
            pltpu.VMEM((12, 96, BT), jnp.bfloat16),   # pooled conv1: (h, wp*8 + c, b)
            pltpu.VMEM((4, 64, BT), jnp.bfloat16),    # pooled conv2: (hp, wp*16 + co, b)
        ],
        compiler_params=pltpu.CompilerParams(
            dimension_semantics=("parallel",)),
    )(x, kp["w1t"], kp["b1"], kp["w2p"], kp["b2"],
      kp["wf1"], kp["bf1"], kp["wf2"], kp["bf2"], kp["wf3"], kp["bf3"])

    out = out.transpose(0, 2, 1).reshape(Bp, 16)
    return out[:B, :NOUT]


def pack_params(p):
    """One-time repack of PyTorch-layout params into MXU/Toeplitz-friendly layouts."""
    f32 = np.float32
    w1 = np.asarray(p["w1"], f32)        # (6, 1, 5, 5)
    b1 = np.asarray(p["b1"], f32)        # (6,)
    w2 = np.asarray(p["w2"], f32)        # (16, 6, 5, 5)
    b2 = np.asarray(p["b2"], f32)        # (16,)
    f1w = np.asarray(p["fc1_w"], f32)    # (128, 256)
    f1b = np.asarray(p["fc1_b"], f32)
    f2w = np.asarray(p["fc2_w"], f32)    # (64, 128)
    f2b = np.asarray(p["fc2_b"], f32)
    f3w = np.asarray(p["fc3_w"], f32)    # (10, 64)
    f3b = np.asarray(p["fc3_b"], f32)

    # conv1 Toeplitz LHS: (192, 160); row = wo*8 + c ; col = kh*32 + (wo+dw)
    w1t = np.zeros((24 * 8, KSZ * 32), f32)
    c, wo, kh, dw = np.meshgrid(np.arange(6), np.arange(24),
                                np.arange(KSZ), np.arange(KSZ), indexing="ij")
    w1t[wo * 8 + c, kh * 32 + wo + dw] = w1[c, 0, kh, dw]
    b1p = np.zeros((8,), f32)
    b1p[:6] = b1
    b1p = np.broadcast_to(b1p[:, None], (8, BT)).copy()

    # conv2 Toeplitz LHS: (128, 480); row = wo*16 + co ; col = dh*96 + (wo+dw)*8 + ci
    w2p = np.zeros((8 * 16, KSZ * 96), f32)
    co, ci, wo, dh, dw = np.meshgrid(np.arange(16), np.arange(6), np.arange(8),
                                     np.arange(KSZ), np.arange(KSZ), indexing="ij")
    w2p[wo * 16 + co, dh * 96 + (wo + dw) * 8 + ci] = w2[co, ci, dh, dw]
    b2p = np.broadcast_to(b2[:, None], (16, BT)).copy()

    # fc1: our p2 rows are ordered (hp, wp, co); PyTorch flatten is (co, hp, wp)
    wf1 = f1w.reshape(128, 16, 4, 4).transpose(0, 2, 3, 1).reshape(128, 256)
    bf1 = np.broadcast_to(f1b[:, None], (128, BT)).copy()
    wf2 = f2w
    bf2 = np.broadcast_to(f2b[:, None], (64, BT)).copy()
    wf3 = np.zeros((16, 64), f32)
    wf3[:NOUT] = f3w
    bf3r = np.zeros((16,), f32)
    bf3r[:NOUT] = f3b
    bf3 = np.broadcast_to(bf3r[:, None], (16, BT)).copy()

    bf16 = jnp.bfloat16
    return {
        "w1t": jnp.asarray(w1t),                    # f32: keep conv1 in f32
        "b1": jnp.asarray(b1p),
        "w2p": jnp.asarray(w2p, dtype=bf16),        # bf16 MXU operands
        "b2": jnp.asarray(b2p),
        "wf1": jnp.asarray(wf1, dtype=bf16),
        "bf1": jnp.asarray(bf1),
        "wf2": jnp.asarray(wf2, dtype=bf16),
        "bf2": jnp.asarray(bf2),
        "wf3": jnp.asarray(wf3, dtype=bf16),
        "bf3": jnp.asarray(bf3),
    }


# --------------------------- deterministic params ----------------------------

def init_params(key):
    def uni(k, shape, fan_in):
        bound = 1.0 / (fan_in ** 0.5)
        return jax.random.uniform(k, shape, jnp.float32, -bound, bound)

    ks = jax.random.split(key, 10)
    return {
        "w1": uni(ks[0], (6, 1, 5, 5), 1 * 25),   "b1": uni(ks[1], (6,), 1 * 25),
        "w2": uni(ks[2], (16, 6, 5, 5), 6 * 25),  "b2": uni(ks[3], (16,), 6 * 25),
        "fc1_w": uni(ks[4], (128, 256), 256),     "fc1_b": uni(ks[5], (128,), 256),
        "fc2_w": uni(ks[6], (64, 128), 128),      "fc2_b": uni(ks[7], (64,), 128),
        "fc3_w": uni(ks[8], (10, 64), 64),        "fc3_b": uni(ks[9], (10,), 64),
    }


# ----------------------------- plain-JAX reference ---------------------------

def lenet_reference(x_nchw, params):
    prec = jax.lax.Precision.HIGHEST

    def conv(x, w, b):
        y = jax.lax.conv_general_dilated(
            x, w, (1, 1), "VALID",
            dimension_numbers=("NCHW", "OIHW", "NCHW"), precision=prec)
        return jax.nn.relu(y + b.reshape(1, -1, 1, 1))

    def pool(x):
        return jax.lax.reduce_window(x, -jnp.inf, jax.lax.max,
                                     (1, 1, 2, 2), (1, 1, 2, 2), "VALID")

    h = pool(conv(x_nchw, params["w1"], params["b1"]))
    h = pool(conv(h, params["w2"], params["b2"]))
    h = h.reshape(h.shape[0], -1)                            # PyTorch (c,h,w) flatten
    h = jax.nn.relu(jnp.matmul(h, params["fc1_w"].T, precision=prec) + params["fc1_b"])
    h = jax.nn.relu(jnp.matmul(h, params["fc2_w"].T, precision=prec) + params["fc2_b"])
    return jnp.matmul(h, params["fc3_w"].T, precision=prec) + params["fc3_b"]


if __name__ == "__main__":
    key = jax.random.PRNGKey(0)
    pkey, xkey = jax.random.split(key)
    params = init_params(pkey)
    # LeNet-5 geometry requires 28x28 single-channel input (16*4*4 = 256 for fc1)
    x = jax.random.normal(xkey, (2, 1, 28, 28), dtype=jnp.float32)

    packed = pack_params(params)            # one-time weight repack (Toeplitz + padding)

    out = jax.block_until_ready(lenet_forward(x, packed))
    assert out.shape == (2, 10), out.shape

    ref = jax.block_until_ready(lenet_reference(x, params))
    max_err = float(jnp.max(jnp.abs(out - ref)))
    # conv2/fc run with bf16 MXU operands (f32 accumulation), so compare with a
    # bf16-appropriate tolerance against the f32 reference.
    if not jnp.allclose(out, ref, atol=2e-2, rtol=2e-2):
        raise AssertionError(
            f"Pallas LeNet output mismatch vs JAX reference (max |err| = {max_err:.3e})")
    print("KERNEL_OK")
</pallas_src>

<mosaic_0001>
module attributes {stable_mosaic.version = 11 : i64} {
  func.func @lenet_kernel(%arg0: i32, %arg1: memref<1x28x32x128xf32, #tpu.memory_space<vmem>>, %arg2: memref<192x160xf32, #tpu.memory_space<vmem>>, %arg3: memref<8x128xf32, #tpu.memory_space<vmem>>, %arg4: memref<128x480xbf16, #tpu.memory_space<vmem>>, %arg5: memref<16x128xf32, #tpu.memory_space<vmem>>, %arg6: memref<128x256xbf16, #tpu.memory_space<vmem>>, %arg7: memref<128x128xf32, #tpu.memory_space<vmem>>, %arg8: memref<64x128xbf16, #tpu.memory_space<vmem>>, %arg9: memref<64x128xf32, #tpu.memory_space<vmem>>, %arg10: memref<16x64xbf16, #tpu.memory_space<vmem>>, %arg11: memref<16x128xf32, #tpu.memory_space<vmem>>, %arg12: memref<1x16x128xf32, #tpu.memory_space<vmem>>, %arg13: memref<12x96x128xbf16, #tpu.memory_space<vmem>>, %arg14: memref<4x64x128xbf16, #tpu.memory_space<vmem>>) attributes {dimension_semantics = [#tpu.dimension_semantics<parallel>], iteration_bounds = array<i64: 1>, scalar_prefetch = 0 : i64, scratch_operands = 2 : i64, tpu.core_type = #tpu.core_type<tc>, window_params = [{transform_indices = @transform_0, window_bounds = array<i64: 1, 28, 32, 128>}, {pipeline_mode = #tpu.pipeline_mode<synchronous>, transform_indices = @transform_1, window_bounds = array<i64: 192, 160>}, {pipeline_mode = #tpu.pipeline_mode<synchronous>, transform_indices = @transform_2, window_bounds = array<i64: 8, 128>}, {pipeline_mode = #tpu.pipeline_mode<synchronous>, transform_indices = @transform_3, window_bounds = array<i64: 128, 480>}, {pipeline_mode = #tpu.pipeline_mode<synchronous>, transform_indices = @transform_4, window_bounds = array<i64: 16, 128>}, {pipeline_mode = #tpu.pipeline_mode<synchronous>, transform_indices = @transform_5, window_bounds = array<i64: 128, 256>}, {pipeline_mode = #tpu.pipeline_mode<synchronous>, transform_indices = @transform_6, window_bounds = array<i64: 128, 128>}, {pipeline_mode = #tpu.pipeline_mode<synchronous>, transform_indices = @transform_7, window_bounds = array<i64: 64, 128>}, {pipeline_mode = #tpu.pipeline_mode<synchronous>, transform_indices = @transform_8, window_bounds = array<i64: 64, 128>}, {pipeline_mode = #tpu.pipeline_mode<synchronous>, transform_indices = @transform_9, window_bounds = array<i64: 16, 64>}, {pipeline_mode = #tpu.pipeline_mode<synchronous>, transform_indices = @transform_10, window_bounds = array<i64: 16, 128>}, {transform_indices = @transform_11, window_bounds = array<i64: 1, 16, 128>}]} {
    %c0 = arith.constant 0 : index
    %c0_0 = arith.constant 0 : index
    %0 = vector.load %arg2[%c0, %c0_0] : memref<192x160xf32, #tpu.memory_space<vmem>>, vector<192x160xf32>
    %c0_1 = arith.constant 0 : index
    %c0_2 = arith.constant 0 : index
    %1 = vector.load %arg3[%c0_1, %c0_2] : memref<8x128xf32, #tpu.memory_space<vmem>>, vector<8x128xf32>
    %c0_3 = arith.constant 0 : index
    %c0_4 = arith.constant 0 : index
    %c0_5 = arith.constant 0 : index
    %c0_6 = arith.constant 0 : index
    %2 = vector.load %arg1[%c0_3, %c0_4, %c0_5, %c0_6] : memref<1x28x32x128xf32, #tpu.memory_space<vmem>>, vector<1x5x32x128xf32>
    %3 = vector.shape_cast %2 : vector<1x5x32x128xf32> to vector<5x32x128xf32>
    %4 = vector.shape_cast %3 : vector<5x32x128xf32> to vector<160x128xf32>
    %cst = arith.constant dense<0.000000e+00> : vector<192x128xf32>
    %5 = tpu.matmul %0, %4, %cst {dimension_numbers = #tpu.dot_dimension_numbers<[1], [0], [0], [1], [0, 0, 1, 1], [], []>} : vector<192x160xf32>, vector<160x128xf32>, vector<192x128xf32> -> vector<192x128xf32>
    %c0_7 = arith.constant 0 : index
    %c1 = arith.constant 1 : index
    %c0_8 = arith.constant 0 : index
    %c0_9 = arith.constant 0 : index
    %6 = vector.load %arg1[%c0_7, %c1, %c0_8, %c0_9] : memref<1x28x32x128xf32, #tpu.memory_space<vmem>>, vector<1x5x32x128xf32>
    %7 = vector.shape_cast %6 : vector<1x5x32x128xf32> to vector<5x32x128xf32>
    %8 = vector.shape_cast %7 : vector<5x32x128xf32> to vector<160x128xf32>
    %cst_10 = arith.constant dense<0.000000e+00> : vector<192x128xf32>
    %9 = tpu.matmul %0, %8, %cst_10 {dimension_numbers = #tpu.dot_dimension_numbers<[1], [0], [0], [1], [0, 0, 1, 1], [], []>} : vector<192x160xf32>, vector<160x128xf32>, vector<192x128xf32> -> vector<192x128xf32>
    %10 = arith.maximumf %5, %9 : vector<192x128xf32>
    %11 = vector.shape_cast %10 : vector<192x128xf32> to vector<12x2x8x128xf32>
    %12 = vector.extract_strided_slice %11 {offsets = [0, 0, 0, 0], sizes = [12, 1, 8, 128], strides = [1, 1, 1, 1]} : vector<12x2x8x128xf32> to vector<12x1x8x128xf32>
    %13 = vector.shape_cast %12 : vector<12x1x8x128xf32> to vector<12x8x128xf32>
    %14 = vector.extract_strided_slice %11 {offsets = [0, 1, 0, 0], sizes = [12, 1, 8, 128], strides = [1, 1, 1, 1]} : vector<12x2x8x128xf32> to vector<12x1x8x128xf32>
    %15 = vector.shape_cast %14 : vector<12x1x8x128xf32> to vector<12x8x128xf32>
    %16 = arith.maximumf %13, %15 : vector<12x8x128xf32>
    %17 = vector.shape_cast %1 : vector<8x128xf32> to vector<1x8x128xf32>
    %18 = vector.broadcast %17 : vector<1x8x128xf32> to vector<12x8x128xf32>
    %19 = arith.addf %16, %18 : vector<12x8x128xf32>
    %cst_11 = arith.constant 0.000000e+00 : f32
    %20 = vector.broadcast %cst_11 : f32 to vector<12x8x128xf32>
    %21 = arith.maximumf %19, %20 : vector<12x8x128xf32>
    %22 = vector.shape_cast %21 : vector<12x8x128xf32> to vector<96x128xf32>
    %23 = arith.truncf %22 : vector<96x128xf32> to vector<96x128xbf16>
    %c0_12 = arith.constant 0 : index
    %c0_13 = arith.constant 0 : index
    %c0_14 = arith.constant 0 : index
    %24 = vector.load %arg13[%c0_12, %c0_13, %c0_14] : memref<12x96x128xbf16, #tpu.memory_space<vmem>>, vector<1x96x128xbf16>
    %25 = vector.shape_cast %24 : vector<1x96x128xbf16> to vector<96x128xbf16>
    %26 = vector.shape_cast %23 : vector<96x128xbf16> to vector<1x96x128xbf16>
    tpu.vector_store %arg13[%c0_12, %c0_13, %c0_14], %26 {strides = array<i32>} : memref<12x96x128xbf16, #tpu.memory_space<vmem>>, vector<1x96x128xbf16>,
    %c0_15 = arith.constant 0 : index
    %c2 = arith.constant 2 : index
    %c0_16 = arith.constant 0 : index
    %c0_17 = arith.constant 0 : index
    %27 = vector.load %arg1[%c0_15, %c2, %c0_16, %c0_17] : memref<1x28x32x128xf32, #tpu.memory_space<vmem>>, vector<1x5x32x128xf32>
    %28 = vector.shape_cast %27 : vector<1x5x32x128xf32> to vector<5x32x128xf32>
    %29 = vector.shape_cast %28 : vector<5x32x128xf32> to vector<160x128xf32>
    %cst_18 = arith.constant dense<0.000000e+00> : vector<192x128xf32>
    %30 = tpu.matmul %0, %29, %cst_18 {dimension_numbers = #tpu.dot_dimension_numbers<[1], [0], [0], [1], [0, 0, 1, 1], [], []>} : vector<192x160xf32>, vector<160x128xf32>, vector<192x128xf32> -> vector<192x128xf32>
    %c0_19 = arith.constant 0 : index
    %c3 = arith.constant 3 : index
    %c0_20 = arith.constant 0 : index
    %c0_21 = arith.constant 0 : index
    %31 = vector.load %arg1[%c0_19, %c3, %c0_20, %c0_21] : memref<1x28x32x128xf32, #tpu.memory_space<vmem>>, vector<1x5x32x128xf32>
    %32 = vector.shape_cast %31 : vector<1x5x32x128xf32> to vector<5x32x128xf32>
    %33 = vector.shape_cast %32 : vector<5x32x128xf32> to vector<160x128xf32>
    %cst_22 = arith.constant dense<0.000000e+00> : vector<192x128xf32>
    %34 = tpu.matmul %0, %33, %cst_22 {dimension_numbers = #tpu.dot_dimension_numbers<[1], [0], [0], [1], [0, 0, 1, 1], [], []>} : vector<192x160xf32>, vector<160x128xf32>, vector<192x128xf32> -> vector<192x128xf32>
    %35 = arith.maximumf %30, %34 : vector<192x128xf32>
    %36 = vector.shape_cast %35 : vector<192x128xf32> to vector<12x2x8x128xf32>
    %37 = vector.extract_strided_slice %36 {offsets = [0, 0, 0, 0], sizes = [12, 1, 8, 128], strides = [1, 1, 1, 1]} : vector<12x2x8x128xf32> to vector<12x1x8x128xf32>
    %38 = vector.shape_cast %37 : vector<12x1x8x128xf32> to vector<12x8x128xf32>
    %39 = vector.extract_strided_slice %36 {offsets = [0, 1, 0, 0], sizes = [12, 1, 8, 128], strides = [1, 1, 1, 1]} : vector<12x2x8x128xf32> to vector<12x1x8x128xf32>
    %40 = vector.shape_cast %39 : vector<12x1x8x128xf32> to vector<12x8x128xf32>
    %41 = arith.maximumf %38, %40 : vector<12x8x128xf32>
    %42 = vector.shape_cast %1 : vector<8x128xf32> to vector<1x8x128xf32>
    %43 = vector.broadcast %42 : vector<1x8x128xf32> to vector<12x8x128xf32>
    %44 = arith.addf %41, %43 : vector<12x8x128xf32>
    %cst_23 = arith.constant 0.000000e+00 : f32
    %45 = vector.broadcast %cst_23 : f32 to vector<12x8x128xf32>
    %46 = arith.maximumf %44, %45 : vector<12x8x128xf32>
    %47 = vector.shape_cast %46 : vector<12x8x128xf32> to vector<96x128xf32>
    %48 = arith.truncf %47 : vector<96x128xf32> to vector<96x128xbf16>
    %c1_24 = arith.constant 1 : index
    %c0_25 = arith.constant 0 : index
    %c0_26 = arith.constant 0 : index
    %49 = vector.load %arg13[%c1_24, %c0_25, %c0_26] : memref<12x96x128xbf16, #tpu.memory_space<vmem>>, vector<1x96x128xbf16>
    %50 = vector.shape_cast %49 : vector<1x96x128xbf16> to vector<96x128xbf16>
    %51 = vector.shape_cast %48 : vector<96x128xbf16> to vector<1x96x128xbf16>
    tpu.vector_store %arg13[%c1_24, %c0_25, %c0_26], %51 {strides = array<i32>} : memref<12x96x128xbf16, #tpu.memory_space<vmem>>, vector<1x96x128xbf16>,
    %c0_27 = arith.constant 0 : index
    %c4 = arith.constant 4 : index
    %c0_28 = arith.constant 0 : index
    %c0_29 = arith.constant 0 : index
    %52 = vector.load %arg1[%c0_27, %c4, %c0_28, %c0_29] : memref<1x28x32x128xf32, #tpu.memory_space<vmem>>, vector<1x5x32x128xf32>
    %53 = vector.shape_cast %52 : vector<1x5x32x128xf32> to vector<5x32x128xf32>
    %54 = vector.shape_cast %53 : vector<5x32x128xf32> to vector<160x128xf32>
    %cst_30 = arith.constant dense<0.000000e+00> : vector<192x128xf32>
    %55 = tpu.matmul %0, %54, %cst_30 {dimension_numbers = #tpu.dot_dimension_numbers<[1], [0], [0], [1], [0, 0, 1, 1], [], []>} : vector<192x160xf32>, vector<160x128xf32>, vector<192x128xf32> -> vector<192x128xf32>
    %c0_31 = arith.constant 0 : index
    %c5 = arith.constant 5 : index
    %c0_32 = arith.constant 0 : index
    %c0_33 = arith.constant 0 : index
    %56 = vector.load %arg1[%c0_31, %c5, %c0_32, %c0_33] : memref<1x28x32x128xf32, #tpu.memory_space<vmem>>, vector<1x5x32x128xf32>
    %57 = vector.shape_cast %56 : vector<1x5x32x128xf32> to vector<5x32x128xf32>
    %58 = vector.shape_cast %57 : vector<5x32x128xf32> to vector<160x128xf32>
    %cst_34 = arith.constant dense<0.000000e+00> : vector<192x128xf32>
    %59 = tpu.matmul %0, %58, %cst_34 {dimension_numbers = #tpu.dot_dimension_numbers<[1], [0], [0], [1], [0, 0, 1, 1], [], []>} : vector<192x160xf32>, vector<160x128xf32>, vector<192x128xf32> -> vector<192x128xf32>
    %60 = arith.maximumf %55, %59 : vector<192x128xf32>
    %61 = vector.shape_cast %60 : vector<192x128xf32> to vector<12x2x8x128xf32>
    %62 = vector.extract_strided_slice %61 {offsets = [0, 0, 0, 0], sizes = [12, 1, 8, 128], strides = [1, 1, 1, 1]} : vector<12x2x8x128xf32> to vector<12x1x8x128xf32>
    %63 = vector.shape_cast %62 : vector<12x1x8x128xf32> to vector<12x8x128xf32>
    %64 = vector.extract_strided_slice %61 {offsets = [0, 1, 0, 0], sizes = [12, 1, 8, 128], strides = [1, 1, 1, 1]} : vector<12x2x8x128xf32> to vector<12x1x8x128xf32>
    %65 = vector.shape_cast %64 : vector<12x1x8x128xf32> to vector<12x8x128xf32>
    %66 = arith.maximumf %63, %65 : vector<12x8x128xf32>
    %67 = vector.shape_cast %1 : vector<8x128xf32> to vector<1x8x128xf32>
    %68 = vector.broadcast %67 : vector<1x8x128xf32> to vector<12x8x128xf32>
    %69 = arith.addf %66, %68 : vector<12x8x128xf32>
    %cst_35 = arith.constant 0.000000e+00 : f32
    %70 = vector.broadcast %cst_35 : f32 to vector<12x8x128xf32>
    %71 = arith.maximumf %69, %70 : vector<12x8x128xf32>
    %72 = vector.shape_cast %71 : vector<12x8x128xf32> to vector<96x128xf32>
    %73 = arith.truncf %72 : vector<96x128xf32> to vector<96x128xbf16>
    %c2_36 = arith.constant 2 : index
    %c0_37 = arith.constant 0 : index
    %c0_38 = arith.constant 0 : index
    %74 = vector.load %arg13[%c2_36, %c0_37, %c0_38] : memref<12x96x128xbf16, #tpu.memory_space<vmem>>, vector<1x96x128xbf16>
    %75 = vector.shape_cast %74 : vector<1x96x128xbf16> to vector<96x128xbf16>
    %76 = vector.shape_cast %73 : vector<96x128xbf16> to vector<1x96x128xbf16>
    tpu.vector_store %arg13[%c2_36, %c0_37, %c0_38], %76 {strides = array<i32>} : memref<12x96x128xbf16, #tpu.memory_space<vmem>>, vector<1x96x128xbf16>,
    %c0_39 = arith.constant 0 : index
    %c6 = arith.constant 6 : index
    %c0_40 = arith.constant 0 : index
    %c0_41 = arith.constant 0 : index
    %77 = vector.load %arg1[%c0_39, %c6, %c0_40, %c0_41] : memref<1x28x32x128xf32, #tpu.memory_space<vmem>>, vector<1x5x32x128xf32>
    %78 = vector.shape_cast %77 : vector<1x5x32x128xf32> to vector<5x32x128xf32>
    %79 = vector.shape_cast %78 : vector<5x32x128xf32> to vector<160x128xf32>
    %cst_42 = arith.constant dense<0.000000e+00> : vector<192x128xf32>
    %80 = tpu.matmul %0, %79, %cst_42 {dimension_numbers = #tpu.dot_dimension_numbers<[1], [0], [0], [1], [0, 0, 1, 1], [], []>} : vector<192x160xf32>, vector<160x128xf32>, vector<192x128xf32> -> vector<192x128xf32>
    %c0_43 = arith.constant 0 : index
    %c7 = arith.constant 7 : index
    %c0_44 = arith.constant 0 : index
    %c0_45 = arith.constant 0 : index
    %81 = vector.load %arg1[%c0_43, %c7, %c0_44, %c0_45] : memref<1x28x32x128xf32, #tpu.memory_space<vmem>>, vector<1x5x32x128xf32>
    %82 = vector.shape_cast %81 : vector<1x5x32x128xf32> to vector<5x32x128xf32>
    %83 = vector.shape_cast %82 : vector<5x32x128xf32> to vector<160x128xf32>
    %cst_46 = arith.constant dense<0.000000e+00> : vector<192x128xf32>
    %84 = tpu.matmul %0, %83, %cst_46 {dimension_numbers = #tpu.dot_dimension_numbers<[1], [0], [0], [1], [0, 0, 1, 1], [], []>} : vector<192x160xf32>, vector<160x128xf32>, vector<192x128xf32> -> vector<192x128xf32>
    %85 = arith.maximumf %80, %84 : vector<192x128xf32>
    %86 = vector.shape_cast %85 : vector<192x128xf32> to vector<12x2x8x128xf32>
    %87 = vector.extract_strided_slice %86 {offsets = [0, 0, 0, 0], sizes = [12, 1, 8, 128], strides = [1, 1, 1, 1]} : vector<12x2x8x128xf32> to vector<12x1x8x128xf32>
    %88 = vector.shape_cast %87 : vector<12x1x8x128xf32> to vector<12x8x128xf32>
    %89 = vector.extract_strided_slice %86 {offsets = [0, 1, 0, 0], sizes = [12, 1, 8, 128], strides = [1, 1, 1, 1]} : vector<12x2x8x128xf32> to vector<12x1x8x128xf32>
    %90 = vector.shape_cast %89 : vector<12x1x8x128xf32> to vector<12x8x128xf32>
    %91 = arith.maximumf %88, %90 : vector<12x8x128xf32>
    %92 = vector.shape_cast %1 : vector<8x128xf32> to vector<1x8x128xf32>
    %93 = vector.broadcast %92 : vector<1x8x128xf32> to vector<12x8x128xf32>
    %94 = arith.addf %91, %93 : vector<12x8x128xf32>
    %cst_47 = arith.constant 0.000000e+00 : f32
    %95 = vector.broadcast %cst_47 : f32 to vector<12x8x128xf32>
    %96 = arith.maximumf %94, %95 : vector<12x8x128xf32>
    %97 = vector.shape_cast %96 : vector<12x8x128xf32> to vector<96x128xf32>
    %98 = arith.truncf %97 : vector<96x128xf32> to vector<96x128xbf16>
    %c3_48 = arith.constant 3 : index
    %c0_49 = arith.constant 0 : index
    %c0_50 = arith.constant 0 : index
    %99 = vector.load %arg13[%c3_48, %c0_49, %c0_50] : memref<12x96x128xbf16, #tpu.memory_space<vmem>>, vector<1x96x128xbf16>
    %100 = vector.shape_cast %99 : vector<1x96x128xbf16> to vector<96x128xbf16>
    %101 = vector.shape_cast %98 : vector<96x128xbf16> to vector<1x96x128xbf16>
    tpu.vector_store %arg13[%c3_48, %c0_49, %c0_50], %101 {strides = array<i32>} : memref<12x96x128xbf16, #tpu.memory_space<vmem>>, vector<1x96x128xbf16>,
    %c0_51 = arith.constant 0 : index
    %c8 = arith.constant 8 : index
    %c0_52 = arith.constant 0 : index
    %c0_53 = arith.constant 0 : index
    %102 = vector.load %arg1[%c0_51, %c8, %c0_52, %c0_53] : memref<1x28x32x128xf32, #tpu.memory_space<vmem>>, vector<1x5x32x128xf32>
    %103 = vector.shape_cast %102 : vector<1x5x32x128xf32> to vector<5x32x128xf32>
    %104 = vector.shape_cast %103 : vector<5x32x128xf32> to vector<160x128xf32>
    %cst_54 = arith.constant dense<0.000000e+00> : vector<192x128xf32>
    %105 = tpu.matmul %0, %104, %cst_54 {dimension_numbers = #tpu.dot_dimension_numbers<[1], [0], [0], [1], [0, 0, 1, 1], [], []>} : vector<192x160xf32>, vector<160x128xf32>, vector<192x128xf32> -> vector<192x128xf32>
    %c0_55 = arith.constant 0 : index
    %c9 = arith.constant 9 : index
    %c0_56 = arith.constant 0 : index
    %c0_57 = arith.constant 0 : index
    %106 = vector.load %arg1[%c0_55, %c9, %c0_56, %c0_57] : memref<1x28x32x128xf32, #tpu.memory_space<vmem>>, vector<1x5x32x128xf32>
    %107 = vector.shape_cast %106 : vector<1x5x32x128xf32> to vector<5x32x128xf32>
    %108 = vector.shape_cast %107 : vector<5x32x128xf32> to vector<160x128xf32>
    %cst_58 = arith.constant dense<0.000000e+00> : vector<192x128xf32>
    %109 = tpu.matmul %0, %108, %cst_58 {dimension_numbers = #tpu.dot_dimension_numbers<[1], [0], [0], [1], [0, 0, 1, 1], [], []>} : vector<192x160xf32>, vector<160x128xf32>, vector<192x128xf32> -> vector<192x128xf32>
    %110 = arith.maximumf %105, %109 : vector<192x128xf32>
    %111 = vector.shape_cast %110 : vector<192x128xf32> to vector<12x2x8x128xf32>
    %112 = vector.extract_strided_slice %111 {offsets = [0, 0, 0, 0], sizes = [12, 1, 8, 128], strides = [1, 1, 1, 1]} : vector<12x2x8x128xf32> to vector<12x1x8x128xf32>
    %113 = vector.shape_cast %112 : vector<12x1x8x128xf32> to vector<12x8x128xf32>
    %114 = vector.extract_strided_slice %111 {offsets = [0, 1, 0, 0], sizes = [12, 1, 8, 128], strides = [1, 1, 1, 1]} : vector<12x2x8x128xf32> to vector<12x1x8x128xf32>
    %115 = vector.shape_cast %114 : vector<12x1x8x128xf32> to vector<12x8x128xf32>
    %116 = arith.maximumf %113, %115 : vector<12x8x128xf32>
    %117 = vector.shape_cast %1 : vector<8x128xf32> to vector<1x8x128xf32>
    %118 = vector.broadcast %117 : vector<1x8x128xf32> to vector<12x8x128xf32>
    %119 = arith.addf %116, %118 : vector<12x8x128xf32>
    %cst_59 = arith.constant 0.000000e+00 : f32
    %120 = vector.broadcast %cst_59 : f32 to vector<12x8x128xf32>
    %121 = arith.maximumf %119, %120 : vector<12x8x128xf32>
    %122 = vector.shape_cast %121 : vector<12x8x128xf32> to vector<96x128xf32>
    %123 = arith.truncf %122 : vector<96x128xf32> to vector<96x128xbf16>
    %c4_60 = arith.constant 4 : index
    %c0_61 = arith.constant 0 : index
    %c0_62 = arith.constant 0 : index
    %124 = vector.load %arg13[%c4_60, %c0_61, %c0_62] : memref<12x96x128xbf16, #tpu.memory_space<vmem>>, vector<1x96x128xbf16>
    %125 = vector.shape_cast %124 : vector<1x96x128xbf16> to vector<96x128xbf16>
    %126 = vector.shape_cast %123 : vector<96x128xbf16> to vector<1x96x128xbf16>
    tpu.vector_store %arg13[%c4_60, %c0_61, %c0_62], %126 {strides = array<i32>} : memref<12x96x128xbf16, #tpu.memory_space<vmem>>, vector<1x96x128xbf16>,
    %c0_63 = arith.constant 0 : index
    %c10 = arith.constant 10 : index
    %c0_64 = arith.constant 0 : index
    %c0_65 = arith.constant 0 : index
    %127 = vector.load %arg1[%c0_63, %c10, %c0_64, %c0_65] : memref<1x28x32x128xf32, #tpu.memory_space<vmem>>, vector<1x5x32x128xf32>
    %128 = vector.shape_cast %127 : vector<1x5x32x128xf32> to vector<5x32x128xf32>
    %129 = vector.shape_cast %128 : vector<5x32x128xf32> to vector<160x128xf32>
    %cst_66 = arith.constant dense<0.000000e+00> : vector<192x128xf32>
    %130 = tpu.matmul %0, %129, %cst_66 {dimension_numbers = #tpu.dot_dimension_numbers<[1], [0], [0], [1], [0, 0, 1, 1], [], []>} : vector<192x160xf32>, vector<160x128xf32>, vector<192x128xf32> -> vector<192x128xf32>
    %c0_67 = arith.constant 0 : index
    %c11 = arith.constant 11 : index
    %c0_68 = arith.constant 0 : index
    %c0_69 = arith.constant 0 : index
    %131 = vector.load %arg1[%c0_67, %c11, %c0_68, %c0_69] : memref<1x28x32x128xf32, #tpu.memory_space<vmem>>, vector<1x5x32x128xf32>
    %132 = vector.shape_cast %131 : vector<1x5x32x128xf32> to vector<5x32x128xf32>
    %133 = vector.shape_cast %132 : vector<5x32x128xf32> to vector<160x128xf32>
    %cst_70 = arith.constant dense<0.000000e+00> : vector<192x128xf32>
    %134 = tpu.matmul %0, %133, %cst_70 {dimension_numbers = #tpu.dot_dimension_numbers<[1], [0], [0], [1], [0, 0, 1, 1], [], []>} : vector<192x160xf32>, vector<160x128xf32>, vector<192x128xf32> -> vector<192x128xf32>
    %135 = arith.maximumf %130, %134 : vector<192x128xf32>
    %136 = vector.shape_cast %135 : vector<192x128xf32> to vector<12x2x8x128xf32>
    %137 = vector.extract_strided_slice %136 {offsets = [0, 0, 0, 0], sizes = [12, 1, 8, 128], strides = [1, 1, 1, 1]} : vector<12x2x8x128xf32> to vector<12x1x8x128xf32>
    %138 = vector.shape_cast %137 : vector<12x1x8x128xf32> to vector<12x8x128xf32>
    %139 = vector.extract_strided_slice %136 {offsets = [0, 1, 0, 0], sizes = [12, 1, 8, 128], strides = [1, 1, 1, 1]} : vector<12x2x8x128xf32> to vector<12x1x8x128xf32>
    %140 = vector.shape_cast %139 : vector<12x1x8x128xf32> to vector<12x8x128xf32>
    %141 = arith.maximumf %138, %140 : vector<12x8x128xf32>
    %142 = vector.shape_cast %1 : vector<8x128xf32> to vector<1x8x128xf32>
    %143 = vector.broadcast %142 : vector<1x8x128xf32> to vector<12x8x128xf32>
    %144 = arith.addf %141, %143 : vector<12x8x128xf32>
    %cst_71 = arith.constant 0.000000e+00 : f32
    %145 = vector.broadcast %cst_71 : f32 to vector<12x8x128xf32>
    %146 = arith.maximumf %144, %145 : vector<12x8x128xf32>
    %147 = vector.shape_cast %146 : vector<12x8x128xf32> to vector<96x128xf32>
    %148 = arith.truncf %147 : vector<96x128xf32> to vector<96x128xbf16>
    %c5_72 = arith.constant 5 : index
    %c0_73 = arith.constant 0 : index
    %c0_74 = arith.constant 0 : index
    %149 = vector.load %arg13[%c5_72, %c0_73, %c0_74] : memref<12x96x128xbf16, #tpu.memory_space<vmem>>, vector<1x96x128xbf16>
    %150 = vector.shape_cast %149 : vector<1x96x128xbf16> to vector<96x128xbf16>
    %151 = vector.shape_cast %148 : vector<96x128xbf16> to vector<1x96x128xbf16>
    tpu.vector_store %arg13[%c5_72, %c0_73, %c0_74], %151 {strides = array<i32>} : memref<12x96x128xbf16, #tpu.memory_space<vmem>>, vector<1x96x128xbf16>,
    %c0_75 = arith.constant 0 : index
    %c12 = arith.constant 12 : index
    %c0_76 = arith.constant 0 : index
    %c0_77 = arith.constant 0 : index
    %152 = vector.load %arg1[%c0_75, %c12, %c0_76, %c0_77] : memref<1x28x32x128xf32, #tpu.memory_space<vmem>>, vector<1x5x32x128xf32>
    %153 = vector.shape_cast %152 : vector<1x5x32x128xf32> to vector<5x32x128xf32>
    %154 = vector.shape_cast %153 : vector<5x32x128xf32> to vector<160x128xf32>
    %cst_78 = arith.constant dense<0.000000e+00> : vector<192x128xf32>
    %155 = tpu.matmul %0, %154, %cst_78 {dimension_numbers = #tpu.dot_dimension_numbers<[1], [0], [0], [1], [0, 0, 1, 1], [], []>} : vector<192x160xf32>, vector<160x128xf32>, vector<192x128xf32> -> vector<192x128xf32>
    %c0_79 = arith.constant 0 : index
    %c13 = arith.constant 13 : index
    %c0_80 = arith.constant 0 : index
    %c0_81 = arith.constant 0 : index
    %156 = vector.load %arg1[%c0_79, %c13, %c0_80, %c0_81] : memref<1x28x32x128xf32, #tpu.memory_space<vmem>>, vector<1x5x32x128xf32>
    %157 = vector.shape_cast %156 : vector<1x5x32x128xf32> to vector<5x32x128xf32>
    %158 = vector.shape_cast %157 : vector<5x32x128xf32> to vector<160x128xf32>
    %cst_82 = arith.constant dense<0.000000e+00> : vector<192x128xf32>
    %159 = tpu.matmul %0, %158, %cst_82 {dimension_numbers = #tpu.dot_dimension_numbers<[1], [0], [0], [1], [0, 0, 1, 1], [], []>} : vector<192x160xf32>, vector<160x128xf32>, vector<192x128xf32> -> vector<192x128xf32>
    %160 = arith.maximumf %155, %159 : vector<192x128xf32>
    %161 = vector.shape_cast %160 : vector<192x128xf32> to vector<12x2x8x128xf32>
    %162 = vector.extract_strided_slice %161 {offsets = [0, 0, 0, 0], sizes = [12, 1, 8, 128], strides = [1, 1, 1, 1]} : vector<12x2x8x128xf32> to vector<12x1x8x128xf32>
    %163 = vector.shape_cast %162 : vector<12x1x8x128xf32> to vector<12x8x128xf32>
    %164 = vector.extract_strided_slice %161 {offsets = [0, 1, 0, 0], sizes = [12, 1, 8, 128], strides = [1, 1, 1, 1]} : vector<12x2x8x128xf32> to vector<12x1x8x128xf32>
    %165 = vector.shape_cast %164 : vector<12x1x8x128xf32> to vector<12x8x128xf32>
    %166 = arith.maximumf %163, %165 : vector<12x8x128xf32>
    %167 = vector.shape_cast %1 : vector<8x128xf32> to vector<1x8x128xf32>
    %168 = vector.broadcast %167 : vector<1x8x128xf32> to vector<12x8x128xf32>
    %169 = arith.addf %166, %168 : vector<12x8x128xf32>
    %cst_83 = arith.constant 0.000000e+00 : f32
    %170 = vector.broadcast %cst_83 : f32 to vector<12x8x128xf32>
    %171 = arith.maximumf %169, %170 : vector<12x8x128xf32>
    %172 = vector.shape_cast %171 : vector<12x8x128xf32> to vector<96x128xf32>
    %173 = arith.truncf %172 : vector<96x128xf32> to vector<96x128xbf16>
    %c6_84 = arith.constant 6 : index
    %c0_85 = arith.constant 0 : index
    %c0_86 = arith.constant 0 : index
    %174 = vector.load %arg13[%c6_84, %c0_85, %c0_86] : memref<12x96x128xbf16, #tpu.memory_space<vmem>>, vector<1x96x128xbf16>
    %175 = vector.shape_cast %174 : vector<1x96x128xbf16> to vector<96x128xbf16>
    %176 = vector.shape_cast %173 : vector<96x128xbf16> to vector<1x96x128xbf16>
    tpu.vector_store %arg13[%c6_84, %c0_85, %c0_86], %176 {strides = array<i32>} : memref<12x96x128xbf16, #tpu.memory_space<vmem>>, vector<1x96x128xbf16>,
    %c0_87 = arith.constant 0 : index
    %c14 = arith.constant 14 : index
    %c0_88 = arith.constant 0 : index
    %c0_89 = arith.constant 0 : index
    %177 = vector.load %arg1[%c0_87, %c14, %c0_88, %c0_89] : memref<1x28x32x128xf32, #tpu.memory_space<vmem>>, vector<1x5x32x128xf32>
    %178 = vector.shape_cast %177 : vector<1x5x32x128xf32> to vector<5x32x128xf32>
    %179 = vector.shape_cast %178 : vector<5x32x128xf32> to vector<160x128xf32>
    %cst_90 = arith.constant dense<0.000000e+00> : vector<192x128xf32>
    %180 = tpu.matmul %0, %179, %cst_90 {dimension_numbers = #tpu.dot_dimension_numbers<[1], [0], [0], [1], [0, 0, 1, 1], [], []>} : vector<192x160xf32>, vector<160x128xf32>, vector<192x128xf32> -> vector<192x128xf32>
    %c0_91 = arith.constant 0 : index
    %c15 = arith.constant 15 : index
    %c0_92 = arith.constant 0 : index
    %c0_93 = arith.constant 0 : index
    %181 = vector.load %arg1[%c0_91, %c15, %c0_92, %c0_93] : memref<1x28x32x128xf32, #tpu.memory_space<vmem>>, vector<1x5x32x128xf32>
    %182 = vector.shape_cast %181 : vector<1x5x32x128xf32> to vector<5x32x128xf32>
    %183 = vector.shape_cast %182 : vector<5x32x128xf32> to vector<160x128xf32>
    %cst_94 = arith.constant dense<0.000000e+00> : vector<192x128xf32>
    %184 = tpu.matmul %0, %183, %cst_94 {dimension_numbers = #tpu.dot_dimension_numbers<[1], [0], [0], [1], [0, 0, 1, 1], [], []>} : vector<192x160xf32>, vector<160x128xf32>, vector<192x128xf32> -> vector<192x128xf32>
    %185 = arith.maximumf %180, %184 : vector<192x128xf32>
    %186 = vector.shape_cast %185 : vector<192x128xf32> to vector<12x2x8x128xf32>
    %187 = vector.extract_strided_slice %186 {offsets = [0, 0, 0, 0], sizes = [12, 1, 8, 128], strides = [1, 1, 1, 1]} : vector<12x2x8x128xf32> to vector<12x1x8x128xf32>
    %188 = vector.shape_cast %187 : vector<12x1x8x128xf32> to vector<12x8x128xf32>
    %189 = vector.extract_strided_slice %186 {offsets = [0, 1, 0, 0], sizes = [12, 1, 8, 128], strides = [1, 1, 1, 1]} : vector<12x2x8x128xf32> to vector<12x1x8x128xf32>
    %190 = vector.shape_cast %189 : vector<12x1x8x128xf32> to vector<12x8x128xf32>
    %191 = arith.maximumf %188, %190 : vector<12x8x128xf32>
    %192 = vector.shape_cast %1 : vector<8x128xf32> to vector<1x8x128xf32>
    %193 = vector.broadcast %192 : vector<1x8x128xf32> to vector<12x8x128xf32>
    %194 = arith.addf %191, %193 : vector<12x8x128xf32>
    %cst_95 = arith.constant 0.000000e+00 : f32
    %195 = vector.broadcast %cst_95 : f32 to vector<12x8x128xf32>
    %196 = arith.maximumf %194, %195 : vector<12x8x128xf32>
    %197 = vector.shape_cast %196 : vector<12x8x128xf32> to vector<96x128xf32>
    %198 = arith.truncf %197 : vector<96x128xf32> to vector<96x128xbf16>
    %c7_96 = arith.constant 7 : index
    %c0_97 = arith.constant 0 : index
    %c0_98 = arith.constant 0 : index
    %199 = vector.load %arg13[%c7_96, %c0_97, %c0_98] : memref<12x96x128xbf16, #tpu.memory_space<vmem>>, vector<1x96x128xbf16>
    %200 = vector.shape_cast %199 : vector<1x96x128xbf16> to vector<96x128xbf16>
    %201 = vector.shape_cast %198 : vector<96x128xbf16> to vector<1x96x128xbf16>
    tpu.vector_store %arg13[%c7_96, %c0_97, %c0_98], %201 {strides = array<i32>} : memref<12x96x128xbf16, #tpu.memory_space<vmem>>, vector<1x96x128xbf16>,
    %c0_99 = arith.constant 0 : index
    %c16 = arith.constant 16 : index
    %c0_100 = arith.constant 0 : index
    %c0_101 = arith.constant 0 : index
    %202 = vector.load %arg1[%c0_99, %c16, %c0_100, %c0_101] : memref<1x28x32x128xf32, #tpu.memory_space<vmem>>, vector<1x5x32x128xf32>
    %203 = vector.shape_cast %202 : vector<1x5x32x128xf32> to vector<5x32x128xf32>
    %204 = vector.shape_cast %203 : vector<5x32x128xf32> to vector<160x128xf32>
    %cst_102 = arith.constant dense<0.000000e+00> : vector<192x128xf32>
    %205 = tpu.matmul %0, %204, %cst_102 {dimension_numbers = #tpu.dot_dimension_numbers<[1], [0], [0], [1], [0, 0, 1, 1], [], []>} : vector<192x160xf32>, vector<160x128xf32>, vector<192x128xf32> -> vector<192x128xf32>
    %c0_103 = arith.constant 0 : index
    %c17 = arith.constant 17 : index
    %c0_104 = arith.constant 0 : index
    %c0_105 = arith.constant 0 : index
    %206 = vector.load %arg1[%c0_103, %c17, %c0_104, %c0_105] : memref<1x28x32x128xf32, #tpu.memory_space<vmem>>, vector<1x5x32x128xf32>
    %207 = vector.shape_cast %206 : vector<1x5x32x128xf32> to vector<5x32x128xf32>
    %208 = vector.shape_cast %207 : vector<5x32x128xf32> to vector<160x128xf32>
    %cst_106 = arith.constant dense<0.000000e+00> : vector<192x128xf32>
    %209 = tpu.matmul %0, %208, %cst_106 {dimension_numbers = #tpu.dot_dimension_numbers<[1], [0], [0], [1], [0, 0, 1, 1], [], []>} : vector<192x160xf32>, vector<160x128xf32>, vector<192x128xf32> -> vector<192x128xf32>
    %210 = arith.maximumf %205, %209 : vector<192x128xf32>
    %211 = vector.shape_cast %210 : vector<192x128xf32> to vector<12x2x8x128xf32>
    %212 = vector.extract_strided_slice %211 {offsets = [0, 0, 0, 0], sizes = [12, 1, 8, 128], strides = [1, 1, 1, 1]} : vector<12x2x8x128xf32> to vector<12x1x8x128xf32>
    %213 = vector.shape_cast %212 : vector<12x1x8x128xf32> to vector<12x8x128xf32>
    %214 = vector.extract_strided_slice %211 {offsets = [0, 1, 0, 0], sizes = [12, 1, 8, 128], strides = [1, 1, 1, 1]} : vector<12x2x8x128xf32> to vector<12x1x8x128xf32>
    %215 = vector.shape_cast %214 : vector<12x1x8x128xf32> to vector<12x8x128xf32>
    %216 = arith.maximumf %213, %215 : vector<12x8x128xf32>
    %217 = vector.shape_cast %1 : vector<8x128xf32> to vector<1x8x128xf32>
    %218 = vector.broadcast %217 : vector<1x8x128xf32> to vector<12x8x128xf32>
    %219 = arith.addf %216, %218 : vector<12x8x128xf32>
    %cst_107 = arith.constant 0.000000e+00 : f32
    %220 = vector.broadcast %cst_107 : f32 to vector<12x8x128xf32>
    %221 = arith.maximumf %219, %220 : vector<12x8x128xf32>
    %222 = vector.shape_cast %221 : vector<12x8x128xf32> to vector<96x128xf32>
    %223 = arith.truncf %222 : vector<96x128xf32> to vector<96x128xbf16>
    %c8_108 = arith.constant 8 : index
    %c0_109 = arith.constant 0 : index
    %c0_110 = arith.constant 0 : index
    %224 = vector.load %arg13[%c8_108, %c0_109, %c0_110] : memref<12x96x128xbf16, #tpu.memory_space<vmem>>, vector<1x96x128xbf16>
    %225 = vector.shape_cast %224 : vector<1x96x128xbf16> to vector<96x128xbf16>
    %226 = vector.shape_cast %223 : vector<96x128xbf16> to vector<1x96x128xbf16>
    tpu.vector_store %arg13[%c8_108, %c0_109, %c0_110], %226 {strides = array<i32>} : memref<12x96x128xbf16, #tpu.memory_space<vmem>>, vector<1x96x128xbf16>,
    %c0_111 = arith.constant 0 : index
    %c18 = arith.constant 18 : index
    %c0_112 = arith.constant 0 : index
    %c0_113 = arith.constant 0 : index
    %227 = vector.load %arg1[%c0_111, %c18, %c0_112, %c0_113] : memref<1x28x32x128xf32, #tpu.memory_space<vmem>>, vector<1x5x32x128xf32>
    %228 = vector.shape_cast %227 : vector<1x5x32x128xf32> to vector<5x32x128xf32>
    %229 = vector.shape_cast %228 : vector<5x32x128xf32> to vector<160x128xf32>
    %cst_114 = arith.constant dense<0.000000e+00> : vector<192x128xf32>
    %230 = tpu.matmul %0, %229, %cst_114 {dimension_numbers = #tpu.dot_dimension_numbers<[1], [0], [0], [1], [0, 0, 1, 1], [], []>} : vector<192x160xf32>, vector<160x128xf32>, vector<192x128xf32> -> vector<192x128xf32>
    %c0_115 = arith.constant 0 : index
    %c19 = arith.constant 19 : index
    %c0_116 = arith.constant 0 : index
    %c0_117 = arith.constant 0 : index
    %231 = vector.load %arg1[%c0_115, %c19, %c0_116, %c0_117] : memref<1x28x32x128xf32, #tpu.memory_space<vmem>>, vector<1x5x32x128xf32>
    %232 = vector.shape_cast %231 : vector<1x5x32x128xf32> to vector<5x32x128xf32>
    %233 = vector.shape_cast %232 : vector<5x32x128xf32> to vector<160x128xf32>
    %cst_118 = arith.constant dense<0.000000e+00> : vector<192x128xf32>
    %234 = tpu.matmul %0, %233, %cst_118 {dimension_numbers = #tpu.dot_dimension_numbers<[1], [0], [0], [1], [0, 0, 1, 1], [], []>} : vector<192x160xf32>, vector<160x128xf32>, vector<192x128xf32> -> vector<192x128xf32>
    %235 = arith.maximumf %230, %234 : vector<192x128xf32>
    %236 = vector.shape_cast %235 : vector<192x128xf32> to vector<12x2x8x128xf32>
    %237 = vector.extract_strided_slice %236 {offsets = [0, 0, 0, 0], sizes = [12, 1, 8, 128], strides = [1, 1, 1, 1]} : vector<12x2x8x128xf32> to vector<12x1x8x128xf32>
    %238 = vector.shape_cast %237 : vector<12x1x8x128xf32> to vector<12x8x128xf32>
    %239 = vector.extract_strided_slice %236 {offsets = [0, 1, 0, 0], sizes = [12, 1, 8, 128], strides = [1, 1, 1, 1]} : vector<12x2x8x128xf32> to vector<12x1x8x128xf32>
    %240 = vector.shape_cast %239 : vector<12x1x8x128xf32> to vector<12x8x128xf32>
    %241 = arith.maximumf %238, %240 : vector<12x8x128xf32>
    %242 = vector.shape_cast %1 : vector<8x128xf32> to vector<1x8x128xf32>
    %243 = vector.broadcast %242 : vector<1x8x128xf32> to vector<12x8x128xf32>
    %244 = arith.addf %241, %243 : vector<12x8x128xf32>
    %cst_119 = arith.constant 0.000000e+00 : f32
    %245 = vector.broadcast %cst_119 : f32 to vector<12x8x128xf32>
    %246 = arith.maximumf %244, %245 : vector<12x8x128xf32>
    %247 = vector.shape_cast %246 : vector<12x8x128xf32> to vector<96x128xf32>
    %248 = arith.truncf %247 : vector<96x128xf32> to vector<96x128xbf16>
    %c9_120 = arith.constant 9 : index
    %c0_121 = arith.constant 0 : index
    %c0_122 = arith.constant 0 : index
    %249 = vector.load %arg13[%c9_120, %c0_121, %c0_122] : memref<12x96x128xbf16, #tpu.memory_space<vmem>>, vector<1x96x128xbf16>
    %250 = vector.shape_cast %249 : vector<1x96x128xbf16> to vector<96x128xbf16>
    %251 = vector.shape_cast %248 : vector<96x128xbf16> to vector<1x96x128xbf16>
    tpu.vector_store %arg13[%c9_120, %c0_121, %c0_122], %251 {strides = array<i32>} : memref<12x96x128xbf16, #tpu.memory_space<vmem>>, vector<1x96x128xbf16>,
    %c0_123 = arith.constant 0 : index
    %c20 = arith.constant 20 : index
    %c0_124 = arith.constant 0 : index
    %c0_125 = arith.constant 0 : index
    %252 = vector.load %arg1[%c0_123, %c20, %c0_124, %c0_125] : memref<1x28x32x128xf32, #tpu.memory_space<vmem>>, vector<1x5x32x128xf32>
    %253 = vector.shape_cast %252 : vector<1x5x32x128xf32> to vector<5x32x128xf32>
    %254 = vector.shape_cast %253 : vector<5x32x128xf32> to vector<160x128xf32>
    %cst_126 = arith.constant dense<0.000000e+00> : vector<192x128xf32>
    %255 = tpu.matmul %0, %254, %cst_126 {dimension_numbers = #tpu.dot_dimension_numbers<[1], [0], [0], [1], [0, 0, 1, 1], [], []>} : vector<192x160xf32>, vector<160x128xf32>, vector<192x128xf32> -> vector<192x128xf32>
    %c0_127 = arith.constant 0 : index
    %c21 = arith.constant 21 : index
    %c0_128 = arith.constant 0 : index
    %c0_129 = arith.constant 0 : index
    %256 = vector.load %arg1[%c0_127, %c21, %c0_128, %c0_129] : memref<1x28x32x128xf32, #tpu.memory_space<vmem>>, vector<1x5x32x128xf32>
    %257 = vector.shape_cast %256 : vector<1x5x32x128xf32> to vector<5x32x128xf32>
    %258 = vector.shape_cast %257 : vector<5x32x128xf32> to vector<160x128xf32>
    %cst_130 = arith.constant dense<0.000000e+00> : vector<192x128xf32>
    %259 = tpu.matmul %0, %258, %cst_130 {dimension_numbers = #tpu.dot_dimension_numbers<[1], [0], [0], [1], [0, 0, 1, 1], [], []>} : vector<192x160xf32>, vector<160x128xf32>, vector<192x128xf32> -> vector<192x128xf32>
    %260 = arith.maximumf %255, %259 : vector<192x128xf32>
    %261 = vector.shape_cast %260 : vector<192x128xf32> to vector<12x2x8x128xf32>
    %262 = vector.extract_strided_slice %261 {offsets = [0, 0, 0, 0], sizes = [12, 1, 8, 128], strides = [1, 1, 1, 1]} : vector<12x2x8x128xf32> to vector<12x1x8x128xf32>
    %263 = vector.shape_cast %262 : vector<12x1x8x128xf32> to vector<12x8x128xf32>
    %264 = vector.extract_strided_slice %261 {offsets = [0, 1, 0, 0], sizes = [12, 1, 8, 128], strides = [1, 1, 1, 1]} : vector<12x2x8x128xf32> to vector<12x1x8x128xf32>
    %265 = vector.shape_cast %264 : vector<12x1x8x128xf32> to vector<12x8x128xf32>
    %266 = arith.maximumf %263, %265 : vector<12x8x128xf32>
    %267 = vector.shape_cast %1 : vector<8x128xf32> to vector<1x8x128xf32>
    %268 = vector.broadcast %267 : vector<1x8x128xf32> to vector<12x8x128xf32>
    %269 = arith.addf %266, %268 : vector<12x8x128xf32>
    %cst_131 = arith.constant 0.000000e+00 : f32
    %270 = vector.broadcast %cst_131 : f32 to vector<12x8x128xf32>
    %271 = arith.maximumf %269, %270 : vector<12x8x128xf32>
    %272 = vector.shape_cast %271 : vector<12x8x128xf32> to vector<96x128xf32>
    %273 = arith.truncf %272 : vector<96x128xf32> to vector<96x128xbf16>
    %c10_132 = arith.constant 10 : index
    %c0_133 = arith.constant 0 : index
    %c0_134 = arith.constant 0 : index
    %274 = vector.load %arg13[%c10_132, %c0_133, %c0_134] : memref<12x96x128xbf16, #tpu.memory_space<vmem>>, vector<1x96x128xbf16>
    %275 = vector.shape_cast %274 : vector<1x96x128xbf16> to vector<96x128xbf16>
    %276 = vector.shape_cast %273 : vector<96x128xbf16> to vector<1x96x128xbf16>
    tpu.vector_store %arg13[%c10_132, %c0_133, %c0_134], %276 {strides = array<i32>} : memref<12x96x128xbf16, #tpu.memory_space<vmem>>, vector<1x96x128xbf16>,
    %c0_135 = arith.constant 0 : index
    %c22 = arith.constant 22 : index
    %c0_136 = arith.constant 0 : index
    %c0_137 = arith.constant 0 : index
    %277 = vector.load %arg1[%c0_135, %c22, %c0_136, %c0_137] : memref<1x28x32x128xf32, #tpu.memory_space<vmem>>, vector<1x5x32x128xf32>
    %278 = vector.shape_cast %277 : vector<1x5x32x128xf32> to vector<5x32x128xf32>
    %279 = vector.shape_cast %278 : vector<5x32x128xf32> to vector<160x128xf32>
    %cst_138 = arith.constant dense<0.000000e+00> : vector<192x128xf32>
    %280 = tpu.matmul %0, %279, %cst_138 {dimension_numbers = #tpu.dot_dimension_numbers<[1], [0], [0], [1], [0, 0, 1, 1], [], []>} : vector<192x160xf32>, vector<160x128xf32>, vector<192x128xf32> -> vector<192x128xf32>
    %c0_139 = arith.constant 0 : index
    %c23 = arith.constant 23 : index
    %c0_140 = arith.constant 0 : index
    %c0_141 = arith.constant 0 : index
    %281 = vector.load %arg1[%c0_139, %c23, %c0_140, %c0_141] : memref<1x28x32x128xf32, #tpu.memory_space<vmem>>, vector<1x5x32x128xf32>
    %282 = vector.shape_cast %281 : vector<1x5x32x128xf32> to vector<5x32x128xf32>
    %283 = vector.shape_cast %282 : vector<5x32x128xf32> to vector<160x128xf32>
    %cst_142 = arith.constant dense<0.000000e+00> : vector<192x128xf32>
    %284 = tpu.matmul %0, %283, %cst_142 {dimension_numbers = #tpu.dot_dimension_numbers<[1], [0], [0], [1], [0, 0, 1, 1], [], []>} : vector<192x160xf32>, vector<160x128xf32>, vector<192x128xf32> -> vector<192x128xf32>
    %285 = arith.maximumf %280, %284 : vector<192x128xf32>
    %286 = vector.shape_cast %285 : vector<192x128xf32> to vector<12x2x8x128xf32>
    %287 = vector.extract_strided_slice %286 {offsets = [0, 0, 0, 0], sizes = [12, 1, 8, 128], strides = [1, 1, 1, 1]} : vector<12x2x8x128xf32> to vector<12x1x8x128xf32>
    %288 = vector.shape_cast %287 : vector<12x1x8x128xf32> to vector<12x8x128xf32>
    %289 = vector.extract_strided_slice %286 {offsets = [0, 1, 0, 0], sizes = [12, 1, 8, 128], strides = [1, 1, 1, 1]} : vector<12x2x8x128xf32> to vector<12x1x8x128xf32>
    %290 = vector.shape_cast %289 : vector<12x1x8x128xf32> to vector<12x8x128xf32>
    %291 = arith.maximumf %288, %290 : vector<12x8x128xf32>
    %292 = vector.shape_cast %1 : vector<8x128xf32> to vector<1x8x128xf32>
    %293 = vector.broadcast %292 : vector<1x8x128xf32> to vector<12x8x128xf32>
    %294 = arith.addf %291, %293 : vector<12x8x128xf32>
    %cst_143 = arith.constant 0.000000e+00 : f32
    %295 = vector.broadcast %cst_143 : f32 to vector<12x8x128xf32>
    %296 = arith.maximumf %294, %295 : vector<12x8x128xf32>
    %297 = vector.shape_cast %296 : vector<12x8x128xf32> to vector<96x128xf32>
    %298 = arith.truncf %297 : vector<96x128xf32> to vector<96x128xbf16>
    %c11_144 = arith.constant 11 : index
    %c0_145 = arith.constant 0 : index
    %c0_146 = arith.constant 0 : index
    %299 = vector.load %arg13[%c11_144, %c0_145, %c0_146] : memref<12x96x128xbf16, #tpu.memory_space<vmem>>, vector<1x96x128xbf16>
    %300 = vector.shape_cast %299 : vector<1x96x128xbf16> to vector<96x128xbf16>
    %301 = vector.shape_cast %298 : vector<96x128xbf16> to vector<1x96x128xbf16>
    tpu.vector_store %arg13[%c11_144, %c0_145, %c0_146], %301 {strides = array<i32>} : memref<12x96x128xbf16, #tpu.memory_space<vmem>>, vector<1x96x128xbf16>,
    %c0_147 = arith.constant 0 : index
    %c0_148 = arith.constant 0 : index
    %302 = vector.load %arg4[%c0_147, %c0_148] : memref<128x480xbf16, #tpu.memory_space<vmem>>, vector<128x480xbf16>
    %c0_149 = arith.constant 0 : index
    %c0_150 = arith.constant 0 : index
    %303 = vector.load %arg5[%c0_149, %c0_150] : memref<16x128xf32, #tpu.memory_space<vmem>>, vector<16x128xf32>
    %c0_151 = arith.constant 0 : index
    %c0_152 = arith.constant 0 : index
    %c0_153 = arith.constant 0 : index
    %304 = vector.load %arg13[%c0_151, %c0_152, %c0_153] : memref<12x96x128xbf16, #tpu.memory_space<vmem>>, vector<5x96x128xbf16>
    %305 = vector.shape_cast %304 : vector<5x96x128xbf16> to vector<480x128xbf16>
    %cst_154 = arith.constant dense<0.000000e+00> : vector<128x128xf32>
    %306 = tpu.matmul %302, %305, %cst_154 {dimension_numbers = #tpu.dot_dimension_numbers<[1], [0], [0], [1], [0, 0, 1, 1], [], []>} : vector<128x480xbf16>, vector<480x128xbf16>, vector<128x128xf32> -> vector<128x128xf32>
    %c1_155 = arith.constant 1 : index
    %c0_156 = arith.constant 0 : index
    %c0_157 = arith.constant 0 : index
    %307 = vector.load %arg13[%c1_155, %c0_156, %c0_157] : memref<12x96x128xbf16, #tpu.memory_space<vmem>>, vector<5x96x128xbf16>
    %308 = vector.shape_cast %307 : vector<5x96x128xbf16> to vector<480x128xbf16>
    %cst_158 = arith.constant dense<0.000000e+00> : vector<128x128xf32>
    %309 = tpu.matmul %302, %308, %cst_158 {dimension_numbers = #tpu.dot_dimension_numbers<[1], [0], [0], [1], [0, 0, 1, 1], [], []>} : vector<128x480xbf16>, vector<480x128xbf16>, vector<128x128xf32> -> vector<128x128xf32>
    %310 = arith.maximumf %306, %309 : vector<128x128xf32>
    %311 = vector.shape_cast %310 : vector<128x128xf32> to vector<4x2x16x128xf32>
    %312 = vector.extract_strided_slice %311 {offsets = [0, 0, 0, 0], sizes = [4, 1, 16, 128], strides = [1, 1, 1, 1]} : vector<4x2x16x128xf32> to vector<4x1x16x128xf32>
    %313 = vector.shape_cast %312 : vector<4x1x16x128xf32> to vector<4x16x128xf32>
    %314 = vector.extract_strided_slice %311 {offsets = [0, 1, 0, 0], sizes = [4, 1, 16, 128], strides = [1, 1, 1, 1]} : vector<4x2x16x128xf32> to vector<4x1x16x128xf32>
    %315 = vector.shape_cast %314 : vector<4x1x16x128xf32> to vector<4x16x128xf32>
    %316 = arith.maximumf %313, %315 : vector<4x16x128xf32>
    %317 = vector.shape_cast %303 : vector<16x128xf32> to vector<1x16x128xf32>
    %318 = vector.broadcast %317 : vector<1x16x128xf32> to vector<4x16x128xf32>
    %319 = arith.addf %316, %318 : vector<4x16x128xf32>
    %cst_159 = arith.constant 0.000000e+00 : f32
    %320 = vector.broadcast %cst_159 : f32 to vector<4x16x128xf32>
    %321 = arith.maximumf %319, %320 : vector<4x16x128xf32>
    %322 = vector.shape_cast %321 : vector<4x16x128xf32> to vector<64x128xf32>
    %323 = arith.truncf %322 : vector<64x128xf32> to vector<64x128xbf16>
    %c0_160 = arith.constant 0 : index
    %c0_161 = arith.constant 0 : index
    %c0_162 = arith.constant 0 : index
    %324 = vector.load %arg14[%c0_160, %c0_161, %c0_162] : memref<4x64x128xbf16, #tpu.memory_space<vmem>>, vector<1x64x128xbf16>
    %325 = vector.shape_cast %324 : vector<1x64x128xbf16> to vector<64x128xbf16>
    %326 = vector.shape_cast %323 : vector<64x128xbf16> to vector<1x64x128xbf16>
    tpu.vector_store %arg14[%c0_160, %c0_161, %c0_162], %326 {strides = array<i32>} : memref<4x64x128xbf16, #tpu.memory_space<vmem>>, vector<1x64x128xbf16>,
    %c2_163 = arith.constant 2 : index
    %c0_164 = arith.constant 0 : index
    %c0_165 = arith.constant 0 : index
    %327 = vector.load %arg13[%c2_163, %c0_164, %c0_165] : memref<12x96x128xbf16, #tpu.memory_space<vmem>>, vector<5x96x128xbf16>
    %328 = vector.shape_cast %327 : vector<5x96x128xbf16> to vector<480x128xbf16>
    %cst_166 = arith.constant dense<0.000000e+00> : vector<128x128xf32>
    %329 = tpu.matmul %302, %328, %cst_166 {dimension_numbers = #tpu.dot_dimension_numbers<[1], [0], [0], [1], [0, 0, 1, 1], [], []>} : vector<128x480xbf16>, vector<480x128xbf16>, vector<128x128xf32> -> vector<128x128xf32>
    %c3_167 = arith.constant 3 : index
    %c0_168 = arith.constant 0 : index
    %c0_169 = arith.constant 0 : index
    %330 = vector.load %arg13[%c3_167, %c0_168, %c0_169] : memref<12x96x128xbf16, #tpu.memory_space<vmem>>, vector<5x96x128xbf16>
    %331 = vector.shape_cast %330 : vector<5x96x128xbf16> to vector<480x128xbf16>
    %cst_170 = arith.constant dense<0.000000e+00> : vector<128x128xf32>
    %332 = tpu.matmul %302, %331, %cst_170 {dimension_numbers = #tpu.dot_dimension_numbers<[1], [0], [0], [1], [0, 0, 1, 1], [], []>} : vector<128x480xbf16>, vector<480x128xbf16>, vector<128x128xf32> -> vector<128x128xf32>
    %333 = arith.maximumf %329, %332 : vector<128x128xf32>
    %334 = vector.shape_cast %333 : vector<128x128xf32> to vector<4x2x16x128xf32>
    %335 = vector.extract_strided_slice %334 {offsets = [0, 0, 0, 0], sizes = [4, 1, 16, 128], strides = [1, 1, 1, 1]} : vector<4x2x16x128xf32> to vector<4x1x16x128xf32>
    %336 = vector.shape_cast %335 : vector<4x1x16x128xf32> to vector<4x16x128xf32>
    %337 = vector.extract_strided_slice %334 {offsets = [0, 1, 0, 0], sizes = [4, 1, 16, 128], strides = [1, 1, 1, 1]} : vector<4x2x16x128xf32> to vector<4x1x16x128xf32>
    %338 = vector.shape_cast %337 : vector<4x1x16x128xf32> to vector<4x16x128xf32>
    %339 = arith.maximumf %336, %338 : vector<4x16x128xf32>
    %340 = vector.shape_cast %303 : vector<16x128xf32> to vector<1x16x128xf32>
    %341 = vector.broadcast %340 : vector<1x16x128xf32> to vector<4x16x128xf32>
    %342 = arith.addf %339, %341 : vector<4x16x128xf32>
    %cst_171 = arith.constant 0.000000e+00 : f32
    %343 = vector.broadcast %cst_171 : f32 to vector<4x16x128xf32>
    %344 = arith.maximumf %342, %343 : vector<4x16x128xf32>
    %345 = vector.shape_cast %344 : vector<4x16x128xf32> to vector<64x128xf32>
    %346 = arith.truncf %345 : vector<64x128xf32> to vector<64x128xbf16>
    %c1_172 = arith.constant 1 : index
    %c0_173 = arith.constant 0 : index
    %c0_174 = arith.constant 0 : index
    %347 = vector.load %arg14[%c1_172, %c0_173, %c0_174] : memref<4x64x128xbf16, #tpu.memory_space<vmem>>, vector<1x64x128xbf16>
    %348 = vector.shape_cast %347 : vector<1x64x128xbf16> to vector<64x128xbf16>
    %349 = vector.shape_cast %346 : vector<64x128xbf16> to vector<1x64x128xbf16>
    tpu.vector_store %arg14[%c1_172, %c0_173, %c0_174], %349 {strides = array<i32>} : memref<4x64x128xbf16, #tpu.memory_space<vmem>>, vector<1x64x128xbf16>,
    %c4_175 = arith.constant 4 : index
    %c0_176 = arith.constant 0 : index
    %c0_177 = arith.constant 0 : index
    %350 = vector.load %arg13[%c4_175, %c0_176, %c0_177] : memref<12x96x128xbf16, #tpu.memory_space<vmem>>, vector<5x96x128xbf16>
    %351 = vector.shape_cast %350 : vector<5x96x128xbf16> to vector<480x128xbf16>
    %cst_178 = arith.constant dense<0.000000e+00> : vector<128x128xf32>
    %352 = tpu.matmul %302, %351, %cst_178 {dimension_numbers = #tpu.dot_dimension_numbers<[1], [0], [0], [1], [0, 0, 1, 1], [], []>} : vector<128x480xbf16>, vector<480x128xbf16>, vector<128x128xf32> -> vector<128x128xf32>
    %c5_179 = arith.constant 5 : index
    %c0_180 = arith.constant 0 : index
    %c0_181 = arith.constant 0 : index
    %353 = vector.load %arg13[%c5_179, %c0_180, %c0_181] : memref<12x96x128xbf16, #tpu.memory_space<vmem>>, vector<5x96x128xbf16>
    %354 = vector.shape_cast %353 : vector<5x96x128xbf16> to vector<480x128xbf16>
    %cst_182 = arith.constant dense<0.000000e+00> : vector<128x128xf32>
    %355 = tpu.matmul %302, %354, %cst_182 {dimension_numbers = #tpu.dot_dimension_numbers<[1], [0], [0], [1], [0, 0, 1, 1], [], []>} : vector<128x480xbf16>, vector<480x128xbf16>, vector<128x128xf32> -> vector<128x128xf32>
    %356 = arith.maximumf %352, %355 : vector<128x128xf32>
    %357 = vector.shape_cast %356 : vector<128x128xf32> to vector<4x2x16x128xf32>
    %358 = vector.extract_strided_slice %357 {offsets = [0, 0, 0, 0], sizes = [4, 1, 16, 128], strides = [1, 1, 1, 1]} : vector<4x2x16x128xf32> to vector<4x1x16x128xf32>
    %359 = vector.shape_cast %358 : vector<4x1x16x128xf32> to vector<4x16x128xf32>
    %360 = vector.extract_strided_slice %357 {offsets = [0, 1, 0, 0], sizes = [4, 1, 16, 128], strides = [1, 1, 1, 1]} : vector<4x2x16x128xf32> to vector<4x1x16x128xf32>
    %361 = vector.shape_cast %360 : vector<4x1x16x128xf32> to vector<4x16x128xf32>
    %362 = arith.maximumf %359, %361 : vector<4x16x128xf32>
    %363 = vector.shape_cast %303 : vector<16x128xf32> to vector<1x16x128xf32>
    %364 = vector.broadcast %363 : vector<1x16x128xf32> to vector<4x16x128xf32>
    %365 = arith.addf %362, %364 : vector<4x16x128xf32>
    %cst_183 = arith.constant 0.000000e+00 : f32
    %366 = vector.broadcast %cst_183 : f32 to vector<4x16x128xf32>
    %367 = arith.maximumf %365, %366 : vector<4x16x128xf32>
    %368 = vector.shape_cast %367 : vector<4x16x128xf32> to vector<64x128xf32>
    %369 = arith.truncf %368 : vector<64x128xf32> to vector<64x128xbf16>
    %c2_184 = arith.constant 2 : index
    %c0_185 = arith.constant 0 : index
    %c0_186 = arith.constant 0 : index
    %370 = vector.load %arg14[%c2_184, %c0_185, %c0_186] : memref<4x64x128xbf16, #tpu.memory_space<vmem>>, vector<1x64x128xbf16>
    %371 = vector.shape_cast %370 : vector<1x64x128xbf16> to vector<64x128xbf16>
    %372 = vector.shape_cast %369 : vector<64x128xbf16> to vector<1x64x128xbf16>
    tpu.vector_store %arg14[%c2_184, %c0_185, %c0_186], %372 {strides = array<i32>} : memref<4x64x128xbf16, #tpu.memory_space<vmem>>, vector<1x64x128xbf16>,
    %c6_187 = arith.constant 6 : index
    %c0_188 = arith.constant 0 : index
    %c0_189 = arith.constant 0 : index
    %373 = vector.load %arg13[%c6_187, %c0_188, %c0_189] : memref<12x96x128xbf16, #tpu.memory_space<vmem>>, vector<5x96x128xbf16>
    %374 = vector.shape_cast %373 : vector<5x96x128xbf16> to vector<480x128xbf16>
    %cst_190 = arith.constant dense<0.000000e+00> : vector<128x128xf32>
    %375 = tpu.matmul %302, %374, %cst_190 {dimension_numbers = #tpu.dot_dimension_numbers<[1], [0], [0], [1], [0, 0, 1, 1], [], []>} : vector<128x480xbf16>, vector<480x128xbf16>, vector<128x128xf32> -> vector<128x128xf32>
    %c7_191 = arith.constant 7 : index
    %c0_192 = arith.constant 0 : index
    %c0_193 = arith.constant 0 : index
    %376 = vector.load %arg13[%c7_191, %c0_192, %c0_193] : memref<12x96x128xbf16, #tpu.memory_space<vmem>>, vector<5x96x128xbf16>
    %377 = vector.shape_cast %376 : vector<5x96x128xbf16> to vector<480x128xbf16>
    %cst_194 = arith.constant dense<0.000000e+00> : vector<128x128xf32>
    %378 = tpu.matmul %302, %377, %cst_194 {dimension_numbers = #tpu.dot_dimension_numbers<[1], [0], [0], [1], [0, 0, 1, 1], [], []>} : vector<128x480xbf16>, vector<480x128xbf16>, vector<128x128xf32> -> vector<128x128xf32>
    %379 = arith.maximumf %375, %378 : vector<128x128xf32>
    %380 = vector.shape_cast %379 : vector<128x128xf32> to vector<4x2x16x128xf32>
    %381 = vector.extract_strided_slice %380 {offsets = [0, 0, 0, 0], sizes = [4, 1, 16, 128], strides = [1, 1, 1, 1]} : vector<4x2x16x128xf32> to vector<4x1x16x128xf32>
    %382 = vector.shape_cast %381 : vector<4x1x16x128xf32> to vector<4x16x128xf32>
    %383 = vector.extract_strided_slice %380 {offsets = [0, 1, 0, 0], sizes = [4, 1, 16, 128], strides = [1, 1, 1, 1]} : vector<4x2x16x128xf32> to vector<4x1x16x128xf32>
    %384 = vector.shape_cast %383 : vector<4x1x16x128xf32> to vector<4x16x128xf32>
    %385 = arith.maximumf %382, %384 : vector<4x16x128xf32>
    %386 = vector.shape_cast %303 : vector<16x128xf32> to vector<1x16x128xf32>
    %387 = vector.broadcast %386 : vector<1x16x128xf32> to vector<4x16x128xf32>
    %388 = arith.addf %385, %387 : vector<4x16x128xf32>
    %cst_195 = arith.constant 0.000000e+00 : f32
    %389 = vector.broadcast %cst_195 : f32 to vector<4x16x128xf32>
    %390 = arith.maximumf %388, %389 : vector<4x16x128xf32>
    %391 = vector.shape_cast %390 : vector<4x16x128xf32> to vector<64x128xf32>
    %392 = arith.truncf %391 : vector<64x128xf32> to vector<64x128xbf16>
    %c3_196 = arith.constant 3 : index
    %c0_197 = arith.constant 0 : index
    %c0_198 = arith.constant 0 : index
    %393 = vector.load %arg14[%c3_196, %c0_197, %c0_198] : memref<4x64x128xbf16, #tpu.memory_space<vmem>>, vector<1x64x128xbf16>
    %394 = vector.shape_cast %393 : vector<1x64x128xbf16> to vector<64x128xbf16>
    %395 = vector.shape_cast %392 : vector<64x128xbf16> to vector<1x64x128xbf16>
    tpu.vector_store %arg14[%c3_196, %c0_197, %c0_198], %395 {strides = array<i32>} : memref<4x64x128xbf16, #tpu.memory_space<vmem>>, vector<1x64x128xbf16>,
    %c0_199 = arith.constant 0 : index
    %c0_200 = arith.constant 0 : index
    %c0_201 = arith.constant 0 : index
    %396 = vector.load %arg14[%c0_199, %c0_200, %c0_201] : memref<4x64x128xbf16, #tpu.memory_space<vmem>>, vector<4x64x128xbf16>
    %397 = vector.shape_cast %396 : vector<4x64x128xbf16> to vector<256x128xbf16>
    %c0_202 = arith.constant 0 : index
    %c0_203 = arith.constant 0 : index
    %398 = vector.load %arg6[%c0_202, %c0_203] : memref<128x256xbf16, #tpu.memory_space<vmem>>, vector<128x256xbf16>
    %cst_204 = arith.constant dense<0.000000e+00> : vector<128x128xf32>
    %399 = tpu.matmul %398, %397, %cst_204 {dimension_numbers = #tpu.dot_dimension_numbers<[1], [0], [0], [1], [0, 0, 1, 1], [], []>} : vector<128x256xbf16>, vector<256x128xbf16>, vector<128x128xf32> -> vector<128x128xf32>
    %c0_205 = arith.constant 0 : index
    %c0_206 = arith.constant 0 : index
    %400 = vector.load %arg7[%c0_205, %c0_206] : memref<128x128xf32, #tpu.memory_space<vmem>>, vector<128x128xf32>
    %401 = arith.addf %399, %400 : vector<128x128xf32>
    %cst_207 = arith.constant 0.000000e+00 : f32
    %402 = vector.broadcast %cst_207 : f32 to vector<128x128xf32>
    %403 = arith.maximumf %401, %402 : vector<128x128xf32>
    %404 = arith.truncf %403 : vector<128x128xf32> to vector<128x128xbf16>
    %c0_208 = arith.constant 0 : index
    %c0_209 = arith.constant 0 : index
    %405 = vector.load %arg8[%c0_208, %c0_209] : memref<64x128xbf16, #tpu.memory_space<vmem>>, vector<64x128xbf16>
    %cst_210 = arith.constant dense<0.000000e+00> : vector<64x128xf32>
    %406 = tpu.matmul %405, %404, %cst_210 {dimension_numbers = #tpu.dot_dimension_numbers<[1], [0], [0], [1], [0, 0, 1, 1], [], []>} : vector<64x128xbf16>, vector<128x128xbf16>, vector<64x128xf32> -> vector<64x128xf32>
    %c0_211 = arith.constant 0 : index
    %c0_212 = arith.constant 0 : index
    %407 = vector.load %arg9[%c0_211, %c0_212] : memref<64x128xf32, #tpu.memory_space<vmem>>, vector<64x128xf32>
    %408 = arith.addf %406, %407 : vector<64x128xf32>
    %cst_213 = arith.constant 0.000000e+00 : f32
    %409 = vector.broadcast %cst_213 : f32 to vector<64x128xf32>
    %410 = arith.maximumf %408, %409 : vector<64x128xf32>
    %411 = arith.truncf %410 : vector<64x128xf32> to vector<64x128xbf16>
    %c0_214 = arith.constant 0 : index
    %c0_215 = arith.constant 0 : index
    %412 = vector.load %arg10[%c0_214, %c0_215] : memref<16x64xbf16, #tpu.memory_space<vmem>>, vector<16x64xbf16>
    %cst_216 = arith.constant dense<0.000000e+00> : vector<16x128xf32>
    %413 = tpu.matmul %412, %411, %cst_216 {dimension_numbers = #tpu.dot_dimension_numbers<[1], [0], [0], [1], [0, 0, 1, 1], [], []>} : vector<16x64xbf16>, vector<64x128xbf16>, vector<16x128xf32> -> vector<16x128xf32>
    %c0_217 = arith.constant 0 : index
    %c0_218 = arith.constant 0 : index
    %414 = vector.load %arg11[%c0_217, %c0_218] : memref<16x128xf32, #tpu.memory_space<vmem>>, vector<16x128xf32>
    %415 = arith.addf %413, %414 : vector<16x128xf32>
    %c0_219 = arith.constant 0 : index
    %c0_220 = arith.constant 0 : index
    %c0_221 = arith.constant 0 : index
    %416 = vector.load %arg12[%c0_219, %c0_220, %c0_221] : memref<1x16x128xf32, #tpu.memory_space<vmem>>, vector<1x16x128xf32>
    %417 = vector.shape_cast %416 : vector<1x16x128xf32> to vector<16x128xf32>
    %418 = vector.shape_cast %415 : vector<16x128xf32> to vector<1x16x128xf32>
    tpu.vector_store %arg12[%c0_219, %c0_220, %c0_221], %418 {strides = array<i32>} : memref<1x16x128xf32, #tpu.memory_space<vmem>>, vector<1x16x128xf32>,
    return
  }
  func.func @transform_0(%arg0: i32) -> (i32, i32, i32, i32) {
    %c0_i32 = arith.constant 0 : i32
    %c0_i32_0 = arith.constant 0 : i32
    %c0_i32_1 = arith.constant 0 : i32
    %c0_i32_2 = arith.constant 0 : i32
    return %arg0, %c0_i32, %c0_i32_0, %c0_i32_1 : i32, i32, i32, i32
  }
  func.func @transform_1(%arg0: i32) -> (i32, i32) {
    %c0_i32 = arith.constant 0 : i32
    %c0_i32_0 = arith.constant 0 : i32
    %c0_i32_1 = arith.constant 0 : i32
    return %c0_i32, %c0_i32_0 : i32, i32
  }
  func.func @transform_2(%arg0: i32) -> (i32, i32) {
    %c0_i32 = arith.constant 0 : i32
    %c0_i32_0 = arith.constant 0 : i32
    %c0_i32_1 = arith.constant 0 : i32
    return %c0_i32, %c0_i32_0 : i32, i32
  }
  func.func @transform_3(%arg0: i32) -> (i32, i32) {
    %c0_i32 = arith.constant 0 : i32
    %c0_i32_0 = arith.constant 0 : i32
    %c0_i32_1 = arith.constant 0 : i32
    return %c0_i32, %c0_i32_0 : i32, i32
  }
  func.func @transform_4(%arg0: i32) -> (i32, i32) {
    %c0_i32 = arith.constant 0 : i32
    %c0_i32_0 = arith.constant 0 : i32
    %c0_i32_1 = arith.constant 0 : i32
    return %c0_i32, %c0_i32_0 : i32, i32
  }
  func.func @transform_5(%arg0: i32) -> (i32, i32) {
    %c0_i32 = arith.constant 0 : i32
    %c0_i32_0 = arith.constant 0 : i32
    %c0_i32_1 = arith.constant 0 : i32
    return %c0_i32, %c0_i32_0 : i32, i32
  }
  func.func @transform_6(%arg0: i32) -> (i32, i32) {
    %c0_i32 = arith.constant 0 : i32
    %c0_i32_0 = arith.constant 0 : i32
    %c0_i32_1 = arith.constant 0 : i32
    return %c0_i32, %c0_i32_0 : i32, i32
  }
  func.func @transform_7(%arg0: i32) -> (i32, i32) {
    %c0_i32 = arith.constant 0 : i32
    %c0_i32_0 = arith.constant 0 : i32
    %c0_i32_1 = arith.constant 0 : i32
    return %c0_i32, %c0_i32_0 : i32, i32
  }
  func.func @transform_8(%arg0: i32) -> (i32, i32) {
    %c0_i32 = arith.constant 0 : i32
    %c0_i32_0 = arith.constant 0 : i32
    %c0_i32_1 = arith.constant 0 : i32
    return %c0_i32, %c0_i32_0 : i32, i32
  }
  func.func @transform_9(%arg0: i32) -> (i32, i32) {
    %c0_i32 = arith.constant 0 : i32
    %c0_i32_0 = arith.constant 0 : i32
    %c0_i32_1 = arith.constant 0 : i32
    return %c0_i32, %c0_i32_0 : i32, i32
  }
  func.func @transform_10(%arg0: i32) -> (i32, i32) {
    %c0_i32 = arith.constant 0 : i32
    %c0_i32_0 = arith.constant 0 : i32
    %c0_i32_1 = arith.constant 0 : i32
    return %c0_i32, %c0_i32_0 : i32, i32
  }
  func.func @transform_11(%arg0: i32) -> (i32, i32, i32) {
    %c0_i32 = arith.constant 0 : i32
    %c0_i32_0 = arith.constant 0 : i32
    %c0_i32_1 = arith.constant 0 : i32
    return %arg0, %c0_i32, %c0_i32_0 : i32, i32, i32
  }
}

</mosaic_0001>

<llo_original>
// kernel: lenet_forward.1
$region0: #{lenet_forward.1}
  #allocation0 [shape = 'u32[]', space=smem, size = 0x4, offset = 0x4, fixed_abs, tag = 'smem constant byte address 0x4 - core index']
  #allocation1 [shape = 'u32[144,128]{1,0:T(1,128)}', space=vmem, size = 0x12000, scoped, tag = 'internal scratch']
  #allocation2 [shape = 'bf16[12,96,128]{2,1,0:T(8,128)(2,1)}', space=vmem, size = 0x48000, scoped, tag = 'scratch operand']
  #allocation3 [shape = 'bf16[4,64,128]{2,1,0:T(8,128)(2,1)}', space=vmem, size = 0x10000, scoped, tag = 'scratch operand']
  %s0 = inlined_call_operand.vmem [shape: f32[1,28,32,128], index: 0, kind: input, shape index: {}]
  %s1 = inlined_call_operand.vmem [shape: f32[192,160], index: 1, kind: input, shape index: {}]
  %s2 = inlined_call_operand.vmem [shape: f32[8,128], index: 2, kind: input, shape index: {}]
  %s3 = inlined_call_operand.vmem [shape: bf16[128,480], index: 3, kind: input, shape index: {}]
  %s4 = inlined_call_operand.vmem [shape: f32[16,128], index: 4, kind: input, shape index: {}]
  %s5 = inlined_call_operand.vmem [shape: bf16[128,256], index: 5, kind: input, shape index: {}]
  %s6 = inlined_call_operand.vmem [shape: f32[128,128], index: 6, kind: input, shape index: {}]
  %s7 = inlined_call_operand.vmem [shape: bf16[64,128], index: 7, kind: input, shape index: {}]
  %s8 = inlined_call_operand.vmem [shape: f32[64,128], index: 8, kind: input, shape index: {}]
  %s9 = inlined_call_operand.vmem [shape: bf16[16,64], index: 9, kind: input, shape index: {}]
  %s10 = inlined_call_operand.vmem [shape: f32[16,128], index: 10, kind: input, shape index: {}]
  %s11 = inlined_call_operand.vmem [shape: f32[1,16,128], index: 11, kind: output, shape index: {}]
  %s12 = sld [smem:[#allocation0]]
  $region54: #{lenet_forward.1} parent=0
    _
  %s14 = ssub.s32 1, %s12
  %s15 = scalar_select 0, %s14, %s12
  // Predicated region
  $region2: #{lenet_forward.1} parent=0 // pred_check
    _
  $region3: #{lenet_forward.1} parent=0 // pred_check_branch
    %17 = sbr.rel (0) target = $region5
  $region4: #{lenet_forward.1} parent=0 // pred_region
    _
  $region5: #{lenet_forward.1} parent=0 // pred_fallthru
    _
  // Predicated region
  $region6: #{lenet_forward.1} parent=0 // pred_check
    _
  $region7: #{lenet_forward.1} parent=0 // pred_check_branch
    %19 = sbr.rel (0) target = $region9
  $region8: #{lenet_forward.1} parent=0 // pred_region
    _
  $region9: #{lenet_forward.1} parent=0 // pred_fallthru
    _
  // Predicated region
  $region10: #{lenet_forward.1} parent=0 // pred_check
    _
  $region11: #{lenet_forward.1} parent=0 // pred_check_branch
    %21 = sbr.rel (0) target = $region13
  $region12: #{lenet_forward.1} parent=0 // pred_region
    _
  $region13: #{lenet_forward.1} parent=0 // pred_fallthru
    _
  // Predicated region
  $region14: #{lenet_forward.1} parent=0 // pred_check
    _
  $region15: #{lenet_forward.1} parent=0 // pred_check_branch
    %23 = sbr.rel (0) target = $region17
  $region16: #{lenet_forward.1} parent=0 // pred_region
    _
  $region17: #{lenet_forward.1} parent=0 // pred_fallthru
    _
  // Predicated region
  $region18: #{lenet_forward.1} parent=0 // pred_check
    _
  $region19: #{lenet_forward.1} parent=0 // pred_check_branch
    %25 = sbr.rel (0) target = $region21
  $region20: #{lenet_forward.1} parent=0 // pred_region
    _
  $region21: #{lenet_forward.1} parent=0 // pred_fallthru
    _
  // Predicated region
  $region22: #{lenet_forward.1} parent=0 // pred_check
    _
  $region23: #{lenet_forward.1} parent=0 // pred_check_branch
    %27 = sbr.rel (0) target = $region25
  $region24: #{lenet_forward.1} parent=0 // pred_region
    _
  $region25: #{lenet_forward.1} parent=0 // pred_fallthru
    _
  // Predicated region
  $region26: #{lenet_forward.1} parent=0 // pred_check
    _
  $region27: #{lenet_forward.1} parent=0 // pred_check_branch
    %29 = sbr.rel (0) target = $region29
  $region28: #{lenet_forward.1} parent=0 // pred_region
    _
  $region29: #{lenet_forward.1} parent=0 // pred_fallthru
    _
  // Predicated region
  $region30: #{lenet_forward.1} parent=0 // pred_check
    _
  $region31: #{lenet_forward.1} parent=0 // pred_check_branch
    %31 = sbr.rel (0) target = $region33
  $region32: #{lenet_forward.1} parent=0 // pred_region
    _
  $region33: #{lenet_forward.1} parent=0 // pred_fallthru
    _
  // Predicated region
  $region34: #{lenet_forward.1} parent=0 // pred_check
    _
  $region35: #{lenet_forward.1} parent=0 // pred_check_branch
    %33 = sbr.rel (0) target = $region37
  $region36: #{lenet_forward.1} parent=0 // pred_region
    _
  $region37: #{lenet_forward.1} parent=0 // pred_fallthru
    _
  // Predicated region
  $region38: #{lenet_forward.1} parent=0 // pred_check
    _
  $region39: #{lenet_forward.1} parent=0 // pred_check_branch
    %35 = sbr.rel (0) target = $region41
  $region40: #{lenet_forward.1} parent=0 // pred_region
    _
  $region41: #{lenet_forward.1} parent=0 // pred_fallthru
    _
  // Predicated region
  $region42: #{lenet_forward.1} parent=0 // pred_check
    _
  $region43: #{lenet_forward.1} parent=0 // pred_check_branch
    %37 = sbr.rel (0) target = $region45
  $region44: #{lenet_forward.1} parent=0 // pred_region
    _
  $region45: #{lenet_forward.1} parent=0 // pred_fallthru
    _
  %v39 = vld [vmem:[%s1] sm:$0xff]
  %v40 = vld [vmem:[%s1 + $0x8] sm:$0xff]
  %v41 = vld [vmem:[%s1 + $0x10] sm:$0xff]
  %v42 = vld [vmem:[%s1 + $0x18] sm:$0xff]
  %v43 = vld [vmem:[%s1 + $0x20] sm:$0xff]
  %v44 = vld [vmem:[%s1 + $0x28] sm:$0xff]
  %v45 = vld [vmem:[%s1 + $0x30] sm:$0xff]
  %v46 = vld [vmem:[%s1 + $0x38] sm:$0xff]
  %v47 = vld [vmem:[%s1 + $0x40] sm:$0xff]
  %v48 = vld [vmem:[%s1 + $0x48] sm:$0xff]
  %v49 = vld [vmem:[%s1 + $0x50] sm:$0xff]
  %v50 = vld [vmem:[%s1 + $0x58] sm:$0xff]
  %v51 = vld [vmem:[%s1 + $0x60] sm:$0xff]
  %v52 = vld [vmem:[%s1 + $0x68] sm:$0xff]
  %v53 = vld [vmem:[%s1 + $0x70] sm:$0xff]
  %v54 = vld [vmem:[%s1 + $0x78] sm:$0xff]
  %v55 = vld [vmem:[%s1 + $0x80] sm:$0xff]
  %v56 = vld [vmem:[%s1 + $0x88] sm:$0xff]
  %v57 = vld [vmem:[%s1 + $0x90] sm:$0xff]
  %v58 = vld [vmem:[%s1 + $0x98] sm:$0xff]
  %v59 = vld [vmem:[%s1 + $0xa0] sm:$0xff]
  %v60 = vld [vmem:[%s1 + $0xa8] sm:$0xff]
  %v61 = vld [vmem:[%s1 + $0xb0] sm:$0xff]
  %v62 = vld [vmem:[%s1 + $0xb8] sm:$0xff]
  %v63 = vld [vmem:[%s1 + $0xc0] sm:$0xff]
  %v64 = vld [vmem:[%s1 + $0xc8] sm:$0xff]
  %v65 = vld [vmem:[%s1 + $0xd0] sm:$0xff]
  %v66 = vld [vmem:[%s1 + $0xd8] sm:$0xff]
  %v67 = vld [vmem:[%s1 + $0xe0] sm:$0xff]
  %v68 = vld [vmem:[%s1 + $0xe8] sm:$0xff]
  %v69 = vld [vmem:[%s1 + $0xf0] sm:$0xff]
  %v70 = vld [vmem:[%s1 + $0xf8] sm:$0xff]
  %v71 = vld [vmem:[%s1 + $0x100] sm:$0xff]
  %v72 = vld [vmem:[%s1 + $0x108] sm:$0xff]
  %v73 = vld [vmem:[%s1 + $0x110] sm:$0xff]
  %v74 = vld [vmem:[%s1 + $0x118] sm:$0xff]
  %v75 = vld [vmem:[%s1 + $0x120] sm:$0xff]
  %v76 = vld [vmem:[%s1 + $0x128] sm:$0xff]
  %v77 = vld [vmem:[%s1 + $0x130] sm:$0xff]
  %v78 = vld [vmem:[%s1 + $0x138] sm:$0xff]
  %v79 = vld [vmem:[%s1 + $0x140] sm:$0xff]
  %v80 = vld [vmem:[%s1 + $0x148] sm:$0xff]
  %v81 = vld [vmem:[%s1 + $0x150] sm:$0xff]
  %v82 = vld [vmem:[%s1 + $0x158] sm:$0xff]
  %v83 = vld [vmem:[%s1 + $0x160] sm:$0xff]
  %v84 = vld [vmem:[%s1 + $0x168] sm:$0xff]
  %v85 = vld [vmem:[%s1 + $0x170] sm:$0xff]
  %v86 = vld [vmem:[%s1 + $0x178] sm:$0xff]
  %v87 = vld [vmem:[%s2] sm:$0xff]
  %v88 = vld [vmem:[%s0] sm:$0xff]
  %v89 = vld [vmem:[%s0 + $0x8] sm:$0xff]
  %v90 = vld [vmem:[%s0 + $0x10] sm:$0xff]
  %v91 = vld [vmem:[%s0 + $0x18] sm:$0xff]
  %v92 = vld [vmem:[%s0 + $0x20] sm:$0xff]
  %v93 = vld [vmem:[%s0 + $0x28] sm:$0xff]
  %v94 = vld [vmem:[%s0 + $0x30] sm:$0xff]
  %v95 = vld [vmem:[%s0 + $0x38] sm:$0xff]
  %v96 = vld [vmem:[%s0 + $0x40] sm:$0xff]
  %v97 = vld [vmem:[%s0 + $0x48] sm:$0xff]
  %v98 = vld [vmem:[%s0 + $0x50] sm:$0xff]
  %v99 = vld [vmem:[%s0 + $0x58] sm:$0xff]
  %v100 = vld [vmem:[%s0 + $0x60] sm:$0xff]
  %v101 = vld [vmem:[%s0 + $0x68] sm:$0xff]
  %v102 = vld [vmem:[%s0 + $0x70] sm:$0xff]
  %v103 = vld [vmem:[%s0 + $0x78] sm:$0xff]
  %v104 = vld [vmem:[%s0 + $0x80] sm:$0xff]
  %v105 = vld [vmem:[%s0 + $0x88] sm:$0xff]
  %v106 = vld [vmem:[%s0 + $0x90] sm:$0xff]
  %v107 = vld [vmem:[%s0 + $0x98] sm:$0xff]
  %vm108 = vcmask 261120
  %v110 = vsel %vm108, %v40, 0
  %v113 = vsel %vm108, %v42, 0
  %v116 = vsel %vm108, %v44, 0
  %v119 = vsel %vm108, %v46, 0
  %v122 = vsel %vm108, %v48, 0
  %v125 = vsel %vm108, %v50, 0
  %v128 = vsel %vm108, %v52, 0
  %v131 = vsel %vm108, %v54, 0
  %v134 = vsel %vm108, %v56, 0
  %v137 = vsel %vm108, %v58, 0
  %v140 = vsel %vm108, %v60, 0
  %v143 = vsel %vm108, %v62, 0
  %v146 = vsel %vm108, %v64, 0
  %v149 = vsel %vm108, %v66, 0
  %v152 = vsel %vm108, %v68, 0
  %v155 = vsel %vm108, %v70, 0
  %v158 = vsel %vm108, %v72, 0
  %v161 = vsel %vm108, %v74, 0
  %v164 = vsel %vm108, %v76, 0
  %v167 = vsel %vm108, %v78, 0
  %v170 = vsel %vm108, %v80, 0
  %v173 = vsel %vm108, %v82, 0
  %v176 = vsel %vm108, %v84, 0
  %v179 = vsel %vm108, %v86, 0
  %181 = vmatprep.subr.mxu0 0.0
  %182 = vmatpush1.msra.mxu0 %v103
  %183 = vmatprep.subr.mxu0 0.0
  %184 = vmatpush1.msra.mxu0 %v102
  %185 = vmatprep.subr.mxu0 0.0
  %186 = vmatpush1.msra.mxu0 %v101
  %187 = vmatprep.subr.mxu0 0.0
  %188 = vmatpush1.msra.mxu0 %v100
  %189 = vmatprep.subr.mxu0 0.0
  %190 = vmatpush1.msra.mxu0 %v99
  %191 = vmatprep.subr.mxu0 0.0
  %192 = vmatpush1.msra.mxu0 %v98
  %193 = vmatprep.subr.mxu0 0.0
  %194 = vmatpush1.msra.mxu0 %v97
  %195 = vmatprep.subr.mxu0 0.0
  %196 = vmatpush1.msra.mxu0 %v96
  %197 = vmatprep.subr.mxu0 0.0
  %198 = vmatpush1.msra.mxu0 %v95
  %199 = vmatprep.subr.mxu0 0.0
  %200 = vmatpush1.msra.mxu0 %v94
  %201 = vmatprep.subr.mxu0 0.0
  %202 = vmatpush1.msra.mxu0 %v93
  %203 = vmatprep.subr.mxu0 0.0
  %204 = vmatpush1.msra.mxu0 %v92
  %205 = vmatprep.subr.mxu0 0.0
  %206 = vmatpush1.msra.mxu0 %v91
  %207 = vmatprep.subr.mxu0 0.0
  %208 = vmatpush1.msra.mxu0 %v90
  %209 = vmatprep.subr.mxu0 0.0
  %210 = vmatpush1.msra.mxu0 %v89
  %211 = vmatprep.subr.mxu0 0.0
  %212 = vmatpush1.msra.mxu0 %v88
  %213 = vmatprep.subr.mxu0 0.0
  %214 = vmatpush2.msra.mxu0 0.0
  %215 = vmatprep.subr.mxu0 0.0
  %216 = vmatpush2.msra.mxu0 0.0
  %217 = vmatprep.subr.mxu0 0.0
  %218 = vmatpush2.msra.mxu0 0.0
  %219 = vmatprep.subr.mxu0 0.0
  %220 = vmatpush2.msra.mxu0 0.0
  %221 = vmatprep.subr.mxu0 0.0
  %222 = vmatpush2.msra.mxu0 0.0
  %223 = vmatprep.subr.mxu0 0.0
  %224 = vmatpush2.msra.mxu0 0.0
  %225 = vmatprep.subr.mxu0 0.0
  %226 = vmatpush2.msra.mxu0 0.0
  %227 = vmatprep.subr.mxu0 0.0
  %228 = vmatpush2.msra.mxu0 0.0
  %229 = vmatprep.subr.mxu0 0.0
  %230 = vmatpush2.msra.mxu0 0.0
  %231 = vmatprep.subr.mxu0 0.0
  %232 = vmatpush2.msra.mxu0 0.0
  %233 = vmatprep.subr.mxu0 0.0
  %234 = vmatpush2.msra.mxu0 0.0
  %235 = vmatprep.subr.mxu0 0.0
  %236 = vmatpush2.msra.mxu0 0.0
  %237 = vmatprep.subr.mxu0 0.0
  %238 = vmatpush2.msra.mxu0 %v107
  %239 = vmatprep.subr.mxu0 0.0
  %240 = vmatpush2.msra.mxu0 %v106
  %241 = vmatprep.subr.mxu0 0.0
  %242 = vmatpush2.msra.mxu0 %v105
  %243 = vmatprep.subr.mxu0 0.0
  %244 = vmatpush2.msra.mxu0 %v104
  %245 = vmatprep.mubr.f32.mxu0 %v110
  %246 = vmatmul.mubr.f32.gmra.mxu0 %v39
  %v247 = vpop.f32.mrf.mxu0
  %v248 = vadd.f32 0.0, %v247
  %v249 = vpop.f32.mrf.mxu0
  %250 = vmatprep.mubr.f32.mxu0 %v113
  %251 = vmatmul.mubr.f32.gmra.mxu0 %v41
  %v252 = vpop.f32.mrf.mxu0
  %v253 = vadd.f32 0.0, %v252
  %v254 = vpop.f32.mrf.mxu0
  %255 = vmatprep.mubr.f32.mxu0 %v116
  %256 = vmatmul.mubr.f32.gmra.mxu0 %v43
  %v257 = vpop.f32.mrf.mxu0
  %v258 = vadd.f32 0.0, %v257
  %v259 = vpop.f32.mrf.mxu0
  %260 = vmatprep.mubr.f32.mxu0 %v119
  %261 = vmatmul.mubr.f32.gmra.mxu0 %v45
  %v262 = vpop.f32.mrf.mxu0
  %v263 = vadd.f32 0.0, %v262
  %v264 = vpop.f32.mrf.mxu0
  %265 = vmatprep.mubr.f32.mxu0 %v122
  %266 = vmatmul.mubr.f32.gmra.mxu0 %v47
  %v267 = vpop.f32.mrf.mxu0
  %v268 = vadd.f32 0.0, %v267
  %v269 = vpop.f32.mrf.mxu0
  %270 = vmatprep.mubr.f32.mxu0 %v125
  %271 = vmatmul.mubr.f32.gmra.mxu0 %v49
  %v272 = vpop.f32.mrf.mxu0
  %v273 = vadd.f32 0.0, %v272
  %v274 = vpop.f32.mrf.mxu0
  %275 = vmatprep.mubr.f32.mxu0 %v128
  %276 = vmatmul.mubr.f32.gmra.mxu0 %v51
  %v277 = vpop.f32.mrf.mxu0
  %v278 = vadd.f32 0.0, %v277
  %v279 = vpop.f32.mrf.mxu0
  %280 = vmatprep.mubr.f32.mxu0 %v131
  %281 = vmatmul.mubr.f32.gmra.mxu0 %v53
  %v282 = vpop.f32.mrf.mxu0
  %v283 = vadd.f32 0.0, %v282
  %v284 = vpop.f32.mrf.mxu0
  %285 = vmatprep.mubr.f32.mxu0 %v134
  %286 = vmatmul.mubr.f32.gmra.mxu0 %v55
  %v287 = vpop.f32.mrf.mxu0
  %v288 = vadd.f32 0.0, %v287
  %v289 = vpop.f32.mrf.mxu0
  %290 = vmatprep.mubr.f32.mxu0 %v137
  %291 = vmatmul.mubr.f32.gmra.mxu0 %v57
  %v292 = vpop.f32.mrf.mxu0
  %v293 = vadd.f32 0.0, %v292
  %v294 = vpop.f32.mrf.mxu0
  %295 = vmatprep.mubr.f32.mxu0 %v140
  %296 = vmatmul.mubr.f32.gmra.mxu0 %v59
  %v297 = vpop.f32.mrf.mxu0
  %v298 = vadd.f32 0.0, %v297
  %v299 = vpop.f32.mrf.mxu0
  %300 = vmatprep.mubr.f32.mxu0 %v143
  %301 = vmatmul.mubr.f32.gmra.mxu0 %v61
  %v302 = vpop.f32.mrf.mxu0
  %v303 = vadd.f32 0.0, %v302
  %v304 = vpop.f32.mrf.mxu0
  %305 = vmatprep.mubr.f32.mxu0 %v146
  %306 = vmatmul.mubr.f32.gmra.mxu0 %v63
  %v307 = vpop.f32.mrf.mxu0
  %v308 = vadd.f32 0.0, %v307
  %v309 = vpop.f32.mrf.mxu0
  %310 = vmatprep.mubr.f32.mxu0 %v149
  %311 = vmatmul.mubr.f32.gmra.mxu0 %v65
  %v312 = vpop.f32.mrf.mxu0
  %v313 = vadd.f32 0.0, %v312
  %v314 = vpop.f32.mrf.mxu0
  %315 = vmatprep.mubr.f32.mxu0 %v152
  %316 = vmatmul.mubr.f32.gmra.mxu0 %v67
  %v317 = vpop.f32.mrf.mxu0
  %v318 = vadd.f32 0.0, %v317
  %v319 = vpop.f32.mrf.mxu0
  %320 = vmatprep.mubr.f32.mxu0 %v155
  %321 = vmatmul.mubr.f32.gmra.mxu0 %v69
  %v322 = vpop.f32.mrf.mxu0
  %v323 = vadd.f32 0.0, %v322
  %v324 = vpop.f32.mrf.mxu0
  %325 = vmatprep.mubr.f32.mxu0 %v158
  %326 = vmatmul.mubr.f32.gmra.mxu0 %v71
  %v327 = vpop.f32.mrf.mxu0
  %v328 = vadd.f32 0.0, %v327
  %v329 = vpop.f32.mrf.mxu0
  %330 = vmatprep.mubr.f32.mxu0 %v161
  %331 = vmatmul.mubr.f32.gmra.mxu0 %v73
  %v332 = vpop.f32.mrf.mxu0
  %v333 = vadd.f32 0.0, %v332
  %v334 = vpop.f32.mrf.mxu0
  %335 = vmatprep.mubr.f32.mxu0 %v164
  %336 = vmatmul.mubr.f32.gmra.mxu0 %v75
  %v337 = vpop.f32.mrf.mxu0
  %v338 = vadd.f32 0.0, %v337
  %v339 = vpop.f32.mrf.mxu0
  %340 = vmatprep.mubr.f32.mxu0 %v167
  %341 = vmatmul.mubr.f32.gmra.mxu0 %v77
  %v342 = vpop.f32.mrf.mxu0
  %v343 = vadd.f32 0.0, %v342
  %v344 = vpop.f32.mrf.mxu0
  %345 = vmatprep.mubr.f32.mxu0 %v170
  %346 = vmatmul.mubr.f32.gmra.mxu0 %v79
  %v347 = vpop.f32.mrf.mxu0
  %v348 = vadd.f32 0.0, %v347
  %v349 = vpop.f32.mrf.mxu0
  %350 = vmatprep.mubr.f32.mxu0 %v173
  %351 = vmatmul.mubr.f32.gmra.mxu0 %v81
  %v352 = vpop.f32.mrf.mxu0
  %v353 = vadd.f32 0.0, %v352
  %v354 = vpop.f32.mrf.mxu0
  %355 = vmatprep.mubr.f32.mxu0 %v176
  %356 = vmatmul.mubr.f32.gmra.mxu0 %v83
  %v357 = vpop.f32.mrf.mxu0
  %v358 = vadd.f32 0.0, %v357
  %v359 = vpop.f32.mrf.mxu0
  %360 = vmatprep.mubr.f32.mxu0 %v179
  %361 = vmatmul.mubr.f32.gmra.mxu0 %v85
  %v362 = vpop.f32.mrf.mxu0
  %v363 = vadd.f32 0.0, %v362
  %v364 = vpop.f32.mrf.mxu0
  %365 = vdwg.mxu0
  %s366 = scalar_lea.vmem %s0, 32
  %v367 = vld [vmem:[%s366] sm:$0xff]
  %v368 = vld [vmem:[%s366 + $0x8] sm:$0xff]
  %v369 = vld [vmem:[%s366 + $0x10] sm:$0xff]
  %v370 = vld [vmem:[%s366 + $0x18] sm:$0xff]
  %v371 = vld [vmem:[%s366 + $0x20] sm:$0xff]
  %v372 = vld [vmem:[%s366 + $0x28] sm:$0xff]
  %v373 = vld [vmem:[%s366 + $0x30] sm:$0xff]
  %v374 = vld [vmem:[%s366 + $0x38] sm:$0xff]
  %v375 = vld [vmem:[%s366 + $0x40] sm:$0xff]
  %v376 = vld [vmem:[%s366 + $0x48] sm:$0xff]
  %v377 = vld [vmem:[%s366 + $0x50] sm:$0xff]
  %v378 = vld [vmem:[%s366 + $0x58] sm:$0xff]
  %v379 = vld [vmem:[%s366 + $0x60] sm:$0xff]
  %v380 = vld [vmem:[%s366 + $0x68] sm:$0xff]
  %v381 = vld [vmem:[%s366 + $0x70] sm:$0xff]
  %v382 = vld [vmem:[%s366 + $0x78] sm:$0xff]
  %v383 = vld [vmem:[%s366 + $0x80] sm:$0xff]
  %v384 = vld [vmem:[%s366 + $0x88] sm:$0xff]
  %v385 = vld [vmem:[%s366 + $0x90] sm:$0xff]
  %v386 = vld [vmem:[%s366 + $0x98] sm:$0xff]
  %387 = vmatprep.subr.mxu0 0.0
  %388 = vmatpush1.msra.mxu0 %v382
  %389 = vmatprep.subr.mxu0 0.0
  %390 = vmatpush1.msra.mxu0 %v381
  %391 = vmatprep.subr.mxu0 0.0
  %392 = vmatpush1.msra.mxu0 %v380
  %393 = vmatprep.subr.mxu0 0.0
  %394 = vmatpush1.msra.mxu0 %v379
  %395 = vmatprep.subr.mxu0 0.0
  %396 = vmatpush1.msra.mxu0 %v378
  %397 = vmatprep.subr.mxu0 0.0
  %398 = vmatpush1.msra.mxu0 %v377
  %399 = vmatprep.subr.mxu0 0.0
  %400 = vmatpush1.msra.mxu0 %v376
  %401 = vmatprep.subr.mxu0 0.0
  %402 = vmatpush1.msra.mxu0 %v375
  %403 = vmatprep.subr.mxu0 0.0
  %404 = vmatpush1.msra.mxu0 %v374
  %405 = vmatprep.subr.mxu0 0.0
  %406 = vmatpush1.msra.mxu0 %v373
  %407 = vmatprep.subr.mxu0 0.0
  %408 = vmatpush1.msra.mxu0 %v372
  %409 = vmatprep.subr.mxu0 0.0
  %410 = vmatpush1.msra.mxu0 %v371
  %411 = vmatprep.subr.mxu0 0.0
  %412 = vmatpush1.msra.mxu0 %v370
  %413 = vmatprep.subr.mxu0 0.0
  %414 = vmatpush1.msra.mxu0 %v369
  %415 = vmatprep.subr.mxu0 0.0
  %416 = vmatpush1.msra.mxu0 %v368
  %417 = vmatprep.subr.mxu0 0.0
  %418 = vmatpush1.msra.mxu0 %v367
  %419 = vmatprep.subr.mxu0 0.0
  %420 = vmatpush2.msra.mxu0 0.0
  %421 = vmatprep.subr.mxu0 0.0
  %422 = vmatpush2.msra.mxu0 0.0
  %423 = vmatprep.subr.mxu0 0.0
  %424 = vmatpush2.msra.mxu0 0.0
  %425 = vmatprep.subr.mxu0 0.0
  %426 = vmatpush2.msra.mxu0 0.0
  %427 = vmatprep.subr.mxu0 0.0
  %428 = vmatpush2.msra.mxu0 0.0
  %429 = vmatprep.subr.mxu0 0.0
  %430 = vmatpush2.msra.mxu0 0.0
  %431 = vmatprep.subr.mxu0 0.0
  %432 = vmatpush2.msra.mxu0 0.0
  %433 = vmatprep.subr.mxu0 0.0
  %434 = vmatpush2.msra.mxu0 0.0
  %435 = vmatprep.subr.mxu0 0.0
  %436 = vmatpush2.msra.mxu0 0.0
  %437 = vmatprep.subr.mxu0 0.0
  %438 = vmatpush2.msra.mxu0 0.0
  %439 = vmatprep.subr.mxu0 0.0
  %440 = vmatpush2.msra.mxu0 0.0
  %441 = vmatprep.subr.mxu0 0.0
  %442 = vmatpush2.msra.mxu0 0.0
  %443 = vmatprep.subr.mxu0 0.0
  %444 = vmatpush2.msra.mxu0 %v386
  %445 = vmatprep.subr.mxu0 0.0
  %446 = vmatpush2.msra.mxu0 %v385
  %447 = vmatprep.subr.mxu0 0.0
  %448 = vmatpush2.msra.mxu0 %v384
  %449 = vmatprep.subr.mxu0 0.0
  %450 = vmatpush2.msra.mxu0 %v383
  %451 = vmatprep.mubr.f32.mxu0 %v110
  %452 = vmatmul.mubr.f32.gmra.mxu0 %v39
  %v453 = vpop.f32.mrf.mxu0
  %v454 = vadd.f32 0.0, %v453
  %v455 = vpop.f32.mrf.mxu0
  %456 = vmatprep.mubr.f32.mxu0 %v113
  %457 = vmatmul.mubr.f32.gmra.mxu0 %v41
  %v458 = vpop.f32.mrf.mxu0
  %v459 = vadd.f32 0.0, %v458
  %v460 = vpop.f32.mrf.mxu0
  %461 = vmatprep.mubr.f32.mxu0 %v116
  %462 = vmatmul.mubr.f32.gmra.mxu0 %v43
  %v463 = vpop.f32.mrf.mxu0
  %v464 = vadd.f32 0.0, %v463
  %v465 = vpop.f32.mrf.mxu0
  %466 = vmatprep.mubr.f32.mxu0 %v119
  %467 = vmatmul.mubr.f32.gmra.mxu0 %v45
  %v468 = vpop.f32.mrf.mxu0
  %v469 = vadd.f32 0.0, %v468
  %v470 = vpop.f32.mrf.mxu0
  %471 = vmatprep.mubr.f32.mxu0 %v122
  %472 = vmatmul.mubr.f32.gmra.mxu0 %v47
  %v473 = vpop.f32.mrf.mxu0
  %v474 = vadd.f32 0.0, %v473
  %v475 = vpop.f32.mrf.mxu0
  %476 = vmatprep.mubr.f32.mxu0 %v125
  %477 = vmatmul.mubr.f32.gmra.mxu0 %v49
  %v478 = vpop.f32.mrf.mxu0
  %v479 = vadd.f32 0.0, %v478
  %v480 = vpop.f32.mrf.mxu0
  %481 = vmatprep.mubr.f32.mxu0 %v128
  %482 = vmatmul.mubr.f32.gmra.mxu0 %v51
  %v483 = vpop.f32.mrf.mxu0
  %v484 = vadd.f32 0.0, %v483
  %v485 = vpop.f32.mrf.mxu0
  %486 = vmatprep.mubr.f32.mxu0 %v131
  %487 = vmatmul.mubr.f32.gmra.mxu0 %v53
  %v488 = vpop.f32.mrf.mxu0
  %v489 = vadd.f32 0.0, %v488
  %v490 = vpop.f32.mrf.mxu0
  %491 = vmatprep.mubr.f32.mxu0 %v134
  %492 = vmatmul.mubr.f32.gmra.mxu0 %v55
  %v493 = vpop.f32.mrf.mxu0
  %v494 = vadd.f32 0.0, %v493
  %v495 = vpop.f32.mrf.mxu0
  %496 = vmatprep.mubr.f32.mxu0 %v137
  %497 = vmatmul.mubr.f32.gmra.mxu0 %v57
  %v498 = vpop.f32.mrf.mxu0
  %v499 = vadd.f32 0.0, %v498
  %v500 = vpop.f32.mrf.mxu0
  %501 = vmatprep.mubr.f32.mxu0 %v140
  %502 = vmatmul.mubr.f32.gmra.mxu0 %v59
  %v503 = vpop.f32.mrf.mxu0
  %v504 = vadd.f32 0.0, %v503
  %v505 = vpop.f32.mrf.mxu0
  %506 = vmatprep.mubr.f32.mxu0 %v143
  %507 = vmatmul.mubr.f32.gmra.mxu0 %v61
  %v508 = vpop.f32.mrf.mxu0
  %v509 = vadd.f32 0.0, %v508
  %v510 = vpop.f32.mrf.mxu0
  %511 = vmatprep.mubr.f32.mxu0 %v146
  %512 = vmatmul.mubr.f32.gmra.mxu0 %v63
  %v513 = vpop.f32.mrf.mxu0
  %v514 = vadd.f32 0.0, %v513
  %v515 = vpop.f32.mrf.mxu0
  %516 = vmatprep.mubr.f32.mxu0 %v149
  %517 = vmatmul.mubr.f32.gmra.mxu0 %v65
  %v518 = vpop.f32.mrf.mxu0
  %v519 = vadd.f32 0.0, %v518
  %v520 = vpop.f32.mrf.mxu0
  %521 = vmatprep.mubr.f32.mxu0 %v152
  %522 = vmatmul.mubr.f32.gmra.mxu0 %v67
  %v523 = vpop.f32.mrf.mxu0
  %v524 = vadd.f32 0.0, %v523
  %v525 = vpop.f32.mrf.mxu0
  %526 = vmatprep.mubr.f32.mxu0 %v155
  %527 = vmatmul.mubr.f32.gmra.mxu0 %v69
  %v528 = vpop.f32.mrf.mxu0
  %v529 = vadd.f32 0.0, %v528
  %v530 = vpop.f32.mrf.mxu0
  %531 = vmatprep.mubr.f32.mxu0 %v158
  %532 = vmatmul.mubr.f32.gmra.mxu0 %v71
  %v533 = vpop.f32.mrf.mxu0
  %v534 = vadd.f32 0.0, %v533
  %v535 = vpop.f32.mrf.mxu0
  %536 = vmatprep.mubr.f32.mxu0 %v161
  %537 = vmatmul.mubr.f32.gmra.mxu0 %v73
  %v538 = vpop.f32.mrf.mxu0
  %v539 = vadd.f32 0.0, %v538
  %v540 = vpop.f32.mrf.mxu0
  %541 = vmatprep.mubr.f32.mxu0 %v164
  %542 = vmatmul.mubr.f32.gmra.mxu0 %v75
  %v543 = vpop.f32.mrf.mxu0
  %v544 = vadd.f32 0.0, %v543
  %v545 = vpop.f32.mrf.mxu0
  %546 = vmatprep.mubr.f32.mxu0 %v167
  %547 = vmatmul.mubr.f32.gmra.mxu0 %v77
  %v548 = vpop.f32.mrf.mxu0
  %v549 = vadd.f32 0.0, %v548
  %v550 = vpop.f32.mrf.mxu0
  %551 = vmatprep.mubr.f32.mxu0 %v170
  %552 = vmatmul.mubr.f32.gmra.mxu0 %v79
  %v553 = vpop.f32.mrf.mxu0
  %v554 = vadd.f32 0.0, %v553
  %v555 = vpop.f32.mrf.mxu0
  %556 = vmatprep.mubr.f32.mxu0 %v173
  %557 = vmatmul.mubr.f32.gmra.mxu0 %v81
  %v558 = vpop.f32.mrf.mxu0
  %v559 = vadd.f32 0.0, %v558
  %v560 = vpop.f32.mrf.mxu0
  %561 = vmatprep.mubr.f32.mxu0 %v176
  %562 = vmatmul.mubr.f32.gmra.mxu0 %v83
  %v563 = vpop.f32.mrf.mxu0
  %v564 = vadd.f32 0.0, %v563
  %v565 = vpop.f32.mrf.mxu0
  %566 = vmatprep.mubr.f32.mxu0 %v179
  %567 = vmatmul.mubr.f32.gmra.mxu0 %v85
  %v568 = vpop.f32.mrf.mxu0
  %v569 = vadd.f32 0.0, %v568
  %v570 = vpop.f32.mrf.mxu0
  %571 = vdwg.mxu0
  %v572 = vmax.f32 %v248, %v454
  %v573 = vmax.f32 %v253, %v459
  %v574 = vmax.f32 %v258, %v464
  %v575 = vmax.f32 %v263, %v469
  %v576 = vmax.f32 %v268, %v474
  %v577 = vmax.f32 %v273, %v479
  %v578 = vmax.f32 %v278, %v484
  %v579 = vmax.f32 %v283, %v489
  %v580 = vmax.f32 %v288, %v494
  %v581 = vmax.f32 %v293, %v499
  %v582 = vmax.f32 %v298, %v504
  %v583 = vmax.f32 %v303, %v509
  %v584 = vmax.f32 %v308, %v514
  %v585 = vmax.f32 %v313, %v519
  %v586 = vmax.f32 %v318, %v524
  %v587 = vmax.f32 %v323, %v529
  %v588 = vmax.f32 %v328, %v534
  %v589 = vmax.f32 %v333, %v539
  %v590 = vmax.f32 %v338, %v544
  %v591 = vmax.f32 %v343, %v549
  %v592 = vmax.f32 %v348, %v554
  %v593 = vmax.f32 %v353, %v559
  %v594 = vmax.f32 %v358, %v564
  %v595 = vmax.f32 %v363, %v569
  %v596 = vmax.f32 %v572, %v573
  %v597 = vmax.f32 %v574, %v575
  %v598 = vmax.f32 %v576, %v577
  %v599 = vmax.f32 %v578, %v579
  %v600 = vmax.f32 %v580, %v581
  %v601 = vmax.f32 %v582, %v583
  %v602 = vmax.f32 %v584, %v585
  %v603 = vmax.f32 %v586, %v587
  %v604 = vmax.f32 %v588, %v589
  %v605 = vmax.f32 %v590, %v591
  %v606 = vmax.f32 %v592, %v593
  %v607 = vmax.f32 %v594, %v595
  %v608 = vadd.f32 %v596, %v87
  %v609 = vadd.f32 %v597, %v87
  %v610 = vadd.f32 %v598, %v87
  %v611 = vadd.f32 %v599, %v87
  %v612 = vadd.f32 %v600, %v87
  %v613 = vadd.f32 %v601, %v87
  %v614 = vadd.f32 %v602, %v87
  %v615 = vadd.f32 %v603, %v87
  %v616 = vadd.f32 %v604, %v87
  %v617 = vadd.f32 %v605, %v87
  %v618 = vadd.f32 %v606, %v87
  %v619 = vadd.f32 %v607, %v87
  %v620 = vmax.f32 %v608, 0.0
  %v621 = vmax.f32 %v609, 0.0
  %v622 = vmax.f32 %v610, 0.0
  %v623 = vmax.f32 %v611, 0.0
  %v624 = vmax.f32 %v612, 0.0
  %v625 = vmax.f32 %v613, 0.0
  %v626 = vmax.f32 %v614, 0.0
  %v627 = vmax.f32 %v615, 0.0
  %v628 = vmax.f32 %v616, 0.0
  %v629 = vmax.f32 %v617, 0.0
  %v630 = vmax.f32 %v618, 0.0
  %v631 = vmax.f32 %v619, 0.0
  %v632 = vpack.c.bf16 %v621, %v620
  %v633 = vpack.c.bf16 %v623, %v622
  %v634 = vpack.c.bf16 %v625, %v624
  %v635 = vpack.c.bf16 %v627, %v626
  %v636 = vpack.c.bf16 %v629, %v628
  %v637 = vpack.c.bf16 %v631, %v630
  %v644 = vunpack.c.l.b16 %v632
  %v645 = vunpack.c.h.b16 %v632
  %v646 = vunpack.c.l.b16 %v633
  %v647 = vunpack.c.h.b16 %v633
  %v648 = vunpack.c.l.b16 %v634
  %v649 = vunpack.c.h.b16 %v634
  %v650 = vunpack.c.l.b16 %v635
  %v651 = vunpack.c.h.b16 %v635
  %v652 = vunpack.c.l.b16 %v636
  %v653 = vunpack.c.h.b16 %v636
  %v654 = vunpack.c.l.b16 %v637
  %v655 = vunpack.c.h.b16 %v637
  %v656 = vpack.c.b16 %v644, %v644
  %v657 = vpack.c.b16 %v645, %v645
  %v658 = vpack.c.b16 %v646, %v646
  %v659 = vpack.c.b16 %v647, %v647
  %v660 = vpack.c.b16 %v648, %v648
  %v661 = vpack.c.b16 %v649, %v649
  %v662 = vpack.c.b16 %v650, %v650
  %v663 = vpack.c.b16 %v651, %v651
  %v664 = vpack.c.b16 %v652, %v652
  %v665 = vpack.c.b16 %v653, %v653
  %v666 = vpack.c.b16 %v654, %v654
  %v667 = vpack.c.b16 %v655, %v655
  %680 = vst [vmem:[#allocation2] sm:$0xf] %v656
  %681 = vst [vmem:[#allocation2 + $0x4] sm:$0xf] %v657
  %682 = vst [vmem:[#allocation2 + $0x8] sm:$0xf] %v658
  %683 = vst [vmem:[#allocation2 + $0xc] sm:$0xf] %v659
  %684 = vst [vmem:[#allocation2 + $0x10] sm:$0xf] %v660
  %685 = vst [vmem:[#allocation2 + $0x14] sm:$0xf] %v661
  %686 = vst [vmem:[#allocation2 + $0x18] sm:$0xf] %v662
  %687 = vst [vmem:[#allocation2 + $0x1c] sm:$0xf] %v663
  %688 = vst [vmem:[#allocation2 + $0x20] sm:$0xf] %v664
  %689 = vst [vmem:[#allocation2 + $0x24] sm:$0xf] %v665
  %690 = vst [vmem:[#allocation2 + $0x28] sm:$0xf] %v666
  %691 = vst [vmem:[#allocation2 + $0x2c] sm:$0xf] %v667
  %s692 = scalar_lea.vmem %s0, 64
  %v693 = vld [vmem:[%s692] sm:$0xff]
  %v694 = vld [vmem:[%s692 + $0x8] sm:$0xff]
  %v695 = vld [vmem:[%s692 + $0x10] sm:$0xff]
  %v696 = vld [vmem:[%s692 + $0x18] sm:$0xff]
  %v697 = vld [vmem:[%s692 + $0x20] sm:$0xff]
  %v698 = vld [vmem:[%s692 + $0x28] sm:$0xff]
  %v699 = vld [vmem:[%s692 + $0x30] sm:$0xff]
  %v700 = vld [vmem:[%s692 + $0x38] sm:$0xff]
  %v701 = vld [vmem:[%s692 + $0x40] sm:$0xff]
  %v702 = vld [vmem:[%s692 + $0x48] sm:$0xff]
  %v703 = vld [vmem:[%s692 + $0x50] sm:$0xff]
  %v704 = vld [vmem:[%s692 + $0x58] sm:$0xff]
  %v705 = vld [vmem:[%s692 + $0x60] sm:$0xff]
  %v706 = vld [vmem:[%s692 + $0x68] sm:$0xff]
  %v707 = vld [vmem:[%s692 + $0x70] sm:$0xff]
  %v708 = vld [vmem:[%s692 + $0x78] sm:$0xff]
  %v709 = vld [vmem:[%s692 + $0x80] sm:$0xff]
  %v710 = vld [vmem:[%s692 + $0x88] sm:$0xff]
  %v711 = vld [vmem:[%s692 + $0x90] sm:$0xff]
  %v712 = vld [vmem:[%s692 + $0x98] sm:$0xff]
  %713 = vmatprep.subr.mxu0 0.0
  %714 = vmatpush1.msra.mxu0 %v708
  %715 = vmatprep.subr.mxu0 0.0
  %716 = vmatpush1.msra.mxu0 %v707
  %717 = vmatprep.subr.mxu0 0.0
  %718 = vmatpush1.msra.mxu0 %v706
  %719 = vmatprep.subr.mxu0 0.0
  %720 = vmatpush1.msra.mxu0 %v705
  %721 = vmatprep.subr.mxu0 0.0
  %722 = vmatpush1.msra.mxu0 %v704
  %723 = vmatprep.subr.mxu0 0.0
  %724 = vmatpush1.msra.mxu0 %v703
  %725 = vmatprep.subr.mxu0 0.0
  %726 = vmatpush1.msra.mxu0 %v702
  %727 = vmatprep.subr.mxu0 0.0
  %728 = vmatpush1.msra.mxu0 %v701
  %729 = vmatprep.subr.mxu0 0.0
  %730 = vmatpush1.msra.mxu0 %v700
  %731 = vmatprep.subr.mxu0 0.0
  %732 = vmatpush1.msra.mxu0 %v699
  %733 = vmatprep.subr.mxu0 0.0
  %734 = vmatpush1.msra.mxu0 %v698
  %735 = vmatprep.subr.mxu0 0.0
  %736 = vmatpush1.msra.mxu0 %v697
  %737 = vmatprep.subr.mxu0 0.0
  %738 = vmatpush1.msra.mxu0 %v696
  %739 = vmatprep.subr.mxu0 0.0
  %740 = vmatpush1.msra.mxu0 %v695
  %741 = vmatprep.subr.mxu0 0.0
  %742 = vmatpush1.msra.mxu0 %v694
  %743 = vmatprep.subr.mxu0 0.0
  %744 = vmatpush1.msra.mxu0 %v693
  %745 = vmatprep.subr.mxu0 0.0
  %746 = vmatpush2.msra.mxu0 0.0
  %747 = vmatprep.subr.mxu0 0.0
  %748 = vmatpush2.msra.mxu0 0.0
  %749 = vmatprep.subr.mxu0 0.0
  %750 = vmatpush2.msra.mxu0 0.0
  %751 = vmatprep.subr.mxu0 0.0
  %752 = vmatpush2.msra.mxu0 0.0
  %753 = vmatprep.subr.mxu0 0.0
  %754 = vmatpush2.msra.mxu0 0.0
  %755 = vmatprep.subr.mxu0 0.0
  %756 = vmatpush2.msra.mxu0 0.0
  %757 = vmatprep.subr.mxu0 0.0
  %758 = vmatpush2.msra.mxu0 0.0
  %759 = vmatprep.subr.mxu0 0.0
  %760 = vmatpush2.msra.mxu0 0.0
  %761 = vmatprep.subr.mxu0 0.0
  %762 = vmatpush2.msra.mxu0 0.0
  %763 = vmatprep.subr.mxu0 0.0
  %764 = vmatpush2.msra.mxu0 0.0
  %765 = vmatprep.subr.mxu0 0.0
  %766 = vmatpush2.msra.mxu0 0.0
  %767 = vmatprep.subr.mxu0 0.0
  %768 = vmatpush2.msra.mxu0 0.0
  %769 = vmatprep.subr.mxu0 0.0
  %770 = vmatpush2.msra.mxu0 %v712
  %771 = vmatprep.subr.mxu0 0.0
  %772 = vmatpush2.msra.mxu0 %v711
  %773 = vmatprep.subr.mxu0 0.0
  %774 = vmatpush2.msra.mxu0 %v710
  %775 = vmatprep.subr.mxu0 0.0
  %776 = vmatpush2.msra.mxu0 %v709
  %777 = vmatprep.mubr.f32.mxu0 %v110
  %778 = vmatmul.mubr.f32.gmra.mxu0 %v39
  %v779 = vpop.f32.mrf.mxu0
  %v780 = vadd.f32 0.0, %v779
  %v781 = vpop.f32.mrf.mxu0
  %782 = vmatprep.mubr.f32.mxu0 %v113
  %783 = vmatmul.mubr.f32.gmra.mxu0 %v41
  %v784 = vpop.f32.mrf.mxu0
  %v785 = vadd.f32 0.0, %v784
  %v786 = vpop.f32.mrf.mxu0
  %787 = vmatprep.mubr.f32.mxu0 %v116
  %788 = vmatmul.mubr.f32.gmra.mxu0 %v43
  %v789 = vpop.f32.mrf.mxu0
  %v790 = vadd.f32 0.0, %v789
  %v791 = vpop.f32.mrf.mxu0
  %792 = vmatprep.mubr.f32.mxu0 %v119
  %793 = vmatmul.mubr.f32.gmra.mxu0 %v45
  %v794 = vpop.f32.mrf.mxu0
  %v795 = vadd.f32 0.0, %v794
  %v796 = vpop.f32.mrf.mxu0
  %797 = vmatprep.mubr.f32.mxu0 %v122
  %798 = vmatmul.mubr.f32.gmra.mxu0 %v47
  %v799 = vpop.f32.mrf.mxu0
  %v800 = vadd.f32 0.0, %v799
  %v801 = vpop.f32.mrf.mxu0
  %802 = vmatprep.mubr.f32.mxu0 %v125
  %803 = vmatmul.mubr.f32.gmra.mxu0 %v49
  %v804 = vpop.f32.mrf.mxu0
  %v805 = vadd.f32 0.0, %v804
  %v806 = vpop.f32.mrf.mxu0
  %807 = vmatprep.mubr.f32.mxu0 %v128
  %808 = vmatmul.mubr.f32.gmra.mxu0 %v51
  %v809 = vpop.f32.mrf.mxu0
  %v810 = vadd.f32 0.0, %v809
  %v811 = vpop.f32.mrf.mxu0
  %812 = vmatprep.mubr.f32.mxu0 %v131
  %813 = vmatmul.mubr.f32.gmra.mxu0 %v53
  %v814 = vpop.f32.mrf.mxu0
  %v815 = vadd.f32 0.0, %v814
  %v816 = vpop.f32.mrf.mxu0
  %817 = vmatprep.mubr.f32.mxu0 %v134
  %818 = vmatmul.mubr.f32.gmra.mxu0 %v55
  %v819 = vpop.f32.mrf.mxu0
  %v820 = vadd.f32 0.0, %v819
  %v821 = vpop.f32.mrf.mxu0
  %822 = vmatprep.mubr.f32.mxu0 %v137
  %823 = vmatmul.mubr.f32.gmra.mxu0 %v57
  %v824 = vpop.f32.mrf.mxu0
  %v825 = vadd.f32 0.0, %v824
  %v826 = vpop.f32.mrf.mxu0
  %827 = vmatprep.mubr.f32.mxu0 %v140
  %828 = vmatmul.mubr.f32.gmra.mxu0 %v59
  %v829 = vpop.f32.mrf.mxu0
  %v830 = vadd.f32 0.0, %v829
  %v831 = vpop.f32.mrf.mxu0
  %832 = vmatprep.mubr.f32.mxu0 %v143
  %833 = vmatmul.mubr.f32.gmra.mxu0 %v61
  %v834 = vpop.f32.mrf.mxu0
  %v835 = vadd.f32 0.0, %v834
  %v836 = vpop.f32.mrf.mxu0
  %837 = vmatprep.mubr.f32.mxu0 %v146
  %838 = vmatmul.mubr.f32.gmra.mxu0 %v63
  %v839 = vpop.f32.mrf.mxu0
  %v840 = vadd.f32 0.0, %v839
  %v841 = vpop.f32.mrf.mxu0
  %842 = vmatprep.mubr.f32.mxu0 %v149
  %843 = vmatmul.mubr.f32.gmra.mxu0 %v65
  %v844 = vpop.f32.mrf.mxu0
  %v845 = vadd.f32 0.0, %v844
  %v846 = vpop.f32.mrf.mxu0
  %847 = vmatprep.mubr.f32.mxu0 %v152
  %848 = vmatmul.mubr.f32.gmra.mxu0 %v67
  %v849 = vpop.f32.mrf.mxu0
  %v850 = vadd.f32 0.0, %v849
  %v851 = vpop.f32.mrf.mxu0
  %852 = vmatprep.mubr.f32.mxu0 %v155
  %853 = vmatmul.mubr.f32.gmra.mxu0 %v69
  %v854 = vpop.f32.mrf.mxu0
  %v855 = vadd.f32 0.0, %v854
  %v856 = vpop.f32.mrf.mxu0
  %857 = vmatprep.mubr.f32.mxu0 %v158
  %858 = vmatmul.mubr.f32.gmra.mxu0 %v71
  %v859 = vpop.f32.mrf.mxu0
  %v860 = vadd.f32 0.0, %v859
  %v861 = vpop.f32.mrf.mxu0
  %862 = vmatprep.mubr.f32.mxu0 %v161
  %863 = vmatmul.mubr.f32.gmra.mxu0 %v73
  %v864 = vpop.f32.mrf.mxu0
  %v865 = vadd.f32 0.0, %v864
  %v866 = vpop.f32.mrf.mxu0
  %867 = vmatprep.mubr.f32.mxu0 %v164
  %868 = vmatmul.mubr.f32.gmra.mxu0 %v75
  %v869 = vpop.f32.mrf.mxu0
  %v870 = vadd.f32 0.0, %v869
  %v871 = vpop.f32.mrf.mxu0
  %872 = vmatprep.mubr.f32.mxu0 %v167
  %873 = vmatmul.mubr.f32.gmra.mxu0 %v77
  %v874 = vpop.f32.mrf.mxu0
  %v875 = vadd.f32 0.0, %v874
  %v876 = vpop.f32.mrf.mxu0
  %877 = vmatprep.mubr.f32.mxu0 %v170
  %878 = vmatmul.mubr.f32.gmra.mxu0 %v79
  %v879 = vpop.f32.mrf.mxu0
  %v880 = vadd.f32 0.0, %v879
  %v881 = vpop.f32.mrf.mxu0
  %882 = vmatprep.mubr.f32.mxu0 %v173
  %883 = vmatmul.mubr.f32.gmra.mxu0 %v81
  %v884 = vpop.f32.mrf.mxu0
  %v885 = vadd.f32 0.0, %v884
  %v886 = vpop.f32.mrf.mxu0
  %887 = vmatprep.mubr.f32.mxu0 %v176
  %888 = vmatmul.mubr.f32.gmra.mxu0 %v83
  %v889 = vpop.f32.mrf.mxu0
  %v890 = vadd.f32 0.0, %v889
  %v891 = vpop.f32.mrf.mxu0
  %892 = vmatprep.mubr.f32.mxu0 %v179
  %893 = vmatmul.mubr.f32.gmra.mxu0 %v85
  %v894 = vpop.f32.mrf.mxu0
  %v895 = vadd.f32 0.0, %v894
  %v896 = vpop.f32.mrf.mxu0
  %897 = vdwg.mxu0
  %s898 = scalar_lea.vmem %s0, 96
  %v899 = vld [vmem:[%s898] sm:$0xff]
  %v900 = vld [vmem:[%s898 + $0x8] sm:$0xff]
  %v901 = vld [vmem:[%s898 + $0x10] sm:$0xff]
  %v902 = vld [vmem:[%s898 + $0x18] sm:$0xff]
  %v903 = vld [vmem:[%s898 + $0x20] sm:$0xff]
  %v904 = vld [vmem:[%s898 + $0x28] sm:$0xff]
  %v905 = vld [vmem:[%s898 + $0x30] sm:$0xff]
  %v906 = vld [vmem:[%s898 + $0x38] sm:$0xff]
  %v907 = vld [vmem:[%s898 + $0x40] sm:$0xff]
  %v908 = vld [vmem:[%s898 + $0x48] sm:$0xff]
  %v909 = vld [vmem:[%s898 + $0x50] sm:$0xff]
  %v910 = vld [vmem:[%s898 + $0x58] sm:$0xff]
  %v911 = vld [vmem:[%s898 + $0x60] sm:$0xff]
  %v912 = vld [vmem:[%s898 + $0x68] sm:$0xff]
  %v913 = vld [vmem:[%s898 + $0x70] sm:$0xff]
  %v914 = vld [vmem:[%s898 + $0x78] sm:$0xff]
  %v915 = vld [vmem:[%s898 + $0x80] sm:$0xff]
  %v916 = vld [vmem:[%s898 + $0x88] sm:$0xff]
  %v917 = vld [vmem:[%s898 + $0x90] sm:$0xff]
  %v918 = vld [vmem:[%s898 + $0x98] sm:$0xff]
  %919 = vmatprep.subr.mxu0 0.0
  %920 = vmatpush1.msra.mxu0 %v914
  %921 = vmatprep.subr.mxu0 0.0
  %922 = vmatpush1.msra.mxu0 %v913
  %923 = vmatprep.subr.mxu0 0.0
  %924 = vmatpush1.msra.mxu0 %v912
  %925 = vmatprep.subr.mxu0 0.0
  %926 = vmatpush1.msra.mxu0 %v911
  %927 = vmatprep.subr.mxu0 0.0
  %928 = vmatpush1.msra.mxu0 %v910
  %929 = vmatprep.subr.mxu0 0.0
  %930 = vmatpush1.msra.mxu0 %v909
  %931 = vmatprep.subr.mxu0 0.0
  %932 = vmatpush1.msra.mxu0 %v908
  %933 = vmatprep.subr.mxu0 0.0
  %934 = vmatpush1.msra.mxu0 %v907
  %935 = vmatprep.subr.mxu0 0.0
  %936 = vmatpush1.msra.mxu0 %v906
  %937 = vmatprep.subr.mxu0 0.0
  %938 = vmatpush1.msra.mxu0 %v905
  %939 = vmatprep.subr.mxu0 0.0
  %940 = vmatpush1.msra.mxu0 %v904
  %941 = vmatprep.subr.mxu0 0.0
  %942 = vmatpush1.msra.mxu0 %v903
  %943 = vmatprep.subr.mxu0 0.0
  %944 = vmatpush1.msra.mxu0 %v902
  %945 = vmatprep.subr.mxu0 0.0
  %946 = vmatpush1.msra.mxu0 %v901
  %947 = vmatprep.subr.mxu0 0.0
  %948 = vmatpush1.msra.mxu0 %v900
  %949 = vmatprep.subr.mxu0 0.0
  %950 = vmatpush1.msra.mxu0 %v899
  %951 = vmatprep.subr.mxu0 0.0
  %952 = vmatpush2.msra.mxu0 0.0
  %953 = vmatprep.subr.mxu0 0.0
  %954 = vmatpush2.msra.mxu0 0.0
  %955 = vmatprep.subr.mxu0 0.0
  %956 = vmatpush2.msra.mxu0 0.0
  %957 = vmatprep.subr.mxu0 0.0
  %958 = vmatpush2.msra.mxu0 0.0
  %959 = vmatprep.subr.mxu0 0.0
  %960 = vmatpush2.msra.mxu0 0.0
  %961 = vmatprep.subr.mxu0 0.0
  %962 = vmatpush2.msra.mxu0 0.0
  %963 = vmatprep.subr.mxu0 0.0
  %964 = vmatpush2.msra.mxu0 0.0
  %965 = vmatprep.subr.mxu0 0.0
  %966 = vmatpush2.msra.mxu0 0.0
  %967 = vmatprep.subr.mxu0 0.0
  %968 = vmatpush2.msra.mxu0 0.0
  %969 = vmatprep.subr.mxu0 0.0
  %970 = vmatpush2.msra.mxu0 0.0
  %971 = vmatprep.subr.mxu0 0.0
  %972 = vmatpush2.msra.mxu0 0.0
  %973 = vmatprep.subr.mxu0 0.0
  %974 = vmatpush2.msra.mxu0 0.0
  %975 = vmatprep.subr.mxu0 0.0
  %976 = vmatpush2.msra.mxu0 %v918
  %977 = vmatprep.subr.mxu0 0.0
  %978 = vmatpush2.msra.mxu0 %v917
  %979 = vmatprep.subr.mxu0 0.0
  %980 = vmatpush2.msra.mxu0 %v916
  %981 = vmatprep.subr.mxu0 0.0
  %982 = vmatpush2.msra.mxu0 %v915
  %983 = vmatprep.mubr.f32.mxu0 %v110
  %984 = vmatmul.mubr.f32.gmra.mxu0 %v39
  %v985 = vpop.f32.mrf.mxu0
  %v986 = vadd.f32 0.0, %v985
  %v987 = vpop.f32.mrf.mxu0
  %988 = vmatprep.mubr.f32.mxu0 %v113
  %989 = vmatmul.mubr.f32.gmra.mxu0 %v41
  %v990 = vpop.f32.mrf.mxu0
  %v991 = vadd.f32 0.0, %v990
  %v992 = vpop.f32.mrf.mxu0
  %993 = vmatprep.mubr.f32.mxu0 %v116
  %994 = vmatmul.mubr.f32.gmra.mxu0 %v43
  %v995 = vpop.f32.mrf.mxu0
  %v996 = vadd.f32 0.0, %v995
  %v997 = vpop.f32.mrf.mxu0
  %998 = vmatprep.mubr.f32.mxu0 %v119
  %999 = vmatmul.mubr.f32.gmra.mxu0 %v45
  %v1000 = vpop.f32.mrf.mxu0
  %v1001 = vadd.f32 0.0, %v1000
  %v1002 = vpop.f32.mrf.mxu0
  %1003 = vmatprep.mubr.f32.mxu0 %v122
  %1004 = vmatmul.mubr.f32.gmra.mxu0 %v47
  %v1005 = vpop.f32.mrf.mxu0
  %v1006 = vadd.f32 0.0, %v1005
  %v1007 = vpop.f32.mrf.mxu0
  %1008 = vmatprep.mubr.f32.mxu0 %v125
  %1009 = vmatmul.mubr.f32.gmra.mxu0 %v49
  %v1010 = vpop.f32.mrf.mxu0
  %v1011 = vadd.f32 0.0, %v1010
  %v1012 = vpop.f32.mrf.mxu0
  %1013 = vmatprep.mubr.f32.mxu0 %v128
  %1014 = vmatmul.mubr.f32.gmra.mxu0 %v51
  %v1015 = vpop.f32.mrf.mxu0
  %v1016 = vadd.f32 0.0, %v1015
  %v1017 = vpop.f32.mrf.mxu0
  %1018 = vmatprep.mubr.f32.mxu0 %v131
  %1019 = vmatmul.mubr.f32.gmra.mxu0 %v53
  %v1020 = vpop.f32.mrf.mxu0
  %v1021 = vadd.f32 0.0, %v1020
  %v1022 = vpop.f32.mrf.mxu0
  %1023 = vmatprep.mubr.f32.mxu0 %v134
  %1024 = vmatmul.mubr.f32.gmra.mxu0 %v55
  %v1025 = vpop.f32.mrf.mxu0
  %v1026 = vadd.f32 0.0, %v1025
  %v1027 = vpop.f32.mrf.mxu0
  %1028 = vmatprep.mubr.f32.mxu0 %v137
  %1029 = vmatmul.mubr.f32.gmra.mxu0 %v57
  %v1030 = vpop.f32.mrf.mxu0
  %v1031 = vadd.f32 0.0, %v1030
  %v1032 = vpop.f32.mrf.mxu0
  %1033 = vmatprep.mubr.f32.mxu0 %v140
  %1034 = vmatmul.mubr.f32.gmra.mxu0 %v59
  %v1035 = vpop.f32.mrf.mxu0
  %v1036 = vadd.f32 0.0, %v1035
  %v1037 = vpop.f32.mrf.mxu0
  %1038 = vmatprep.mubr.f32.mxu0 %v143
  %1039 = vmatmul.mubr.f32.gmra.mxu0 %v61
  %v1040 = vpop.f32.mrf.mxu0
  %v1041 = vadd.f32 0.0, %v1040
  %v1042 = vpop.f32.mrf.mxu0
  %1043 = vmatprep.mubr.f32.mxu0 %v146
  %1044 = vmatmul.mubr.f32.gmra.mxu0 %v63
  %v1045 = vpop.f32.mrf.mxu0
  %v1046 = vadd.f32 0.0, %v1045
  %v1047 = vpop.f32.mrf.mxu0
  %1048 = vmatprep.mubr.f32.mxu0 %v149
  %1049 = vmatmul.mubr.f32.gmra.mxu0 %v65
  %v1050 = vpop.f32.mrf.mxu0
  %v1051 = vadd.f32 0.0, %v1050
  %v1052 = vpop.f32.mrf.mxu0
  %1053 = vmatprep.mubr.f32.mxu0 %v152
  %1054 = vmatmul.mubr.f32.gmra.mxu0 %v67
  %v1055 = vpop.f32.mrf.mxu0
  %v1056 = vadd.f32 0.0, %v1055
  %v1057 = vpop.f32.mrf.mxu0
  %1058 = vmatprep.mubr.f32.mxu0 %v155
  %1059 = vmatmul.mubr.f32.gmra.mxu0 %v69
  %v1060 = vpop.f32.mrf.mxu0
  %v1061 = vadd.f32 0.0, %v1060
  %v1062 = vpop.f32.mrf.mxu0
  %1063 = vmatprep.mubr.f32.mxu0 %v158
  %1064 = vmatmul.mubr.f32.gmra.mxu0 %v71
  %v1065 = vpop.f32.mrf.mxu0
  %v1066 = vadd.f32 0.0, %v1065
  %v1067 = vpop.f32.mrf.mxu0
  %1068 = vmatprep.mubr.f32.mxu0 %v161
  %1069 = vmatmul.mubr.f32.gmra.mxu0 %v73
  %v1070 = vpop.f32.mrf.mxu0
  %v1071 = vadd.f32 0.0, %v1070
  %v1072 = vpop.f32.mrf.mxu0
  %1073 = vmatprep.mubr.f32.mxu0 %v164
  %1074 = vmatmul.mubr.f32.gmra.mxu0 %v75
  %v1075 = vpop.f32.mrf.mxu0
  %v1076 = vadd.f32 0.0, %v1075
  %v1077 = vpop.f32.mrf.mxu0
  %1078 = vmatprep.mubr.f32.mxu0 %v167
  %1079 = vmatmul.mubr.f32.gmra.mxu0 %v77
  %v1080 = vpop.f32.mrf.mxu0
  %v1081 = vadd.f32 0.0, %v1080
  %v1082 = vpop.f32.mrf.mxu0
  %1083 = vmatprep.mubr.f32.mxu0 %v170
  %1084 = vmatmul.mubr.f32.gmra.mxu0 %v79
  %v1085 = vpop.f32.mrf.mxu0
  %v1086 = vadd.f32 0.0, %v1085
  %v1087 = vpop.f32.mrf.mxu0
  %1088 = vmatprep.mubr.f32.mxu0 %v173
  %1089 = vmatmul.mubr.f32.gmra.mxu0 %v81
  %v1090 = vpop.f32.mrf.mxu0
  %v1091 = vadd.f32 0.0, %v1090
  %v1092 = vpop.f32.mrf.mxu0
  %1093 = vmatprep.mubr.f32.mxu0 %v176
  %1094 = vmatmul.mubr.f32.gmra.mxu0 %v83
  %v1095 = vpop.f32.mrf.mxu0
  %v1096 = vadd.f32 0.0, %v1095
  %v1097 = vpop.f32.mrf.mxu0
  %1098 = vmatprep.mubr.f32.mxu0 %v179
  %1099 = vmatmul.mubr.f32.gmra.mxu0 %v85
  %v1100 = vpop.f32.mrf.mxu0
  %v1101 = vadd.f32 0.0, %v1100
  %v1102 = vpop.f32.mrf.mxu0
  %1103 = vdwg.mxu0
  %v1104 = vmax.f32 %v780, %v986
  %v1105 = vmax.f32 %v785, %v991
  %v1106 = vmax.f32 %v790, %v996
  %v1107 = vmax.f32 %v795, %v1001
  %v1108 = vmax.f32 %v800, %v1006
  %v1109 = vmax.f32 %v805, %v1011
  %v1110 = vmax.f32 %v810, %v1016
  %v1111 = vmax.f32 %v815, %v1021
  %v1112 = vmax.f32 %v820, %v1026
  %v1113 = vmax.f32 %v825, %v1031
  %v1114 = vmax.f32 %v830, %v1036
  %v1115 = vmax.f32 %v835, %v1041
  %v1116 = vmax.f32 %v840, %v1046
  %v1117 = vmax.f32 %v845, %v1051
  %v1118 = vmax.f32 %v850, %v1056
  %v1119 = vmax.f32 %v855, %v1061
  %v1120 = vmax.f32 %v860, %v1066
  %v1121 = vmax.f32 %v865, %v1071
  %v1122 = vmax.f32 %v870, %v1076
  %v1123 = vmax.f32 %v875, %v1081
  %v1124 = vmax.f32 %v880, %v1086
  %v1125 = vmax.f32 %v885, %v1091
  %v1126 = vmax.f32 %v890, %v1096
  %v1127 = vmax.f32 %v895, %v1101
  %v1128 = vmax.f32 %v1104, %v1105
  %v1129 = vmax.f32 %v1106, %v1107
  %v1130 = vmax.f32 %v1108, %v1109
  %v1131 = vmax.f32 %v1110, %v1111
  %v1132 = vmax.f32 %v1112, %v1113
  %v1133 = vmax.f32 %v1114, %v1115
  %v1134 = vmax.f32 %v1116, %v1117
  %v1135 = vmax.f32 %v1118, %v1119
  %v1136 = vmax.f32 %v1120, %v1121
  %v1137 = vmax.f32 %v1122, %v1123
  %v1138 = vmax.f32 %v1124, %v1125
  %v1139 = vmax.f32 %v1126, %v1127
  %v1140 = vadd.f32 %v1128, %v87
  %v1141 = vadd.f32 %v1129, %v87
  %v1142 = vadd.f32 %v1130, %v87
  %v1143 = vadd.f32 %v1131, %v87
  %v1144 = vadd.f32 %v1132, %v87
  %v1145 = vadd.f32 %v1133, %v87
  %v1146 = vadd.f32 %v1134, %v87
  %v1147 = vadd.f32 %v1135, %v87
  %v1148 = vadd.f32 %v1136, %v87
  %v1149 = vadd.f32 %v1137, %v87
  %v1150 = vadd.f32 %v1138, %v87
  %v1151 = vadd.f32 %v1139, %v87
  %v1152 = vmax.f32 %v1140, 0.0
  %v1153 = vmax.f32 %v1141, 0.0
  %v1154 = vmax.f32 %v1142, 0.0
  %v1155 = vmax.f32 %v1143, 0.0
  %v1156 = vmax.f32 %v1144, 0.0
  %v1157 = vmax.f32 %v1145, 0.0
  %v1158 = vmax.f32 %v1146, 0.0
  %v1159 = vmax.f32 %v1147, 0.0
  %v1160 = vmax.f32 %v1148, 0.0
  %v1161 = vmax.f32 %v1149, 0.0
  %v1162 = vmax.f32 %v1150, 0.0
  %v1163 = vmax.f32 %v1151, 0.0
  %v1164 = vpack.c.bf16 %v1153, %v1152
  %v1165 = vpack.c.bf16 %v1155, %v1154
  %v1166 = vpack.c.bf16 %v1157, %v1156
  %v1167 = vpack.c.bf16 %v1159, %v1158
  %v1168 = vpack.c.bf16 %v1161, %v1160
  %v1169 = vpack.c.bf16 %v1163, %v1162
  %v1176 = vunpack.c.l.b16 %v1164
  %v1177 = vunpack.c.h.b16 %v1164
  %v1178 = vunpack.c.l.b16 %v1165
  %v1179 = vunpack.c.h.b16 %v1165
  %v1180 = vunpack.c.l.b16 %v1166
  %v1181 = vunpack.c.h.b16 %v1166
  %v1182 = vunpack.c.l.b16 %v1167
  %v1183 = vunpack.c.h.b16 %v1167
  %v1184 = vunpack.c.l.b16 %v1168
  %v1185 = vunpack.c.h.b16 %v1168
  %v1186 = vunpack.c.l.b16 %v1169
  %v1187 = vunpack.c.h.b16 %v1169
  %v1188 = vpack.c.b16 %v1176, %v1176
  %v1189 = vpack.c.b16 %v1177, %v1177
  %v1190 = vpack.c.b16 %v1178, %v1178
  %v1191 = vpack.c.b16 %v1179, %v1179
  %v1192 = vpack.c.b16 %v1180, %v1180
  %v1193 = vpack.c.b16 %v1181, %v1181
  %v1194 = vpack.c.b16 %v1182, %v1182
  %v1195 = vpack.c.b16 %v1183, %v1183
  %v1196 = vpack.c.b16 %v1184, %v1184
  %v1197 = vpack.c.b16 %v1185, %v1185
  %v1198 = vpack.c.b16 %v1186, %v1186
  %v1199 = vpack.c.b16 %v1187, %v1187
  %s1212 = scalar_lea.vmem [#allocation2], 48
  %1213 = vst [vmem:[%s1212] sm:$0xf] %v1188
  %1214 = vst [vmem:[%s1212 + $0x4] sm:$0xf] %v1189
  %1215 = vst [vmem:[%s1212 + $0x8] sm:$0xf] %v1190
  %1216 = vst [vmem:[%s1212 + $0xc] sm:$0xf] %v1191
  %1217 = vst [vmem:[%s1212 + $0x10] sm:$0xf] %v1192
  %1218 = vst [vmem:[%s1212 + $0x14] sm:$0xf] %v1193
  %1219 = vst [vmem:[%s1212 + $0x18] sm:$0xf] %v1194
  %1220 = vst [vmem:[%s1212 + $0x1c] sm:$0xf] %v1195
  %1221 = vst [vmem:[%s1212 + $0x20] sm:$0xf] %v1196
  %1222 = vst [vmem:[%s1212 + $0x24] sm:$0xf] %v1197
  %1223 = vst [vmem:[%s1212 + $0x28] sm:$0xf] %v1198
  %1224 = vst [vmem:[%s1212 + $0x2c] sm:$0xf] %v1199
  %s1225 = scalar_lea.vmem %s0, 128
  %v1226 = vld [vmem:[%s1225] sm:$0xff]
  %v1227 = vld [vmem:[%s1225 + $0x8] sm:$0xff]
  %v1228 = vld [vmem:[%s1225 + $0x10] sm:$0xff]
  %v1229 = vld [vmem:[%s1225 + $0x18] sm:$0xff]
  %v1230 = vld [vmem:[%s1225 + $0x20] sm:$0xff]
  %v1231 = vld [vmem:[%s1225 + $0x28] sm:$0xff]
  %v1232 = vld [vmem:[%s1225 + $0x30] sm:$0xff]
  %v1233 = vld [vmem:[%s1225 + $0x38] sm:$0xff]
  %v1234 = vld [vmem:[%s1225 + $0x40] sm:$0xff]
  %v1235 = vld [vmem:[%s1225 + $0x48] sm:$0xff]
  %v1236 = vld [vmem:[%s1225 + $0x50] sm:$0xff]
  %v1237 = vld [vmem:[%s1225 + $0x58] sm:$0xff]
  %v1238 = vld [vmem:[%s1225 + $0x60] sm:$0xff]
  %v1239 = vld [vmem:[%s1225 + $0x68] sm:$0xff]
  %v1240 = vld [vmem:[%s1225 + $0x70] sm:$0xff]
  %v1241 = vld [vmem:[%s1225 + $0x78] sm:$0xff]
  %v1242 = vld [vmem:[%s1225 + $0x80] sm:$0xff]
  %v1243 = vld [vmem:[%s1225 + $0x88] sm:$0xff]
  %v1244 = vld [vmem:[%s1225 + $0x90] sm:$0xff]
  %v1245 = vld [vmem:[%s1225 + $0x98] sm:$0xff]
  %1246 = vmatprep.subr.mxu0 0.0
  %1247 = vmatpush1.msra.mxu0 %v1241
  %1248 = vmatprep.subr.mxu0 0.0
  %1249 = vmatpush1.msra.mxu0 %v1240
  %1250 = vmatprep.subr.mxu0 0.0
  %1251 = vmatpush1.msra.mxu0 %v1239
  %1252 = vmatprep.subr.mxu0 0.0
  %1253 = vmatpush1.msra.mxu0 %v1238
  %1254 = vmatprep.subr.mxu0 0.0
  %1255 = vmatpush1.msra.mxu0 %v1237
  %1256 = vmatprep.subr.mxu0 0.0
  %1257 = vmatpush1.msra.mxu0 %v1236
  %1258 = vmatprep.subr.mxu0 0.0
  %1259 = vmatpush1.msra.mxu0 %v1235
  %1260 = vmatprep.subr.mxu0 0.0
  %1261 = vmatpush1.msra.mxu0 %v1234
  %1262 = vmatprep.subr.mxu0 0.0
  %1263 = vmatpush1.msra.mxu0 %v1233
  %1264 = vmatprep.subr.mxu0 0.0
  %1265 = vmatpush1.msra.mxu0 %v1232
  %1266 = vmatprep.subr.mxu0 0.0
  %1267 = vmatpush1.msra.mxu0 %v1231
  %1268 = vmatprep.subr.mxu0 0.0
  %1269 = vmatpush1.msra.mxu0 %v1230
  %1270 = vmatprep.subr.mxu0 0.0
  %1271 = vmatpush1.msra.mxu0 %v1229
  %1272 = vmatprep.subr.mxu0 0.0
  %1273 = vmatpush1.msra.mxu0 %v1228
  %1274 = vmatprep.subr.mxu0 0.0
  %1275 = vmatpush1.msra.mxu0 %v1227
  %1276 = vmatprep.subr.mxu0 0.0
  %1277 = vmatpush1.msra.mxu0 %v1226
  %1278 = vmatprep.subr.mxu0 0.0
  %1279 = vmatpush2.msra.mxu0 0.0
  %1280 = vmatprep.subr.mxu0 0.0
  %1281 = vmatpush2.msra.mxu0 0.0
  %1282 = vmatprep.subr.mxu0 0.0
  %1283 = vmatpush2.msra.mxu0 0.0
  %1284 = vmatprep.subr.mxu0 0.0
  %1285 = vmatpush2.msra.mxu0 0.0
  %1286 = vmatprep.subr.mxu0 0.0
  %1287 = vmatpush2.msra.mxu0 0.0
  %1288 = vmatprep.subr.mxu0 0.0
  %1289 = vmatpush2.msra.mxu0 0.0
  %1290 = vmatprep.subr.mxu0 0.0
  %1291 = vmatpush2.msra.mxu0 0.0
  %1292 = vmatprep.subr.mxu0 0.0
  %1293 = vmatpush2.msra.mxu0 0.0
  %1294 = vmatprep.subr.mxu0 0.0
  %1295 = vmatpush2.msra.mxu0 0.0
  %1296 = vmatprep.subr.mxu0 0.0
  %1297 = vmatpush2.msra.mxu0 0.0
  %1298 = vmatprep.subr.mxu0 0.0
  %1299 = vmatpush2.msra.mxu0 0.0
  %1300 = vmatprep.subr.mxu0 0.0
  %1301 = vmatpush2.msra.mxu0 0.0
  %1302 = vmatprep.subr.mxu0 0.0
  %1303 = vmatpush2.msra.mxu0 %v1245
  %1304 = vmatprep.subr.mxu0 0.0
  %1305 = vmatpush2.msra.mxu0 %v1244
  %1306 = vmatprep.subr.mxu0 0.0
  %1307 = vmatpush2.msra.mxu0 %v1243
  %1308 = vmatprep.subr.mxu0 0.0
  %1309 = vmatpush2.msra.mxu0 %v1242
  %1310 = vmatprep.mubr.f32.mxu0 %v110
  %1311 = vmatmul.mubr.f32.gmra.mxu0 %v39
  %v1312 = vpop.f32.mrf.mxu0
  %v1313 = vadd.f32 0.0, %v1312
  %v1314 = vpop.f32.mrf.mxu0
  %1315 = vmatprep.mubr.f32.mxu0 %v113
  %1316 = vmatmul.mubr.f32.gmra.mxu0 %v41
  %v1317 = vpop.f32.mrf.mxu0
  %v1318 = vadd.f32 0.0, %v1317
  %v1319 = vpop.f32.mrf.mxu0
  %1320 = vmatprep.mubr.f32.mxu0 %v116
  %1321 = vmatmul.mubr.f32.gmra.mxu0 %v43
  %v1322 = vpop.f32.mrf.mxu0
  %v1323 = vadd.f32 0.0, %v1322
  %v1324 = vpop.f32.mrf.mxu0
  %1325 = vmatprep.mubr.f32.mxu0 %v119
  %1326 = vmatmul.mubr.f32.gmra.mxu0 %v45
  %v1327 = vpop.f32.mrf.mxu0
  %v1328 = vadd.f32 0.0, %v1327
  %v1329 = vpop.f32.mrf.mxu0
  %1330 = vmatprep.mubr.f32.mxu0 %v122
  %1331 = vmatmul.mubr.f32.gmra.mxu0 %v47
  %v1332 = vpop.f32.mrf.mxu0
  %v1333 = vadd.f32 0.0, %v1332
  %v1334 = vpop.f32.mrf.mxu0
  %1335 = vmatprep.mubr.f32.mxu0 %v125
  %1336 = vmatmul.mubr.f32.gmra.mxu0 %v49
  %v1337 = vpop.f32.mrf.mxu0
  %v1338 = vadd.f32 0.0, %v1337
  %v1339 = vpop.f32.mrf.mxu0
  %1340 = vmatprep.mubr.f32.mxu0 %v128
  %1341 = vmatmul.mubr.f32.gmra.mxu0 %v51
  %v1342 = vpop.f32.mrf.mxu0
  %v1343 = vadd.f32 0.0, %v1342
  %v1344 = vpop.f32.mrf.mxu0
  %1345 = vmatprep.mubr.f32.mxu0 %v131
  %1346 = vmatmul.mubr.f32.gmra.mxu0 %v53
  %v1347 = vpop.f32.mrf.mxu0
  %v1348 = vadd.f32 0.0, %v1347
  %v1349 = vpop.f32.mrf.mxu0
  %1350 = vmatprep.mubr.f32.mxu0 %v134
  %1351 = vmatmul.mubr.f32.gmra.mxu0 %v55
  %v1352 = vpop.f32.mrf.mxu0
  %v1353 = vadd.f32 0.0, %v1352
  %v1354 = vpop.f32.mrf.mxu0
  %1355 = vmatprep.mubr.f32.mxu0 %v137
  %1356 = vmatmul.mubr.f32.gmra.mxu0 %v57
  %v1357 = vpop.f32.mrf.mxu0
  %v1358 = vadd.f32 0.0, %v1357
  %v1359 = vpop.f32.mrf.mxu0
  %1360 = vmatprep.mubr.f32.mxu0 %v140
  %1361 = vmatmul.mubr.f32.gmra.mxu0 %v59
  %v1362 = vpop.f32.mrf.mxu0
  %v1363 = vadd.f32 0.0, %v1362
  %v1364 = vpop.f32.mrf.mxu0
  %1365 = vmatprep.mubr.f32.mxu0 %v143
  %1366 = vmatmul.mubr.f32.gmra.mxu0 %v61
  %v1367 = vpop.f32.mrf.mxu0
  %v1368 = vadd.f32 0.0, %v1367
  %v1369 = vpop.f32.mrf.mxu0
  %1370 = vmatprep.mubr.f32.mxu0 %v146
  %1371 = vmatmul.mubr.f32.gmra.mxu0 %v63
  %v1372 = vpop.f32.mrf.mxu0
  %v1373 = vadd.f32 0.0, %v1372
  %v1374 = vpop.f32.mrf.mxu0
  %1375 = vmatprep.mubr.f32.mxu0 %v149
  %1376 = vmatmul.mubr.f32.gmra.mxu0 %v65
  %v1377 = vpop.f32.mrf.mxu0
  %v1378 = vadd.f32 0.0, %v1377
  %v1379 = vpop.f32.mrf.mxu0
  %1380 = vmatprep.mubr.f32.mxu0 %v152
  %1381 = vmatmul.mubr.f32.gmra.mxu0 %v67
  %v1382 = vpop.f32.mrf.mxu0
  %v1383 = vadd.f32 0.0, %v1382
  %v1384 = vpop.f32.mrf.mxu0
  %1385 = vmatprep.mubr.f32.mxu0 %v155
  %1386 = vmatmul.mubr.f32.gmra.mxu0 %v69
  %v1387 = vpop.f32.mrf.mxu0
  %v1388 = vadd.f32 0.0, %v1387
  %v1389 = vpop.f32.mrf.mxu0
  %1390 = vmatprep.mubr.f32.mxu0 %v158
  %1391 = vmatmul.mubr.f32.gmra.mxu0 %v71
  %v1392 = vpop.f32.mrf.mxu0
  %v1393 = vadd.f32 0.0, %v1392
  %v1394 = vpop.f32.mrf.mxu0
  %1395 = vmatprep.mubr.f32.mxu0 %v161
  %1396 = vmatmul.mubr.f32.gmra.mxu0 %v73
  %v1397 = vpop.f32.mrf.mxu0
  %v1398 = vadd.f32 0.0, %v1397
  %v1399 = vpop.f32.mrf.mxu0
  %1400 = vmatprep.mubr.f32.mxu0 %v164
  %1401 = vmatmul.mubr.f32.gmra.mxu0 %v75
  %v1402 = vpop.f32.mrf.mxu0
  %v1403 = vadd.f32 0.0, %v1402
  %v1404 = vpop.f32.mrf.mxu0
  %1405 = vmatprep.mubr.f32.mxu0 %v167
  %1406 = vmatmul.mubr.f32.gmra.mxu0 %v77
  %v1407 = vpop.f32.mrf.mxu0
  %v1408 = vadd.f32 0.0, %v1407
  %v1409 = vpop.f32.mrf.mxu0
  %1410 = vmatprep.mubr.f32.mxu0 %v170
  %1411 = vmatmul.mubr.f32.gmra.mxu0 %v79
  %v1412 = vpop.f32.mrf.mxu0
  %v1413 = vadd.f32 0.0, %v1412
  %v1414 = vpop.f32.mrf.mxu0
  %1415 = vmatprep.mubr.f32.mxu0 %v173
  %1416 = vmatmul.mubr.f32.gmra.mxu0 %v81
  %v1417 = vpop.f32.mrf.mxu0
  %v1418 = vadd.f32 0.0, %v1417
  %v1419 = vpop.f32.mrf.mxu0
  %1420 = vmatprep.mubr.f32.mxu0 %v176
  %1421 = vmatmul.mubr.f32.gmra.mxu0 %v83
  %v1422 = vpop.f32.mrf.mxu0
  %v1423 = vadd.f32 0.0, %v1422
  %v1424 = vpop.f32.mrf.mxu0
  %1425 = vmatprep.mubr.f32.mxu0 %v179
  %1426 = vmatmul.mubr.f32.gmra.mxu0 %v85
  %v1427 = vpop.f32.mrf.mxu0
  %v1428 = vadd.f32 0.0, %v1427
  %v1429 = vpop.f32.mrf.mxu0
  %1430 = vdwg.mxu0
  %s1431 = scalar_lea.vmem %s0, 160
  %v1432 = vld [vmem:[%s1431] sm:$0xff]
  %v1433 = vld [vmem:[%s1431 + $0x8] sm:$0xff]
  %v1434 = vld [vmem:[%s1431 + $0x10] sm:$0xff]
  %v1435 = vld [vmem:[%s1431 + $0x18] sm:$0xff]
  %v1436 = vld [vmem:[%s1431 + $0x20] sm:$0xff]
  %v1437 = vld [vmem:[%s1431 + $0x28] sm:$0xff]
  %v1438 = vld [vmem:[%s1431 + $0x30] sm:$0xff]
  %v1439 = vld [vmem:[%s1431 + $0x38] sm:$0xff]
  %v1440 = vld [vmem:[%s1431 + $0x40] sm:$0xff]
  %v1441 = vld [vmem:[%s1431 + $0x48] sm:$0xff]
  %v1442 = vld [vmem:[%s1431 + $0x50] sm:$0xff]
  %v1443 = vld [vmem:[%s1431 + $0x58] sm:$0xff]
  %v1444 = vld [vmem:[%s1431 + $0x60] sm:$0xff]
  %v1445 = vld [vmem:[%s1431 + $0x68] sm:$0xff]
  %v1446 = vld [vmem:[%s1431 + $0x70] sm:$0xff]
  %v1447 = vld [vmem:[%s1431 + $0x78] sm:$0xff]
  %v1448 = vld [vmem:[%s1431 + $0x80] sm:$0xff]
  %v1449 = vld [vmem:[%s1431 + $0x88] sm:$0xff]
  %v1450 = vld [vmem:[%s1431 + $0x90] sm:$0xff]
  %v1451 = vld [vmem:[%s1431 + $0x98] sm:$0xff]
  %1452 = vmatprep.subr.mxu0 0.0
  %1453 = vmatpush1.msra.mxu0 %v1447
  %1454 = vmatprep.subr.mxu0 0.0
  %1455 = vmatpush1.msra.mxu0 %v1446
  %1456 = vmatprep.subr.mxu0 0.0
  %1457 = vmatpush1.msra.mxu0 %v1445
  %1458 = vmatprep.subr.mxu0 0.0
  %1459 = vmatpush1.msra.mxu0 %v1444
  %1460 = vmatprep.subr.mxu0 0.0
  %1461 = vmatpush1.msra.mxu0 %v1443
  %1462 = vmatprep.subr.mxu0 0.0
  %1463 = vmatpush1.msra.mxu0 %v1442
  %1464 = vmatprep.subr.mxu0 0.0
  %1465 = vmatpush1.msra.mxu0 %v1441
  %1466 = vmatprep.subr.mxu0 0.0
  %1467 = vmatpush1.msra.mxu0 %v1440
  %1468 = vmatprep.subr.mxu0 0.0
  %1469 = vmatpush1.msra.mxu0 %v1439
  %1470 = vmatprep.subr.mxu0 0.0
  %1471 = vmatpush1.msra.mxu0 %v1438
  %1472 = vmatprep.subr.mxu0 0.0
  %1473 = vmatpush1.msra.mxu0 %v1437
  %1474 = vmatprep.subr.mxu0 0.0
  %1475 = vmatpush1.msra.mxu0 %v1436
  %1476 = vmatprep.subr.mxu0 0.0
  %1477 = vmatpush1.msra.mxu0 %v1435
  %1478 = vmatprep.subr.mxu0 0.0
  %1479 = vmatpush1.msra.mxu0 %v1434
  %1480 = vmatprep.subr.mxu0 0.0
  %1481 = vmatpush1.msra.mxu0 %v1433
  %1482 = vmatprep.subr.mxu0 0.0
  %1483 = vmatpush1.msra.mxu0 %v1432
  %1484 = vmatprep.subr.mxu0 0.0
  %1485 = vmatpush2.msra.mxu0 0.0
  %1486 = vmatprep.subr.mxu0 0.0
  %1487 = vmatpush2.msra.mxu0 0.0
  %1488 = vmatprep.subr.mxu0 0.0
  %1489 = vmatpush2.msra.mxu0 0.0
  %1490 = vmatprep.subr.mxu0 0.0
  %1491 = vmatpush2.msra.mxu0 0.0
  %1492 = vmatprep.subr.mxu0 0.0
  %1493 = vmatpush2.msra.mxu0 0.0
  %1494 = vmatprep.subr.mxu0 0.0
  %1495 = vmatpush2.msra.mxu0 0.0
  %1496 = vmatprep.subr.mxu0 0.0
  %1497 = vmatpush2.msra.mxu0 0.0
  %1498 = vmatprep.subr.mxu0 0.0
  %1499 = vmatpush2.msra.mxu0 0.0
  %1500 = vmatprep.subr.mxu0 0.0
  %1501 = vmatpush2.msra.mxu0 0.0
  %1502 = vmatprep.subr.mxu0 0.0
  %1503 = vmatpush2.msra.mxu0 0.0
  %1504 = vmatprep.subr.mxu0 0.0
  %1505 = vmatpush2.msra.mxu0 0.0
  %1506 = vmatprep.subr.mxu0 0.0
  %1507 = vmatpush2.msra.mxu0 0.0
  %1508 = vmatprep.subr.mxu0 0.0
  %1509 = vmatpush2.msra.mxu0 %v1451
  %1510 = vmatprep.subr.mxu0 0.0
  %1511 = vmatpush2.msra.mxu0 %v1450
  %1512 = vmatprep.subr.mxu0 0.0
  %1513 = vmatpush2.msra.mxu0 %v1449
  %1514 = vmatprep.subr.mxu0 0.0
  %1515 = vmatpush2.msra.mxu0 %v1448
  %1516 = vmatprep.mubr.f32.mxu0 %v110
  %1517 = vmatmul.mubr.f32.gmra.mxu0 %v39
  %v1518 = vpop.f32.mrf.mxu0
  %v1519 = vadd.f32 0.0, %v1518
  %v1520 = vpop.f32.mrf.mxu0
  %1521 = vmatprep.mubr.f32.mxu0 %v113
  %1522 = vmatmul.mubr.f32.gmra.mxu0 %v41
  %v1523 = vpop.f32.mrf.mxu0
  %v1524 = vadd.f32 0.0, %v1523
  %v1525 = vpop.f32.mrf.mxu0
  %1526 = vmatprep.mubr.f32.mxu0 %v116
  %1527 = vmatmul.mubr.f32.gmra.mxu0 %v43
  %v1528 = vpop.f32.mrf.mxu0
  %v1529 = vadd.f32 0.0, %v1528
  %v1530 = vpop.f32.mrf.mxu0
  %1531 = vmatprep.mubr.f32.mxu0 %v119
  %1532 = vmatmul.mubr.f32.gmra.mxu0 %v45
  %v1533 = vpop.f32.mrf.mxu0
  %v1534 = vadd.f32 0.0, %v1533
  %v1535 = vpop.f32.mrf.mxu0
  %1536 = vmatprep.mubr.f32.mxu0 %v122
  %1537 = vmatmul.mubr.f32.gmra.mxu0 %v47
  %v1538 = vpop.f32.mrf.mxu0
  %v1539 = vadd.f32 0.0, %v1538
  %v1540 = vpop.f32.mrf.mxu0
  %1541 = vmatprep.mubr.f32.mxu0 %v125
  %1542 = vmatmul.mubr.f32.gmra.mxu0 %v49
  %v1543 = vpop.f32.mrf.mxu0
  %v1544 = vadd.f32 0.0, %v1543
  %v1545 = vpop.f32.mrf.mxu0
  %1546 = vmatprep.mubr.f32.mxu0 %v128
  %1547 = vmatmul.mubr.f32.gmra.mxu0 %v51
  %v1548 = vpop.f32.mrf.mxu0
  %v1549 = vadd.f32 0.0, %v1548
  %v1550 = vpop.f32.mrf.mxu0
  %1551 = vmatprep.mubr.f32.mxu0 %v131
  %1552 = vmatmul.mubr.f32.gmra.mxu0 %v53
  %v1553 = vpop.f32.mrf.mxu0
  %v1554 = vadd.f32 0.0, %v1553
  %v1555 = vpop.f32.mrf.mxu0
  %1556 = vmatprep.mubr.f32.mxu0 %v134
  %1557 = vmatmul.mubr.f32.gmra.mxu0 %v55
  %v1558 = vpop.f32.mrf.mxu0
  %v1559 = vadd.f32 0.0, %v1558
  %v1560 = vpop.f32.mrf.mxu0
  %1561 = vmatprep.mubr.f32.mxu0 %v137
  %1562 = vmatmul.mubr.f32.gmra.mxu0 %v57
  %v1563 = vpop.f32.mrf.mxu0
  %v1564 = vadd.f32 0.0, %v1563
  %v1565 = vpop.f32.mrf.mxu0
  %1566 = vmatprep.mubr.f32.mxu0 %v140
  %1567 = vmatmul.mubr.f32.gmra.mxu0 %v59
  %v1568 = vpop.f32.mrf.mxu0
  %v1569 = vadd.f32 0.0, %v1568
  %v1570 = vpop.f32.mrf.mxu0
  %1571 = vmatprep.mubr.f32.mxu0 %v143
  %1572 = vmatmul.mubr.f32.gmra.mxu0 %v61
  %v1573 = vpop.f32.mrf.mxu0
  %v1574 = vadd.f32 0.0, %v1573
  %v1575 = vpop.f32.mrf.mxu0
  %1576 = vmatprep.mubr.f32.mxu0 %v146
  %1577 = vmatmul.mubr.f32.gmra.mxu0 %v63
  %v1578 = vpop.f32.mrf.mxu0
  %v1579 = vadd.f32 0.0, %v1578
  %v1580 = vpop.f32.mrf.mxu0
  %1581 = vmatprep.mubr.f32.mxu0 %v149
  %1582 = vmatmul.mubr.f32.gmra.mxu0 %v65
  %v1583 = vpop.f32.mrf.mxu0
  %v1584 = vadd.f32 0.0, %v1583
  %v1585 = vpop.f32.mrf.mxu0
  %1586 = vmatprep.mubr.f32.mxu0 %v152
  %1587 = vmatmul.mubr.f32.gmra.mxu0 %v67
  %v1588 = vpop.f32.mrf.mxu0
  %v1589 = vadd.f32 0.0, %v1588
  %v1590 = vpop.f32.mrf.mxu0
  %1591 = vmatprep.mubr.f32.mxu0 %v155
  %1592 = vmatmul.mubr.f32.gmra.mxu0 %v69
  %v1593 = vpop.f32.mrf.mxu0
  %v1594 = vadd.f32 0.0, %v1593
  %v1595 = vpop.f32.mrf.mxu0
  %1596 = vmatprep.mubr.f32.mxu0 %v158
  %1597 = vmatmul.mubr.f32.gmra.mxu0 %v71
  %v1598 = vpop.f32.mrf.mxu0
  %v1599 = vadd.f32 0.0, %v1598
  %v1600 = vpop.f32.mrf.mxu0
  %1601 = vmatprep.mubr.f32.mxu0 %v161
  %1602 = vmatmul.mubr.f32.gmra.mxu0 %v73
  %v1603 = vpop.f32.mrf.mxu0
  %v1604 = vadd.f32 0.0, %v1603
  %v1605 = vpop.f32.mrf.mxu0
  %1606 = vmatprep.mubr.f32.mxu0 %v164
  %1607 = vmatmul.mubr.f32.gmra.mxu0 %v75
  %v1608 = vpop.f32.mrf.mxu0
  %v1609 = vadd.f32 0.0, %v1608
  %v1610 = vpop.f32.mrf.mxu0
  %1611 = vmatprep.mubr.f32.mxu0 %v167
  %1612 = vmatmul.mubr.f32.gmra.mxu0 %v77
  %v1613 = vpop.f32.mrf.mxu0
  %v1614 = vadd.f32 0.0, %v1613
  %v1615 = vpop.f32.mrf.mxu0
  %1616 = vmatprep.mubr.f32.mxu0 %v170
  %1617 = vmatmul.mubr.f32.gmra.mxu0 %v79
  %v1618 = vpop.f32.mrf.mxu0
  %v1619 = vadd.f32 0.0, %v1618
  %v1620 = vpop.f32.mrf.mxu0
  %1621 = vmatprep.mubr.f32.mxu0 %v173
  %1622 = vmatmul.mubr.f32.gmra.mxu0 %v81
  %v1623 = vpop.f32.mrf.mxu0
  %v1624 = vadd.f32 0.0, %v1623
  %v1625 = vpop.f32.mrf.mxu0
  %1626 = vmatprep.mubr.f32.mxu0 %v176
  %1627 = vmatmul.mubr.f32.gmra.mxu0 %v83
  %v1628 = vpop.f32.mrf.mxu0
  %v1629 = vadd.f32 0.0, %v1628
  %v1630 = vpop.f32.mrf.mxu0
  %1631 = vmatprep.mubr.f32.mxu0 %v179
  %1632 = vmatmul.mubr.f32.gmra.mxu0 %v85
  %v1633 = vpop.f32.mrf.mxu0
  %v1634 = vadd.f32 0.0, %v1633
  %v1635 = vpop.f32.mrf.mxu0
  %1636 = vdwg.mxu0
  %v1637 = vmax.f32 %v1313, %v1519
  %v1638 = vmax.f32 %v1318, %v1524
  %v1639 = vmax.f32 %v1323, %v1529
  %v1640 = vmax.f32 %v1328, %v1534
  %v1641 = vmax.f32 %v1333, %v1539
  %v1642 = vmax.f32 %v1338, %v1544
  %v1643 = vmax.f32 %v1343, %v1549
  %v1644 = vmax.f32 %v1348, %v1554
  %v1645 = vmax.f32 %v1353, %v1559
  %v1646 = vmax.f32 %v1358, %v1564
  %v1647 = vmax.f32 %v1363, %v1569
  %v1648 = vmax.f32 %v1368, %v1574
  %v1649 = vmax.f32 %v1373, %v1579
  %v1650 = vmax.f32 %v1378, %v1584
  %v1651 = vmax.f32 %v1383, %v1589
  %v1652 = vmax.f32 %v1388, %v1594
  %v1653 = vmax.f32 %v1393, %v1599
  %v1654 = vmax.f32 %v1398, %v1604
  %v1655 = vmax.f32 %v1403, %v1609
  %v1656 = vmax.f32 %v1408, %v1614
  %v1657 = vmax.f32 %v1413, %v1619
  %v1658 = vmax.f32 %v1418, %v1624
  %v1659 = vmax.f32 %v1423, %v1629
  %v1660 = vmax.f32 %v1428, %v1634
  %v1661 = vmax.f32 %v1637, %v1638
  %v1662 = vmax.f32 %v1639, %v1640
  %v1663 = vmax.f32 %v1641, %v1642
  %v1664 = vmax.f32 %v1643, %v1644
  %v1665 = vmax.f32 %v1645, %v1646
  %v1666 = vmax.f32 %v1647, %v1648
  %v1667 = vmax.f32 %v1649, %v1650
  %v1668 = vmax.f32 %v1651, %v1652
  %v1669 = vmax.f32 %v1653, %v1654
  %v1670 = vmax.f32 %v1655, %v1656
  %v1671 = vmax.f32 %v1657, %v1658
  %v1672 = vmax.f32 %v1659, %v1660
  %v1673 = vadd.f32 %v1661, %v87
  %v1674 = vadd.f32 %v1662, %v87
  %v1675 = vadd.f32 %v1663, %v87
  %v1676 = vadd.f32 %v1664, %v87
  %v1677 = vadd.f32 %v1665, %v87
  %v1678 = vadd.f32 %v1666, %v87
  %v1679 = vadd.f32 %v1667, %v87
  %v1680 = vadd.f32 %v1668, %v87
  %v1681 = vadd.f32 %v1669, %v87
  %v1682 = vadd.f32 %v1670, %v87
  %v1683 = vadd.f32 %v1671, %v87
  %v1684 = vadd.f32 %v1672, %v87
  %v1685 = vmax.f32 %v1673, 0.0
  %v1686 = vmax.f32 %v1674, 0.0
  %v1687 = vmax.f32 %v1675, 0.0
  %v1688 = vmax.f32 %v1676, 0.0
  %v1689 = vmax.f32 %v1677, 0.0
  %v1690 = vmax.f32 %v1678, 0.0
  %v1691 = vmax.f32 %v1679, 0.0
  %v1692 = vmax.f32 %v1680, 0.0
  %v1693 = vmax.f32 %v1681, 0.0
  %v1694 = vmax.f32 %v1682, 0.0
  %v1695 = vmax.f32 %v1683, 0.0
  %v1696 = vmax.f32 %v1684, 0.0
  %v1697 = vpack.c.bf16 %v1686, %v1685
  %v1698 = vpack.c.bf16 %v1688, %v1687
  %v1699 = vpack.c.bf16 %v1690, %v1689
  %v1700 = vpack.c.bf16 %v1692, %v1691
  %v1701 = vpack.c.bf16 %v1694, %v1693
  %v1702 = vpack.c.bf16 %v1696, %v1695
  %v1709 = vunpack.c.l.b16 %v1697
  %v1710 = vunpack.c.h.b16 %v1697
  %v1711 = vunpack.c.l.b16 %v1698
  %v1712 = vunpack.c.h.b16 %v1698
  %v1713 = vunpack.c.l.b16 %v1699
  %v1714 = vunpack.c.h.b16 %v1699
  %v1715 = vunpack.c.l.b16 %v1700
  %v1716 = vunpack.c.h.b16 %v1700
  %v1717 = vunpack.c.l.b16 %v1701
  %v1718 = vunpack.c.h.b16 %v1701
  %v1719 = vunpack.c.l.b16 %v1702
  %v1720 = vunpack.c.h.b16 %v1702
  %v1721 = vpack.c.b16 %v1709, %v1709
  %v1722 = vpack.c.b16 %v1710, %v1710
  %v1723 = vpack.c.b16 %v1711, %v1711
  %v1724 = vpack.c.b16 %v1712, %v1712
  %v1725 = vpack.c.b16 %v1713, %v1713
  %v1726 = vpack.c.b16 %v1714, %v1714
  %v1727 = vpack.c.b16 %v1715, %v1715
  %v1728 = vpack.c.b16 %v1716, %v1716
  %v1729 = vpack.c.b16 %v1717, %v1717
  %v1730 = vpack.c.b16 %v1718, %v1718
  %v1731 = vpack.c.b16 %v1719, %v1719
  %v1732 = vpack.c.b16 %v1720, %v1720
  %s1745 = scalar_lea.vmem [#allocation2], 96
  %1746 = vst [vmem:[%s1745] sm:$0xf] %v1721
  %1747 = vst [vmem:[%s1745 + $0x4] sm:$0xf] %v1722
  %1748 = vst [vmem:[%s1745 + $0x8] sm:$0xf] %v1723
  %1749 = vst [vmem:[%s1745 + $0xc] sm:$0xf] %v1724
  %1750 = vst [vmem:[%s1745 + $0x10] sm:$0xf] %v1725
  %1751 = vst [vmem:[%s1745 + $0x14] sm:$0xf] %v1726
  %1752 = vst [vmem:[%s1745 + $0x18] sm:$0xf] %v1727
  %1753 = vst [vmem:[%s1745 + $0x1c] sm:$0xf] %v1728
  %1754 = vst [vmem:[%s1745 + $0x20] sm:$0xf] %v1729
  %1755 = vst [vmem:[%s1745 + $0x24] sm:$0xf] %v1730
  %1756 = vst [vmem:[%s1745 + $0x28] sm:$0xf] %v1731
  %1757 = vst [vmem:[%s1745 + $0x2c] sm:$0xf] %v1732
  %s1758 = scalar_lea.vmem %s0, 192
  %v1759 = vld [vmem:[%s1758] sm:$0xff]
  %v1760 = vld [vmem:[%s1758 + $0x8] sm:$0xff]
  %v1761 = vld [vmem:[%s1758 + $0x10] sm:$0xff]
  %v1762 = vld [vmem:[%s1758 + $0x18] sm:$0xff]
  %v1763 = vld [vmem:[%s1758 + $0x20] sm:$0xff]
  %v1764 = vld [vmem:[%s1758 + $0x28] sm:$0xff]
  %v1765 = vld [vmem:[%s1758 + $0x30] sm:$0xff]
  %v1766 = vld [vmem:[%s1758 + $0x38] sm:$0xff]
  %v1767 = vld [vmem:[%s1758 + $0x40] sm:$0xff]
  %v1768 = vld [vmem:[%s1758 + $0x48] sm:$0xff]
  %v1769 = vld [vmem:[%s1758 + $0x50] sm:$0xff]
  %v1770 = vld [vmem:[%s1758 + $0x58] sm:$0xff]
  %v1771 = vld [vmem:[%s1758 + $0x60] sm:$0xff]
  %v1772 = vld [vmem:[%s1758 + $0x68] sm:$0xff]
  %v1773 = vld [vmem:[%s1758 + $0x70] sm:$0xff]
  %v1774 = vld [vmem:[%s1758 + $0x78] sm:$0xff]
  %v1775 = vld [vmem:[%s1758 + $0x80] sm:$0xff]
  %v1776 = vld [vmem:[%s1758 + $0x88] sm:$0xff]
  %v1777 = vld [vmem:[%s1758 + $0x90] sm:$0xff]
  %v1778 = vld [vmem:[%s1758 + $0x98] sm:$0xff]
  %1779 = vmatprep.subr.mxu0 0.0
  %1780 = vmatpush1.msra.mxu0 %v1774
  %1781 = vmatprep.subr.mxu0 0.0
  %1782 = vmatpush1.msra.mxu0 %v1773
  %1783 = vmatprep.subr.mxu0 0.0
  %1784 = vmatpush1.msra.mxu0 %v1772
  %1785 = vmatprep.subr.mxu0 0.0
  %1786 = vmatpush1.msra.mxu0 %v1771
  %1787 = vmatprep.subr.mxu0 0.0
  %1788 = vmatpush1.msra.mxu0 %v1770
  %1789 = vmatprep.subr.mxu0 0.0
  %1790 = vmatpush1.msra.mxu0 %v1769
  %1791 = vmatprep.subr.mxu0 0.0
  %1792 = vmatpush1.msra.mxu0 %v1768
  %1793 = vmatprep.subr.mxu0 0.0
  %1794 = vmatpush1.msra.mxu0 %v1767
  %1795 = vmatprep.subr.mxu0 0.0
  %1796 = vmatpush1.msra.mxu0 %v1766
  %1797 = vmatprep.subr.mxu0 0.0
  %1798 = vmatpush1.msra.mxu0 %v1765
  %1799 = vmatprep.subr.mxu0 0.0
  %1800 = vmatpush1.msra.mxu0 %v1764
  %1801 = vmatprep.subr.mxu0 0.0
  %1802 = vmatpush1.msra.mxu0 %v1763
  %1803 = vmatprep.subr.mxu0 0.0
  %1804 = vmatpush1.msra.mxu0 %v1762
  %1805 = vmatprep.subr.mxu0 0.0
  %1806 = vmatpush1.msra.mxu0 %v1761
  %1807 = vmatprep.subr.mxu0 0.0
  %1808 = vmatpush1.msra.mxu0 %v1760
  %1809 = vmatprep.subr.mxu0 0.0
  %1810 = vmatpush1.msra.mxu0 %v1759
  %1811 = vmatprep.subr.mxu0 0.0
  %1812 = vmatpush2.msra.mxu0 0.0
  %1813 = vmatprep.subr.mxu0 0.0
  %1814 = vmatpush2.msra.mxu0 0.0
  %1815 = vmatprep.subr.mxu0 0.0
  %1816 = vmatpush2.msra.mxu0 0.0
  %1817 = vmatprep.subr.mxu0 0.0
  %1818 = vmatpush2.msra.mxu0 0.0
  %1819 = vmatprep.subr.mxu0 0.0
  %1820 = vmatpush2.msra.mxu0 0.0
  %1821 = vmatprep.subr.mxu0 0.0
  %1822 = vmatpush2.msra.mxu0 0.0
  %1823 = vmatprep.subr.mxu0 0.0
  %1824 = vmatpush2.msra.mxu0 0.0
  %1825 = vmatprep.subr.mxu0 0.0
  %1826 = vmatpush2.msra.mxu0 0.0
  %1827 = vmatprep.subr.mxu0 0.0
  %1828 = vmatpush2.msra.mxu0 0.0
  %1829 = vmatprep.subr.mxu0 0.0
  %1830 = vmatpush2.msra.mxu0 0.0
  %1831 = vmatprep.subr.mxu0 0.0
  %1832 = vmatpush2.msra.mxu0 0.0
  %1833 = vmatprep.subr.mxu0 0.0
  %1834 = vmatpush2.msra.mxu0 0.0
  %1835 = vmatprep.subr.mxu0 0.0
  %1836 = vmatpush2.msra.mxu0 %v1778
  %1837 = vmatprep.subr.mxu0 0.0
  %1838 = vmatpush2.msra.mxu0 %v1777
  %1839 = vmatprep.subr.mxu0 0.0
  %1840 = vmatpush2.msra.mxu0 %v1776
  %1841 = vmatprep.subr.mxu0 0.0
  %1842 = vmatpush2.msra.mxu0 %v1775
  %1843 = vmatprep.mubr.f32.mxu0 %v110
  %1844 = vmatmul.mubr.f32.gmra.mxu0 %v39
  %v1845 = vpop.f32.mrf.mxu0
  %v1846 = vadd.f32 0.0, %v1845
  %v1847 = vpop.f32.mrf.mxu0
  %1848 = vmatprep.mubr.f32.mxu0 %v113
  %1849 = vmatmul.mubr.f32.gmra.mxu0 %v41
  %v1850 = vpop.f32.mrf.mxu0
  %v1851 = vadd.f32 0.0, %v1850
  %v1852 = vpop.f32.mrf.mxu0
  %1853 = vmatprep.mubr.f32.mxu0 %v116
  %1854 = vmatmul.mubr.f32.gmra.mxu0 %v43
  %v1855 = vpop.f32.mrf.mxu0
  %v1856 = vadd.f32 0.0, %v1855
  %v1857 = vpop.f32.mrf.mxu0
  %1858 = vmatprep.mubr.f32.mxu0 %v119
  %1859 = vmatmul.mubr.f32.gmra.mxu0 %v45
  %v1860 = vpop.f32.mrf.mxu0
  %v1861 = vadd.f32 0.0, %v1860
  %v1862 = vpop.f32.mrf.mxu0
  %1863 = vmatprep.mubr.f32.mxu0 %v122
  %1864 = vmatmul.mubr.f32.gmra.mxu0 %v47
  %v1865 = vpop.f32.mrf.mxu0
  %v1866 = vadd.f32 0.0, %v1865
  %v1867 = vpop.f32.mrf.mxu0
  %1868 = vmatprep.mubr.f32.mxu0 %v125
  %1869 = vmatmul.mubr.f32.gmra.mxu0 %v49
  %v1870 = vpop.f32.mrf.mxu0
  %v1871 = vadd.f32 0.0, %v1870
  %v1872 = vpop.f32.mrf.mxu0
  %1873 = vmatprep.mubr.f32.mxu0 %v128
  %1874 = vmatmul.mubr.f32.gmra.mxu0 %v51
  %v1875 = vpop.f32.mrf.mxu0
  %v1876 = vadd.f32 0.0, %v1875
  %v1877 = vpop.f32.mrf.mxu0
  %1878 = vmatprep.mubr.f32.mxu0 %v131
  %1879 = vmatmul.mubr.f32.gmra.mxu0 %v53
  %v1880 = vpop.f32.mrf.mxu0
  %v1881 = vadd.f32 0.0, %v1880
  %v1882 = vpop.f32.mrf.mxu0
  %1883 = vmatprep.mubr.f32.mxu0 %v134
  %1884 = vmatmul.mubr.f32.gmra.mxu0 %v55
  %v1885 = vpop.f32.mrf.mxu0
  %v1886 = vadd.f32 0.0, %v1885
  %v1887 = vpop.f32.mrf.mxu0
  %1888 = vmatprep.mubr.f32.mxu0 %v137
  %1889 = vmatmul.mubr.f32.gmra.mxu0 %v57
  %v1890 = vpop.f32.mrf.mxu0
  %v1891 = vadd.f32 0.0, %v1890
  %v1892 = vpop.f32.mrf.mxu0
  %1893 = vmatprep.mubr.f32.mxu0 %v140
  %1894 = vmatmul.mubr.f32.gmra.mxu0 %v59
  %v1895 = vpop.f32.mrf.mxu0
  %v1896 = vadd.f32 0.0, %v1895
  %v1897 = vpop.f32.mrf.mxu0
  %1898 = vmatprep.mubr.f32.mxu0 %v143
  %1899 = vmatmul.mubr.f32.gmra.mxu0 %v61
  %v1900 = vpop.f32.mrf.mxu0
  %v1901 = vadd.f32 0.0, %v1900
  %v1902 = vpop.f32.mrf.mxu0
  %1903 = vmatprep.mubr.f32.mxu0 %v146
  %1904 = vmatmul.mubr.f32.gmra.mxu0 %v63
  %v1905 = vpop.f32.mrf.mxu0
  %v1906 = vadd.f32 0.0, %v1905
  %v1907 = vpop.f32.mrf.mxu0
  %1908 = vmatprep.mubr.f32.mxu0 %v149
  %1909 = vmatmul.mubr.f32.gmra.mxu0 %v65
  %v1910 = vpop.f32.mrf.mxu0
  %v1911 = vadd.f32 0.0, %v1910
  %v1912 = vpop.f32.mrf.mxu0
  %1913 = vmatprep.mubr.f32.mxu0 %v152
  %1914 = vmatmul.mubr.f32.gmra.mxu0 %v67
  %v1915 = vpop.f32.mrf.mxu0
  %v1916 = vadd.f32 0.0, %v1915
  %v1917 = vpop.f32.mrf.mxu0
  %1918 = vmatprep.mubr.f32.mxu0 %v155
  %1919 = vmatmul.mubr.f32.gmra.mxu0 %v69
  %v1920 = vpop.f32.mrf.mxu0
  %v1921 = vadd.f32 0.0, %v1920
  %v1922 = vpop.f32.mrf.mxu0
  %1923 = vmatprep.mubr.f32.mxu0 %v158
  %1924 = vmatmul.mubr.f32.gmra.mxu0 %v71
  %v1925 = vpop.f32.mrf.mxu0
  %v1926 = vadd.f32 0.0, %v1925
  %v1927 = vpop.f32.mrf.mxu0
  %1928 = vmatprep.mubr.f32.mxu0 %v161
  %1929 = vmatmul.mubr.f32.gmra.mxu0 %v73
  %v1930 = vpop.f32.mrf.mxu0
  %v1931 = vadd.f32 0.0, %v1930
  %v1932 = vpop.f32.mrf.mxu0
  %1933 = vmatprep.mubr.f32.mxu0 %v164
  %1934 = vmatmul.mubr.f32.gmra.mxu0 %v75
  %v1935 = vpop.f32.mrf.mxu0
  %v1936 = vadd.f32 0.0, %v1935
  %v1937 = vpop.f32.mrf.mxu0
  %1938 = vmatprep.mubr.f32.mxu0 %v167
  %1939 = vmatmul.mubr.f32.gmra.mxu0 %v77
  %v1940 = vpop.f32.mrf.mxu0
  %v1941 = vadd.f32 0.0, %v1940
  %v1942 = vpop.f32.mrf.mxu0
  %1943 = vmatprep.mubr.f32.mxu0 %v170
  %1944 = vmatmul.mubr.f32.gmra.mxu0 %v79
  %v1945 = vpop.f32.mrf.mxu0
  %v1946 = vadd.f32 0.0, %v1945
  %v1947 = vpop.f32.mrf.mxu0
  %1948 = vmatprep.mubr.f32.mxu0 %v173
  %1949 = vmatmul.mubr.f32.gmra.mxu0 %v81
  %v1950 = vpop.f32.mrf.mxu0
  %v1951 = vadd.f32 0.0, %v1950
  %v1952 = vpop.f32.mrf.mxu0
  %1953 = vmatprep.mubr.f32.mxu0 %v176
  %1954 = vmatmul.mubr.f32.gmra.mxu0 %v83
  %v1955 = vpop.f32.mrf.mxu0
  %v1956 = vadd.f32 0.0, %v1955
  %v1957 = vpop.f32.mrf.mxu0
  %1958 = vmatprep.mubr.f32.mxu0 %v179
  %1959 = vmatmul.mubr.f32.gmra.mxu0 %v85
  %v1960 = vpop.f32.mrf.mxu0
  %v1961 = vadd.f32 0.0, %v1960
  %v1962 = vpop.f32.mrf.mxu0
  %1963 = vdwg.mxu0
  %s1964 = scalar_lea.vmem %s0, 224
  %v1965 = vld [vmem:[%s1964] sm:$0xff]
  %v1966 = vld [vmem:[%s1964 + $0x8] sm:$0xff]
  %v1967 = vld [vmem:[%s1964 + $0x10] sm:$0xff]
  %v1968 = vld [vmem:[%s1964 + $0x18] sm:$0xff]
  %v1969 = vld [vmem:[%s1964 + $0x20] sm:$0xff]
  %v1970 = vld [vmem:[%s1964 + $0x28] sm:$0xff]
  %v1971 = vld [vmem:[%s1964 + $0x30] sm:$0xff]
  %v1972 = vld [vmem:[%s1964 + $0x38] sm:$0xff]
  %v1973 = vld [vmem:[%s1964 + $0x40] sm:$0xff]
  %v1974 = vld [vmem:[%s1964 + $0x48] sm:$0xff]
  %v1975 = vld [vmem:[%s1964 + $0x50] sm:$0xff]
  %v1976 = vld [vmem:[%s1964 + $0x58] sm:$0xff]
  %v1977 = vld [vmem:[%s1964 + $0x60] sm:$0xff]
  %v1978 = vld [vmem:[%s1964 + $0x68] sm:$0xff]
  %v1979 = vld [vmem:[%s1964 + $0x70] sm:$0xff]
  %v1980 = vld [vmem:[%s1964 + $0x78] sm:$0xff]
  %v1981 = vld [vmem:[%s1964 + $0x80] sm:$0xff]
  %v1982 = vld [vmem:[%s1964 + $0x88] sm:$0xff]
  %v1983 = vld [vmem:[%s1964 + $0x90] sm:$0xff]
  %v1984 = vld [vmem:[%s1964 + $0x98] sm:$0xff]
  %1985 = vmatprep.subr.mxu0 0.0
  %1986 = vmatpush1.msra.mxu0 %v1980
  %1987 = vmatprep.subr.mxu0 0.0
  %1988 = vmatpush1.msra.mxu0 %v1979
  %1989 = vmatprep.subr.mxu0 0.0
  %1990 = vmatpush1.msra.mxu0 %v1978
  %1991 = vmatprep.subr.mxu0 0.0
  %1992 = vmatpush1.msra.mxu0 %v1977
  %1993 = vmatprep.subr.mxu0 0.0
  %1994 = vmatpush1.msra.mxu0 %v1976
  %1995 = vmatprep.subr.mxu0 0.0
  %1996 = vmatpush1.msra.mxu0 %v1975
  %1997 = vmatprep.subr.mxu0 0.0
  %1998 = vmatpush1.msra.mxu0 %v1974
  %1999 = vmatprep.subr.mxu0 0.0
  %2000 = vmatpush1.msra.mxu0 %v1973
  %2001 = vmatprep.subr.mxu0 0.0
  %2002 = vmatpush1.msra.mxu0 %v1972
  %2003 = vmatprep.subr.mxu0 0.0
  %2004 = vmatpush1.msra.mxu0 %v1971
  %2005 = vmatprep.subr.mxu0 0.0
  %2006 = vmatpush1.msra.mxu0 %v1970
  %2007 = vmatprep.subr.mxu0 0.0
  %2008 = vmatpush1.msra.mxu0 %v1969
  %2009 = vmatprep.subr.mxu0 0.0
  %2010 = vmatpush1.msra.mxu0 %v1968
  %2011 = vmatprep.subr.mxu0 0.0
  %2012 = vmatpush1.msra.mxu0 %v1967
  %2013 = vmatprep.subr.mxu0 0.0
  %2014 = vmatpush1.msra.mxu0 %v1966
  %2015 = vmatprep.subr.mxu0 0.0
  %2016 = vmatpush1.msra.mxu0 %v1965
  %2017 = vmatprep.subr.mxu0 0.0
  %2018 = vmatpush2.msra.mxu0 0.0
  %2019 = vmatprep.subr.mxu0 0.0
  %2020 = vmatpush2.msra.mxu0 0.0
  %2021 = vmatprep.subr.mxu0 0.0
  %2022 = vmatpush2.msra.mxu0 0.0
  %2023 = vmatprep.subr.mxu0 0.0
  %2024 = vmatpush2.msra.mxu0 0.0
  %2025 = vmatprep.subr.mxu0 0.0
  %2026 = vmatpush2.msra.mxu0 0.0
  %2027 = vmatprep.subr.mxu0 0.0
  %2028 = vmatpush2.msra.mxu0 0.0
  %2029 = vmatprep.subr.mxu0 0.0
  %2030 = vmatpush2.msra.mxu0 0.0
  %2031 = vmatprep.subr.mxu0 0.0
  %2032 = vmatpush2.msra.mxu0 0.0
  %2033 = vmatprep.subr.mxu0 0.0
  %2034 = vmatpush2.msra.mxu0 0.0
  %2035 = vmatprep.subr.mxu0 0.0
  %2036 = vmatpush2.msra.mxu0 0.0
  %2037 = vmatprep.subr.mxu0 0.0
  %2038 = vmatpush2.msra.mxu0 0.0
  %2039 = vmatprep.subr.mxu0 0.0
  %2040 = vmatpush2.msra.mxu0 0.0
  %2041 = vmatprep.subr.mxu0 0.0
  %2042 = vmatpush2.msra.mxu0 %v1984
  %2043 = vmatprep.subr.mxu0 0.0
  %2044 = vmatpush2.msra.mxu0 %v1983
  %2045 = vmatprep.subr.mxu0 0.0
  %2046 = vmatpush2.msra.mxu0 %v1982
  %2047 = vmatprep.subr.mxu0 0.0
  %2048 = vmatpush2.msra.mxu0 %v1981
  %2049 = vmatprep.mubr.f32.mxu0 %v110
  %2050 = vmatmul.mubr.f32.gmra.mxu0 %v39
  %v2051 = vpop.f32.mrf.mxu0
  %v2052 = vadd.f32 0.0, %v2051
  %v2053 = vpop.f32.mrf.mxu0
  %2054 = vmatprep.mubr.f32.mxu0 %v113
  %2055 = vmatmul.mubr.f32.gmra.mxu0 %v41
  %v2056 = vpop.f32.mrf.mxu0
  %v2057 = vadd.f32 0.0, %v2056
  %v2058 = vpop.f32.mrf.mxu0
  %2059 = vmatprep.mubr.f32.mxu0 %v116
  %2060 = vmatmul.mubr.f32.gmra.mxu0 %v43
  %v2061 = vpop.f32.mrf.mxu0
  %v2062 = vadd.f32 0.0, %v2061
  %v2063 = vpop.f32.mrf.mxu0
  %2064 = vmatprep.mubr.f32.mxu0 %v119
  %2065 = vmatmul.mubr.f32.gmra.mxu0 %v45
  %v2066 = vpop.f32.mrf.mxu0
  %v2067 = vadd.f32 0.0, %v2066
  %v2068 = vpop.f32.mrf.mxu0
  %2069 = vmatprep.mubr.f32.mxu0 %v122
  %2070 = vmatmul.mubr.f32.gmra.mxu0 %v47
  %v2071 = vpop.f32.mrf.mxu0
  %v2072 = vadd.f32 0.0, %v2071
  %v2073 = vpop.f32.mrf.mxu0
  %2074 = vmatprep.mubr.f32.mxu0 %v125
  %2075 = vmatmul.mubr.f32.gmra.mxu0 %v49
  %v2076 = vpop.f32.mrf.mxu0
  %v2077 = vadd.f32 0.0, %v2076
  %v2078 = vpop.f32.mrf.mxu0
  %2079 = vmatprep.mubr.f32.mxu0 %v128
  %2080 = vmatmul.mubr.f32.gmra.mxu0 %v51
  %v2081 = vpop.f32.mrf.mxu0
  %v2082 = vadd.f32 0.0, %v2081
  %v2083 = vpop.f32.mrf.mxu0
  %2084 = vmatprep.mubr.f32.mxu0 %v131
  %2085 = vmatmul.mubr.f32.gmra.mxu0 %v53
  %v2086 = vpop.f32.mrf.mxu0
  %v2087 = vadd.f32 0.0, %v2086
  %v2088 = vpop.f32.mrf.mxu0
  %2089 = vmatprep.mubr.f32.mxu0 %v134
  %2090 = vmatmul.mubr.f32.gmra.mxu0 %v55
  %v2091 = vpop.f32.mrf.mxu0
  %v2092 = vadd.f32 0.0, %v2091
  %v2093 = vpop.f32.mrf.mxu0
  %2094 = vmatprep.mubr.f32.mxu0 %v137
  %2095 = vmatmul.mubr.f32.gmra.mxu0 %v57
  %v2096 = vpop.f32.mrf.mxu0
  %v2097 = vadd.f32 0.0, %v2096
  %v2098 = vpop.f32.mrf.mxu0
  %2099 = vmatprep.mubr.f32.mxu0 %v140
  %2100 = vmatmul.mubr.f32.gmra.mxu0 %v59
  %v2101 = vpop.f32.mrf.mxu0
  %v2102 = vadd.f32 0.0, %v2101
  %v2103 = vpop.f32.mrf.mxu0
  %2104 = vmatprep.mubr.f32.mxu0 %v143
  %2105 = vmatmul.mubr.f32.gmra.mxu0 %v61
  %v2106 = vpop.f32.mrf.mxu0
  %v2107 = vadd.f32 0.0, %v2106
  %v2108 = vpop.f32.mrf.mxu0
  %2109 = vmatprep.mubr.f32.mxu0 %v146
  %2110 = vmatmul.mubr.f32.gmra.mxu0 %v63
  %v2111 = vpop.f32.mrf.mxu0
  %v2112 = vadd.f32 0.0, %v2111
  %v2113 = vpop.f32.mrf.mxu0
  %2114 = vmatprep.mubr.f32.mxu0 %v149
  %2115 = vmatmul.mubr.f32.gmra.mxu0 %v65
  %v2116 = vpop.f32.mrf.mxu0
  %v2117 = vadd.f32 0.0, %v2116
  %v2118 = vpop.f32.mrf.mxu0
  %2119 = vmatprep.mubr.f32.mxu0 %v152
  %2120 = vmatmul.mubr.f32.gmra.mxu0 %v67
  %v2121 = vpop.f32.mrf.mxu0
  %v2122 = vadd.f32 0.0, %v2121
  %v2123 = vpop.f32.mrf.mxu0
  %2124 = vmatprep.mubr.f32.mxu0 %v155
  %2125 = vmatmul.mubr.f32.gmra.mxu0 %v69
  %v2126 = vpop.f32.mrf.mxu0
  %v2127 = vadd.f32 0.0, %v2126
  %v2128 = vpop.f32.mrf.mxu0
  %2129 = vmatprep.mubr.f32.mxu0 %v158
  %2130 = vmatmul.mubr.f32.gmra.mxu0 %v71
  %v2131 = vpop.f32.mrf.mxu0
  %v2132 = vadd.f32 0.0, %v2131
  %v2133 = vpop.f32.mrf.mxu0
  %2134 = vmatprep.mubr.f32.mxu0 %v161
  %2135 = vmatmul.mubr.f32.gmra.mxu0 %v73
  %v2136 = vpop.f32.mrf.mxu0
  %v2137 = vadd.f32 0.0, %v2136
  %v2138 = vpop.f32.mrf.mxu0
  %2139 = vmatprep.mubr.f32.mxu0 %v164
  %2140 = vmatmul.mubr.f32.gmra.mxu0 %v75
  %v2141 = vpop.f32.mrf.mxu0
  %v2142 = vadd.f32 0.0, %v2141
  %v2143 = vpop.f32.mrf.mxu0
  %2144 = vmatprep.mubr.f32.mxu0 %v167
  %2145 = vmatmul.mubr.f32.gmra.mxu0 %v77
  %v2146 = vpop.f32.mrf.mxu0
  %v2147 = vadd.f32 0.0, %v2146
  %v2148 = vpop.f32.mrf.mxu0
  %2149 = vmatprep.mubr.f32.mxu0 %v170
  %2150 = vmatmul.mubr.f32.gmra.mxu0 %v79
  %v2151 = vpop.f32.mrf.mxu0
  %v2152 = vadd.f32 0.0, %v2151
  %v2153 = vpop.f32.mrf.mxu0
  %2154 = vmatprep.mubr.f32.mxu0 %v173
  %2155 = vmatmul.mubr.f32.gmra.mxu0 %v81
  %v2156 = vpop.f32.mrf.mxu0
  %v2157 = vadd.f32 0.0, %v2156
  %v2158 = vpop.f32.mrf.mxu0
  %2159 = vmatprep.mubr.f32.mxu0 %v176
  %2160 = vmatmul.mubr.f32.gmra.mxu0 %v83
  %v2161 = vpop.f32.mrf.mxu0
  %v2162 = vadd.f32 0.0, %v2161
  %v2163 = vpop.f32.mrf.mxu0
  %2164 = vmatprep.mubr.f32.mxu0 %v179
  %2165 = vmatmul.mubr.f32.gmra.mxu0 %v85
  %v2166 = vpop.f32.mrf.mxu0
  %v2167 = vadd.f32 0.0, %v2166
  %v2168 = vpop.f32.mrf.mxu0
  %2169 = vdwg.mxu0
  %v2170 = vmax.f32 %v1846, %v2052
  %v2171 = vmax.f32 %v1851, %v2057
  %v2172 = vmax.f32 %v1856, %v2062
  %v2173 = vmax.f32 %v1861, %v2067
  %v2174 = vmax.f32 %v1866, %v2072
  %v2175 = vmax.f32 %v1871, %v2077
  %v2176 = vmax.f32 %v1876, %v2082
  %v2177 = vmax.f32 %v1881, %v2087
  %v2178 = vmax.f32 %v1886, %v2092
  %v2179 = vmax.f32 %v1891, %v2097
  %v2180 = vmax.f32 %v1896, %v2102
  %v2181 = vmax.f32 %v1901, %v2107
  %v2182 = vmax.f32 %v1906, %v2112
  %v2183 = vmax.f32 %v1911, %v2117
  %v2184 = vmax.f32 %v1916, %v2122
  %v2185 = vmax.f32 %v1921, %v2127
  %v2186 = vmax.f32 %v1926, %v2132
  %v2187 = vmax.f32 %v1931, %v2137
  %v2188 = vmax.f32 %v1936, %v2142
  %v2189 = vmax.f32 %v1941, %v2147
  %v2190 = vmax.f32 %v1946, %v2152
  %v2191 = vmax.f32 %v1951, %v2157
  %v2192 = vmax.f32 %v1956, %v2162
  %v2193 = vmax.f32 %v1961, %v2167
  %v2194 = vmax.f32 %v2170, %v2171
  %v2195 = vmax.f32 %v2172, %v2173
  %v2196 = vmax.f32 %v2174, %v2175
  %v2197 = vmax.f32 %v2176, %v2177
  %v2198 = vmax.f32 %v2178, %v2179
  %v2199 = vmax.f32 %v2180, %v2181
  %v2200 = vmax.f32 %v2182, %v2183
  %v2201 = vmax.f32 %v2184, %v2185
  %v2202 = vmax.f32 %v2186, %v2187
  %v2203 = vmax.f32 %v2188, %v2189
  %v2204 = vmax.f32 %v2190, %v2191
  %v2205 = vmax.f32 %v2192, %v2193
  %v2206 = vadd.f32 %v2194, %v87
  %v2207 = vadd.f32 %v2195, %v87
  %v2208 = vadd.f32 %v2196, %v87
  %v2209 = vadd.f32 %v2197, %v87
  %v2210 = vadd.f32 %v2198, %v87
  %v2211 = vadd.f32 %v2199, %v87
  %v2212 = vadd.f32 %v2200, %v87
  %v2213 = vadd.f32 %v2201, %v87
  %v2214 = vadd.f32 %v2202, %v87
  %v2215 = vadd.f32 %v2203, %v87
  %v2216 = vadd.f32 %v2204, %v87
  %v2217 = vadd.f32 %v2205, %v87
  %v2218 = vmax.f32 %v2206, 0.0
  %v2219 = vmax.f32 %v2207, 0.0
  %v2220 = vmax.f32 %v2208, 0.0
  %v2221 = vmax.f32 %v2209, 0.0
  %v2222 = vmax.f32 %v2210, 0.0
  %v2223 = vmax.f32 %v2211, 0.0
  %v2224 = vmax.f32 %v2212, 0.0
  %v2225 = vmax.f32 %v2213, 0.0
  %v2226 = vmax.f32 %v2214, 0.0
  %v2227 = vmax.f32 %v2215, 0.0
  %v2228 = vmax.f32 %v2216, 0.0
  %v2229 = vmax.f32 %v2217, 0.0
  %v2230 = vpack.c.bf16 %v2219, %v2218
  %v2231 = vpack.c.bf16 %v2221, %v2220
  %v2232 = vpack.c.bf16 %v2223, %v2222
  %v2233 = vpack.c.bf16 %v2225, %v2224
  %v2234 = vpack.c.bf16 %v2227, %v2226
  %v2235 = vpack.c.bf16 %v2229, %v2228
  %v2242 = vunpack.c.l.b16 %v2230
  %v2243 = vunpack.c.h.b16 %v2230
  %v2244 = vunpack.c.l.b16 %v2231
  %v2245 = vunpack.c.h.b16 %v2231
  %v2246 = vunpack.c.l.b16 %v2232
  %v2247 = vunpack.c.h.b16 %v2232
  %v2248 = vunpack.c.l.b16 %v2233
  %v2249 = vunpack.c.h.b16 %v2233
  %v2250 = vunpack.c.l.b16 %v2234
  %v2251 = vunpack.c.h.b16 %v2234
  %v2252 = vunpack.c.l.b16 %v2235
  %v2253 = vunpack.c.h.b16 %v2235
  %v2254 = vpack.c.b16 %v2242, %v2242
  %v2255 = vpack.c.b16 %v2243, %v2243
  %v2256 = vpack.c.b16 %v2244, %v2244
  %v2257 = vpack.c.b16 %v2245, %v2245
  %v2258 = vpack.c.b16 %v2246, %v2246
  %v2259 = vpack.c.b16 %v2247, %v2247
  %v2260 = vpack.c.b16 %v2248, %v2248
  %v2261 = vpack.c.b16 %v2249, %v2249
  %v2262 = vpack.c.b16 %v2250, %v2250
  %v2263 = vpack.c.b16 %v2251, %v2251
  %v2264 = vpack.c.b16 %v2252, %v2252
  %v2265 = vpack.c.b16 %v2253, %v2253
  %s2278 = scalar_lea.vmem [#allocation2], 144
  %2279 = vst [vmem:[%s2278] sm:$0xf] %v2254
  %2280 = vst [vmem:[%s2278 + $0x4] sm:$0xf] %v2255
  %2281 = vst [vmem:[%s2278 + $0x8] sm:$0xf] %v2256
  %2282 = vst [vmem:[%s2278 + $0xc] sm:$0xf] %v2257
  %2283 = vst [vmem:[%s2278 + $0x10] sm:$0xf] %v2258
  %2284 = vst [vmem:[%s2278 + $0x14] sm:$0xf] %v2259
  %2285 = vst [vmem:[%s2278 + $0x18] sm:$0xf] %v2260
  %2286 = vst [vmem:[%s2278 + $0x1c] sm:$0xf] %v2261
  %2287 = vst [vmem:[%s2278 + $0x20] sm:$0xf] %v2262
  %2288 = vst [vmem:[%s2278 + $0x24] sm:$0xf] %v2263
  %2289 = vst [vmem:[%s2278 + $0x28] sm:$0xf] %v2264
  %2290 = vst [vmem:[%s2278 + $0x2c] sm:$0xf] %v2265
  %s2291 = scalar_lea.vmem %s0, 256
  %v2292 = vld [vmem:[%s2291] sm:$0xff]
  %v2293 = vld [vmem:[%s2291 + $0x8] sm:$0xff]
  %v2294 = vld [vmem:[%s2291 + $0x10] sm:$0xff]
  %v2295 = vld [vmem:[%s2291 + $0x18] sm:$0xff]
  %v2296 = vld [vmem:[%s2291 + $0x20] sm:$0xff]
  %v2297 = vld [vmem:[%s2291 + $0x28] sm:$0xff]
  %v2298 = vld [vmem:[%s2291 + $0x30] sm:$0xff]
  %v2299 = vld [vmem:[%s2291 + $0x38] sm:$0xff]
  %v2300 = vld [vmem:[%s2291 + $0x40] sm:$0xff]
  %v2301 = vld [vmem:[%s2291 + $0x48] sm:$0xff]
  %v2302 = vld [vmem:[%s2291 + $0x50] sm:$0xff]
  %v2303 = vld [vmem:[%s2291 + $0x58] sm:$0xff]
  %v2304 = vld [vmem:[%s2291 + $0x60] sm:$0xff]
  %v2305 = vld [vmem:[%s2291 + $0x68] sm:$0xff]
  %v2306 = vld [vmem:[%s2291 + $0x70] sm:$0xff]
  %v2307 = vld [vmem:[%s2291 + $0x78] sm:$0xff]
  %v2308 = vld [vmem:[%s2291 + $0x80] sm:$0xff]
  %v2309 = vld [vmem:[%s2291 + $0x88] sm:$0xff]
  %v2310 = vld [vmem:[%s2291 + $0x90] sm:$0xff]
  %v2311 = vld [vmem:[%s2291 + $0x98] sm:$0xff]
  %2312 = vmatprep.subr.mxu0 0.0
  %2313 = vmatpush1.msra.mxu0 %v2307
  %2314 = vmatprep.subr.mxu0 0.0
  %2315 = vmatpush1.msra.mxu0 %v2306
  %2316 = vmatprep.subr.mxu0 0.0
  %2317 = vmatpush1.msra.mxu0 %v2305
  %2318 = vmatprep.subr.mxu0 0.0
  %2319 = vmatpush1.msra.mxu0 %v2304
  %2320 = vmatprep.subr.mxu0 0.0
  %2321 = vmatpush1.msra.mxu0 %v2303
  %2322 = vmatprep.subr.mxu0 0.0
  %2323 = vmatpush1.msra.mxu0 %v2302
  %2324 = vmatprep.subr.mxu0 0.0
  %2325 = vmatpush1.msra.mxu0 %v2301
  %2326 = vmatprep.subr.mxu0 0.0
  %2327 = vmatpush1.msra.mxu0 %v2300
  %2328 = vmatprep.subr.mxu0 0.0
  %2329 = vmatpush1.msra.mxu0 %v2299
  %2330 = vmatprep.subr.mxu0 0.0
  %2331 = vmatpush1.msra.mxu0 %v2298
  %2332 = vmatprep.subr.mxu0 0.0
  %2333 = vmatpush1.msra.mxu0 %v2297
  %2334 = vmatprep.subr.mxu0 0.0
  %2335 = vmatpush1.msra.mxu0 %v2296
  %2336 = vmatprep.subr.mxu0 0.0
  %2337 = vmatpush1.msra.mxu0 %v2295
  %2338 = vmatprep.subr.mxu0 0.0
  %2339 = vmatpush1.msra.mxu0 %v2294
  %2340 = vmatprep.subr.mxu0 0.0
  %2341 = vmatpush1.msra.mxu0 %v2293
  %2342 = vmatprep.subr.mxu0 0.0
  %2343 = vmatpush1.msra.mxu0 %v2292
  %2344 = vmatprep.subr.mxu0 0.0
  %2345 = vmatpush2.msra.mxu0 0.0
  %2346 = vmatprep.subr.mxu0 0.0
  %2347 = vmatpush2.msra.mxu0 0.0
  %2348 = vmatprep.subr.mxu0 0.0
  %2349 = vmatpush2.msra.mxu0 0.0
  %2350 = vmatprep.subr.mxu0 0.0
  %2351 = vmatpush2.msra.mxu0 0.0
  %2352 = vmatprep.subr.mxu0 0.0
  %2353 = vmatpush2.msra.mxu0 0.0
  %2354 = vmatprep.subr.mxu0 0.0
  %2355 = vmatpush2.msra.mxu0 0.0
  %2356 = vmatprep.subr.mxu0 0.0
  %2357 = vmatpush2.msra.mxu0 0.0
  %2358 = vmatprep.subr.mxu0 0.0
  %2359 = vmatpush2.msra.mxu0 0.0
  %2360 = vmatprep.subr.mxu0 0.0
  %2361 = vmatpush2.msra.mxu0 0.0
  %2362 = vmatprep.subr.mxu0 0.0
  %2363 = vmatpush2.msra.mxu0 0.0
  %2364 = vmatprep.subr.mxu0 0.0
  %2365 = vmatpush2.msra.mxu0 0.0
  %2366 = vmatprep.subr.mxu0 0.0
  %2367 = vmatpush2.msra.mxu0 0.0
  %2368 = vmatprep.subr.mxu0 0.0
  %2369 = vmatpush2.msra.mxu0 %v2311
  %2370 = vmatprep.subr.mxu0 0.0
  %2371 = vmatpush2.msra.mxu0 %v2310
  %2372 = vmatprep.subr.mxu0 0.0
  %2373 = vmatpush2.msra.mxu0 %v2309
  %2374 = vmatprep.subr.mxu0 0.0
  %2375 = vmatpush2.msra.mxu0 %v2308
  %2376 = vmatprep.mubr.f32.mxu0 %v110
  %2377 = vmatmul.mubr.f32.gmra.mxu0 %v39
  %v2378 = vpop.f32.mrf.mxu0
  %v2379 = vadd.f32 0.0, %v2378
  %v2380 = vpop.f32.mrf.mxu0
  %2381 = vmatprep.mubr.f32.mxu0 %v113
  %2382 = vmatmul.mubr.f32.gmra.mxu0 %v41
  %v2383 = vpop.f32.mrf.mxu0
  %v2384 = vadd.f32 0.0, %v2383
  %v2385 = vpop.f32.mrf.mxu0
  %2386 = vmatprep.mubr.f32.mxu0 %v116
  %2387 = vmatmul.mubr.f32.gmra.mxu0 %v43
  %v2388 = vpop.f32.mrf.mxu0
  %v2389 = vadd.f32 0.0, %v2388
  %v2390 = vpop.f32.mrf.mxu0
  %2391 = vmatprep.mubr.f32.mxu0 %v119
  %2392 = vmatmul.mubr.f32.gmra.mxu0 %v45
  %v2393 = vpop.f32.mrf.mxu0
  %v2394 = vadd.f32 0.0, %v2393
  %v2395 = vpop.f32.mrf.mxu0
  %2396 = vmatprep.mubr.f32.mxu0 %v122
  %2397 = vmatmul.mubr.f32.gmra.mxu0 %v47
  %v2398 = vpop.f32.mrf.mxu0
  %v2399 = vadd.f32 0.0, %v2398
  %v2400 = vpop.f32.mrf.mxu0
  %2401 = vmatprep.mubr.f32.mxu0 %v125
  %2402 = vmatmul.mubr.f32.gmra.mxu0 %v49
  %v2403 = vpop.f32.mrf.mxu0
  %v2404 = vadd.f32 0.0, %v2403
  %v2405 = vpop.f32.mrf.mxu0
  %2406 = vmatprep.mubr.f32.mxu0 %v128
  %2407 = vmatmul.mubr.f32.gmra.mxu0 %v51
  %v2408 = vpop.f32.mrf.mxu0
  %v2409 = vadd.f32 0.0, %v2408
  %v2410 = vpop.f32.mrf.mxu0
  %2411 = vmatprep.mubr.f32.mxu0 %v131
  %2412 = vmatmul.mubr.f32.gmra.mxu0 %v53
  %v2413 = vpop.f32.mrf.mxu0
  %v2414 = vadd.f32 0.0, %v2413
  %v2415 = vpop.f32.mrf.mxu0
  %2416 = vmatprep.mubr.f32.mxu0 %v134
  %2417 = vmatmul.mubr.f32.gmra.mxu0 %v55
  %v2418 = vpop.f32.mrf.mxu0
  %v2419 = vadd.f32 0.0, %v2418
  %v2420 = vpop.f32.mrf.mxu0
  %2421 = vmatprep.mubr.f32.mxu0 %v137
  %2422 = vmatmul.mubr.f32.gmra.mxu0 %v57
  %v2423 = vpop.f32.mrf.mxu0
  %v2424 = vadd.f32 0.0, %v2423
  %v2425 = vpop.f32.mrf.mxu0
  %2426 = vmatprep.mubr.f32.mxu0 %v140
  %2427 = vmatmul.mubr.f32.gmra.mxu0 %v59
  %v2428 = vpop.f32.mrf.mxu0
  %v2429 = vadd.f32 0.0, %v2428
  %v2430 = vpop.f32.mrf.mxu0
  %2431 = vmatprep.mubr.f32.mxu0 %v143
  %2432 = vmatmul.mubr.f32.gmra.mxu0 %v61
  %v2433 = vpop.f32.mrf.mxu0
  %v2434 = vadd.f32 0.0, %v2433
  %v2435 = vpop.f32.mrf.mxu0
  %2436 = vmatprep.mubr.f32.mxu0 %v146
  %2437 = vmatmul.mubr.f32.gmra.mxu0 %v63
  %v2438 = vpop.f32.mrf.mxu0
  %v2439 = vadd.f32 0.0, %v2438
  %v2440 = vpop.f32.mrf.mxu0
  %2441 = vmatprep.mubr.f32.mxu0 %v149
  %2442 = vmatmul.mubr.f32.gmra.mxu0 %v65
  %v2443 = vpop.f32.mrf.mxu0
  %v2444 = vadd.f32 0.0, %v2443
  %v2445 = vpop.f32.mrf.mxu0
  %2446 = vmatprep.mubr.f32.mxu0 %v152
  %2447 = vmatmul.mubr.f32.gmra.mxu0 %v67
  %v2448 = vpop.f32.mrf.mxu0
  %v2449 = vadd.f32 0.0, %v2448
  %v2450 = vpop.f32.mrf.mxu0
  %2451 = vmatprep.mubr.f32.mxu0 %v155
  %2452 = vmatmul.mubr.f32.gmra.mxu0 %v69
  %v2453 = vpop.f32.mrf.mxu0
  %v2454 = vadd.f32 0.0, %v2453
  %v2455 = vpop.f32.mrf.mxu0
  %2456 = vmatprep.mubr.f32.mxu0 %v158
  %2457 = vmatmul.mubr.f32.gmra.mxu0 %v71
  %v2458 = vpop.f32.mrf.mxu0
  %v2459 = vadd.f32 0.0, %v2458
  %v2460 = vpop.f32.mrf.mxu0
  %2461 = vmatprep.mubr.f32.mxu0 %v161
  %2462 = vmatmul.mubr.f32.gmra.mxu0 %v73
  %v2463 = vpop.f32.mrf.mxu0
  %v2464 = vadd.f32 0.0, %v2463
  %v2465 = vpop.f32.mrf.mxu0
  %2466 = vmatprep.mubr.f32.mxu0 %v164
  %2467 = vmatmul.mubr.f32.gmra.mxu0 %v75
  %v2468 = vpop.f32.mrf.mxu0
  %v2469 = vadd.f32 0.0, %v2468
  %v2470 = vpop.f32.mrf.mxu0
  %2471 = vmatprep.mubr.f32.mxu0 %v167
  %2472 = vmatmul.mubr.f32.gmra.mxu0 %v77
  %v2473 = vpop.f32.mrf.mxu0
  %v2474 = vadd.f32 0.0, %v2473
  %v2475 = vpop.f32.mrf.mxu0
  %2476 = vmatprep.mubr.f32.mxu0 %v170
  %2477 = vmatmul.mubr.f32.gmra.mxu0 %v79
  %v2478 = vpop.f32.mrf.mxu0
  %v2479 = vadd.f32 0.0, %v2478
  %v2480 = vpop.f32.mrf.mxu0
  %2481 = vmatprep.mubr.f32.mxu0 %v173
  %2482 = vmatmul.mubr.f32.gmra.mxu0 %v81
  %v2483 = vpop.f32.mrf.mxu0
  %v2484 = vadd.f32 0.0, %v2483
  %v2485 = vpop.f32.mrf.mxu0
  %2486 = vmatprep.mubr.f32.mxu0 %v176
  %2487 = vmatmul.mubr.f32.gmra.mxu0 %v83
  %v2488 = vpop.f32.mrf.mxu0
  %v2489 = vadd.f32 0.0, %v2488
  %v2490 = vpop.f32.mrf.mxu0
  %2491 = vmatprep.mubr.f32.mxu0 %v179
  %2492 = vmatmul.mubr.f32.gmra.mxu0 %v85
  %v2493 = vpop.f32.mrf.mxu0
  %v2494 = vadd.f32 0.0, %v2493
  %v2495 = vpop.f32.mrf.mxu0
  %2496 = vdwg.mxu0
  %s2497 = scalar_lea.vmem %s0, 288
  %v2498 = vld [vmem:[%s2497] sm:$0xff]
  %v2499 = vld [vmem:[%s2497 + $0x8] sm:$0xff]
  %v2500 = vld [vmem:[%s2497 + $0x10] sm:$0xff]
  %v2501 = vld [vmem:[%s2497 + $0x18] sm:$0xff]
  %v2502 = vld [vmem:[%s2497 + $0x20] sm:$0xff]
  %v2503 = vld [vmem:[%s2497 + $0x28] sm:$0xff]
  %v2504 = vld [vmem:[%s2497 + $0x30] sm:$0xff]
  %v2505 = vld [vmem:[%s2497 + $0x38] sm:$0xff]
  %v2506 = vld [vmem:[%s2497 + $0x40] sm:$0xff]
  %v2507 = vld [vmem:[%s2497 + $0x48] sm:$0xff]
  %v2508 = vld [vmem:[%s2497 + $0x50] sm:$0xff]
  %v2509 = vld [vmem:[%s2497 + $0x58] sm:$0xff]
  %v2510 = vld [vmem:[%s2497 + $0x60] sm:$0xff]
  %v2511 = vld [vmem:[%s2497 + $0x68] sm:$0xff]
  %v2512 = vld [vmem:[%s2497 + $0x70] sm:$0xff]
  %v2513 = vld [vmem:[%s2497 + $0x78] sm:$0xff]
  %v2514 = vld [vmem:[%s2497 + $0x80] sm:$0xff]
  %v2515 = vld [vmem:[%s2497 + $0x88] sm:$0xff]
  %v2516 = vld [vmem:[%s2497 + $0x90] sm:$0xff]
  %v2517 = vld [vmem:[%s2497 + $0x98] sm:$0xff]
  %2518 = vmatprep.subr.mxu0 0.0
  %2519 = vmatpush1.msra.mxu0 %v2513
  %2520 = vmatprep.subr.mxu0 0.0
  %2521 = vmatpush1.msra.mxu0 %v2512
  %2522 = vmatprep.subr.mxu0 0.0
  %2523 = vmatpush1.msra.mxu0 %v2511
  %2524 = vmatprep.subr.mxu0 0.0
  %2525 = vmatpush1.msra.mxu0 %v2510
  %2526 = vmatprep.subr.mxu0 0.0
  %2527 = vmatpush1.msra.mxu0 %v2509
  %2528 = vmatprep.subr.mxu0 0.0
  %2529 = vmatpush1.msra.mxu0 %v2508
  %2530 = vmatprep.subr.mxu0 0.0
  %2531 = vmatpush1.msra.mxu0 %v2507
  %2532 = vmatprep.subr.mxu0 0.0
  %2533 = vmatpush1.msra.mxu0 %v2506
  %2534 = vmatprep.subr.mxu0 0.0
  %2535 = vmatpush1.msra.mxu0 %v2505
  %2536 = vmatprep.subr.mxu0 0.0
  %2537 = vmatpush1.msra.mxu0 %v2504
  %2538 = vmatprep.subr.mxu0 0.0
  %2539 = vmatpush1.msra.mxu0 %v2503
  %2540 = vmatprep.subr.mxu0 0.0
  %2541 = vmatpush1.msra.mxu0 %v2502
  %2542 = vmatprep.subr.mxu0 0.0
  %2543 = vmatpush1.msra.mxu0 %v2501
  %2544 = vmatprep.subr.mxu0 0.0
  %2545 = vmatpush1.msra.mxu0 %v2500
  %2546 = vmatprep.subr.mxu0 0.0
  %2547 = vmatpush1.msra.mxu0 %v2499
  %2548 = vmatprep.subr.mxu0 0.0
  %2549 = vmatpush1.msra.mxu0 %v2498
  %2550 = vmatprep.subr.mxu0 0.0
  %2551 = vmatpush2.msra.mxu0 0.0
  %2552 = vmatprep.subr.mxu0 0.0
  %2553 = vmatpush2.msra.mxu0 0.0
  %2554 = vmatprep.subr.mxu0 0.0
  %2555 = vmatpush2.msra.mxu0 0.0
  %2556 = vmatprep.subr.mxu0 0.0
  %2557 = vmatpush2.msra.mxu0 0.0
  %2558 = vmatprep.subr.mxu0 0.0
  %2559 = vmatpush2.msra.mxu0 0.0
  %2560 = vmatprep.subr.mxu0 0.0
  %2561 = vmatpush2.msra.mxu0 0.0
  %2562 = vmatprep.subr.mxu0 0.0
  %2563 = vmatpush2.msra.mxu0 0.0
  %2564 = vmatprep.subr.mxu0 0.0
  %2565 = vmatpush2.msra.mxu0 0.0
  %2566 = vmatprep.subr.mxu0 0.0
  %2567 = vmatpush2.msra.mxu0 0.0
  %2568 = vmatprep.subr.mxu0 0.0
  %2569 = vmatpush2.msra.mxu0 0.0
  %2570 = vmatprep.subr.mxu0 0.0
  %2571 = vmatpush2.msra.mxu0 0.0
  %2572 = vmatprep.subr.mxu0 0.0
  %2573 = vmatpush2.msra.mxu0 0.0
  %2574 = vmatprep.subr.mxu0 0.0
  %2575 = vmatpush2.msra.mxu0 %v2517
  %2576 = vmatprep.subr.mxu0 0.0
  %2577 = vmatpush2.msra.mxu0 %v2516
  %2578 = vmatprep.subr.mxu0 0.0
  %2579 = vmatpush2.msra.mxu0 %v2515
  %2580 = vmatprep.subr.mxu0 0.0
  %2581 = vmatpush2.msra.mxu0 %v2514
  %2582 = vmatprep.mubr.f32.mxu0 %v110
  %2583 = vmatmul.mubr.f32.gmra.mxu0 %v39
  %v2584 = vpop.f32.mrf.mxu0
  %v2585 = vadd.f32 0.0, %v2584
  %v2586 = vpop.f32.mrf.mxu0
  %2587 = vmatprep.mubr.f32.mxu0 %v113
  %2588 = vmatmul.mubr.f32.gmra.mxu0 %v41
  %v2589 = vpop.f32.mrf.mxu0
  %v2590 = vadd.f32 0.0, %v2589
  %v2591 = vpop.f32.mrf.mxu0
  %2592 = vmatprep.mubr.f32.mxu0 %v116
  %2593 = vmatmul.mubr.f32.gmra.mxu0 %v43
  %v2594 = vpop.f32.mrf.mxu0
  %v2595 = vadd.f32 0.0, %v2594
  %v2596 = vpop.f32.mrf.mxu0
  %2597 = vmatprep.mubr.f32.mxu0 %v119
  %2598 = vmatmul.mubr.f32.gmra.mxu0 %v45
  %v2599 = vpop.f32.mrf.mxu0
  %v2600 = vadd.f32 0.0, %v2599
  %v2601 = vpop.f32.mrf.mxu0
  %2602 = vmatprep.mubr.f32.mxu0 %v122
  %2603 = vmatmul.mubr.f32.gmra.mxu0 %v47
  %v2604 = vpop.f32.mrf.mxu0
  %v2605 = vadd.f32 0.0, %v2604
  %v2606 = vpop.f32.mrf.mxu0
  %2607 = vmatprep.mubr.f32.mxu0 %v125
  %2608 = vmatmul.mubr.f32.gmra.mxu0 %v49
  %v2609 = vpop.f32.mrf.mxu0
  %v2610 = vadd.f32 0.0, %v2609
  %v2611 = vpop.f32.mrf.mxu0
  %2612 = vmatprep.mubr.f32.mxu0 %v128
  %2613 = vmatmul.mubr.f32.gmra.mxu0 %v51
  %v2614 = vpop.f32.mrf.mxu0
  %v2615 = vadd.f32 0.0, %v2614
  %v2616 = vpop.f32.mrf.mxu0
  %2617 = vmatprep.mubr.f32.mxu0 %v131
  %2618 = vmatmul.mubr.f32.gmra.mxu0 %v53
  %v2619 = vpop.f32.mrf.mxu0
  %v2620 = vadd.f32 0.0, %v2619
  %v2621 = vpop.f32.mrf.mxu0
  %2622 = vmatprep.mubr.f32.mxu0 %v134
  %2623 = vmatmul.mubr.f32.gmra.mxu0 %v55
  %v2624 = vpop.f32.mrf.mxu0
  %v2625 = vadd.f32 0.0, %v2624
  %v2626 = vpop.f32.mrf.mxu0
  %2627 = vmatprep.mubr.f32.mxu0 %v137
  %2628 = vmatmul.mubr.f32.gmra.mxu0 %v57
  %v2629 = vpop.f32.mrf.mxu0
  %v2630 = vadd.f32 0.0, %v2629
  %v2631 = vpop.f32.mrf.mxu0
  %2632 = vmatprep.mubr.f32.mxu0 %v140
  %2633 = vmatmul.mubr.f32.gmra.mxu0 %v59
  %v2634 = vpop.f32.mrf.mxu0
  %v2635 = vadd.f32 0.0, %v2634
  %v2636 = vpop.f32.mrf.mxu0
  %2637 = vmatprep.mubr.f32.mxu0 %v143
  %2638 = vmatmul.mubr.f32.gmra.mxu0 %v61
  %v2639 = vpop.f32.mrf.mxu0
  %v2640 = vadd.f32 0.0, %v2639
  %v2641 = vpop.f32.mrf.mxu0
  %2642 = vmatprep.mubr.f32.mxu0 %v146
  %2643 = vmatmul.mubr.f32.gmra.mxu0 %v63
  %v2644 = vpop.f32.mrf.mxu0
  %v2645 = vadd.f32 0.0, %v2644
  %v2646 = vpop.f32.mrf.mxu0
  %2647 = vmatprep.mubr.f32.mxu0 %v149
  %2648 = vmatmul.mubr.f32.gmra.mxu0 %v65
  %v2649 = vpop.f32.mrf.mxu0
  %v2650 = vadd.f32 0.0, %v2649
  %v2651 = vpop.f32.mrf.mxu0
  %2652 = vmatprep.mubr.f32.mxu0 %v152
  %2653 = vmatmul.mubr.f32.gmra.mxu0 %v67
  %v2654 = vpop.f32.mrf.mxu0
  %v2655 = vadd.f32 0.0, %v2654
  %v2656 = vpop.f32.mrf.mxu0
  %2657 = vmatprep.mubr.f32.mxu0 %v155
  %2658 = vmatmul.mubr.f32.gmra.mxu0 %v69
  %v2659 = vpop.f32.mrf.mxu0
  %v2660 = vadd.f32 0.0, %v2659
  %v2661 = vpop.f32.mrf.mxu0
  %2662 = vmatprep.mubr.f32.mxu0 %v158
  %2663 = vmatmul.mubr.f32.gmra.mxu0 %v71
  %v2664 = vpop.f32.mrf.mxu0
  %v2665 = vadd.f32 0.0, %v2664
  %v2666 = vpop.f32.mrf.mxu0
  %2667 = vmatprep.mubr.f32.mxu0 %v161
  %2668 = vmatmul.mubr.f32.gmra.mxu0 %v73
  %v2669 = vpop.f32.mrf.mxu0
  %v2670 = vadd.f32 0.0, %v2669
  %v2671 = vpop.f32.mrf.mxu0
  %2672 = vmatprep.mubr.f32.mxu0 %v164
  %2673 = vmatmul.mubr.f32.gmra.mxu0 %v75
  %v2674 = vpop.f32.mrf.mxu0
  %v2675 = vadd.f32 0.0, %v2674
  %v2676 = vpop.f32.mrf.mxu0
  %2677 = vmatprep.mubr.f32.mxu0 %v167
  %2678 = vmatmul.mubr.f32.gmra.mxu0 %v77
  %v2679 = vpop.f32.mrf.mxu0
  %v2680 = vadd.f32 0.0, %v2679
  %v2681 = vpop.f32.mrf.mxu0
  %2682 = vmatprep.mubr.f32.mxu0 %v170
  %2683 = vmatmul.mubr.f32.gmra.mxu0 %v79
  %v2684 = vpop.f32.mrf.mxu0
  %v2685 = vadd.f32 0.0, %v2684
  %v2686 = vpop.f32.mrf.mxu0
  %2687 = vmatprep.mubr.f32.mxu0 %v173
  %2688 = vmatmul.mubr.f32.gmra.mxu0 %v81
  %v2689 = vpop.f32.mrf.mxu0
  %v2690 = vadd.f32 0.0, %v2689
  %v2691 = vpop.f32.mrf.mxu0
  %2692 = vmatprep.mubr.f32.mxu0 %v176
  %2693 = vmatmul.mubr.f32.gmra.mxu0 %v83
  %v2694 = vpop.f32.mrf.mxu0
  %v2695 = vadd.f32 0.0, %v2694
  %v2696 = vpop.f32.mrf.mxu0
  %2697 = vmatprep.mubr.f32.mxu0 %v179
  %2698 = vmatmul.mubr.f32.gmra.mxu0 %v85
  %v2699 = vpop.f32.mrf.mxu0
  %v2700 = vadd.f32 0.0, %v2699
  %v2701 = vpop.f32.mrf.mxu0
  %2702 = vdwg.mxu0
  %v2703 = vmax.f32 %v2379, %v2585
  %v2704 = vmax.f32 %v2384, %v2590
  %v2705 = vmax.f32 %v2389, %v2595
  %v2706 = vmax.f32 %v2394, %v2600
  %v2707 = vmax.f32 %v2399, %v2605
  %v2708 = vmax.f32 %v2404, %v2610
  %v2709 = vmax.f32 %v2409, %v2615
  %v2710 = vmax.f32 %v2414, %v2620
  %v2711 = vmax.f32 %v2419, %v2625
  %v2712 = vmax.f32 %v2424, %v2630
  %v2713 = vmax.f32 %v2429, %v2635
  %v2714 = vmax.f32 %v2434, %v2640
  %v2715 = vmax.f32 %v2439, %v2645
  %v2716 = vmax.f32 %v2444, %v2650
  %v2717 = vmax.f32 %v2449, %v2655
  %v2718 = vmax.f32 %v2454, %v2660
  %v2719 = vmax.f32 %v2459, %v2665
  %v2720 = vmax.f32 %v2464, %v2670
  %v2721 = vmax.f32 %v2469, %v2675
  %v2722 = vmax.f32 %v2474, %v2680
  %v2723 = vmax.f32 %v2479, %v2685
  %v2724 = vmax.f32 %v2484, %v2690
  %v2725 = vmax.f32 %v2489, %v2695
  %v2726 = vmax.f32 %v2494, %v2700
  %v2727 = vmax.f32 %v2703, %v2704
  %v2728 = vmax.f32 %v2705, %v2706
  %v2729 = vmax.f32 %v2707, %v2708
  %v2730 = vmax.f32 %v2709, %v2710
  %v2731 = vmax.f32 %v2711, %v2712
  %v2732 = vmax.f32 %v2713, %v2714
  %v2733 = vmax.f32 %v2715, %v2716
  %v2734 = vmax.f32 %v2717, %v2718
  %v2735 = vmax.f32 %v2719, %v2720
  %v2736 = vmax.f32 %v2721, %v2722
  %v2737 = vmax.f32 %v2723, %v2724
  %v2738 = vmax.f32 %v2725, %v2726
  %v2739 = vadd.f32 %v2727, %v87
  %v2740 = vadd.f32 %v2728, %v87
  %v2741 = vadd.f32 %v2729, %v87
  %v2742 = vadd.f32 %v2730, %v87
  %v2743 = vadd.f32 %v2731, %v87
  %v2744 = vadd.f32 %v2732, %v87
  %v2745 = vadd.f32 %v2733, %v87
  %v2746 = vadd.f32 %v2734, %v87
  %v2747 = vadd.f32 %v2735, %v87
  %v2748 = vadd.f32 %v2736, %v87
  %v2749 = vadd.f32 %v2737, %v87
  %v2750 = vadd.f32 %v2738, %v87
  %v2751 = vmax.f32 %v2739, 0.0
  %v2752 = vmax.f32 %v2740, 0.0
  %v2753 = vmax.f32 %v2741, 0.0
  %v2754 = vmax.f32 %v2742, 0.0
  %v2755 = vmax.f32 %v2743, 0.0
  %v2756 = vmax.f32 %v2744, 0.0
  %v2757 = vmax.f32 %v2745, 0.0
  %v2758 = vmax.f32 %v2746, 0.0
  %v2759 = vmax.f32 %v2747, 0.0
  %v2760 = vmax.f32 %v2748, 0.0
  %v2761 = vmax.f32 %v2749, 0.0
  %v2762 = vmax.f32 %v2750, 0.0
  %v2763 = vpack.c.bf16 %v2752, %v2751
  %v2764 = vpack.c.bf16 %v2754, %v2753
  %v2765 = vpack.c.bf16 %v2756, %v2755
  %v2766 = vpack.c.bf16 %v2758, %v2757
  %v2767 = vpack.c.bf16 %v2760, %v2759
  %v2768 = vpack.c.bf16 %v2762, %v2761
  %v2775 = vunpack.c.l.b16 %v2763
  %v2776 = vunpack.c.h.b16 %v2763
  %v2777 = vunpack.c.l.b16 %v2764
  %v2778 = vunpack.c.h.b16 %v2764
  %v2779 = vunpack.c.l.b16 %v2765
  %v2780 = vunpack.c.h.b16 %v2765
  %v2781 = vunpack.c.l.b16 %v2766
  %v2782 = vunpack.c.h.b16 %v2766
  %v2783 = vunpack.c.l.b16 %v2767
  %v2784 = vunpack.c.h.b16 %v2767
  %v2785 = vunpack.c.l.b16 %v2768
  %v2786 = vunpack.c.h.b16 %v2768
  %v2787 = vpack.c.b16 %v2775, %v2775
  %v2788 = vpack.c.b16 %v2776, %v2776
  %v2789 = vpack.c.b16 %v2777, %v2777
  %v2790 = vpack.c.b16 %v2778, %v2778
  %v2791 = vpack.c.b16 %v2779, %v2779
  %v2792 = vpack.c.b16 %v2780, %v2780
  %v2793 = vpack.c.b16 %v2781, %v2781
  %v2794 = vpack.c.b16 %v2782, %v2782
  %v2795 = vpack.c.b16 %v2783, %v2783
  %v2796 = vpack.c.b16 %v2784, %v2784
  %v2797 = vpack.c.b16 %v2785, %v2785
  %v2798 = vpack.c.b16 %v2786, %v2786
  %s2811 = scalar_lea.vmem [#allocation2], 192
  %2812 = vst [vmem:[%s2811] sm:$0xf] %v2787
  %2813 = vst [vmem:[%s2811 + $0x4] sm:$0xf] %v2788
  %2814 = vst [vmem:[%s2811 + $0x8] sm:$0xf] %v2789
  %2815 = vst [vmem:[%s2811 + $0xc] sm:$0xf] %v2790
  %2816 = vst [vmem:[%s2811 + $0x10] sm:$0xf] %v2791
  %2817 = vst [vmem:[%s2811 + $0x14] sm:$0xf] %v2792
  %2818 = vst [vmem:[%s2811 + $0x18] sm:$0xf] %v2793
  %2819 = vst [vmem:[%s2811 + $0x1c] sm:$0xf] %v2794
  %2820 = vst [vmem:[%s2811 + $0x20] sm:$0xf] %v2795
  %2821 = vst [vmem:[%s2811 + $0x24] sm:$0xf] %v2796
  %2822 = vst [vmem:[%s2811 + $0x28] sm:$0xf] %v2797
  %2823 = vst [vmem:[%s2811 + $0x2c] sm:$0xf] %v2798
  %s2824 = scalar_lea.vmem %s0, 320
  %v2825 = vld [vmem:[%s2824] sm:$0xff]
  %v2826 = vld [vmem:[%s2824 + $0x8] sm:$0xff]
  %v2827 = vld [vmem:[%s2824 + $0x10] sm:$0xff]
  %v2828 = vld [vmem:[%s2824 + $0x18] sm:$0xff]
  %v2829 = vld [vmem:[%s2824 + $0x20] sm:$0xff]
  %v2830 = vld [vmem:[%s2824 + $0x28] sm:$0xff]
  %v2831 = vld [vmem:[%s2824 + $0x30] sm:$0xff]
  %v2832 = vld [vmem:[%s2824 + $0x38] sm:$0xff]
  %v2833 = vld [vmem:[%s2824 + $0x40] sm:$0xff]
  %v2834 = vld [vmem:[%s2824 + $0x48] sm:$0xff]
  %v2835 = vld [vmem:[%s2824 + $0x50] sm:$0xff]
  %v2836 = vld [vmem:[%s2824 + $0x58] sm:$0xff]
  %v2837 = vld [vmem:[%s2824 + $0x60] sm:$0xff]
  %v2838 = vld [vmem:[%s2824 + $0x68] sm:$0xff]
  %v2839 = vld [vmem:[%s2824 + $0x70] sm:$0xff]
  %v2840 = vld [vmem:[%s2824 + $0x78] sm:$0xff]
  %v2841 = vld [vmem:[%s2824 + $0x80] sm:$0xff]
  %v2842 = vld [vmem:[%s2824 + $0x88] sm:$0xff]
  %v2843 = vld [vmem:[%s2824 + $0x90] sm:$0xff]
  %v2844 = vld [vmem:[%s2824 + $0x98] sm:$0xff]
  %2845 = vmatprep.subr.mxu0 0.0
  %2846 = vmatpush1.msra.mxu0 %v2840
  %2847 = vmatprep.subr.mxu0 0.0
  %2848 = vmatpush1.msra.mxu0 %v2839
  %2849 = vmatprep.subr.mxu0 0.0
  %2850 = vmatpush1.msra.mxu0 %v2838
  %2851 = vmatprep.subr.mxu0 0.0
  %2852 = vmatpush1.msra.mxu0 %v2837
  %2853 = vmatprep.subr.mxu0 0.0
  %2854 = vmatpush1.msra.mxu0 %v2836
  %2855 = vmatprep.subr.mxu0 0.0
  %2856 = vmatpush1.msra.mxu0 %v2835
  %2857 = vmatprep.subr.mxu0 0.0
  %2858 = vmatpush1.msra.mxu0 %v2834
  %2859 = vmatprep.subr.mxu0 0.0
  %2860 = vmatpush1.msra.mxu0 %v2833
  %2861 = vmatprep.subr.mxu0 0.0
  %2862 = vmatpush1.msra.mxu0 %v2832
  %2863 = vmatprep.subr.mxu0 0.0
  %2864 = vmatpush1.msra.mxu0 %v2831
  %2865 = vmatprep.subr.mxu0 0.0
  %2866 = vmatpush1.msra.mxu0 %v2830
  %2867 = vmatprep.subr.mxu0 0.0
  %2868 = vmatpush1.msra.mxu0 %v2829
  %2869 = vmatprep.subr.mxu0 0.0
  %2870 = vmatpush1.msra.mxu0 %v2828
  %2871 = vmatprep.subr.mxu0 0.0
  %2872 = vmatpush1.msra.mxu0 %v2827
  %2873 = vmatprep.subr.mxu0 0.0
  %2874 = vmatpush1.msra.mxu0 %v2826
  %2875 = vmatprep.subr.mxu0 0.0
  %2876 = vmatpush1.msra.mxu0 %v2825
  %2877 = vmatprep.subr.mxu0 0.0
  %2878 = vmatpush2.msra.mxu0 0.0
  %2879 = vmatprep.subr.mxu0 0.0
  %2880 = vmatpush2.msra.mxu0 0.0
  %2881 = vmatprep.subr.mxu0 0.0
  %2882 = vmatpush2.msra.mxu0 0.0
  %2883 = vmatprep.subr.mxu0 0.0
  %2884 = vmatpush2.msra.mxu0 0.0
  %2885 = vmatprep.subr.mxu0 0.0
  %2886 = vmatpush2.msra.mxu0 0.0
  %2887 = vmatprep.subr.mxu0 0.0
  %2888 = vmatpush2.msra.mxu0 0.0
  %2889 = vmatprep.subr.mxu0 0.0
  %2890 = vmatpush2.msra.mxu0 0.0
  %2891 = vmatprep.subr.mxu0 0.0
  %2892 = vmatpush2.msra.mxu0 0.0
  %2893 = vmatprep.subr.mxu0 0.0
  %2894 = vmatpush2.msra.mxu0 0.0
  %2895 = vmatprep.subr.mxu0 0.0
  %2896 = vmatpush2.msra.mxu0 0.0
  %2897 = vmatprep.subr.mxu0 0.0
  %2898 = vmatpush2.msra.mxu0 0.0
  %2899 = vmatprep.subr.mxu0 0.0
  %2900 = vmatpush2.msra.mxu0 0.0
  %2901 = vmatprep.subr.mxu0 0.0
  %2902 = vmatpush2.msra.mxu0 %v2844
  %2903 = vmatprep.subr.mxu0 0.0
  %2904 = vmatpush2.msra.mxu0 %v2843
  %2905 = vmatprep.subr.mxu0 0.0
  %2906 = vmatpush2.msra.mxu0 %v2842
  %2907 = vmatprep.subr.mxu0 0.0
  %2908 = vmatpush2.msra.mxu0 %v2841
  %2909 = vmatprep.mubr.f32.mxu0 %v110
  %2910 = vmatmul.mubr.f32.gmra.mxu0 %v39
  %v2911 = vpop.f32.mrf.mxu0
  %v2912 = vadd.f32 0.0, %v2911
  %v2913 = vpop.f32.mrf.mxu0
  %2914 = vmatprep.mubr.f32.mxu0 %v113
  %2915 = vmatmul.mubr.f32.gmra.mxu0 %v41
  %v2916 = vpop.f32.mrf.mxu0
  %v2917 = vadd.f32 0.0, %v2916
  %v2918 = vpop.f32.mrf.mxu0
  %2919 = vmatprep.mubr.f32.mxu0 %v116
  %2920 = vmatmul.mubr.f32.gmra.mxu0 %v43
  %v2921 = vpop.f32.mrf.mxu0
  %v2922 = vadd.f32 0.0, %v2921
  %v2923 = vpop.f32.mrf.mxu0
  %2924 = vmatprep.mubr.f32.mxu0 %v119
  %2925 = vmatmul.mubr.f32.gmra.mxu0 %v45
  %v2926 = vpop.f32.mrf.mxu0
  %v2927 = vadd.f32 0.0, %v2926
  %v2928 = vpop.f32.mrf.mxu0
  %2929 = vmatprep.mubr.f32.mxu0 %v122
  %2930 = vmatmul.mubr.f32.gmra.mxu0 %v47
  %v2931 = vpop.f32.mrf.mxu0
  %v2932 = vadd.f32 0.0, %v2931
  %v2933 = vpop.f32.mrf.mxu0
  %2934 = vmatprep.mubr.f32.mxu0 %v125
  %2935 = vmatmul.mubr.f32.gmra.mxu0 %v49
  %v2936 = vpop.f32.mrf.mxu0
  %v2937 = vadd.f32 0.0, %v2936
  %v2938 = vpop.f32.mrf.mxu0
  %2939 = vmatprep.mubr.f32.mxu0 %v128
  %2940 = vmatmul.mubr.f32.gmra.mxu0 %v51
  %v2941 = vpop.f32.mrf.mxu0
  %v2942 = vadd.f32 0.0, %v2941
  %v2943 = vpop.f32.mrf.mxu0
  %2944 = vmatprep.mubr.f32.mxu0 %v131
  %2945 = vmatmul.mubr.f32.gmra.mxu0 %v53
  %v2946 = vpop.f32.mrf.mxu0
  %v2947 = vadd.f32 0.0, %v2946
  %v2948 = vpop.f32.mrf.mxu0
  %2949 = vmatprep.mubr.f32.mxu0 %v134
  %2950 = vmatmul.mubr.f32.gmra.mxu0 %v55
  %v2951 = vpop.f32.mrf.mxu0
  %v2952 = vadd.f32 0.0, %v2951
  %v2953 = vpop.f32.mrf.mxu0
  %2954 = vmatprep.mubr.f32.mxu0 %v137
  %2955 = vmatmul.mubr.f32.gmra.mxu0 %v57
  %v2956 = vpop.f32.mrf.mxu0
  %v2957 = vadd.f32 0.0, %v2956
  %v2958 = vpop.f32.mrf.mxu0
  %2959 = vmatprep.mubr.f32.mxu0 %v140
  %2960 = vmatmul.mubr.f32.gmra.mxu0 %v59
  %v2961 = vpop.f32.mrf.mxu0
  %v2962 = vadd.f32 0.0, %v2961
  %v2963 = vpop.f32.mrf.mxu0
  %2964 = vmatprep.mubr.f32.mxu0 %v143
  %2965 = vmatmul.mubr.f32.gmra.mxu0 %v61
  %v2966 = vpop.f32.mrf.mxu0
  %v2967 = vadd.f32 0.0, %v2966
  %v2968 = vpop.f32.mrf.mxu0
  %2969 = vmatprep.mubr.f32.mxu0 %v146
  %2970 = vmatmul.mubr.f32.gmra.mxu0 %v63
  %v2971 = vpop.f32.mrf.mxu0
  %v2972 = vadd.f32 0.0, %v2971
  %v2973 = vpop.f32.mrf.mxu0
  %2974 = vmatprep.mubr.f32.mxu0 %v149
  %2975 = vmatmul.mubr.f32.gmra.mxu0 %v65
  %v2976 = vpop.f32.mrf.mxu0
  %v2977 = vadd.f32 0.0, %v2976
  %v2978 = vpop.f32.mrf.mxu0
  %2979 = vmatprep.mubr.f32.mxu0 %v152
  %2980 = vmatmul.mubr.f32.gmra.mxu0 %v67
  %v2981 = vpop.f32.mrf.mxu0
  %v2982 = vadd.f32 0.0, %v2981
  %v2983 = vpop.f32.mrf.mxu0
  %2984 = vmatprep.mubr.f32.mxu0 %v155
  %2985 = vmatmul.mubr.f32.gmra.mxu0 %v69
  %v2986 = vpop.f32.mrf.mxu0
  %v2987 = vadd.f32 0.0, %v2986
  %v2988 = vpop.f32.mrf.mxu0
  %2989 = vmatprep.mubr.f32.mxu0 %v158
  %2990 = vmatmul.mubr.f32.gmra.mxu0 %v71
  %v2991 = vpop.f32.mrf.mxu0
  %v2992 = vadd.f32 0.0, %v2991
  %v2993 = vpop.f32.mrf.mxu0
  %2994 = vmatprep.mubr.f32.mxu0 %v161
  %2995 = vmatmul.mubr.f32.gmra.mxu0 %v73
  %v2996 = vpop.f32.mrf.mxu0
  %v2997 = vadd.f32 0.0, %v2996
  %v2998 = vpop.f32.mrf.mxu0
  %2999 = vmatprep.mubr.f32.mxu0 %v164
  %3000 = vmatmul.mubr.f32.gmra.mxu0 %v75
  %v3001 = vpop.f32.mrf.mxu0
  %v3002 = vadd.f32 0.0, %v3001
  %v3003 = vpop.f32.mrf.mxu0
  %3004 = vmatprep.mubr.f32.mxu0 %v167
  %3005 = vmatmul.mubr.f32.gmra.mxu0 %v77
  %v3006 = vpop.f32.mrf.mxu0
  %v3007 = vadd.f32 0.0, %v3006
  %v3008 = vpop.f32.mrf.mxu0
  %3009 = vmatprep.mubr.f32.mxu0 %v170
  %3010 = vmatmul.mubr.f32.gmra.mxu0 %v79
  %v3011 = vpop.f32.mrf.mxu0
  %v3012 = vadd.f32 0.0, %v3011
  %v3013 = vpop.f32.mrf.mxu0
  %3014 = vmatprep.mubr.f32.mxu0 %v173
  %3015 = vmatmul.mubr.f32.gmra.mxu0 %v81
  %v3016 = vpop.f32.mrf.mxu0
  %v3017 = vadd.f32 0.0, %v3016
  %v3018 = vpop.f32.mrf.mxu0
  %3019 = vmatprep.mubr.f32.mxu0 %v176
  %3020 = vmatmul.mubr.f32.gmra.mxu0 %v83
  %v3021 = vpop.f32.mrf.mxu0
  %v3022 = vadd.f32 0.0, %v3021
  %v3023 = vpop.f32.mrf.mxu0
  %3024 = vmatprep.mubr.f32.mxu0 %v179
  %3025 = vmatmul.mubr.f32.gmra.mxu0 %v85
  %v3026 = vpop.f32.mrf.mxu0
  %v3027 = vadd.f32 0.0, %v3026
  %v3028 = vpop.f32.mrf.mxu0
  %3029 = vdwg.mxu0
  %s3030 = scalar_lea.vmem %s0, 352
  %v3031 = vld [vmem:[%s3030] sm:$0xff]
  %v3032 = vld [vmem:[%s3030 + $0x8] sm:$0xff]
  %v3033 = vld [vmem:[%s3030 + $0x10] sm:$0xff]
  %v3034 = vld [vmem:[%s3030 + $0x18] sm:$0xff]
  %v3035 = vld [vmem:[%s3030 + $0x20] sm:$0xff]
  %v3036 = vld [vmem:[%s3030 + $0x28] sm:$0xff]
  %v3037 = vld [vmem:[%s3030 + $0x30] sm:$0xff]
  %v3038 = vld [vmem:[%s3030 + $0x38] sm:$0xff]
  %v3039 = vld [vmem:[%s3030 + $0x40] sm:$0xff]
  %v3040 = vld [vmem:[%s3030 + $0x48] sm:$0xff]
  %v3041 = vld [vmem:[%s3030 + $0x50] sm:$0xff]
  %v3042 = vld [vmem:[%s3030 + $0x58] sm:$0xff]
  %v3043 = vld [vmem:[%s3030 + $0x60] sm:$0xff]
  %v3044 = vld [vmem:[%s3030 + $0x68] sm:$0xff]
  %v3045 = vld [vmem:[%s3030 + $0x70] sm:$0xff]
  %v3046 = vld [vmem:[%s3030 + $0x78] sm:$0xff]
  %v3047 = vld [vmem:[%s3030 + $0x80] sm:$0xff]
  %v3048 = vld [vmem:[%s3030 + $0x88] sm:$0xff]
  %v3049 = vld [vmem:[%s3030 + $0x90] sm:$0xff]
  %v3050 = vld [vmem:[%s3030 + $0x98] sm:$0xff]
  %3051 = vmatprep.subr.mxu0 0.0
  %3052 = vmatpush1.msra.mxu0 %v3046
  %3053 = vmatprep.subr.mxu0 0.0
  %3054 = vmatpush1.msra.mxu0 %v3045
  %3055 = vmatprep.subr.mxu0 0.0
  %3056 = vmatpush1.msra.mxu0 %v3044
  %3057 = vmatprep.subr.mxu0 0.0
  %3058 = vmatpush1.msra.mxu0 %v3043
  %3059 = vmatprep.subr.mxu0 0.0
  %3060 = vmatpush1.msra.mxu0 %v3042
  %3061 = vmatprep.subr.mxu0 0.0
  %3062 = vmatpush1.msra.mxu0 %v3041
  %3063 = vmatprep.subr.mxu0 0.0
  %3064 = vmatpush1.msra.mxu0 %v3040
  %3065 = vmatprep.subr.mxu0 0.0
  %3066 = vmatpush1.msra.mxu0 %v3039
  %3067 = vmatprep.subr.mxu0 0.0
  %3068 = vmatpush1.msra.mxu0 %v3038
  %3069 = vmatprep.subr.mxu0 0.0
  %3070 = vmatpush1.msra.mxu0 %v3037
  %3071 = vmatprep.subr.mxu0 0.0
  %3072 = vmatpush1.msra.mxu0 %v3036
  %3073 = vmatprep.subr.mxu0 0.0
  %3074 = vmatpush1.msra.mxu0 %v3035
  %3075 = vmatprep.subr.mxu0 0.0
  %3076 = vmatpush1.msra.mxu0 %v3034
  %3077 = vmatprep.subr.mxu0 0.0
  %3078 = vmatpush1.msra.mxu0 %v3033
  %3079 = vmatprep.subr.mxu0 0.0
  %3080 = vmatpush1.msra.mxu0 %v3032
  %3081 = vmatprep.subr.mxu0 0.0
  %3082 = vmatpush1.msra.mxu0 %v3031
  %3083 = vmatprep.subr.mxu0 0.0
  %3084 = vmatpush2.msra.mxu0 0.0
  %3085 = vmatprep.subr.mxu0 0.0
  %3086 = vmatpush2.msra.mxu0 0.0
  %3087 = vmatprep.subr.mxu0 0.0
  %3088 = vmatpush2.msra.mxu0 0.0
  %3089 = vmatprep.subr.mxu0 0.0
  %3090 = vmatpush2.msra.mxu0 0.0
  %3091 = vmatprep.subr.mxu0 0.0
  %3092 = vmatpush2.msra.mxu0 0.0
  %3093 = vmatprep.subr.mxu0 0.0
  %3094 = vmatpush2.msra.mxu0 0.0
  %3095 = vmatprep.subr.mxu0 0.0
  %3096 = vmatpush2.msra.mxu0 0.0
  %3097 = vmatprep.subr.mxu0 0.0
  %3098 = vmatpush2.msra.mxu0 0.0
  %3099 = vmatprep.subr.mxu0 0.0
  %3100 = vmatpush2.msra.mxu0 0.0
  %3101 = vmatprep.subr.mxu0 0.0
  %3102 = vmatpush2.msra.mxu0 0.0
  %3103 = vmatprep.subr.mxu0 0.0
  %3104 = vmatpush2.msra.mxu0 0.0
  %3105 = vmatprep.subr.mxu0 0.0
  %3106 = vmatpush2.msra.mxu0 0.0
  %3107 = vmatprep.subr.mxu0 0.0
  %3108 = vmatpush2.msra.mxu0 %v3050
  %3109 = vmatprep.subr.mxu0 0.0
  %3110 = vmatpush2.msra.mxu0 %v3049
  %3111 = vmatprep.subr.mxu0 0.0
  %3112 = vmatpush2.msra.mxu0 %v3048
  %3113 = vmatprep.subr.mxu0 0.0
  %3114 = vmatpush2.msra.mxu0 %v3047
  %3115 = vmatprep.mubr.f32.mxu0 %v110
  %3116 = vmatmul.mubr.f32.gmra.mxu0 %v39
  %v3117 = vpop.f32.mrf.mxu0
  %v3118 = vadd.f32 0.0, %v3117
  %v3119 = vpop.f32.mrf.mxu0
  %3120 = vmatprep.mubr.f32.mxu0 %v113
  %3121 = vmatmul.mubr.f32.gmra.mxu0 %v41
  %v3122 = vpop.f32.mrf.mxu0
  %v3123 = vadd.f32 0.0, %v3122
  %v3124 = vpop.f32.mrf.mxu0
  %3125 = vmatprep.mubr.f32.mxu0 %v116
  %3126 = vmatmul.mubr.f32.gmra.mxu0 %v43
  %v3127 = vpop.f32.mrf.mxu0
  %v3128 = vadd.f32 0.0, %v3127
  %v3129 = vpop.f32.mrf.mxu0
  %3130 = vmatprep.mubr.f32.mxu0 %v119
  %3131 = vmatmul.mubr.f32.gmra.mxu0 %v45
  %v3132 = vpop.f32.mrf.mxu0
  %v3133 = vadd.f32 0.0, %v3132
  %v3134 = vpop.f32.mrf.mxu0
  %3135 = vmatprep.mubr.f32.mxu0 %v122
  %3136 = vmatmul.mubr.f32.gmra.mxu0 %v47
  %v3137 = vpop.f32.mrf.mxu0
  %v3138 = vadd.f32 0.0, %v3137
  %v3139 = vpop.f32.mrf.mxu0
  %3140 = vmatprep.mubr.f32.mxu0 %v125
  %3141 = vmatmul.mubr.f32.gmra.mxu0 %v49
  %v3142 = vpop.f32.mrf.mxu0
  %v3143 = vadd.f32 0.0, %v3142
  %v3144 = vpop.f32.mrf.mxu0
  %3145 = vmatprep.mubr.f32.mxu0 %v128
  %3146 = vmatmul.mubr.f32.gmra.mxu0 %v51
  %v3147 = vpop.f32.mrf.mxu0
  %v3148 = vadd.f32 0.0, %v3147
  %v3149 = vpop.f32.mrf.mxu0
  %3150 = vmatprep.mubr.f32.mxu0 %v131
  %3151 = vmatmul.mubr.f32.gmra.mxu0 %v53
  %v3152 = vpop.f32.mrf.mxu0
  %v3153 = vadd.f32 0.0, %v3152
  %v3154 = vpop.f32.mrf.mxu0
  %3155 = vmatprep.mubr.f32.mxu0 %v134
  %3156 = vmatmul.mubr.f32.gmra.mxu0 %v55
  %v3157 = vpop.f32.mrf.mxu0
  %v3158 = vadd.f32 0.0, %v3157
  %v3159 = vpop.f32.mrf.mxu0
  %3160 = vmatprep.mubr.f32.mxu0 %v137
  %3161 = vmatmul.mubr.f32.gmra.mxu0 %v57
  %v3162 = vpop.f32.mrf.mxu0
  %v3163 = vadd.f32 0.0, %v3162
  %v3164 = vpop.f32.mrf.mxu0
  %3165 = vmatprep.mubr.f32.mxu0 %v140
  %3166 = vmatmul.mubr.f32.gmra.mxu0 %v59
  %v3167 = vpop.f32.mrf.mxu0
  %v3168 = vadd.f32 0.0, %v3167
  %v3169 = vpop.f32.mrf.mxu0
  %3170 = vmatprep.mubr.f32.mxu0 %v143
  %3171 = vmatmul.mubr.f32.gmra.mxu0 %v61
  %v3172 = vpop.f32.mrf.mxu0
  %v3173 = vadd.f32 0.0, %v3172
  %v3174 = vpop.f32.mrf.mxu0
  %3175 = vmatprep.mubr.f32.mxu0 %v146
  %3176 = vmatmul.mubr.f32.gmra.mxu0 %v63
  %v3177 = vpop.f32.mrf.mxu0
  %v3178 = vadd.f32 0.0, %v3177
  %v3179 = vpop.f32.mrf.mxu0
  %3180 = vmatprep.mubr.f32.mxu0 %v149
  %3181 = vmatmul.mubr.f32.gmra.mxu0 %v65
  %v3182 = vpop.f32.mrf.mxu0
  %v3183 = vadd.f32 0.0, %v3182
  %v3184 = vpop.f32.mrf.mxu0
  %3185 = vmatprep.mubr.f32.mxu0 %v152
  %3186 = vmatmul.mubr.f32.gmra.mxu0 %v67
  %v3187 = vpop.f32.mrf.mxu0
  %v3188 = vadd.f32 0.0, %v3187
  %v3189 = vpop.f32.mrf.mxu0
  %3190 = vmatprep.mubr.f32.mxu0 %v155
  %3191 = vmatmul.mubr.f32.gmra.mxu0 %v69
  %v3192 = vpop.f32.mrf.mxu0
  %v3193 = vadd.f32 0.0, %v3192
  %v3194 = vpop.f32.mrf.mxu0
  %3195 = vmatprep.mubr.f32.mxu0 %v158
  %3196 = vmatmul.mubr.f32.gmra.mxu0 %v71
  %v3197 = vpop.f32.mrf.mxu0
  %v3198 = vadd.f32 0.0, %v3197
  %v3199 = vpop.f32.mrf.mxu0
  %3200 = vmatprep.mubr.f32.mxu0 %v161
  %3201 = vmatmul.mubr.f32.gmra.mxu0 %v73
  %v3202 = vpop.f32.mrf.mxu0
  %v3203 = vadd.f32 0.0, %v3202
  %v3204 = vpop.f32.mrf.mxu0
  %3205 = vmatprep.mubr.f32.mxu0 %v164
  %3206 = vmatmul.mubr.f32.gmra.mxu0 %v75
  %v3207 = vpop.f32.mrf.mxu0
  %v3208 = vadd.f32 0.0, %v3207
  %v3209 = vpop.f32.mrf.mxu0
  %3210 = vmatprep.mubr.f32.mxu0 %v167
  %3211 = vmatmul.mubr.f32.gmra.mxu0 %v77
  %v3212 = vpop.f32.mrf.mxu0
  %v3213 = vadd.f32 0.0, %v3212
  %v3214 = vpop.f32.mrf.mxu0
  %3215 = vmatprep.mubr.f32.mxu0 %v170
  %3216 = vmatmul.mubr.f32.gmra.mxu0 %v79
  %v3217 = vpop.f32.mrf.mxu0
  %v3218 = vadd.f32 0.0, %v3217
  %v3219 = vpop.f32.mrf.mxu0
  %3220 = vmatprep.mubr.f32.mxu0 %v173
  %3221 = vmatmul.mubr.f32.gmra.mxu0 %v81
  %v3222 = vpop.f32.mrf.mxu0
  %v3223 = vadd.f32 0.0, %v3222
  %v3224 = vpop.f32.mrf.mxu0
  %3225 = vmatprep.mubr.f32.mxu0 %v176
  %3226 = vmatmul.mubr.f32.gmra.mxu0 %v83
  %v3227 = vpop.f32.mrf.mxu0
  %v3228 = vadd.f32 0.0, %v3227
  %v3229 = vpop.f32.mrf.mxu0
  %3230 = vmatprep.mubr.f32.mxu0 %v179
  %3231 = vmatmul.mubr.f32.gmra.mxu0 %v85
  %v3232 = vpop.f32.mrf.mxu0
  %v3233 = vadd.f32 0.0, %v3232
  %v3234 = vpop.f32.mrf.mxu0
  %3235 = vdwg.mxu0
  %v3236 = vmax.f32 %v2912, %v3118
  %v3237 = vmax.f32 %v2917, %v3123
  %v3238 = vmax.f32 %v2922, %v3128
  %v3239 = vmax.f32 %v2927, %v3133
  %v3240 = vmax.f32 %v2932, %v3138
  %v3241 = vmax.f32 %v2937, %v3143
  %v3242 = vmax.f32 %v2942, %v3148
  %v3243 = vmax.f32 %v2947, %v3153
  %v3244 = vmax.f32 %v2952, %v3158
  %v3245 = vmax.f32 %v2957, %v3163
  %v3246 = vmax.f32 %v2962, %v3168
  %v3247 = vmax.f32 %v2967, %v3173
  %v3248 = vmax.f32 %v2972, %v3178
  %v3249 = vmax.f32 %v2977, %v3183
  %v3250 = vmax.f32 %v2982, %v3188
  %v3251 = vmax.f32 %v2987, %v3193
  %v3252 = vmax.f32 %v2992, %v3198
  %v3253 = vmax.f32 %v2997, %v3203
  %v3254 = vmax.f32 %v3002, %v3208
  %v3255 = vmax.f32 %v3007, %v3213
  %v3256 = vmax.f32 %v3012, %v3218
  %v3257 = vmax.f32 %v3017, %v3223
  %v3258 = vmax.f32 %v3022, %v3228
  %v3259 = vmax.f32 %v3027, %v3233
  %v3260 = vmax.f32 %v3236, %v3237
  %v3261 = vmax.f32 %v3238, %v3239
  %v3262 = vmax.f32 %v3240, %v3241
  %v3263 = vmax.f32 %v3242, %v3243
  %v3264 = vmax.f32 %v3244, %v3245
  %v3265 = vmax.f32 %v3246, %v3247
  %v3266 = vmax.f32 %v3248, %v3249
  %v3267 = vmax.f32 %v3250, %v3251
  %v3268 = vmax.f32 %v3252, %v3253
  %v3269 = vmax.f32 %v3254, %v3255
  %v3270 = vmax.f32 %v3256, %v3257
  %v3271 = vmax.f32 %v3258, %v3259
  %v3272 = vadd.f32 %v3260, %v87
  %v3273 = vadd.f32 %v3261, %v87
  %v3274 = vadd.f32 %v3262, %v87
  %v3275 = vadd.f32 %v3263, %v87
  %v3276 = vadd.f32 %v3264, %v87
  %v3277 = vadd.f32 %v3265, %v87
  %v3278 = vadd.f32 %v3266, %v87
  %v3279 = vadd.f32 %v3267, %v87
  %v3280 = vadd.f32 %v3268, %v87
  %v3281 = vadd.f32 %v3269, %v87
  %v3282 = vadd.f32 %v3270, %v87
  %v3283 = vadd.f32 %v3271, %v87
  %v3284 = vmax.f32 %v3272, 0.0
  %v3285 = vmax.f32 %v3273, 0.0
  %v3286 = vmax.f32 %v3274, 0.0
  %v3287 = vmax.f32 %v3275, 0.0
  %v3288 = vmax.f32 %v3276, 0.0
  %v3289 = vmax.f32 %v3277, 0.0
  %v3290 = vmax.f32 %v3278, 0.0
  %v3291 = vmax.f32 %v3279, 0.0
  %v3292 = vmax.f32 %v3280, 0.0
  %v3293 = vmax.f32 %v3281, 0.0
  %v3294 = vmax.f32 %v3282, 0.0
  %v3295 = vmax.f32 %v3283, 0.0
  %v3296 = vpack.c.bf16 %v3285, %v3284
  %v3297 = vpack.c.bf16 %v3287, %v3286
  %v3298 = vpack.c.bf16 %v3289, %v3288
  %v3299 = vpack.c.bf16 %v3291, %v3290
  %v3300 = vpack.c.bf16 %v3293, %v3292
  %v3301 = vpack.c.bf16 %v3295, %v3294
  %v3308 = vunpack.c.l.b16 %v3296
  %v3309 = vunpack.c.h.b16 %v3296
  %v3310 = vunpack.c.l.b16 %v3297
  %v3311 = vunpack.c.h.b16 %v3297
  %v3312 = vunpack.c.l.b16 %v3298
  %v3313 = vunpack.c.h.b16 %v3298
  %v3314 = vunpack.c.l.b16 %v3299
  %v3315 = vunpack.c.h.b16 %v3299
  %v3316 = vunpack.c.l.b16 %v3300
  %v3317 = vunpack.c.h.b16 %v3300
  %v3318 = vunpack.c.l.b16 %v3301
  %v3319 = vunpack.c.h.b16 %v3301
  %v3320 = vpack.c.b16 %v3308, %v3308
  %v3321 = vpack.c.b16 %v3309, %v3309
  %v3322 = vpack.c.b16 %v3310, %v3310
  %v3323 = vpack.c.b16 %v3311, %v3311
  %v3324 = vpack.c.b16 %v3312, %v3312
  %v3325 = vpack.c.b16 %v3313, %v3313
  %v3326 = vpack.c.b16 %v3314, %v3314
  %v3327 = vpack.c.b16 %v3315, %v3315
  %v3328 = vpack.c.b16 %v3316, %v3316
  %v3329 = vpack.c.b16 %v3317, %v3317
  %v3330 = vpack.c.b16 %v3318, %v3318
  %v3331 = vpack.c.b16 %v3319, %v3319
  %s3344 = scalar_lea.vmem [#allocation2], 240
  %3345 = vst [vmem:[%s3344] sm:$0xf] %v3320
  %3346 = vst [vmem:[%s3344 + $0x4] sm:$0xf] %v3321
  %3347 = vst [vmem:[%s3344 + $0x8] sm:$0xf] %v3322
  %3348 = vst [vmem:[%s3344 + $0xc] sm:$0xf] %v3323
  %3349 = vst [vmem:[%s3344 + $0x10] sm:$0xf] %v3324
  %3350 = vst [vmem:[%s3344 + $0x14] sm:$0xf] %v3325
  %3351 = vst [vmem:[%s3344 + $0x18] sm:$0xf] %v3326
  %3352 = vst [vmem:[%s3344 + $0x1c] sm:$0xf] %v3327
  %3353 = vst [vmem:[%s3344 + $0x20] sm:$0xf] %v3328
  %3354 = vst [vmem:[%s3344 + $0x24] sm:$0xf] %v3329
  %3355 = vst [vmem:[%s3344 + $0x28] sm:$0xf] %v3330
  %3356 = vst [vmem:[%s3344 + $0x2c] sm:$0xf] %v3331
  %s3357 = scalar_lea.vmem %s0, 384
  %v3358 = vld [vmem:[%s3357] sm:$0xff]
  %v3359 = vld [vmem:[%s3357 + $0x8] sm:$0xff]
  %v3360 = vld [vmem:[%s3357 + $0x10] sm:$0xff]
  %v3361 = vld [vmem:[%s3357 + $0x18] sm:$0xff]
  %v3362 = vld [vmem:[%s3357 + $0x20] sm:$0xff]
  %v3363 = vld [vmem:[%s3357 + $0x28] sm:$0xff]
  %v3364 = vld [vmem:[%s3357 + $0x30] sm:$0xff]
  %v3365 = vld [vmem:[%s3357 + $0x38] sm:$0xff]
  %v3366 = vld [vmem:[%s3357 + $0x40] sm:$0xff]
  %v3367 = vld [vmem:[%s3357 + $0x48] sm:$0xff]
  %v3368 = vld [vmem:[%s3357 + $0x50] sm:$0xff]
  %v3369 = vld [vmem:[%s3357 + $0x58] sm:$0xff]
  %v3370 = vld [vmem:[%s3357 + $0x60] sm:$0xff]
  %v3371 = vld [vmem:[%s3357 + $0x68] sm:$0xff]
  %v3372 = vld [vmem:[%s3357 + $0x70] sm:$0xff]
  %v3373 = vld [vmem:[%s3357 + $0x78] sm:$0xff]
  %v3374 = vld [vmem:[%s3357 + $0x80] sm:$0xff]
  %v3375 = vld [vmem:[%s3357 + $0x88] sm:$0xff]
  %v3376 = vld [vmem:[%s3357 + $0x90] sm:$0xff]
  %v3377 = vld [vmem:[%s3357 + $0x98] sm:$0xff]
  %3378 = vmatprep.subr.mxu0 0.0
  %3379 = vmatpush1.msra.mxu0 %v3373
  %3380 = vmatprep.subr.mxu0 0.0
  %3381 = vmatpush1.msra.mxu0 %v3372
  %3382 = vmatprep.subr.mxu0 0.0
  %3383 = vmatpush1.msra.mxu0 %v3371
  %3384 = vmatprep.subr.mxu0 0.0
  %3385 = vmatpush1.msra.mxu0 %v3370
  %3386 = vmatprep.subr.mxu0 0.0
  %3387 = vmatpush1.msra.mxu0 %v3369
  %3388 = vmatprep.subr.mxu0 0.0
  %3389 = vmatpush1.msra.mxu0 %v3368
  %3390 = vmatprep.subr.mxu0 0.0
  %3391 = vmatpush1.msra.mxu0 %v3367
  %3392 = vmatprep.subr.mxu0 0.0
  %3393 = vmatpush1.msra.mxu0 %v3366
  %3394 = vmatprep.subr.mxu0 0.0
  %3395 = vmatpush1.msra.mxu0 %v3365
  %3396 = vmatprep.subr.mxu0 0.0
  %3397 = vmatpush1.msra.mxu0 %v3364
  %3398 = vmatprep.subr.mxu0 0.0
  %3399 = vmatpush1.msra.mxu0 %v3363
  %3400 = vmatprep.subr.mxu0 0.0
  %3401 = vmatpush1.msra.mxu0 %v3362
  %3402 = vmatprep.subr.mxu0 0.0
  %3403 = vmatpush1.msra.mxu0 %v3361
  %3404 = vmatprep.subr.mxu0 0.0
  %3405 = vmatpush1.msra.mxu0 %v3360
  %3406 = vmatprep.subr.mxu0 0.0
  %3407 = vmatpush1.msra.mxu0 %v3359
  %3408 = vmatprep.subr.mxu0 0.0
  %3409 = vmatpush1.msra.mxu0 %v3358
  %3410 = vmatprep.subr.mxu0 0.0
  %3411 = vmatpush2.msra.mxu0 0.0
  %3412 = vmatprep.subr.mxu0 0.0
  %3413 = vmatpush2.msra.mxu0 0.0
  %3414 = vmatprep.subr.mxu0 0.0
  %3415 = vmatpush2.msra.mxu0 0.0
  %3416 = vmatprep.subr.mxu0 0.0
  %3417 = vmatpush2.msra.mxu0 0.0
  %3418 = vmatprep.subr.mxu0 0.0
  %3419 = vmatpush2.msra.mxu0 0.0
  %3420 = vmatprep.subr.mxu0 0.0
  %3421 = vmatpush2.msra.mxu0 0.0
  %3422 = vmatprep.subr.mxu0 0.0
  %3423 = vmatpush2.msra.mxu0 0.0
  %3424 = vmatprep.subr.mxu0 0.0
  %3425 = vmatpush2.msra.mxu0 0.0
  %3426 = vmatprep.subr.mxu0 0.0
  %3427 = vmatpush2.msra.mxu0 0.0
  %3428 = vmatprep.subr.mxu0 0.0
  %3429 = vmatpush2.msra.mxu0 0.0
  %3430 = vmatprep.subr.mxu0 0.0
  %3431 = vmatpush2.msra.mxu0 0.0
  %3432 = vmatprep.subr.mxu0 0.0
  %3433 = vmatpush2.msra.mxu0 0.0
  %3434 = vmatprep.subr.mxu0 0.0
  %3435 = vmatpush2.msra.mxu0 %v3377
  %3436 = vmatprep.subr.mxu0 0.0
  %3437 = vmatpush2.msra.mxu0 %v3376
  %3438 = vmatprep.subr.mxu0 0.0
  %3439 = vmatpush2.msra.mxu0 %v3375
  %3440 = vmatprep.subr.mxu0 0.0
  %3441 = vmatpush2.msra.mxu0 %v3374
  %3442 = vmatprep.mubr.f32.mxu0 %v110
  %3443 = vmatmul.mubr.f32.gmra.mxu0 %v39
  %v3444 = vpop.f32.mrf.mxu0
  %v3445 = vadd.f32 0.0, %v3444
  %v3446 = vpop.f32.mrf.mxu0
  %3447 = vmatprep.mubr.f32.mxu0 %v113
  %3448 = vmatmul.mubr.f32.gmra.mxu0 %v41
  %v3449 = vpop.f32.mrf.mxu0
  %v3450 = vadd.f32 0.0, %v3449
  %v3451 = vpop.f32.mrf.mxu0
  %3452 = vmatprep.mubr.f32.mxu0 %v116
  %3453 = vmatmul.mubr.f32.gmra.mxu0 %v43
  %v3454 = vpop.f32.mrf.mxu0
  %v3455 = vadd.f32 0.0, %v3454
  %v3456 = vpop.f32.mrf.mxu0
  %3457 = vmatprep.mubr.f32.mxu0 %v119
  %3458 = vmatmul.mubr.f32.gmra.mxu0 %v45
  %v3459 = vpop.f32.mrf.mxu0
  %v3460 = vadd.f32 0.0, %v3459
  %v3461 = vpop.f32.mrf.mxu0
  %3462 = vmatprep.mubr.f32.mxu0 %v122
  %3463 = vmatmul.mubr.f32.gmra.mxu0 %v47
  %v3464 = vpop.f32.mrf.mxu0
  %v3465 = vadd.f32 0.0, %v3464
  %v3466 = vpop.f32.mrf.mxu0
  %3467 = vmatprep.mubr.f32.mxu0 %v125
  %3468 = vmatmul.mubr.f32.gmra.mxu0 %v49
  %v3469 = vpop.f32.mrf.mxu0
  %v3470 = vadd.f32 0.0, %v3469
  %v3471 = vpop.f32.mrf.mxu0
  %3472 = vmatprep.mubr.f32.mxu0 %v128
  %3473 = vmatmul.mubr.f32.gmra.mxu0 %v51
  %v3474 = vpop.f32.mrf.mxu0
  %v3475 = vadd.f32 0.0, %v3474
  %v3476 = vpop.f32.mrf.mxu0
  %3477 = vmatprep.mubr.f32.mxu0 %v131
  %3478 = vmatmul.mubr.f32.gmra.mxu0 %v53
  %v3479 = vpop.f32.mrf.mxu0
  %v3480 = vadd.f32 0.0, %v3479
  %v3481 = vpop.f32.mrf.mxu0
  %3482 = vmatprep.mubr.f32.mxu0 %v134
  %3483 = vmatmul.mubr.f32.gmra.mxu0 %v55
  %v3484 = vpop.f32.mrf.mxu0
  %v3485 = vadd.f32 0.0, %v3484
  %v3486 = vpop.f32.mrf.mxu0
  %3487 = vmatprep.mubr.f32.mxu0 %v137
  %3488 = vmatmul.mubr.f32.gmra.mxu0 %v57
  %v3489 = vpop.f32.mrf.mxu0
  %v3490 = vadd.f32 0.0, %v3489
  %v3491 = vpop.f32.mrf.mxu0
  %3492 = vmatprep.mubr.f32.mxu0 %v140
  %3493 = vmatmul.mubr.f32.gmra.mxu0 %v59
  %v3494 = vpop.f32.mrf.mxu0
  %v3495 = vadd.f32 0.0, %v3494
  %v3496 = vpop.f32.mrf.mxu0
  %3497 = vmatprep.mubr.f32.mxu0 %v143
  %3498 = vmatmul.mubr.f32.gmra.mxu0 %v61
  %v3499 = vpop.f32.mrf.mxu0
  %v3500 = vadd.f32 0.0, %v3499
  %v3501 = vpop.f32.mrf.mxu0
  %3502 = vmatprep.mubr.f32.mxu0 %v146
  %3503 = vmatmul.mubr.f32.gmra.mxu0 %v63
  %v3504 = vpop.f32.mrf.mxu0
  %v3505 = vadd.f32 0.0, %v3504
  %v3506 = vpop.f32.mrf.mxu0
  %3507 = vmatprep.mubr.f32.mxu0 %v149
  %3508 = vmatmul.mubr.f32.gmra.mxu0 %v65
  %v3509 = vpop.f32.mrf.mxu0
  %v3510 = vadd.f32 0.0, %v3509
  %v3511 = vpop.f32.mrf.mxu0
  %3512 = vmatprep.mubr.f32.mxu0 %v152
  %3513 = vmatmul.mubr.f32.gmra.mxu0 %v67
  %v3514 = vpop.f32.mrf.mxu0
  %v3515 = vadd.f32 0.0, %v3514
  %v3516 = vpop.f32.mrf.mxu0
  %3517 = vmatprep.mubr.f32.mxu0 %v155
  %3518 = vmatmul.mubr.f32.gmra.mxu0 %v69
  %v3519 = vpop.f32.mrf.mxu0
  %v3520 = vadd.f32 0.0, %v3519
  %v3521 = vpop.f32.mrf.mxu0
  %3522 = vmatprep.mubr.f32.mxu0 %v158
  %3523 = vmatmul.mubr.f32.gmra.mxu0 %v71
  %v3524 = vpop.f32.mrf.mxu0
  %v3525 = vadd.f32 0.0, %v3524
  %v3526 = vpop.f32.mrf.mxu0
  %3527 = vmatprep.mubr.f32.mxu0 %v161
  %3528 = vmatmul.mubr.f32.gmra.mxu0 %v73
  %v3529 = vpop.f32.mrf.mxu0
  %v3530 = vadd.f32 0.0, %v3529
  %v3531 = vpop.f32.mrf.mxu0
  %3532 = vmatprep.mubr.f32.mxu0 %v164
  %3533 = vmatmul.mubr.f32.gmra.mxu0 %v75
  %v3534 = vpop.f32.mrf.mxu0
  %v3535 = vadd.f32 0.0, %v3534
  %v3536 = vpop.f32.mrf.mxu0
  %3537 = vmatprep.mubr.f32.mxu0 %v167
  %3538 = vmatmul.mubr.f32.gmra.mxu0 %v77
  %v3539 = vpop.f32.mrf.mxu0
  %v3540 = vadd.f32 0.0, %v3539
  %v3541 = vpop.f32.mrf.mxu0
  %3542 = vmatprep.mubr.f32.mxu0 %v170
  %3543 = vmatmul.mubr.f32.gmra.mxu0 %v79
  %v3544 = vpop.f32.mrf.mxu0
  %v3545 = vadd.f32 0.0, %v3544
  %v3546 = vpop.f32.mrf.mxu0
  %3547 = vmatprep.mubr.f32.mxu0 %v173
  %3548 = vmatmul.mubr.f32.gmra.mxu0 %v81
  %v3549 = vpop.f32.mrf.mxu0
  %v3550 = vadd.f32 0.0, %v3549
  %v3551 = vpop.f32.mrf.mxu0
  %3552 = vmatprep.mubr.f32.mxu0 %v176
  %3553 = vmatmul.mubr.f32.gmra.mxu0 %v83
  %v3554 = vpop.f32.mrf.mxu0
  %v3555 = vadd.f32 0.0, %v3554
  %v3556 = vpop.f32.mrf.mxu0
  %3557 = vmatprep.mubr.f32.mxu0 %v179
  %3558 = vmatmul.mubr.f32.gmra.mxu0 %v85
  %v3559 = vpop.f32.mrf.mxu0
  %v3560 = vadd.f32 0.0, %v3559
  %v3561 = vpop.f32.mrf.mxu0
  %3562 = vdwg.mxu0
  %s3563 = scalar_lea.vmem %s0, 416
  %v3564 = vld [vmem:[%s3563] sm:$0xff]
  %v3565 = vld [vmem:[%s3563 + $0x8] sm:$0xff]
  %v3566 = vld [vmem:[%s3563 + $0x10] sm:$0xff]
  %v3567 = vld [vmem:[%s3563 + $0x18] sm:$0xff]
  %v3568 = vld [vmem:[%s3563 + $0x20] sm:$0xff]
  %v3569 = vld [vmem:[%s3563 + $0x28] sm:$0xff]
  %v3570 = vld [vmem:[%s3563 + $0x30] sm:$0xff]
  %v3571 = vld [vmem:[%s3563 + $0x38] sm:$0xff]
  %v3572 = vld [vmem:[%s3563 + $0x40] sm:$0xff]
  %v3573 = vld [vmem:[%s3563 + $0x48] sm:$0xff]
  %v3574 = vld [vmem:[%s3563 + $0x50] sm:$0xff]
  %v3575 = vld [vmem:[%s3563 + $0x58] sm:$0xff]
  %v3576 = vld [vmem:[%s3563 + $0x60] sm:$0xff]
  %v3577 = vld [vmem:[%s3563 + $0x68] sm:$0xff]
  %v3578 = vld [vmem:[%s3563 + $0x70] sm:$0xff]
  %v3579 = vld [vmem:[%s3563 + $0x78] sm:$0xff]
  %v3580 = vld [vmem:[%s3563 + $0x80] sm:$0xff]
  %v3581 = vld [vmem:[%s3563 + $0x88] sm:$0xff]
  %v3582 = vld [vmem:[%s3563 + $0x90] sm:$0xff]
  %v3583 = vld [vmem:[%s3563 + $0x98] sm:$0xff]
  %3584 = vmatprep.subr.mxu0 0.0
  %3585 = vmatpush1.msra.mxu0 %v3579
  %3586 = vmatprep.subr.mxu0 0.0
  %3587 = vmatpush1.msra.mxu0 %v3578
  %3588 = vmatprep.subr.mxu0 0.0
  %3589 = vmatpush1.msra.mxu0 %v3577
  %3590 = vmatprep.subr.mxu0 0.0
  %3591 = vmatpush1.msra.mxu0 %v3576
  %3592 = vmatprep.subr.mxu0 0.0
  %3593 = vmatpush1.msra.mxu0 %v3575
  %3594 = vmatprep.subr.mxu0 0.0
  %3595 = vmatpush1.msra.mxu0 %v3574
  %3596 = vmatprep.subr.mxu0 0.0
  %3597 = vmatpush1.msra.mxu0 %v3573
  %3598 = vmatprep.subr.mxu0 0.0
  %3599 = vmatpush1.msra.mxu0 %v3572
  %3600 = vmatprep.subr.mxu0 0.0
  %3601 = vmatpush1.msra.mxu0 %v3571
  %3602 = vmatprep.subr.mxu0 0.0
  %3603 = vmatpush1.msra.mxu0 %v3570
  %3604 = vmatprep.subr.mxu0 0.0
  %3605 = vmatpush1.msra.mxu0 %v3569
  %3606 = vmatprep.subr.mxu0 0.0
  %3607 = vmatpush1.msra.mxu0 %v3568
  %3608 = vmatprep.subr.mxu0 0.0
  %3609 = vmatpush1.msra.mxu0 %v3567
  %3610 = vmatprep.subr.mxu0 0.0
  %3611 = vmatpush1.msra.mxu0 %v3566
  %3612 = vmatprep.subr.mxu0 0.0
  %3613 = vmatpush1.msra.mxu0 %v3565
  %3614 = vmatprep.subr.mxu0 0.0
  %3615 = vmatpush1.msra.mxu0 %v3564
  %3616 = vmatprep.subr.mxu0 0.0
  %3617 = vmatpush2.msra.mxu0 0.0
  %3618 = vmatprep.subr.mxu0 0.0
  %3619 = vmatpush2.msra.mxu0 0.0
  %3620 = vmatprep.subr.mxu0 0.0
  %3621 = vmatpush2.msra.mxu0 0.0
  %3622 = vmatprep.subr.mxu0 0.0
  %3623 = vmatpush2.msra.mxu0 0.0
  %3624 = vmatprep.subr.mxu0 0.0
  %3625 = vmatpush2.msra.mxu0 0.0
  %3626 = vmatprep.subr.mxu0 0.0
  %3627 = vmatpush2.msra.mxu0 0.0
  %3628 = vmatprep.subr.mxu0 0.0
  %3629 = vmatpush2.msra.mxu0 0.0
  %3630 = vmatprep.subr.mxu0 0.0
  %3631 = vmatpush2.msra.mxu0 0.0
  %3632 = vmatprep.subr.mxu0 0.0
  %3633 = vmatpush2.msra.mxu0 0.0
  %3634 = vmatprep.subr.mxu0 0.0
  %3635 = vmatpush2.msra.mxu0 0.0
  %3636 = vmatprep.subr.mxu0 0.0
  %3637 = vmatpush2.msra.mxu0 0.0
  %3638 = vmatprep.subr.mxu0 0.0
  %3639 = vmatpush2.msra.mxu0 0.0
  %3640 = vmatprep.subr.mxu0 0.0
  %3641 = vmatpush2.msra.mxu0 %v3583
  %3642 = vmatprep.subr.mxu0 0.0
  %3643 = vmatpush2.msra.mxu0 %v3582
  %3644 = vmatprep.subr.mxu0 0.0
  %3645 = vmatpush2.msra.mxu0 %v3581
  %3646 = vmatprep.subr.mxu0 0.0
  %3647 = vmatpush2.msra.mxu0 %v3580
  %3648 = vmatprep.mubr.f32.mxu0 %v110
  %3649 = vmatmul.mubr.f32.gmra.mxu0 %v39
  %v3650 = vpop.f32.mrf.mxu0
  %v3651 = vadd.f32 0.0, %v3650
  %v3652 = vpop.f32.mrf.mxu0
  %3653 = vmatprep.mubr.f32.mxu0 %v113
  %3654 = vmatmul.mubr.f32.gmra.mxu0 %v41
  %v3655 = vpop.f32.mrf.mxu0
  %v3656 = vadd.f32 0.0, %v3655
  %v3657 = vpop.f32.mrf.mxu0
  %3658 = vmatprep.mubr.f32.mxu0 %v116
  %3659 = vmatmul.mubr.f32.gmra.mxu0 %v43
  %v3660 = vpop.f32.mrf.mxu0
  %v3661 = vadd.f32 0.0, %v3660
  %v3662 = vpop.f32.mrf.mxu0
  %3663 = vmatprep.mubr.f32.mxu0 %v119
  %3664 = vmatmul.mubr.f32.gmra.mxu0 %v45
  %v3665 = vpop.f32.mrf.mxu0
  %v3666 = vadd.f32 0.0, %v3665
  %v3667 = vpop.f32.mrf.mxu0
  %3668 = vmatprep.mubr.f32.mxu0 %v122
  %3669 = vmatmul.mubr.f32.gmra.mxu0 %v47
  %v3670 = vpop.f32.mrf.mxu0
  %v3671 = vadd.f32 0.0, %v3670
  %v3672 = vpop.f32.mrf.mxu0
  %3673 = vmatprep.mubr.f32.mxu0 %v125
  %3674 = vmatmul.mubr.f32.gmra.mxu0 %v49
  %v3675 = vpop.f32.mrf.mxu0
  %v3676 = vadd.f32 0.0, %v3675
  %v3677 = vpop.f32.mrf.mxu0
  %3678 = vmatprep.mubr.f32.mxu0 %v128
  %3679 = vmatmul.mubr.f32.gmra.mxu0 %v51
  %v3680 = vpop.f32.mrf.mxu0
  %v3681 = vadd.f32 0.0, %v3680
  %v3682 = vpop.f32.mrf.mxu0
  %3683 = vmatprep.mubr.f32.mxu0 %v131
  %3684 = vmatmul.mubr.f32.gmra.mxu0 %v53
  %v3685 = vpop.f32.mrf.mxu0
  %v3686 = vadd.f32 0.0, %v3685
  %v3687 = vpop.f32.mrf.mxu0
  %3688 = vmatprep.mubr.f32.mxu0 %v134
  %3689 = vmatmul.mubr.f32.gmra.mxu0 %v55
  %v3690 = vpop.f32.mrf.mxu0
  %v3691 = vadd.f32 0.0, %v3690
  %v3692 = vpop.f32.mrf.mxu0
  %3693 = vmatprep.mubr.f32.mxu0 %v137
  %3694 = vmatmul.mubr.f32.gmra.mxu0 %v57
  %v3695 = vpop.f32.mrf.mxu0
  %v3696 = vadd.f32 0.0, %v3695
  %v3697 = vpop.f32.mrf.mxu0
  %3698 = vmatprep.mubr.f32.mxu0 %v140
  %3699 = vmatmul.mubr.f32.gmra.mxu0 %v59
  %v3700 = vpop.f32.mrf.mxu0
  %v3701 = vadd.f32 0.0, %v3700
  %v3702 = vpop.f32.mrf.mxu0
  %3703 = vmatprep.mubr.f32.mxu0 %v143
  %3704 = vmatmul.mubr.f32.gmra.mxu0 %v61
  %v3705 = vpop.f32.mrf.mxu0
  %v3706 = vadd.f32 0.0, %v3705
  %v3707 = vpop.f32.mrf.mxu0
  %3708 = vmatprep.mubr.f32.mxu0 %v146
  %3709 = vmatmul.mubr.f32.gmra.mxu0 %v63
  %v3710 = vpop.f32.mrf.mxu0
  %v3711 = vadd.f32 0.0, %v3710
  %v3712 = vpop.f32.mrf.mxu0
  %3713 = vmatprep.mubr.f32.mxu0 %v149
  %3714 = vmatmul.mubr.f32.gmra.mxu0 %v65
  %v3715 = vpop.f32.mrf.mxu0
  %v3716 = vadd.f32 0.0, %v3715
  %v3717 = vpop.f32.mrf.mxu0
  %3718 = vmatprep.mubr.f32.mxu0 %v152
  %3719 = vmatmul.mubr.f32.gmra.mxu0 %v67
  %v3720 = vpop.f32.mrf.mxu0
  %v3721 = vadd.f32 0.0, %v3720
  %v3722 = vpop.f32.mrf.mxu0
  %3723 = vmatprep.mubr.f32.mxu0 %v155
  %3724 = vmatmul.mubr.f32.gmra.mxu0 %v69
  %v3725 = vpop.f32.mrf.mxu0
  %v3726 = vadd.f32 0.0, %v3725
  %v3727 = vpop.f32.mrf.mxu0
  %3728 = vmatprep.mubr.f32.mxu0 %v158
  %3729 = vmatmul.mubr.f32.gmra.mxu0 %v71
  %v3730 = vpop.f32.mrf.mxu0
  %v3731 = vadd.f32 0.0, %v3730
  %v3732 = vpop.f32.mrf.mxu0
  %3733 = vmatprep.mubr.f32.mxu0 %v161
  %3734 = vmatmul.mubr.f32.gmra.mxu0 %v73
  %v3735 = vpop.f32.mrf.mxu0
  %v3736 = vadd.f32 0.0, %v3735
  %v3737 = vpop.f32.mrf.mxu0
  %3738 = vmatprep.mubr.f32.mxu0 %v164
  %3739 = vmatmul.mubr.f32.gmra.mxu0 %v75
  %v3740 = vpop.f32.mrf.mxu0
  %v3741 = vadd.f32 0.0, %v3740
  %v3742 = vpop.f32.mrf.mxu0
  %3743 = vmatprep.mubr.f32.mxu0 %v167
  %3744 = vmatmul.mubr.f32.gmra.mxu0 %v77
  %v3745 = vpop.f32.mrf.mxu0
  %v3746 = vadd.f32 0.0, %v3745
  %v3747 = vpop.f32.mrf.mxu0
  %3748 = vmatprep.mubr.f32.mxu0 %v170
  %3749 = vmatmul.mubr.f32.gmra.mxu0 %v79
  %v3750 = vpop.f32.mrf.mxu0
  %v3751 = vadd.f32 0.0, %v3750
  %v3752 = vpop.f32.mrf.mxu0
  %3753 = vmatprep.mubr.f32.mxu0 %v173
  %3754 = vmatmul.mubr.f32.gmra.mxu0 %v81
  %v3755 = vpop.f32.mrf.mxu0
  %v3756 = vadd.f32 0.0, %v3755
  %v3757 = vpop.f32.mrf.mxu0
  %3758 = vmatprep.mubr.f32.mxu0 %v176
  %3759 = vmatmul.mubr.f32.gmra.mxu0 %v83
  %v3760 = vpop.f32.mrf.mxu0
  %v3761 = vadd.f32 0.0, %v3760
  %v3762 = vpop.f32.mrf.mxu0
  %3763 = vmatprep.mubr.f32.mxu0 %v179
  %3764 = vmatmul.mubr.f32.gmra.mxu0 %v85
  %v3765 = vpop.f32.mrf.mxu0
  %v3766 = vadd.f32 0.0, %v3765
  %v3767 = vpop.f32.mrf.mxu0
  %3768 = vdwg.mxu0
  %v3769 = vmax.f32 %v3445, %v3651
  %v3770 = vmax.f32 %v3450, %v3656
  %v3771 = vmax.f32 %v3455, %v3661
  %v3772 = vmax.f32 %v3460, %v3666
  %v3773 = vmax.f32 %v3465, %v3671
  %v3774 = vmax.f32 %v3470, %v3676
  %v3775 = vmax.f32 %v3475, %v3681
  %v3776 = vmax.f32 %v3480, %v3686
  %v3777 = vmax.f32 %v3485, %v3691
  %v3778 = vmax.f32 %v3490, %v3696
  %v3779 = vmax.f32 %v3495, %v3701
  %v3780 = vmax.f32 %v3500, %v3706
  %v3781 = vmax.f32 %v3505, %v3711
  %v3782 = vmax.f32 %v3510, %v3716
  %v3783 = vmax.f32 %v3515, %v3721
  %v3784 = vmax.f32 %v3520, %v3726
  %v3785 = vmax.f32 %v3525, %v3731
  %v3786 = vmax.f32 %v3530, %v3736
  %v3787 = vmax.f32 %v3535, %v3741
  %v3788 = vmax.f32 %v3540, %v3746
  %v3789 = vmax.f32 %v3545, %v3751
  %v3790 = vmax.f32 %v3550, %v3756
  %v3791 = vmax.f32 %v3555, %v3761
  %v3792 = vmax.f32 %v3560, %v3766
  %v3793 = vmax.f32 %v3769, %v3770
  %v3794 = vmax.f32 %v3771, %v3772
  %v3795 = vmax.f32 %v3773, %v3774
  %v3796 = vmax.f32 %v3775, %v3776
  %v3797 = vmax.f32 %v3777, %v3778
  %v3798 = vmax.f32 %v3779, %v3780
  %v3799 = vmax.f32 %v3781, %v3782
  %v3800 = vmax.f32 %v3783, %v3784
  %v3801 = vmax.f32 %v3785, %v3786
  %v3802 = vmax.f32 %v3787, %v3788
  %v3803 = vmax.f32 %v3789, %v3790
  %v3804 = vmax.f32 %v3791, %v3792
  %v3805 = vadd.f32 %v3793, %v87
  %v3806 = vadd.f32 %v3794, %v87
  %v3807 = vadd.f32 %v3795, %v87
  %v3808 = vadd.f32 %v3796, %v87
  %v3809 = vadd.f32 %v3797, %v87
  %v3810 = vadd.f32 %v3798, %v87
  %v3811 = vadd.f32 %v3799, %v87
  %v3812 = vadd.f32 %v3800, %v87
  %v3813 = vadd.f32 %v3801, %v87
  %v3814 = vadd.f32 %v3802, %v87
  %v3815 = vadd.f32 %v3803, %v87
  %v3816 = vadd.f32 %v3804, %v87
  %v3817 = vmax.f32 %v3805, 0.0
  %v3818 = vmax.f32 %v3806, 0.0
  %v3819 = vmax.f32 %v3807, 0.0
  %v3820 = vmax.f32 %v3808, 0.0
  %v3821 = vmax.f32 %v3809, 0.0
  %v3822 = vmax.f32 %v3810, 0.0
  %v3823 = vmax.f32 %v3811, 0.0
  %v3824 = vmax.f32 %v3812, 0.0
  %v3825 = vmax.f32 %v3813, 0.0
  %v3826 = vmax.f32 %v3814, 0.0
  %v3827 = vmax.f32 %v3815, 0.0
  %v3828 = vmax.f32 %v3816, 0.0
  %v3829 = vpack.c.bf16 %v3818, %v3817
  %v3830 = vpack.c.bf16 %v3820, %v3819
  %v3831 = vpack.c.bf16 %v3822, %v3821
  %v3832 = vpack.c.bf16 %v3824, %v3823
  %v3833 = vpack.c.bf16 %v3826, %v3825
  %v3834 = vpack.c.bf16 %v3828, %v3827
  %v3841 = vunpack.c.l.b16 %v3829
  %v3842 = vunpack.c.h.b16 %v3829
  %v3843 = vunpack.c.l.b16 %v3830
  %v3844 = vunpack.c.h.b16 %v3830
  %v3845 = vunpack.c.l.b16 %v3831
  %v3846 = vunpack.c.h.b16 %v3831
  %v3847 = vunpack.c.l.b16 %v3832
  %v3848 = vunpack.c.h.b16 %v3832
  %v3849 = vunpack.c.l.b16 %v3833
  %v3850 = vunpack.c.h.b16 %v3833
  %v3851 = vunpack.c.l.b16 %v3834
  %v3852 = vunpack.c.h.b16 %v3834
  %v3853 = vpack.c.b16 %v3841, %v3841
  %v3854 = vpack.c.b16 %v3842, %v3842
  %v3855 = vpack.c.b16 %v3843, %v3843
  %v3856 = vpack.c.b16 %v3844, %v3844
  %v3857 = vpack.c.b16 %v3845, %v3845
  %v3858 = vpack.c.b16 %v3846, %v3846
  %v3859 = vpack.c.b16 %v3847, %v3847
  %v3860 = vpack.c.b16 %v3848, %v3848
  %v3861 = vpack.c.b16 %v3849, %v3849
  %v3862 = vpack.c.b16 %v3850, %v3850
  %v3863 = vpack.c.b16 %v3851, %v3851
  %v3864 = vpack.c.b16 %v3852, %v3852
  %s3877 = scalar_lea.vmem [#allocation2], 288
  %3878 = vst [vmem:[%s3877] sm:$0xf] %v3853
  %3879 = vst [vmem:[%s3877 + $0x4] sm:$0xf] %v3854
  %3880 = vst [vmem:[%s3877 + $0x8] sm:$0xf] %v3855
  %3881 = vst [vmem:[%s3877 + $0xc] sm:$0xf] %v3856
  %3882 = vst [vmem:[%s3877 + $0x10] sm:$0xf] %v3857
  %3883 = vst [vmem:[%s3877 + $0x14] sm:$0xf] %v3858
  %3884 = vst [vmem:[%s3877 + $0x18] sm:$0xf] %v3859
  %3885 = vst [vmem:[%s3877 + $0x1c] sm:$0xf] %v3860
  %3886 = vst [vmem:[%s3877 + $0x20] sm:$0xf] %v3861
  %3887 = vst [vmem:[%s3877 + $0x24] sm:$0xf] %v3862
  %3888 = vst [vmem:[%s3877 + $0x28] sm:$0xf] %v3863
  %3889 = vst [vmem:[%s3877 + $0x2c] sm:$0xf] %v3864
  %s3890 = scalar_lea.vmem %s0, 448
  %v3891 = vld [vmem:[%s3890] sm:$0xff]
  %v3892 = vld [vmem:[%s3890 + $0x8] sm:$0xff]
  %v3893 = vld [vmem:[%s3890 + $0x10] sm:$0xff]
  %v3894 = vld [vmem:[%s3890 + $0x18] sm:$0xff]
  %v3895 = vld [vmem:[%s3890 + $0x20] sm:$0xff]
  %v3896 = vld [vmem:[%s3890 + $0x28] sm:$0xff]
  %v3897 = vld [vmem:[%s3890 + $0x30] sm:$0xff]
  %v3898 = vld [vmem:[%s3890 + $0x38] sm:$0xff]
  %v3899 = vld [vmem:[%s3890 + $0x40] sm:$0xff]
  %v3900 = vld [vmem:[%s3890 + $0x48] sm:$0xff]
  %v3901 = vld [vmem:[%s3890 + $0x50] sm:$0xff]
  %v3902 = vld [vmem:[%s3890 + $0x58] sm:$0xff]
  %v3903 = vld [vmem:[%s3890 + $0x60] sm:$0xff]
  %v3904 = vld [vmem:[%s3890 + $0x68] sm:$0xff]
  %v3905 = vld [vmem:[%s3890 + $0x70] sm:$0xff]
  %v3906 = vld [vmem:[%s3890 + $0x78] sm:$0xff]
  %v3907 = vld [vmem:[%s3890 + $0x80] sm:$0xff]
  %v3908 = vld [vmem:[%s3890 + $0x88] sm:$0xff]
  %v3909 = vld [vmem:[%s3890 + $0x90] sm:$0xff]
  %v3910 = vld [vmem:[%s3890 + $0x98] sm:$0xff]
  %3911 = vmatprep.subr.mxu0 0.0
  %3912 = vmatpush1.msra.mxu0 %v3906
  %3913 = vmatprep.subr.mxu0 0.0
  %3914 = vmatpush1.msra.mxu0 %v3905
  %3915 = vmatprep.subr.mxu0 0.0
  %3916 = vmatpush1.msra.mxu0 %v3904
  %3917 = vmatprep.subr.mxu0 0.0
  %3918 = vmatpush1.msra.mxu0 %v3903
  %3919 = vmatprep.subr.mxu0 0.0
  %3920 = vmatpush1.msra.mxu0 %v3902
  %3921 = vmatprep.subr.mxu0 0.0
  %3922 = vmatpush1.msra.mxu0 %v3901
  %3923 = vmatprep.subr.mxu0 0.0
  %3924 = vmatpush1.msra.mxu0 %v3900
  %3925 = vmatprep.subr.mxu0 0.0
  %3926 = vmatpush1.msra.mxu0 %v3899
  %3927 = vmatprep.subr.mxu0 0.0
  %3928 = vmatpush1.msra.mxu0 %v3898
  %3929 = vmatprep.subr.mxu0 0.0
  %3930 = vmatpush1.msra.mxu0 %v3897
  %3931 = vmatprep.subr.mxu0 0.0
  %3932 = vmatpush1.msra.mxu0 %v3896
  %3933 = vmatprep.subr.mxu0 0.0
  %3934 = vmatpush1.msra.mxu0 %v3895
  %3935 = vmatprep.subr.mxu0 0.0
  %3936 = vmatpush1.msra.mxu0 %v3894
  %3937 = vmatprep.subr.mxu0 0.0
  %3938 = vmatpush1.msra.mxu0 %v3893
  %3939 = vmatprep.subr.mxu0 0.0
  %3940 = vmatpush1.msra.mxu0 %v3892
  %3941 = vmatprep.subr.mxu0 0.0
  %3942 = vmatpush1.msra.mxu0 %v3891
  %3943 = vmatprep.subr.mxu0 0.0
  %3944 = vmatpush2.msra.mxu0 0.0
  %3945 = vmatprep.subr.mxu0 0.0
  %3946 = vmatpush2.msra.mxu0 0.0
  %3947 = vmatprep.subr.mxu0 0.0
  %3948 = vmatpush2.msra.mxu0 0.0
  %3949 = vmatprep.subr.mxu0 0.0
  %3950 = vmatpush2.msra.mxu0 0.0
  %3951 = vmatprep.subr.mxu0 0.0
  %3952 = vmatpush2.msra.mxu0 0.0
  %3953 = vmatprep.subr.mxu0 0.0
  %3954 = vmatpush2.msra.mxu0 0.0
  %3955 = vmatprep.subr.mxu0 0.0
  %3956 = vmatpush2.msra.mxu0 0.0
  %3957 = vmatprep.subr.mxu0 0.0
  %3958 = vmatpush2.msra.mxu0 0.0
  %3959 = vmatprep.subr.mxu0 0.0
  %3960 = vmatpush2.msra.mxu0 0.0
  %3961 = vmatprep.subr.mxu0 0.0
  %3962 = vmatpush2.msra.mxu0 0.0
  %3963 = vmatprep.subr.mxu0 0.0
  %3964 = vmatpush2.msra.mxu0 0.0
  %3965 = vmatprep.subr.mxu0 0.0
  %3966 = vmatpush2.msra.mxu0 0.0
  %3967 = vmatprep.subr.mxu0 0.0
  %3968 = vmatpush2.msra.mxu0 %v3910
  %3969 = vmatprep.subr.mxu0 0.0
  %3970 = vmatpush2.msra.mxu0 %v3909
  %3971 = vmatprep.subr.mxu0 0.0
  %3972 = vmatpush2.msra.mxu0 %v3908
  %3973 = vmatprep.subr.mxu0 0.0
  %3974 = vmatpush2.msra.mxu0 %v3907
  %3975 = vmatprep.mubr.f32.mxu0 %v110
  %3976 = vmatmul.mubr.f32.gmra.mxu0 %v39
  %v3977 = vpop.f32.mrf.mxu0
  %v3978 = vadd.f32 0.0, %v3977
  %v3979 = vpop.f32.mrf.mxu0
  %3980 = vmatprep.mubr.f32.mxu0 %v113
  %3981 = vmatmul.mubr.f32.gmra.mxu0 %v41
  %v3982 = vpop.f32.mrf.mxu0
  %v3983 = vadd.f32 0.0, %v3982
  %v3984 = vpop.f32.mrf.mxu0
  %3985 = vmatprep.mubr.f32.mxu0 %v116
  %3986 = vmatmul.mubr.f32.gmra.mxu0 %v43
  %v3987 = vpop.f32.mrf.mxu0
  %v3988 = vadd.f32 0.0, %v3987
  %v3989 = vpop.f32.mrf.mxu0
  %3990 = vmatprep.mubr.f32.mxu0 %v119
  %3991 = vmatmul.mubr.f32.gmra.mxu0 %v45
  %v3992 = vpop.f32.mrf.mxu0
  %v3993 = vadd.f32 0.0, %v3992
  %v3994 = vpop.f32.mrf.mxu0
  %3995 = vmatprep.mubr.f32.mxu0 %v122
  %3996 = vmatmul.mubr.f32.gmra.mxu0 %v47
  %v3997 = vpop.f32.mrf.mxu0
  %v3998 = vadd.f32 0.0, %v3997
  %v3999 = vpop.f32.mrf.mxu0
  %4000 = vmatprep.mubr.f32.mxu0 %v125
  %4001 = vmatmul.mubr.f32.gmra.mxu0 %v49
  %v4002 = vpop.f32.mrf.mxu0
  %v4003 = vadd.f32 0.0, %v4002
  %v4004 = vpop.f32.mrf.mxu0
  %4005 = vmatprep.mubr.f32.mxu0 %v128
  %4006 = vmatmul.mubr.f32.gmra.mxu0 %v51
  %v4007 = vpop.f32.mrf.mxu0
  %v4008 = vadd.f32 0.0, %v4007
  %v4009 = vpop.f32.mrf.mxu0
  %4010 = vmatprep.mubr.f32.mxu0 %v131
  %4011 = vmatmul.mubr.f32.gmra.mxu0 %v53
  %v4012 = vpop.f32.mrf.mxu0
  %v4013 = vadd.f32 0.0, %v4012
  %v4014 = vpop.f32.mrf.mxu0
  %4015 = vmatprep.mubr.f32.mxu0 %v134
  %4016 = vmatmul.mubr.f32.gmra.mxu0 %v55
  %v4017 = vpop.f32.mrf.mxu0
  %v4018 = vadd.f32 0.0, %v4017
  %v4019 = vpop.f32.mrf.mxu0
  %4020 = vmatprep.mubr.f32.mxu0 %v137
  %4021 = vmatmul.mubr.f32.gmra.mxu0 %v57
  %v4022 = vpop.f32.mrf.mxu0
  %v4023 = vadd.f32 0.0, %v4022
  %v4024 = vpop.f32.mrf.mxu0
  %4025 = vmatprep.mubr.f32.mxu0 %v140
  %4026 = vmatmul.mubr.f32.gmra.mxu0 %v59
  %v4027 = vpop.f32.mrf.mxu0
  %v4028 = vadd.f32 0.0, %v4027
  %v4029 = vpop.f32.mrf.mxu0
  %4030 = vmatprep.mubr.f32.mxu0 %v143
  %4031 = vmatmul.mubr.f32.gmra.mxu0 %v61
  %v4032 = vpop.f32.mrf.mxu0
  %v4033 = vadd.f32 0.0, %v4032
  %v4034 = vpop.f32.mrf.mxu0
  %4035 = vmatprep.mubr.f32.mxu0 %v146
  %4036 = vmatmul.mubr.f32.gmra.mxu0 %v63
  %v4037 = vpop.f32.mrf.mxu0
  %v4038 = vadd.f32 0.0, %v4037
  %v4039 = vpop.f32.mrf.mxu0
  %4040 = vmatprep.mubr.f32.mxu0 %v149
  %4041 = vmatmul.mubr.f32.gmra.mxu0 %v65
  %v4042 = vpop.f32.mrf.mxu0
  %v4043 = vadd.f32 0.0, %v4042
  %v4044 = vpop.f32.mrf.mxu0
  %4045 = vmatprep.mubr.f32.mxu0 %v152
  %4046 = vmatmul.mubr.f32.gmra.mxu0 %v67
  %v4047 = vpop.f32.mrf.mxu0
  %v4048 = vadd.f32 0.0, %v4047
  %v4049 = vpop.f32.mrf.mxu0
  %4050 = vmatprep.mubr.f32.mxu0 %v155
  %4051 = vmatmul.mubr.f32.gmra.mxu0 %v69
  %v4052 = vpop.f32.mrf.mxu0
  %v4053 = vadd.f32 0.0, %v4052
  %v4054 = vpop.f32.mrf.mxu0
  %4055 = vmatprep.mubr.f32.mxu0 %v158
  %4056 = vmatmul.mubr.f32.gmra.mxu0 %v71
  %v4057 = vpop.f32.mrf.mxu0
  %v4058 = vadd.f32 0.0, %v4057
  %v4059 = vpop.f32.mrf.mxu0
  %4060 = vmatprep.mubr.f32.mxu0 %v161
  %4061 = vmatmul.mubr.f32.gmra.mxu0 %v73
  %v4062 = vpop.f32.mrf.mxu0
  %v4063 = vadd.f32 0.0, %v4062
  %v4064 = vpop.f32.mrf.mxu0
  %4065 = vmatprep.mubr.f32.mxu0 %v164
  %4066 = vmatmul.mubr.f32.gmra.mxu0 %v75
  %v4067 = vpop.f32.mrf.mxu0
  %v4068 = vadd.f32 0.0, %v4067
  %v4069 = vpop.f32.mrf.mxu0
  %4070 = vmatprep.mubr.f32.mxu0 %v167
  %4071 = vmatmul.mubr.f32.gmra.mxu0 %v77
  %v4072 = vpop.f32.mrf.mxu0
  %v4073 = vadd.f32 0.0, %v4072
  %v4074 = vpop.f32.mrf.mxu0
  %4075 = vmatprep.mubr.f32.mxu0 %v170
  %4076 = vmatmul.mubr.f32.gmra.mxu0 %v79
  %v4077 = vpop.f32.mrf.mxu0
  %v4078 = vadd.f32 0.0, %v4077
  %v4079 = vpop.f32.mrf.mxu0
  %4080 = vmatprep.mubr.f32.mxu0 %v173
  %4081 = vmatmul.mubr.f32.gmra.mxu0 %v81
  %v4082 = vpop.f32.mrf.mxu0
  %v4083 = vadd.f32 0.0, %v4082
  %v4084 = vpop.f32.mrf.mxu0
  %4085 = vmatprep.mubr.f32.mxu0 %v176
  %4086 = vmatmul.mubr.f32.gmra.mxu0 %v83
  %v4087 = vpop.f32.mrf.mxu0
  %v4088 = vadd.f32 0.0, %v4087
  %v4089 = vpop.f32.mrf.mxu0
  %4090 = vmatprep.mubr.f32.mxu0 %v179
  %4091 = vmatmul.mubr.f32.gmra.mxu0 %v85
  %v4092 = vpop.f32.mrf.mxu0
  %v4093 = vadd.f32 0.0, %v4092
  %v4094 = vpop.f32.mrf.mxu0
  %4095 = vdwg.mxu0
  %s4096 = scalar_lea.vmem %s0, 480
  %v4097 = vld [vmem:[%s4096] sm:$0xff]
  %v4098 = vld [vmem:[%s4096 + $0x8] sm:$0xff]
  %v4099 = vld [vmem:[%s4096 + $0x10] sm:$0xff]
  %v4100 = vld [vmem:[%s4096 + $0x18] sm:$0xff]
  %v4101 = vld [vmem:[%s4096 + $0x20] sm:$0xff]
  %v4102 = vld [vmem:[%s4096 + $0x28] sm:$0xff]
  %v4103 = vld [vmem:[%s4096 + $0x30] sm:$0xff]
  %v4104 = vld [vmem:[%s4096 + $0x38] sm:$0xff]
  %v4105 = vld [vmem:[%s4096 + $0x40] sm:$0xff]
  %v4106 = vld [vmem:[%s4096 + $0x48] sm:$0xff]
  %v4107 = vld [vmem:[%s4096 + $0x50] sm:$0xff]
  %v4108 = vld [vmem:[%s4096 + $0x58] sm:$0xff]
  %v4109 = vld [vmem:[%s4096 + $0x60] sm:$0xff]
  %v4110 = vld [vmem:[%s4096 + $0x68] sm:$0xff]
  %v4111 = vld [vmem:[%s4096 + $0x70] sm:$0xff]
  %v4112 = vld [vmem:[%s4096 + $0x78] sm:$0xff]
  %v4113 = vld [vmem:[%s4096 + $0x80] sm:$0xff]
  %v4114 = vld [vmem:[%s4096 + $0x88] sm:$0xff]
  %v4115 = vld [vmem:[%s4096 + $0x90] sm:$0xff]
  %v4116 = vld [vmem:[%s4096 + $0x98] sm:$0xff]
  %4117 = vmatprep.subr.mxu0 0.0
  %4118 = vmatpush1.msra.mxu0 %v4112
  %4119 = vmatprep.subr.mxu0 0.0
  %4120 = vmatpush1.msra.mxu0 %v4111
  %4121 = vmatprep.subr.mxu0 0.0
  %4122 = vmatpush1.msra.mxu0 %v4110
  %4123 = vmatprep.subr.mxu0 0.0
  %4124 = vmatpush1.msra.mxu0 %v4109
  %4125 = vmatprep.subr.mxu0 0.0
  %4126 = vmatpush1.msra.mxu0 %v4108
  %4127 = vmatprep.subr.mxu0 0.0
  %4128 = vmatpush1.msra.mxu0 %v4107
  %4129 = vmatprep.subr.mxu0 0.0
  %4130 = vmatpush1.msra.mxu0 %v4106
  %4131 = vmatprep.subr.mxu0 0.0
  %4132 = vmatpush1.msra.mxu0 %v4105
  %4133 = vmatprep.subr.mxu0 0.0
  %4134 = vmatpush1.msra.mxu0 %v4104
  %4135 = vmatprep.subr.mxu0 0.0
  %4136 = vmatpush1.msra.mxu0 %v4103
  %4137 = vmatprep.subr.mxu0 0.0
  %4138 = vmatpush1.msra.mxu0 %v4102
  %4139 = vmatprep.subr.mxu0 0.0
  %4140 = vmatpush1.msra.mxu0 %v4101
  %4141 = vmatprep.subr.mxu0 0.0
  %4142 = vmatpush1.msra.mxu0 %v4100
  %4143 = vmatprep.subr.mxu0 0.0
  %4144 = vmatpush1.msra.mxu0 %v4099
  %4145 = vmatprep.subr.mxu0 0.0
  %4146 = vmatpush1.msra.mxu0 %v4098
  %4147 = vmatprep.subr.mxu0 0.0
  %4148 = vmatpush1.msra.mxu0 %v4097
  %4149 = vmatprep.subr.mxu0 0.0
  %4150 = vmatpush2.msra.mxu0 0.0
  %4151 = vmatprep.subr.mxu0 0.0
  %4152 = vmatpush2.msra.mxu0 0.0
  %4153 = vmatprep.subr.mxu0 0.0
  %4154 = vmatpush2.msra.mxu0 0.0
  %4155 = vmatprep.subr.mxu0 0.0
  %4156 = vmatpush2.msra.mxu0 0.0
  %4157 = vmatprep.subr.mxu0 0.0
  %4158 = vmatpush2.msra.mxu0 0.0
  %4159 = vmatprep.subr.mxu0 0.0
  %4160 = vmatpush2.msra.mxu0 0.0
  %4161 = vmatprep.subr.mxu0 0.0
  %4162 = vmatpush2.msra.mxu0 0.0
  %4163 = vmatprep.subr.mxu0 0.0
  %4164 = vmatpush2.msra.mxu0 0.0
  %4165 = vmatprep.subr.mxu0 0.0
  %4166 = vmatpush2.msra.mxu0 0.0
  %4167 = vmatprep.subr.mxu0 0.0
  %4168 = vmatpush2.msra.mxu0 0.0
  %4169 = vmatprep.subr.mxu0 0.0
  %4170 = vmatpush2.msra.mxu0 0.0
  %4171 = vmatprep.subr.mxu0 0.0
  %4172 = vmatpush2.msra.mxu0 0.0
  %4173 = vmatprep.subr.mxu0 0.0
  %4174 = vmatpush2.msra.mxu0 %v4116
  %4175 = vmatprep.subr.mxu0 0.0
  %4176 = vmatpush2.msra.mxu0 %v4115
  %4177 = vmatprep.subr.mxu0 0.0
  %4178 = vmatpush2.msra.mxu0 %v4114
  %4179 = vmatprep.subr.mxu0 0.0
  %4180 = vmatpush2.msra.mxu0 %v4113
  %4181 = vmatprep.mubr.f32.mxu0 %v110
  %4182 = vmatmul.mubr.f32.gmra.mxu0 %v39
  %v4183 = vpop.f32.mrf.mxu0
  %v4184 = vadd.f32 0.0, %v4183
  %v4185 = vpop.f32.mrf.mxu0
  %4186 = vmatprep.mubr.f32.mxu0 %v113
  %4187 = vmatmul.mubr.f32.gmra.mxu0 %v41
  %v4188 = vpop.f32.mrf.mxu0
  %v4189 = vadd.f32 0.0, %v4188
  %v4190 = vpop.f32.mrf.mxu0
  %4191 = vmatprep.mubr.f32.mxu0 %v116
  %4192 = vmatmul.mubr.f32.gmra.mxu0 %v43
  %v4193 = vpop.f32.mrf.mxu0
  %v4194 = vadd.f32 0.0, %v4193
  %v4195 = vpop.f32.mrf.mxu0
  %4196 = vmatprep.mubr.f32.mxu0 %v119
  %4197 = vmatmul.mubr.f32.gmra.mxu0 %v45
  %v4198 = vpop.f32.mrf.mxu0
  %v4199 = vadd.f32 0.0, %v4198
  %v4200 = vpop.f32.mrf.mxu0
  %4201 = vmatprep.mubr.f32.mxu0 %v122
  %4202 = vmatmul.mubr.f32.gmra.mxu0 %v47
  %v4203 = vpop.f32.mrf.mxu0
  %v4204 = vadd.f32 0.0, %v4203
  %v4205 = vpop.f32.mrf.mxu0
  %4206 = vmatprep.mubr.f32.mxu0 %v125
  %4207 = vmatmul.mubr.f32.gmra.mxu0 %v49
  %v4208 = vpop.f32.mrf.mxu0
  %v4209 = vadd.f32 0.0, %v4208
  %v4210 = vpop.f32.mrf.mxu0
  %4211 = vmatprep.mubr.f32.mxu0 %v128
  %4212 = vmatmul.mubr.f32.gmra.mxu0 %v51
  %v4213 = vpop.f32.mrf.mxu0
  %v4214 = vadd.f32 0.0, %v4213
  %v4215 = vpop.f32.mrf.mxu0
  %4216 = vmatprep.mubr.f32.mxu0 %v131
  %4217 = vmatmul.mubr.f32.gmra.mxu0 %v53
  %v4218 = vpop.f32.mrf.mxu0
  %v4219 = vadd.f32 0.0, %v4218
  %v4220 = vpop.f32.mrf.mxu0
  %4221 = vmatprep.mubr.f32.mxu0 %v134
  %4222 = vmatmul.mubr.f32.gmra.mxu0 %v55
  %v4223 = vpop.f32.mrf.mxu0
  %v4224 = vadd.f32 0.0, %v4223
  %v4225 = vpop.f32.mrf.mxu0
  %4226 = vmatprep.mubr.f32.mxu0 %v137
  %4227 = vmatmul.mubr.f32.gmra.mxu0 %v57
  %v4228 = vpop.f32.mrf.mxu0
  %v4229 = vadd.f32 0.0, %v4228
  %v4230 = vpop.f32.mrf.mxu0
  %4231 = vmatprep.mubr.f32.mxu0 %v140
  %4232 = vmatmul.mubr.f32.gmra.mxu0 %v59
  %v4233 = vpop.f32.mrf.mxu0
  %v4234 = vadd.f32 0.0, %v4233
  %v4235 = vpop.f32.mrf.mxu0
  %4236 = vmatprep.mubr.f32.mxu0 %v143
  %4237 = vmatmul.mubr.f32.gmra.mxu0 %v61
  %v4238 = vpop.f32.mrf.mxu0
  %v4239 = vadd.f32 0.0, %v4238
  %v4240 = vpop.f32.mrf.mxu0
  %4241 = vmatprep.mubr.f32.mxu0 %v146
  %4242 = vmatmul.mubr.f32.gmra.mxu0 %v63
  %v4243 = vpop.f32.mrf.mxu0
  %v4244 = vadd.f32 0.0, %v4243
  %v4245 = vpop.f32.mrf.mxu0
  %4246 = vmatprep.mubr.f32.mxu0 %v149
  %4247 = vmatmul.mubr.f32.gmra.mxu0 %v65
  %v4248 = vpop.f32.mrf.mxu0
  %v4249 = vadd.f32 0.0, %v4248
  %v4250 = vpop.f32.mrf.mxu0
  %4251 = vmatprep.mubr.f32.mxu0 %v152
  %4252 = vmatmul.mubr.f32.gmra.mxu0 %v67
  %v4253 = vpop.f32.mrf.mxu0
  %v4254 = vadd.f32 0.0, %v4253
  %v4255 = vpop.f32.mrf.mxu0
  %4256 = vmatprep.mubr.f32.mxu0 %v155
  %4257 = vmatmul.mubr.f32.gmra.mxu0 %v69
  %v4258 = vpop.f32.mrf.mxu0
  %v4259 = vadd.f32 0.0, %v4258
  %v4260 = vpop.f32.mrf.mxu0
  %4261 = vmatprep.mubr.f32.mxu0 %v158
  %4262 = vmatmul.mubr.f32.gmra.mxu0 %v71
  %v4263 = vpop.f32.mrf.mxu0
  %v4264 = vadd.f32 0.0, %v4263
  %v4265 = vpop.f32.mrf.mxu0
  %4266 = vmatprep.mubr.f32.mxu0 %v161
  %4267 = vmatmul.mubr.f32.gmra.mxu0 %v73
  %v4268 = vpop.f32.mrf.mxu0
  %v4269 = vadd.f32 0.0, %v4268
  %v4270 = vpop.f32.mrf.mxu0
  %4271 = vmatprep.mubr.f32.mxu0 %v164
  %4272 = vmatmul.mubr.f32.gmra.mxu0 %v75
  %v4273 = vpop.f32.mrf.mxu0
  %v4274 = vadd.f32 0.0, %v4273
  %v4275 = vpop.f32.mrf.mxu0
  %4276 = vmatprep.mubr.f32.mxu0 %v167
  %4277 = vmatmul.mubr.f32.gmra.mxu0 %v77
  %v4278 = vpop.f32.mrf.mxu0
  %v4279 = vadd.f32 0.0, %v4278
  %v4280 = vpop.f32.mrf.mxu0
  %4281 = vmatprep.mubr.f32.mxu0 %v170
  %4282 = vmatmul.mubr.f32.gmra.mxu0 %v79
  %v4283 = vpop.f32.mrf.mxu0
  %v4284 = vadd.f32 0.0, %v4283
  %v4285 = vpop.f32.mrf.mxu0
  %4286 = vmatprep.mubr.f32.mxu0 %v173
  %4287 = vmatmul.mubr.f32.gmra.mxu0 %v81
  %v4288 = vpop.f32.mrf.mxu0
  %v4289 = vadd.f32 0.0, %v4288
  %v4290 = vpop.f32.mrf.mxu0
  %4291 = vmatprep.mubr.f32.mxu0 %v176
  %4292 = vmatmul.mubr.f32.gmra.mxu0 %v83
  %v4293 = vpop.f32.mrf.mxu0
  %v4294 = vadd.f32 0.0, %v4293
  %v4295 = vpop.f32.mrf.mxu0
  %4296 = vmatprep.mubr.f32.mxu0 %v179
  %4297 = vmatmul.mubr.f32.gmra.mxu0 %v85
  %v4298 = vpop.f32.mrf.mxu0
  %v4299 = vadd.f32 0.0, %v4298
  %v4300 = vpop.f32.mrf.mxu0
  %4301 = vdwg.mxu0
  %v4302 = vmax.f32 %v3978, %v4184
  %v4303 = vmax.f32 %v3983, %v4189
  %v4304 = vmax.f32 %v3988, %v4194
  %v4305 = vmax.f32 %v3993, %v4199
  %v4306 = vmax.f32 %v3998, %v4204
  %v4307 = vmax.f32 %v4003, %v4209
  %v4308 = vmax.f32 %v4008, %v4214
  %v4309 = vmax.f32 %v4013, %v4219
  %v4310 = vmax.f32 %v4018, %v4224
  %v4311 = vmax.f32 %v4023, %v4229
  %v4312 = vmax.f32 %v4028, %v4234
  %v4313 = vmax.f32 %v4033, %v4239
  %v4314 = vmax.f32 %v4038, %v4244
  %v4315 = vmax.f32 %v4043, %v4249
  %v4316 = vmax.f32 %v4048, %v4254
  %v4317 = vmax.f32 %v4053, %v4259
  %v4318 = vmax.f32 %v4058, %v4264
  %v4319 = vmax.f32 %v4063, %v4269
  %v4320 = vmax.f32 %v4068, %v4274
  %v4321 = vmax.f32 %v4073, %v4279
  %v4322 = vmax.f32 %v4078, %v4284
  %v4323 = vmax.f32 %v4083, %v4289
  %v4324 = vmax.f32 %v4088, %v4294
  %v4325 = vmax.f32 %v4093, %v4299
  %v4326 = vmax.f32 %v4302, %v4303
  %v4327 = vmax.f32 %v4304, %v4305
  %v4328 = vmax.f32 %v4306, %v4307
  %v4329 = vmax.f32 %v4308, %v4309
  %v4330 = vmax.f32 %v4310, %v4311
  %v4331 = vmax.f32 %v4312, %v4313
  %v4332 = vmax.f32 %v4314, %v4315
  %v4333 = vmax.f32 %v4316, %v4317
  %v4334 = vmax.f32 %v4318, %v4319
  %v4335 = vmax.f32 %v4320, %v4321
  %v4336 = vmax.f32 %v4322, %v4323
  %v4337 = vmax.f32 %v4324, %v4325
  %v4338 = vadd.f32 %v4326, %v87
  %v4339 = vadd.f32 %v4327, %v87
  %v4340 = vadd.f32 %v4328, %v87
  %v4341 = vadd.f32 %v4329, %v87
  %v4342 = vadd.f32 %v4330, %v87
  %v4343 = vadd.f32 %v4331, %v87
  %v4344 = vadd.f32 %v4332, %v87
  %v4345 = vadd.f32 %v4333, %v87
  %v4346 = vadd.f32 %v4334, %v87
  %v4347 = vadd.f32 %v4335, %v87
  %v4348 = vadd.f32 %v4336, %v87
  %v4349 = vadd.f32 %v4337, %v87
  %v4350 = vmax.f32 %v4338, 0.0
  %v4351 = vmax.f32 %v4339, 0.0
  %v4352 = vmax.f32 %v4340, 0.0
  %v4353 = vmax.f32 %v4341, 0.0
  %v4354 = vmax.f32 %v4342, 0.0
  %v4355 = vmax.f32 %v4343, 0.0
  %v4356 = vmax.f32 %v4344, 0.0
  %v4357 = vmax.f32 %v4345, 0.0
  %v4358 = vmax.f32 %v4346, 0.0
  %v4359 = vmax.f32 %v4347, 0.0
  %v4360 = vmax.f32 %v4348, 0.0
  %v4361 = vmax.f32 %v4349, 0.0
  %v4362 = vpack.c.bf16 %v4351, %v4350
  %v4363 = vpack.c.bf16 %v4353, %v4352
  %v4364 = vpack.c.bf16 %v4355, %v4354
  %v4365 = vpack.c.bf16 %v4357, %v4356
  %v4366 = vpack.c.bf16 %v4359, %v4358
  %v4367 = vpack.c.bf16 %v4361, %v4360
  %v4374 = vunpack.c.l.b16 %v4362
  %v4375 = vunpack.c.h.b16 %v4362
  %v4376 = vunpack.c.l.b16 %v4363
  %v4377 = vunpack.c.h.b16 %v4363
  %v4378 = vunpack.c.l.b16 %v4364
  %v4379 = vunpack.c.h.b16 %v4364
  %v4380 = vunpack.c.l.b16 %v4365
  %v4381 = vunpack.c.h.b16 %v4365
  %v4382 = vunpack.c.l.b16 %v4366
  %v4383 = vunpack.c.h.b16 %v4366
  %v4384 = vunpack.c.l.b16 %v4367
  %v4385 = vunpack.c.h.b16 %v4367
  %v4386 = vpack.c.b16 %v4374, %v4374
  %v4387 = vpack.c.b16 %v4375, %v4375
  %v4388 = vpack.c.b16 %v4376, %v4376
  %v4389 = vpack.c.b16 %v4377, %v4377
  %v4390 = vpack.c.b16 %v4378, %v4378
  %v4391 = vpack.c.b16 %v4379, %v4379
  %v4392 = vpack.c.b16 %v4380, %v4380
  %v4393 = vpack.c.b16 %v4381, %v4381
  %v4394 = vpack.c.b16 %v4382, %v4382
  %v4395 = vpack.c.b16 %v4383, %v4383
  %v4396 = vpack.c.b16 %v4384, %v4384
  %v4397 = vpack.c.b16 %v4385, %v4385
  %s4410 = scalar_lea.vmem [#allocation2], 336
  %4411 = vst [vmem:[%s4410] sm:$0xf] %v4386
  %4412 = vst [vmem:[%s4410 + $0x4] sm:$0xf] %v4387
  %4413 = vst [vmem:[%s4410 + $0x8] sm:$0xf] %v4388
  %4414 = vst [vmem:[%s4410 + $0xc] sm:$0xf] %v4389
  %4415 = vst [vmem:[%s4410 + $0x10] sm:$0xf] %v4390
  %4416 = vst [vmem:[%s4410 + $0x14] sm:$0xf] %v4391
  %4417 = vst [vmem:[%s4410 + $0x18] sm:$0xf] %v4392
  %4418 = vst [vmem:[%s4410 + $0x1c] sm:$0xf] %v4393
  %4419 = vst [vmem:[%s4410 + $0x20] sm:$0xf] %v4394
  %4420 = vst [vmem:[%s4410 + $0x24] sm:$0xf] %v4395
  %4421 = vst [vmem:[%s4410 + $0x28] sm:$0xf] %v4396
  %4422 = vst [vmem:[%s4410 + $0x2c] sm:$0xf] %v4397
  %s4423 = scalar_lea.vmem %s0, 512
  %v4424 = vld [vmem:[%s4423] sm:$0xff]
  %v4425 = vld [vmem:[%s4423 + $0x8] sm:$0xff]
  %v4426 = vld [vmem:[%s4423 + $0x10] sm:$0xff]
  %v4427 = vld [vmem:[%s4423 + $0x18] sm:$0xff]
  %v4428 = vld [vmem:[%s4423 + $0x20] sm:$0xff]
  %v4429 = vld [vmem:[%s4423 + $0x28] sm:$0xff]
  %v4430 = vld [vmem:[%s4423 + $0x30] sm:$0xff]
  %v4431 = vld [vmem:[%s4423 + $0x38] sm:$0xff]
  %v4432 = vld [vmem:[%s4423 + $0x40] sm:$0xff]
  %v4433 = vld [vmem:[%s4423 + $0x48] sm:$0xff]
  %v4434 = vld [vmem:[%s4423 + $0x50] sm:$0xff]
  %v4435 = vld [vmem:[%s4423 + $0x58] sm:$0xff]
  %v4436 = vld [vmem:[%s4423 + $0x60] sm:$0xff]
  %v4437 = vld [vmem:[%s4423 + $0x68] sm:$0xff]
  %v4438 = vld [vmem:[%s4423 + $0x70] sm:$0xff]
  %v4439 = vld [vmem:[%s4423 + $0x78] sm:$0xff]
  %v4440 = vld [vmem:[%s4423 + $0x80] sm:$0xff]
  %v4441 = vld [vmem:[%s4423 + $0x88] sm:$0xff]
  %v4442 = vld [vmem:[%s4423 + $0x90] sm:$0xff]
  %v4443 = vld [vmem:[%s4423 + $0x98] sm:$0xff]
  %4444 = vmatprep.subr.mxu0 0.0
  %4445 = vmatpush1.msra.mxu0 %v4439
  %4446 = vmatprep.subr.mxu0 0.0
  %4447 = vmatpush1.msra.mxu0 %v4438
  %4448 = vmatprep.subr.mxu0 0.0
  %4449 = vmatpush1.msra.mxu0 %v4437
  %4450 = vmatprep.subr.mxu0 0.0
  %4451 = vmatpush1.msra.mxu0 %v4436
  %4452 = vmatprep.subr.mxu0 0.0
  %4453 = vmatpush1.msra.mxu0 %v4435
  %4454 = vmatprep.subr.mxu0 0.0
  %4455 = vmatpush1.msra.mxu0 %v4434
  %4456 = vmatprep.subr.mxu0 0.0
  %4457 = vmatpush1.msra.mxu0 %v4433
  %4458 = vmatprep.subr.mxu0 0.0
  %4459 = vmatpush1.msra.mxu0 %v4432
  %4460 = vmatprep.subr.mxu0 0.0
  %4461 = vmatpush1.msra.mxu0 %v4431
  %4462 = vmatprep.subr.mxu0 0.0
  %4463 = vmatpush1.msra.mxu0 %v4430
  %4464 = vmatprep.subr.mxu0 0.0
  %4465 = vmatpush1.msra.mxu0 %v4429
  %4466 = vmatprep.subr.mxu0 0.0
  %4467 = vmatpush1.msra.mxu0 %v4428
  %4468 = vmatprep.subr.mxu0 0.0
  %4469 = vmatpush1.msra.mxu0 %v4427
  %4470 = vmatprep.subr.mxu0 0.0
  %4471 = vmatpush1.msra.mxu0 %v4426
  %4472 = vmatprep.subr.mxu0 0.0
  %4473 = vmatpush1.msra.mxu0 %v4425
  %4474 = vmatprep.subr.mxu0 0.0
  %4475 = vmatpush1.msra.mxu0 %v4424
  %4476 = vmatprep.subr.mxu0 0.0
  %4477 = vmatpush2.msra.mxu0 0.0
  %4478 = vmatprep.subr.mxu0 0.0
  %4479 = vmatpush2.msra.mxu0 0.0
  %4480 = vmatprep.subr.mxu0 0.0
  %4481 = vmatpush2.msra.mxu0 0.0
  %4482 = vmatprep.subr.mxu0 0.0
  %4483 = vmatpush2.msra.mxu0 0.0
  %4484 = vmatprep.subr.mxu0 0.0
  %4485 = vmatpush2.msra.mxu0 0.0
  %4486 = vmatprep.subr.mxu0 0.0
  %4487 = vmatpush2.msra.mxu0 0.0
  %4488 = vmatprep.subr.mxu0 0.0
  %4489 = vmatpush2.msra.mxu0 0.0
  %4490 = vmatprep.subr.mxu0 0.0
  %4491 = vmatpush2.msra.mxu0 0.0
  %4492 = vmatprep.subr.mxu0 0.0
  %4493 = vmatpush2.msra.mxu0 0.0
  %4494 = vmatprep.subr.mxu0 0.0
  %4495 = vmatpush2.msra.mxu0 0.0
  %4496 = vmatprep.subr.mxu0 0.0
  %4497 = vmatpush2.msra.mxu0 0.0
  %4498 = vmatprep.subr.mxu0 0.0
  %4499 = vmatpush2.msra.mxu0 0.0
  %4500 = vmatprep.subr.mxu0 0.0
  %4501 = vmatpush2.msra.mxu0 %v4443
  %4502 = vmatprep.subr.mxu0 0.0
  %4503 = vmatpush2.msra.mxu0 %v4442
  %4504 = vmatprep.subr.mxu0 0.0
  %4505 = vmatpush2.msra.mxu0 %v4441
  %4506 = vmatprep.subr.mxu0 0.0
  %4507 = vmatpush2.msra.mxu0 %v4440
  %4508 = vmatprep.mubr.f32.mxu0 %v110
  %4509 = vmatmul.mubr.f32.gmra.mxu0 %v39
  %v4510 = vpop.f32.mrf.mxu0
  %v4511 = vadd.f32 0.0, %v4510
  %v4512 = vpop.f32.mrf.mxu0
  %4513 = vmatprep.mubr.f32.mxu0 %v113
  %4514 = vmatmul.mubr.f32.gmra.mxu0 %v41
  %v4515 = vpop.f32.mrf.mxu0
  %v4516 = vadd.f32 0.0, %v4515
  %v4517 = vpop.f32.mrf.mxu0
  %4518 = vmatprep.mubr.f32.mxu0 %v116
  %4519 = vmatmul.mubr.f32.gmra.mxu0 %v43
  %v4520 = vpop.f32.mrf.mxu0
  %v4521 = vadd.f32 0.0, %v4520
  %v4522 = vpop.f32.mrf.mxu0
  %4523 = vmatprep.mubr.f32.mxu0 %v119
  %4524 = vmatmul.mubr.f32.gmra.mxu0 %v45
  %v4525 = vpop.f32.mrf.mxu0
  %v4526 = vadd.f32 0.0, %v4525
  %v4527 = vpop.f32.mrf.mxu0
  %4528 = vmatprep.mubr.f32.mxu0 %v122
  %4529 = vmatmul.mubr.f32.gmra.mxu0 %v47
  %v4530 = vpop.f32.mrf.mxu0
  %v4531 = vadd.f32 0.0, %v4530
  %v4532 = vpop.f32.mrf.mxu0
  %4533 = vmatprep.mubr.f32.mxu0 %v125
  %4534 = vmatmul.mubr.f32.gmra.mxu0 %v49
  %v4535 = vpop.f32.mrf.mxu0
  %v4536 = vadd.f32 0.0, %v4535
  %v4537 = vpop.f32.mrf.mxu0
  %4538 = vmatprep.mubr.f32.mxu0 %v128
  %4539 = vmatmul.mubr.f32.gmra.mxu0 %v51
  %v4540 = vpop.f32.mrf.mxu0
  %v4541 = vadd.f32 0.0, %v4540
  %v4542 = vpop.f32.mrf.mxu0
  %4543 = vmatprep.mubr.f32.mxu0 %v131
  %4544 = vmatmul.mubr.f32.gmra.mxu0 %v53
  %v4545 = vpop.f32.mrf.mxu0
  %v4546 = vadd.f32 0.0, %v4545
  %v4547 = vpop.f32.mrf.mxu0
  %4548 = vmatprep.mubr.f32.mxu0 %v134
  %4549 = vmatmul.mubr.f32.gmra.mxu0 %v55
  %v4550 = vpop.f32.mrf.mxu0
  %v4551 = vadd.f32 0.0, %v4550
  %v4552 = vpop.f32.mrf.mxu0
  %4553 = vmatprep.mubr.f32.mxu0 %v137
  %4554 = vmatmul.mubr.f32.gmra.mxu0 %v57
  %v4555 = vpop.f32.mrf.mxu0
  %v4556 = vadd.f32 0.0, %v4555
  %v4557 = vpop.f32.mrf.mxu0
  %4558 = vmatprep.mubr.f32.mxu0 %v140
  %4559 = vmatmul.mubr.f32.gmra.mxu0 %v59
  %v4560 = vpop.f32.mrf.mxu0
  %v4561 = vadd.f32 0.0, %v4560
  %v4562 = vpop.f32.mrf.mxu0
  %4563 = vmatprep.mubr.f32.mxu0 %v143
  %4564 = vmatmul.mubr.f32.gmra.mxu0 %v61
  %v4565 = vpop.f32.mrf.mxu0
  %v4566 = vadd.f32 0.0, %v4565
  %v4567 = vpop.f32.mrf.mxu0
  %4568 = vmatprep.mubr.f32.mxu0 %v146
  %4569 = vmatmul.mubr.f32.gmra.mxu0 %v63
  %v4570 = vpop.f32.mrf.mxu0
  %v4571 = vadd.f32 0.0, %v4570
  %v4572 = vpop.f32.mrf.mxu0
  %4573 = vmatprep.mubr.f32.mxu0 %v149
  %4574 = vmatmul.mubr.f32.gmra.mxu0 %v65
  %v4575 = vpop.f32.mrf.mxu0
  %v4576 = vadd.f32 0.0, %v4575
  %v4577 = vpop.f32.mrf.mxu0
  %4578 = vmatprep.mubr.f32.mxu0 %v152
  %4579 = vmatmul.mubr.f32.gmra.mxu0 %v67
  %v4580 = vpop.f32.mrf.mxu0
  %v4581 = vadd.f32 0.0, %v4580
  %v4582 = vpop.f32.mrf.mxu0
  %4583 = vmatprep.mubr.f32.mxu0 %v155
  %4584 = vmatmul.mubr.f32.gmra.mxu0 %v69
  %v4585 = vpop.f32.mrf.mxu0
  %v4586 = vadd.f32 0.0, %v4585
  %v4587 = vpop.f32.mrf.mxu0
  %4588 = vmatprep.mubr.f32.mxu0 %v158
  %4589 = vmatmul.mubr.f32.gmra.mxu0 %v71
  %v4590 = vpop.f32.mrf.mxu0
  %v4591 = vadd.f32 0.0, %v4590
  %v4592 = vpop.f32.mrf.mxu0
  %4593 = vmatprep.mubr.f32.mxu0 %v161
  %4594 = vmatmul.mubr.f32.gmra.mxu0 %v73
  %v4595 = vpop.f32.mrf.mxu0
  %v4596 = vadd.f32 0.0, %v4595
  %v4597 = vpop.f32.mrf.mxu0
  %4598 = vmatprep.mubr.f32.mxu0 %v164
  %4599 = vmatmul.mubr.f32.gmra.mxu0 %v75
  %v4600 = vpop.f32.mrf.mxu0
  %v4601 = vadd.f32 0.0, %v4600
  %v4602 = vpop.f32.mrf.mxu0
  %4603 = vmatprep.mubr.f32.mxu0 %v167
  %4604 = vmatmul.mubr.f32.gmra.mxu0 %v77
  %v4605 = vpop.f32.mrf.mxu0
  %v4606 = vadd.f32 0.0, %v4605
  %v4607 = vpop.f32.mrf.mxu0
  %4608 = vmatprep.mubr.f32.mxu0 %v170
  %4609 = vmatmul.mubr.f32.gmra.mxu0 %v79
  %v4610 = vpop.f32.mrf.mxu0
  %v4611 = vadd.f32 0.0, %v4610
  %v4612 = vpop.f32.mrf.mxu0
  %4613 = vmatprep.mubr.f32.mxu0 %v173
  %4614 = vmatmul.mubr.f32.gmra.mxu0 %v81
  %v4615 = vpop.f32.mrf.mxu0
  %v4616 = vadd.f32 0.0, %v4615
  %v4617 = vpop.f32.mrf.mxu0
  %4618 = vmatprep.mubr.f32.mxu0 %v176
  %4619 = vmatmul.mubr.f32.gmra.mxu0 %v83
  %v4620 = vpop.f32.mrf.mxu0
  %v4621 = vadd.f32 0.0, %v4620
  %v4622 = vpop.f32.mrf.mxu0
  %4623 = vmatprep.mubr.f32.mxu0 %v179
  %4624 = vmatmul.mubr.f32.gmra.mxu0 %v85
  %v4625 = vpop.f32.mrf.mxu0
  %v4626 = vadd.f32 0.0, %v4625
  %v4627 = vpop.f32.mrf.mxu0
  %4628 = vdwg.mxu0
  %s4629 = scalar_lea.vmem %s0, 544
  %v4630 = vld [vmem:[%s4629] sm:$0xff]
  %v4631 = vld [vmem:[%s4629 + $0x8] sm:$0xff]
  %v4632 = vld [vmem:[%s4629 + $0x10] sm:$0xff]
  %v4633 = vld [vmem:[%s4629 + $0x18] sm:$0xff]
  %v4634 = vld [vmem:[%s4629 + $0x20] sm:$0xff]
  %v4635 = vld [vmem:[%s4629 + $0x28] sm:$0xff]
  %v4636 = vld [vmem:[%s4629 + $0x30] sm:$0xff]
  %v4637 = vld [vmem:[%s4629 + $0x38] sm:$0xff]
  %v4638 = vld [vmem:[%s4629 + $0x40] sm:$0xff]
  %v4639 = vld [vmem:[%s4629 + $0x48] sm:$0xff]
  %v4640 = vld [vmem:[%s4629 + $0x50] sm:$0xff]
  %v4641 = vld [vmem:[%s4629 + $0x58] sm:$0xff]
  %v4642 = vld [vmem:[%s4629 + $0x60] sm:$0xff]
  %v4643 = vld [vmem:[%s4629 + $0x68] sm:$0xff]
  %v4644 = vld [vmem:[%s4629 + $0x70] sm:$0xff]
  %v4645 = vld [vmem:[%s4629 + $0x78] sm:$0xff]
  %v4646 = vld [vmem:[%s4629 + $0x80] sm:$0xff]
  %v4647 = vld [vmem:[%s4629 + $0x88] sm:$0xff]
  %v4648 = vld [vmem:[%s4629 + $0x90] sm:$0xff]
  %v4649 = vld [vmem:[%s4629 + $0x98] sm:$0xff]
  %4650 = vmatprep.subr.mxu0 0.0
  %4651 = vmatpush1.msra.mxu0 %v4645
  %4652 = vmatprep.subr.mxu0 0.0
  %4653 = vmatpush1.msra.mxu0 %v4644
  %4654 = vmatprep.subr.mxu0 0.0
  %4655 = vmatpush1.msra.mxu0 %v4643
  %4656 = vmatprep.subr.mxu0 0.0
  %4657 = vmatpush1.msra.mxu0 %v4642
  %4658 = vmatprep.subr.mxu0 0.0
  %4659 = vmatpush1.msra.mxu0 %v4641
  %4660 = vmatprep.subr.mxu0 0.0
  %4661 = vmatpush1.msra.mxu0 %v4640
  %4662 = vmatprep.subr.mxu0 0.0
  %4663 = vmatpush1.msra.mxu0 %v4639
  %4664 = vmatprep.subr.mxu0 0.0
  %4665 = vmatpush1.msra.mxu0 %v4638
  %4666 = vmatprep.subr.mxu0 0.0
  %4667 = vmatpush1.msra.mxu0 %v4637
  %4668 = vmatprep.subr.mxu0 0.0
  %4669 = vmatpush1.msra.mxu0 %v4636
  %4670 = vmatprep.subr.mxu0 0.0
  %4671 = vmatpush1.msra.mxu0 %v4635
  %4672 = vmatprep.subr.mxu0 0.0
  %4673 = vmatpush1.msra.mxu0 %v4634
  %4674 = vmatprep.subr.mxu0 0.0
  %4675 = vmatpush1.msra.mxu0 %v4633
  %4676 = vmatprep.subr.mxu0 0.0
  %4677 = vmatpush1.msra.mxu0 %v4632
  %4678 = vmatprep.subr.mxu0 0.0
  %4679 = vmatpush1.msra.mxu0 %v4631
  %4680 = vmatprep.subr.mxu0 0.0
  %4681 = vmatpush1.msra.mxu0 %v4630
  %4682 = vmatprep.subr.mxu0 0.0
  %4683 = vmatpush2.msra.mxu0 0.0
  %4684 = vmatprep.subr.mxu0 0.0
  %4685 = vmatpush2.msra.mxu0 0.0
  %4686 = vmatprep.subr.mxu0 0.0
  %4687 = vmatpush2.msra.mxu0 0.0
  %4688 = vmatprep.subr.mxu0 0.0
  %4689 = vmatpush2.msra.mxu0 0.0
  %4690 = vmatprep.subr.mxu0 0.0
  %4691 = vmatpush2.msra.mxu0 0.0
  %4692 = vmatprep.subr.mxu0 0.0
  %4693 = vmatpush2.msra.mxu0 0.0
  %4694 = vmatprep.subr.mxu0 0.0
  %4695 = vmatpush2.msra.mxu0 0.0
  %4696 = vmatprep.subr.mxu0 0.0
  %4697 = vmatpush2.msra.mxu0 0.0
  %4698 = vmatprep.subr.mxu0 0.0
  %4699 = vmatpush2.msra.mxu0 0.0
  %4700 = vmatprep.subr.mxu0 0.0
  %4701 = vmatpush2.msra.mxu0 0.0
  %4702 = vmatprep.subr.mxu0 0.0
  %4703 = vmatpush2.msra.mxu0 0.0
  %4704 = vmatprep.subr.mxu0 0.0
  %4705 = vmatpush2.msra.mxu0 0.0
  %4706 = vmatprep.subr.mxu0 0.0
  %4707 = vmatpush2.msra.mxu0 %v4649
  %4708 = vmatprep.subr.mxu0 0.0
  %4709 = vmatpush2.msra.mxu0 %v4648
  %4710 = vmatprep.subr.mxu0 0.0
  %4711 = vmatpush2.msra.mxu0 %v4647
  %4712 = vmatprep.subr.mxu0 0.0
  %4713 = vmatpush2.msra.mxu0 %v4646
  %4714 = vmatprep.mubr.f32.mxu0 %v110
  %4715 = vmatmul.mubr.f32.gmra.mxu0 %v39
  %v4716 = vpop.f32.mrf.mxu0
  %v4717 = vadd.f32 0.0, %v4716
  %v4718 = vpop.f32.mrf.mxu0
  %4719 = vmatprep.mubr.f32.mxu0 %v113
  %4720 = vmatmul.mubr.f32.gmra.mxu0 %v41
  %v4721 = vpop.f32.mrf.mxu0
  %v4722 = vadd.f32 0.0, %v4721
  %v4723 = vpop.f32.mrf.mxu0
  %4724 = vmatprep.mubr.f32.mxu0 %v116
  %4725 = vmatmul.mubr.f32.gmra.mxu0 %v43
  %v4726 = vpop.f32.mrf.mxu0
  %v4727 = vadd.f32 0.0, %v4726
  %v4728 = vpop.f32.mrf.mxu0
  %4729 = vmatprep.mubr.f32.mxu0 %v119
  %4730 = vmatmul.mubr.f32.gmra.mxu0 %v45
  %v4731 = vpop.f32.mrf.mxu0
  %v4732 = vadd.f32 0.0, %v4731
  %v4733 = vpop.f32.mrf.mxu0
  %4734 = vmatprep.mubr.f32.mxu0 %v122
  %4735 = vmatmul.mubr.f32.gmra.mxu0 %v47
  %v4736 = vpop.f32.mrf.mxu0
  %v4737 = vadd.f32 0.0, %v4736
  %v4738 = vpop.f32.mrf.mxu0
  %4739 = vmatprep.mubr.f32.mxu0 %v125
  %4740 = vmatmul.mubr.f32.gmra.mxu0 %v49
  %v4741 = vpop.f32.mrf.mxu0
  %v4742 = vadd.f32 0.0, %v4741
  %v4743 = vpop.f32.mrf.mxu0
  %4744 = vmatprep.mubr.f32.mxu0 %v128
  %4745 = vmatmul.mubr.f32.gmra.mxu0 %v51
  %v4746 = vpop.f32.mrf.mxu0
  %v4747 = vadd.f32 0.0, %v4746
  %v4748 = vpop.f32.mrf.mxu0
  %4749 = vmatprep.mubr.f32.mxu0 %v131
  %4750 = vmatmul.mubr.f32.gmra.mxu0 %v53
  %v4751 = vpop.f32.mrf.mxu0
  %v4752 = vadd.f32 0.0, %v4751
  %v4753 = vpop.f32.mrf.mxu0
  %4754 = vmatprep.mubr.f32.mxu0 %v134
  %4755 = vmatmul.mubr.f32.gmra.mxu0 %v55
  %v4756 = vpop.f32.mrf.mxu0
  %v4757 = vadd.f32 0.0, %v4756
  %v4758 = vpop.f32.mrf.mxu0
  %4759 = vmatprep.mubr.f32.mxu0 %v137
  %4760 = vmatmul.mubr.f32.gmra.mxu0 %v57
  %v4761 = vpop.f32.mrf.mxu0
  %v4762 = vadd.f32 0.0, %v4761
  %v4763 = vpop.f32.mrf.mxu0
  %4764 = vmatprep.mubr.f32.mxu0 %v140
  %4765 = vmatmul.mubr.f32.gmra.mxu0 %v59
  %v4766 = vpop.f32.mrf.mxu0
  %v4767 = vadd.f32 0.0, %v4766
  %v4768 = vpop.f32.mrf.mxu0
  %4769 = vmatprep.mubr.f32.mxu0 %v143
  %4770 = vmatmul.mubr.f32.gmra.mxu0 %v61
  %v4771 = vpop.f32.mrf.mxu0
  %v4772 = vadd.f32 0.0, %v4771
  %v4773 = vpop.f32.mrf.mxu0
  %4774 = vmatprep.mubr.f32.mxu0 %v146
  %4775 = vmatmul.mubr.f32.gmra.mxu0 %v63
  %v4776 = vpop.f32.mrf.mxu0
  %v4777 = vadd.f32 0.0, %v4776
  %v4778 = vpop.f32.mrf.mxu0
  %4779 = vmatprep.mubr.f32.mxu0 %v149
  %4780 = vmatmul.mubr.f32.gmra.mxu0 %v65
  %v4781 = vpop.f32.mrf.mxu0
  %v4782 = vadd.f32 0.0, %v4781
  %v4783 = vpop.f32.mrf.mxu0
  %4784 = vmatprep.mubr.f32.mxu0 %v152
  %4785 = vmatmul.mubr.f32.gmra.mxu0 %v67
  %v4786 = vpop.f32.mrf.mxu0
  %v4787 = vadd.f32 0.0, %v4786
  %v4788 = vpop.f32.mrf.mxu0
  %4789 = vmatprep.mubr.f32.mxu0 %v155
  %4790 = vmatmul.mubr.f32.gmra.mxu0 %v69
  %v4791 = vpop.f32.mrf.mxu0
  %v4792 = vadd.f32 0.0, %v4791
  %v4793 = vpop.f32.mrf.mxu0
  %4794 = vmatprep.mubr.f32.mxu0 %v158
  %4795 = vmatmul.mubr.f32.gmra.mxu0 %v71
  %v4796 = vpop.f32.mrf.mxu0
  %v4797 = vadd.f32 0.0, %v4796
  %v4798 = vpop.f32.mrf.mxu0
  %4799 = vmatprep.mubr.f32.mxu0 %v161
  %4800 = vmatmul.mubr.f32.gmra.mxu0 %v73
  %v4801 = vpop.f32.mrf.mxu0
  %v4802 = vadd.f32 0.0, %v4801
  %v4803 = vpop.f32.mrf.mxu0
  %4804 = vmatprep.mubr.f32.mxu0 %v164
  %4805 = vmatmul.mubr.f32.gmra.mxu0 %v75
  %v4806 = vpop.f32.mrf.mxu0
  %v4807 = vadd.f32 0.0, %v4806
  %v4808 = vpop.f32.mrf.mxu0
  %4809 = vmatprep.mubr.f32.mxu0 %v167
  %4810 = vmatmul.mubr.f32.gmra.mxu0 %v77
  %v4811 = vpop.f32.mrf.mxu0
  %v4812 = vadd.f32 0.0, %v4811
  %v4813 = vpop.f32.mrf.mxu0
  %4814 = vmatprep.mubr.f32.mxu0 %v170
  %4815 = vmatmul.mubr.f32.gmra.mxu0 %v79
  %v4816 = vpop.f32.mrf.mxu0
  %v4817 = vadd.f32 0.0, %v4816
  %v4818 = vpop.f32.mrf.mxu0
  %4819 = vmatprep.mubr.f32.mxu0 %v173
  %4820 = vmatmul.mubr.f32.gmra.mxu0 %v81
  %v4821 = vpop.f32.mrf.mxu0
  %v4822 = vadd.f32 0.0, %v4821
  %v4823 = vpop.f32.mrf.mxu0
  %4824 = vmatprep.mubr.f32.mxu0 %v176
  %4825 = vmatmul.mubr.f32.gmra.mxu0 %v83
  %v4826 = vpop.f32.mrf.mxu0
  %v4827 = vadd.f32 0.0, %v4826
  %v4828 = vpop.f32.mrf.mxu0
  %4829 = vmatprep.mubr.f32.mxu0 %v179
  %4830 = vmatmul.mubr.f32.gmra.mxu0 %v85
  %v4831 = vpop.f32.mrf.mxu0
  %v4832 = vadd.f32 0.0, %v4831
  %v4833 = vpop.f32.mrf.mxu0
  %4834 = vdwg.mxu0
  %v4835 = vmax.f32 %v4511, %v4717
  %v4836 = vmax.f32 %v4516, %v4722
  %v4837 = vmax.f32 %v4521, %v4727
  %v4838 = vmax.f32 %v4526, %v4732
  %v4839 = vmax.f32 %v4531, %v4737
  %v4840 = vmax.f32 %v4536, %v4742
  %v4841 = vmax.f32 %v4541, %v4747
  %v4842 = vmax.f32 %v4546, %v4752
  %v4843 = vmax.f32 %v4551, %v4757
  %v4844 = vmax.f32 %v4556, %v4762
  %v4845 = vmax.f32 %v4561, %v4767
  %v4846 = vmax.f32 %v4566, %v4772
  %v4847 = vmax.f32 %v4571, %v4777
  %v4848 = vmax.f32 %v4576, %v4782
  %v4849 = vmax.f32 %v4581, %v4787
  %v4850 = vmax.f32 %v4586, %v4792
  %v4851 = vmax.f32 %v4591, %v4797
  %v4852 = vmax.f32 %v4596, %v4802
  %v4853 = vmax.f32 %v4601, %v4807
  %v4854 = vmax.f32 %v4606, %v4812
  %v4855 = vmax.f32 %v4611, %v4817
  %v4856 = vmax.f32 %v4616, %v4822
  %v4857 = vmax.f32 %v4621, %v4827
  %v4858 = vmax.f32 %v4626, %v4832
  %v4859 = vmax.f32 %v4835, %v4836
  %v4860 = vmax.f32 %v4837, %v4838
  %v4861 = vmax.f32 %v4839, %v4840
  %v4862 = vmax.f32 %v4841, %v4842
  %v4863 = vmax.f32 %v4843, %v4844
  %v4864 = vmax.f32 %v4845, %v4846
  %v4865 = vmax.f32 %v4847, %v4848
  %v4866 = vmax.f32 %v4849, %v4850
  %v4867 = vmax.f32 %v4851, %v4852
  %v4868 = vmax.f32 %v4853, %v4854
  %v4869 = vmax.f32 %v4855, %v4856
  %v4870 = vmax.f32 %v4857, %v4858
  %v4871 = vadd.f32 %v4859, %v87
  %v4872 = vadd.f32 %v4860, %v87
  %v4873 = vadd.f32 %v4861, %v87
  %v4874 = vadd.f32 %v4862, %v87
  %v4875 = vadd.f32 %v4863, %v87
  %v4876 = vadd.f32 %v4864, %v87
  %v4877 = vadd.f32 %v4865, %v87
  %v4878 = vadd.f32 %v4866, %v87
  %v4879 = vadd.f32 %v4867, %v87
  %v4880 = vadd.f32 %v4868, %v87
  %v4881 = vadd.f32 %v4869, %v87
  %v4882 = vadd.f32 %v4870, %v87
  %v4883 = vmax.f32 %v4871, 0.0
  %v4884 = vmax.f32 %v4872, 0.0
  %v4885 = vmax.f32 %v4873, 0.0
  %v4886 = vmax.f32 %v4874, 0.0
  %v4887 = vmax.f32 %v4875, 0.0
  %v4888 = vmax.f32 %v4876, 0.0
  %v4889 = vmax.f32 %v4877, 0.0
  %v4890 = vmax.f32 %v4878, 0.0
  %v4891 = vmax.f32 %v4879, 0.0
  %v4892 = vmax.f32 %v4880, 0.0
  %v4893 = vmax.f32 %v4881, 0.0
  %v4894 = vmax.f32 %v4882, 0.0
  %v4895 = vpack.c.bf16 %v4884, %v4883
  %v4896 = vpack.c.bf16 %v4886, %v4885
  %v4897 = vpack.c.bf16 %v4888, %v4887
  %v4898 = vpack.c.bf16 %v4890, %v4889
  %v4899 = vpack.c.bf16 %v4892, %v4891
  %v4900 = vpack.c.bf16 %v4894, %v4893
  %v4907 = vunpack.c.l.b16 %v4895
  %v4908 = vunpack.c.h.b16 %v4895
  %v4909 = vunpack.c.l.b16 %v4896
  %v4910 = vunpack.c.h.b16 %v4896
  %v4911 = vunpack.c.l.b16 %v4897
  %v4912 = vunpack.c.h.b16 %v4897
  %v4913 = vunpack.c.l.b16 %v4898
  %v4914 = vunpack.c.h.b16 %v4898
  %v4915 = vunpack.c.l.b16 %v4899
  %v4916 = vunpack.c.h.b16 %v4899
  %v4917 = vunpack.c.l.b16 %v4900
  %v4918 = vunpack.c.h.b16 %v4900
  %v4919 = vpack.c.b16 %v4907, %v4907
  %v4920 = vpack.c.b16 %v4908, %v4908
  %v4921 = vpack.c.b16 %v4909, %v4909
  %v4922 = vpack.c.b16 %v4910, %v4910
  %v4923 = vpack.c.b16 %v4911, %v4911
  %v4924 = vpack.c.b16 %v4912, %v4912
  %v4925 = vpack.c.b16 %v4913, %v4913
  %v4926 = vpack.c.b16 %v4914, %v4914
  %v4927 = vpack.c.b16 %v4915, %v4915
  %v4928 = vpack.c.b16 %v4916, %v4916
  %v4929 = vpack.c.b16 %v4917, %v4917
  %v4930 = vpack.c.b16 %v4918, %v4918
  %s4943 = scalar_lea.vmem [#allocation2], 384
  %4944 = vst [vmem:[%s4943] sm:$0xf] %v4919
  %4945 = vst [vmem:[%s4943 + $0x4] sm:$0xf] %v4920
  %4946 = vst [vmem:[%s4943 + $0x8] sm:$0xf] %v4921
  %4947 = vst [vmem:[%s4943 + $0xc] sm:$0xf] %v4922
  %4948 = vst [vmem:[%s4943 + $0x10] sm:$0xf] %v4923
  %4949 = vst [vmem:[%s4943 + $0x14] sm:$0xf] %v4924
  %4950 = vst [vmem:[%s4943 + $0x18] sm:$0xf] %v4925
  %4951 = vst [vmem:[%s4943 + $0x1c] sm:$0xf] %v4926
  %4952 = vst [vmem:[%s4943 + $0x20] sm:$0xf] %v4927
  %4953 = vst [vmem:[%s4943 + $0x24] sm:$0xf] %v4928
  %4954 = vst [vmem:[%s4943 + $0x28] sm:$0xf] %v4929
  %4955 = vst [vmem:[%s4943 + $0x2c] sm:$0xf] %v4930
  %s4956 = scalar_lea.vmem %s0, 576
  %v4957 = vld [vmem:[%s4956] sm:$0xff]
  %v4958 = vld [vmem:[%s4956 + $0x8] sm:$0xff]
  %v4959 = vld [vmem:[%s4956 + $0x10] sm:$0xff]
  %v4960 = vld [vmem:[%s4956 + $0x18] sm:$0xff]
  %v4961 = vld [vmem:[%s4956 + $0x20] sm:$0xff]
  %v4962 = vld [vmem:[%s4956 + $0x28] sm:$0xff]
  %v4963 = vld [vmem:[%s4956 + $0x30] sm:$0xff]
  %v4964 = vld [vmem:[%s4956 + $0x38] sm:$0xff]
  %v4965 = vld [vmem:[%s4956 + $0x40] sm:$0xff]
  %v4966 = vld [vmem:[%s4956 + $0x48] sm:$0xff]
  %v4967 = vld [vmem:[%s4956 + $0x50] sm:$0xff]
  %v4968 = vld [vmem:[%s4956 + $0x58] sm:$0xff]
  %v4969 = vld [vmem:[%s4956 + $0x60] sm:$0xff]
  %v4970 = vld [vmem:[%s4956 + $0x68] sm:$0xff]
  %v4971 = vld [vmem:[%s4956 + $0x70] sm:$0xff]
  %v4972 = vld [vmem:[%s4956 + $0x78] sm:$0xff]
  %v4973 = vld [vmem:[%s4956 + $0x80] sm:$0xff]
  %v4974 = vld [vmem:[%s4956 + $0x88] sm:$0xff]
  %v4975 = vld [vmem:[%s4956 + $0x90] sm:$0xff]
  %v4976 = vld [vmem:[%s4956 + $0x98] sm:$0xff]
  %4977 = vmatprep.subr.mxu0 0.0
  %4978 = vmatpush1.msra.mxu0 %v4972
  %4979 = vmatprep.subr.mxu0 0.0
  %4980 = vmatpush1.msra.mxu0 %v4971
  %4981 = vmatprep.subr.mxu0 0.0
  %4982 = vmatpush1.msra.mxu0 %v4970
  %4983 = vmatprep.subr.mxu0 0.0
  %4984 = vmatpush1.msra.mxu0 %v4969
  %4985 = vmatprep.subr.mxu0 0.0
  %4986 = vmatpush1.msra.mxu0 %v4968
  %4987 = vmatprep.subr.mxu0 0.0
  %4988 = vmatpush1.msra.mxu0 %v4967
  %4989 = vmatprep.subr.mxu0 0.0
  %4990 = vmatpush1.msra.mxu0 %v4966
  %4991 = vmatprep.subr.mxu0 0.0
  %4992 = vmatpush1.msra.mxu0 %v4965
  %4993 = vmatprep.subr.mxu0 0.0
  %4994 = vmatpush1.msra.mxu0 %v4964
  %4995 = vmatprep.subr.mxu0 0.0
  %4996 = vmatpush1.msra.mxu0 %v4963
  %4997 = vmatprep.subr.mxu0 0.0
  %4998 = vmatpush1.msra.mxu0 %v4962
  %4999 = vmatprep.subr.mxu0 0.0
  %5000 = vmatpush1.msra.mxu0 %v4961
  %5001 = vmatprep.subr.mxu0 0.0
  %5002 = vmatpush1.msra.mxu0 %v4960
  %5003 = vmatprep.subr.mxu0 0.0
  %5004 = vmatpush1.msra.mxu0 %v4959
  %5005 = vmatprep.subr.mxu0 0.0
  %5006 = vmatpush1.msra.mxu0 %v4958
  %5007 = vmatprep.subr.mxu0 0.0
  %5008 = vmatpush1.msra.mxu0 %v4957
  %5009 = vmatprep.subr.mxu0 0.0
  %5010 = vmatpush2.msra.mxu0 0.0
  %5011 = vmatprep.subr.mxu0 0.0
  %5012 = vmatpush2.msra.mxu0 0.0
  %5013 = vmatprep.subr.mxu0 0.0
  %5014 = vmatpush2.msra.mxu0 0.0
  %5015 = vmatprep.subr.mxu0 0.0
  %5016 = vmatpush2.msra.mxu0 0.0
  %5017 = vmatprep.subr.mxu0 0.0
  %5018 = vmatpush2.msra.mxu0 0.0
  %5019 = vmatprep.subr.mxu0 0.0
  %5020 = vmatpush2.msra.mxu0 0.0
  %5021 = vmatprep.subr.mxu0 0.0
  %5022 = vmatpush2.msra.mxu0 0.0
  %5023 = vmatprep.subr.mxu0 0.0
  %5024 = vmatpush2.msra.mxu0 0.0
  %5025 = vmatprep.subr.mxu0 0.0
  %5026 = vmatpush2.msra.mxu0 0.0
  %5027 = vmatprep.subr.mxu0 0.0
  %5028 = vmatpush2.msra.mxu0 0.0
  %5029 = vmatprep.subr.mxu0 0.0
  %5030 = vmatpush2.msra.mxu0 0.0
  %5031 = vmatprep.subr.mxu0 0.0
  %5032 = vmatpush2.msra.mxu0 0.0
  %5033 = vmatprep.subr.mxu0 0.0
  %5034 = vmatpush2.msra.mxu0 %v4976
  %5035 = vmatprep.subr.mxu0 0.0
  %5036 = vmatpush2.msra.mxu0 %v4975
  %5037 = vmatprep.subr.mxu0 0.0
  %5038 = vmatpush2.msra.mxu0 %v4974
  %5039 = vmatprep.subr.mxu0 0.0
  %5040 = vmatpush2.msra.mxu0 %v4973
  %5041 = vmatprep.mubr.f32.mxu0 %v110
  %5042 = vmatmul.mubr.f32.gmra.mxu0 %v39
  %v5043 = vpop.f32.mrf.mxu0
  %v5044 = vadd.f32 0.0, %v5043
  %v5045 = vpop.f32.mrf.mxu0
  %5046 = vmatprep.mubr.f32.mxu0 %v113
  %5047 = vmatmul.mubr.f32.gmra.mxu0 %v41
  %v5048 = vpop.f32.mrf.mxu0
  %v5049 = vadd.f32 0.0, %v5048
  %v5050 = vpop.f32.mrf.mxu0
  %5051 = vmatprep.mubr.f32.mxu0 %v116
  %5052 = vmatmul.mubr.f32.gmra.mxu0 %v43
  %v5053 = vpop.f32.mrf.mxu0
  %v5054 = vadd.f32 0.0, %v5053
  %v5055 = vpop.f32.mrf.mxu0
  %5056 = vmatprep.mubr.f32.mxu0 %v119
  %5057 = vmatmul.mubr.f32.gmra.mxu0 %v45
  %v5058 = vpop.f32.mrf.mxu0
  %v5059 = vadd.f32 0.0, %v5058
  %v5060 = vpop.f32.mrf.mxu0
  %5061 = vmatprep.mubr.f32.mxu0 %v122
  %5062 = vmatmul.mubr.f32.gmra.mxu0 %v47
  %v5063 = vpop.f32.mrf.mxu0
  %v5064 = vadd.f32 0.0, %v5063
  %v5065 = vpop.f32.mrf.mxu0
  %5066 = vmatprep.mubr.f32.mxu0 %v125
  %5067 = vmatmul.mubr.f32.gmra.mxu0 %v49
  %v5068 = vpop.f32.mrf.mxu0
  %v5069 = vadd.f32 0.0, %v5068
  %v5070 = vpop.f32.mrf.mxu0
  %5071 = vmatprep.mubr.f32.mxu0 %v128
  %5072 = vmatmul.mubr.f32.gmra.mxu0 %v51
  %v5073 = vpop.f32.mrf.mxu0
  %v5074 = vadd.f32 0.0, %v5073
  %v5075 = vpop.f32.mrf.mxu0
  %5076 = vmatprep.mubr.f32.mxu0 %v131
  %5077 = vmatmul.mubr.f32.gmra.mxu0 %v53
  %v5078 = vpop.f32.mrf.mxu0
  %v5079 = vadd.f32 0.0, %v5078
  %v5080 = vpop.f32.mrf.mxu0
  %5081 = vmatprep.mubr.f32.mxu0 %v134
  %5082 = vmatmul.mubr.f32.gmra.mxu0 %v55
  %v5083 = vpop.f32.mrf.mxu0
  %v5084 = vadd.f32 0.0, %v5083
  %v5085 = vpop.f32.mrf.mxu0
  %5086 = vmatprep.mubr.f32.mxu0 %v137
  %5087 = vmatmul.mubr.f32.gmra.mxu0 %v57
  %v5088 = vpop.f32.mrf.mxu0
  %v5089 = vadd.f32 0.0, %v5088
  %v5090 = vpop.f32.mrf.mxu0
  %5091 = vmatprep.mubr.f32.mxu0 %v140
  %5092 = vmatmul.mubr.f32.gmra.mxu0 %v59
  %v5093 = vpop.f32.mrf.mxu0
  %v5094 = vadd.f32 0.0, %v5093
  %v5095 = vpop.f32.mrf.mxu0
  %5096 = vmatprep.mubr.f32.mxu0 %v143
  %5097 = vmatmul.mubr.f32.gmra.mxu0 %v61
  %v5098 = vpop.f32.mrf.mxu0
  %v5099 = vadd.f32 0.0, %v5098
  %v5100 = vpop.f32.mrf.mxu0
  %5101 = vmatprep.mubr.f32.mxu0 %v146
  %5102 = vmatmul.mubr.f32.gmra.mxu0 %v63
  %v5103 = vpop.f32.mrf.mxu0
  %v5104 = vadd.f32 0.0, %v5103
  %v5105 = vpop.f32.mrf.mxu0
  %5106 = vmatprep.mubr.f32.mxu0 %v149
  %5107 = vmatmul.mubr.f32.gmra.mxu0 %v65
  %v5108 = vpop.f32.mrf.mxu0
  %v5109 = vadd.f32 0.0, %v5108
  %v5110 = vpop.f32.mrf.mxu0
  %5111 = vmatprep.mubr.f32.mxu0 %v152
  %5112 = vmatmul.mubr.f32.gmra.mxu0 %v67
  %v5113 = vpop.f32.mrf.mxu0
  %v5114 = vadd.f32 0.0, %v5113
  %v5115 = vpop.f32.mrf.mxu0
  %5116 = vmatprep.mubr.f32.mxu0 %v155
  %5117 = vmatmul.mubr.f32.gmra.mxu0 %v69
  %v5118 = vpop.f32.mrf.mxu0
  %v5119 = vadd.f32 0.0, %v5118
  %v5120 = vpop.f32.mrf.mxu0
  %5121 = vmatprep.mubr.f32.mxu0 %v158
  %5122 = vmatmul.mubr.f32.gmra.mxu0 %v71
  %v5123 = vpop.f32.mrf.mxu0
  %v5124 = vadd.f32 0.0, %v5123
  %v5125 = vpop.f32.mrf.mxu0
  %5126 = vmatprep.mubr.f32.mxu0 %v161
  %5127 = vmatmul.mubr.f32.gmra.mxu0 %v73
  %v5128 = vpop.f32.mrf.mxu0
  %v5129 = vadd.f32 0.0, %v5128
  %v5130 = vpop.f32.mrf.mxu0
  %5131 = vmatprep.mubr.f32.mxu0 %v164
  %5132 = vmatmul.mubr.f32.gmra.mxu0 %v75
  %v5133 = vpop.f32.mrf.mxu0
  %v5134 = vadd.f32 0.0, %v5133
  %v5135 = vpop.f32.mrf.mxu0
  %5136 = vmatprep.mubr.f32.mxu0 %v167
  %5137 = vmatmul.mubr.f32.gmra.mxu0 %v77
  %v5138 = vpop.f32.mrf.mxu0
  %v5139 = vadd.f32 0.0, %v5138
  %v5140 = vpop.f32.mrf.mxu0
  %5141 = vmatprep.mubr.f32.mxu0 %v170
  %5142 = vmatmul.mubr.f32.gmra.mxu0 %v79
  %v5143 = vpop.f32.mrf.mxu0
  %v5144 = vadd.f32 0.0, %v5143
  %v5145 = vpop.f32.mrf.mxu0
  %5146 = vmatprep.mubr.f32.mxu0 %v173
  %5147 = vmatmul.mubr.f32.gmra.mxu0 %v81
  %v5148 = vpop.f32.mrf.mxu0
  %v5149 = vadd.f32 0.0, %v5148
  %v5150 = vpop.f32.mrf.mxu0
  %5151 = vmatprep.mubr.f32.mxu0 %v176
  %5152 = vmatmul.mubr.f32.gmra.mxu0 %v83
  %v5153 = vpop.f32.mrf.mxu0
  %v5154 = vadd.f32 0.0, %v5153
  %v5155 = vpop.f32.mrf.mxu0
  %5156 = vmatprep.mubr.f32.mxu0 %v179
  %5157 = vmatmul.mubr.f32.gmra.mxu0 %v85
  %v5158 = vpop.f32.mrf.mxu0
  %v5159 = vadd.f32 0.0, %v5158
  %v5160 = vpop.f32.mrf.mxu0
  %5161 = vdwg.mxu0
  %s5162 = scalar_lea.vmem %s0, 608
  %v5163 = vld [vmem:[%s5162] sm:$0xff]
  %v5164 = vld [vmem:[%s5162 + $0x8] sm:$0xff]
  %v5165 = vld [vmem:[%s5162 + $0x10] sm:$0xff]
  %v5166 = vld [vmem:[%s5162 + $0x18] sm:$0xff]
  %v5167 = vld [vmem:[%s5162 + $0x20] sm:$0xff]
  %v5168 = vld [vmem:[%s5162 + $0x28] sm:$0xff]
  %v5169 = vld [vmem:[%s5162 + $0x30] sm:$0xff]
  %v5170 = vld [vmem:[%s5162 + $0x38] sm:$0xff]
  %v5171 = vld [vmem:[%s5162 + $0x40] sm:$0xff]
  %v5172 = vld [vmem:[%s5162 + $0x48] sm:$0xff]
  %v5173 = vld [vmem:[%s5162 + $0x50] sm:$0xff]
  %v5174 = vld [vmem:[%s5162 + $0x58] sm:$0xff]
  %v5175 = vld [vmem:[%s5162 + $0x60] sm:$0xff]
  %v5176 = vld [vmem:[%s5162 + $0x68] sm:$0xff]
  %v5177 = vld [vmem:[%s5162 + $0x70] sm:$0xff]
  %v5178 = vld [vmem:[%s5162 + $0x78] sm:$0xff]
  %v5179 = vld [vmem:[%s5162 + $0x80] sm:$0xff]
  %v5180 = vld [vmem:[%s5162 + $0x88] sm:$0xff]
  %v5181 = vld [vmem:[%s5162 + $0x90] sm:$0xff]
  %v5182 = vld [vmem:[%s5162 + $0x98] sm:$0xff]
  %5183 = vmatprep.subr.mxu0 0.0
  %5184 = vmatpush1.msra.mxu0 %v5178
  %5185 = vmatprep.subr.mxu0 0.0
  %5186 = vmatpush1.msra.mxu0 %v5177
  %5187 = vmatprep.subr.mxu0 0.0
  %5188 = vmatpush1.msra.mxu0 %v5176
  %5189 = vmatprep.subr.mxu0 0.0
  %5190 = vmatpush1.msra.mxu0 %v5175
  %5191 = vmatprep.subr.mxu0 0.0
  %5192 = vmatpush1.msra.mxu0 %v5174
  %5193 = vmatprep.subr.mxu0 0.0
  %5194 = vmatpush1.msra.mxu0 %v5173
  %5195 = vmatprep.subr.mxu0 0.0
  %5196 = vmatpush1.msra.mxu0 %v5172
  %5197 = vmatprep.subr.mxu0 0.0
  %5198 = vmatpush1.msra.mxu0 %v5171
  %5199 = vmatprep.subr.mxu0 0.0
  %5200 = vmatpush1.msra.mxu0 %v5170
  %5201 = vmatprep.subr.mxu0 0.0
  %5202 = vmatpush1.msra.mxu0 %v5169
  %5203 = vmatprep.subr.mxu0 0.0
  %5204 = vmatpush1.msra.mxu0 %v5168
  %5205 = vmatprep.subr.mxu0 0.0
  %5206 = vmatpush1.msra.mxu0 %v5167
  %5207 = vmatprep.subr.mxu0 0.0
  %5208 = vmatpush1.msra.mxu0 %v5166
  %5209 = vmatprep.subr.mxu0 0.0
  %5210 = vmatpush1.msra.mxu0 %v5165
  %5211 = vmatprep.subr.mxu0 0.0
  %5212 = vmatpush1.msra.mxu0 %v5164
  %5213 = vmatprep.subr.mxu0 0.0
  %5214 = vmatpush1.msra.mxu0 %v5163
  %5215 = vmatprep.subr.mxu0 0.0
  %5216 = vmatpush2.msra.mxu0 0.0
  %5217 = vmatprep.subr.mxu0 0.0
  %5218 = vmatpush2.msra.mxu0 0.0
  %5219 = vmatprep.subr.mxu0 0.0
  %5220 = vmatpush2.msra.mxu0 0.0
  %5221 = vmatprep.subr.mxu0 0.0
  %5222 = vmatpush2.msra.mxu0 0.0
  %5223 = vmatprep.subr.mxu0 0.0
  %5224 = vmatpush2.msra.mxu0 0.0
  %5225 = vmatprep.subr.mxu0 0.0
  %5226 = vmatpush2.msra.mxu0 0.0
  %5227 = vmatprep.subr.mxu0 0.0
  %5228 = vmatpush2.msra.mxu0 0.0
  %5229 = vmatprep.subr.mxu0 0.0
  %5230 = vmatpush2.msra.mxu0 0.0
  %5231 = vmatprep.subr.mxu0 0.0
  %5232 = vmatpush2.msra.mxu0 0.0
  %5233 = vmatprep.subr.mxu0 0.0
  %5234 = vmatpush2.msra.mxu0 0.0
  %5235 = vmatprep.subr.mxu0 0.0
  %5236 = vmatpush2.msra.mxu0 0.0
  %5237 = vmatprep.subr.mxu0 0.0
  %5238 = vmatpush2.msra.mxu0 0.0
  %5239 = vmatprep.subr.mxu0 0.0
  %5240 = vmatpush2.msra.mxu0 %v5182
  %5241 = vmatprep.subr.mxu0 0.0
  %5242 = vmatpush2.msra.mxu0 %v5181
  %5243 = vmatprep.subr.mxu0 0.0
  %5244 = vmatpush2.msra.mxu0 %v5180
  %5245 = vmatprep.subr.mxu0 0.0
  %5246 = vmatpush2.msra.mxu0 %v5179
  %5247 = vmatprep.mubr.f32.mxu0 %v110
  %5248 = vmatmul.mubr.f32.gmra.mxu0 %v39
  %v5249 = vpop.f32.mrf.mxu0
  %v5250 = vadd.f32 0.0, %v5249
  %v5251 = vpop.f32.mrf.mxu0
  %5252 = vmatprep.mubr.f32.mxu0 %v113
  %5253 = vmatmul.mubr.f32.gmra.mxu0 %v41
  %v5254 = vpop.f32.mrf.mxu0
  %v5255 = vadd.f32 0.0, %v5254
  %v5256 = vpop.f32.mrf.mxu0
  %5257 = vmatprep.mubr.f32.mxu0 %v116
  %5258 = vmatmul.mubr.f32.gmra.mxu0 %v43
  %v5259 = vpop.f32.mrf.mxu0
  %v5260 = vadd.f32 0.0, %v5259
  %v5261 = vpop.f32.mrf.mxu0
  %5262 = vmatprep.mubr.f32.mxu0 %v119
  %5263 = vmatmul.mubr.f32.gmra.mxu0 %v45
  %v5264 = vpop.f32.mrf.mxu0
  %v5265 = vadd.f32 0.0, %v5264
  %v5266 = vpop.f32.mrf.mxu0
  %5267 = vmatprep.mubr.f32.mxu0 %v122
  %5268 = vmatmul.mubr.f32.gmra.mxu0 %v47
  %v5269 = vpop.f32.mrf.mxu0
  %v5270 = vadd.f32 0.0, %v5269
  %v5271 = vpop.f32.mrf.mxu0
  %5272 = vmatprep.mubr.f32.mxu0 %v125
  %5273 = vmatmul.mubr.f32.gmra.mxu0 %v49
  %v5274 = vpop.f32.mrf.mxu0
  %v5275 = vadd.f32 0.0, %v5274
  %v5276 = vpop.f32.mrf.mxu0
  %5277 = vmatprep.mubr.f32.mxu0 %v128
  %5278 = vmatmul.mubr.f32.gmra.mxu0 %v51
  %v5279 = vpop.f32.mrf.mxu0
  %v5280 = vadd.f32 0.0, %v5279
  %v5281 = vpop.f32.mrf.mxu0
  %5282 = vmatprep.mubr.f32.mxu0 %v131
  %5283 = vmatmul.mubr.f32.gmra.mxu0 %v53
  %v5284 = vpop.f32.mrf.mxu0
  %v5285 = vadd.f32 0.0, %v5284
  %v5286 = vpop.f32.mrf.mxu0
  %5287 = vmatprep.mubr.f32.mxu0 %v134
  %5288 = vmatmul.mubr.f32.gmra.mxu0 %v55
  %v5289 = vpop.f32.mrf.mxu0
  %v5290 = vadd.f32 0.0, %v5289
  %v5291 = vpop.f32.mrf.mxu0
  %5292 = vmatprep.mubr.f32.mxu0 %v137
  %5293 = vmatmul.mubr.f32.gmra.mxu0 %v57
  %v5294 = vpop.f32.mrf.mxu0
  %v5295 = vadd.f32 0.0, %v5294
  %v5296 = vpop.f32.mrf.mxu0
  %5297 = vmatprep.mubr.f32.mxu0 %v140
  %5298 = vmatmul.mubr.f32.gmra.mxu0 %v59
  %v5299 = vpop.f32.mrf.mxu0
  %v5300 = vadd.f32 0.0, %v5299
  %v5301 = vpop.f32.mrf.mxu0
  %5302 = vmatprep.mubr.f32.mxu0 %v143
  %5303 = vmatmul.mubr.f32.gmra.mxu0 %v61
  %v5304 = vpop.f32.mrf.mxu0
  %v5305 = vadd.f32 0.0, %v5304
  %v5306 = vpop.f32.mrf.mxu0
  %5307 = vmatprep.mubr.f32.mxu0 %v146
  %5308 = vmatmul.mubr.f32.gmra.mxu0 %v63
  %v5309 = vpop.f32.mrf.mxu0
  %v5310 = vadd.f32 0.0, %v5309
  %v5311 = vpop.f32.mrf.mxu0
  %5312 = vmatprep.mubr.f32.mxu0 %v149
  %5313 = vmatmul.mubr.f32.gmra.mxu0 %v65
  %v5314 = vpop.f32.mrf.mxu0
  %v5315 = vadd.f32 0.0, %v5314
  %v5316 = vpop.f32.mrf.mxu0
  %5317 = vmatprep.mubr.f32.mxu0 %v152
  %5318 = vmatmul.mubr.f32.gmra.mxu0 %v67
  %v5319 = vpop.f32.mrf.mxu0
  %v5320 = vadd.f32 0.0, %v5319
  %v5321 = vpop.f32.mrf.mxu0
  %5322 = vmatprep.mubr.f32.mxu0 %v155
  %5323 = vmatmul.mubr.f32.gmra.mxu0 %v69
  %v5324 = vpop.f32.mrf.mxu0
  %v5325 = vadd.f32 0.0, %v5324
  %v5326 = vpop.f32.mrf.mxu0
  %5327 = vmatprep.mubr.f32.mxu0 %v158
  %5328 = vmatmul.mubr.f32.gmra.mxu0 %v71
  %v5329 = vpop.f32.mrf.mxu0
  %v5330 = vadd.f32 0.0, %v5329
  %v5331 = vpop.f32.mrf.mxu0
  %5332 = vmatprep.mubr.f32.mxu0 %v161
  %5333 = vmatmul.mubr.f32.gmra.mxu0 %v73
  %v5334 = vpop.f32.mrf.mxu0
  %v5335 = vadd.f32 0.0, %v5334
  %v5336 = vpop.f32.mrf.mxu0
  %5337 = vmatprep.mubr.f32.mxu0 %v164
  %5338 = vmatmul.mubr.f32.gmra.mxu0 %v75
  %v5339 = vpop.f32.mrf.mxu0
  %v5340 = vadd.f32 0.0, %v5339
  %v5341 = vpop.f32.mrf.mxu0
  %5342 = vmatprep.mubr.f32.mxu0 %v167
  %5343 = vmatmul.mubr.f32.gmra.mxu0 %v77
  %v5344 = vpop.f32.mrf.mxu0
  %v5345 = vadd.f32 0.0, %v5344
  %v5346 = vpop.f32.mrf.mxu0
  %5347 = vmatprep.mubr.f32.mxu0 %v170
  %5348 = vmatmul.mubr.f32.gmra.mxu0 %v79
  %v5349 = vpop.f32.mrf.mxu0
  %v5350 = vadd.f32 0.0, %v5349
  %v5351 = vpop.f32.mrf.mxu0
  %5352 = vmatprep.mubr.f32.mxu0 %v173
  %5353 = vmatmul.mubr.f32.gmra.mxu0 %v81
  %v5354 = vpop.f32.mrf.mxu0
  %v5355 = vadd.f32 0.0, %v5354
  %v5356 = vpop.f32.mrf.mxu0
  %5357 = vmatprep.mubr.f32.mxu0 %v176
  %5358 = vmatmul.mubr.f32.gmra.mxu0 %v83
  %v5359 = vpop.f32.mrf.mxu0
  %v5360 = vadd.f32 0.0, %v5359
  %v5361 = vpop.f32.mrf.mxu0
  %5362 = vmatprep.mubr.f32.mxu0 %v179
  %5363 = vmatmul.mubr.f32.gmra.mxu0 %v85
  %v5364 = vpop.f32.mrf.mxu0
  %v5365 = vadd.f32 0.0, %v5364
  %v5366 = vpop.f32.mrf.mxu0
  %5367 = vdwg.mxu0
  %v5368 = vmax.f32 %v5044, %v5250
  %v5369 = vmax.f32 %v5049, %v5255
  %v5370 = vmax.f32 %v5054, %v5260
  %v5371 = vmax.f32 %v5059, %v5265
  %v5372 = vmax.f32 %v5064, %v5270
  %v5373 = vmax.f32 %v5069, %v5275
  %v5374 = vmax.f32 %v5074, %v5280
  %v5375 = vmax.f32 %v5079, %v5285
  %v5376 = vmax.f32 %v5084, %v5290
  %v5377 = vmax.f32 %v5089, %v5295
  %v5378 = vmax.f32 %v5094, %v5300
  %v5379 = vmax.f32 %v5099, %v5305
  %v5380 = vmax.f32 %v5104, %v5310
  %v5381 = vmax.f32 %v5109, %v5315
  %v5382 = vmax.f32 %v5114, %v5320
  %v5383 = vmax.f32 %v5119, %v5325
  %v5384 = vmax.f32 %v5124, %v5330
  %v5385 = vmax.f32 %v5129, %v5335
  %v5386 = vmax.f32 %v5134, %v5340
  %v5387 = vmax.f32 %v5139, %v5345
  %v5388 = vmax.f32 %v5144, %v5350
  %v5389 = vmax.f32 %v5149, %v5355
  %v5390 = vmax.f32 %v5154, %v5360
  %v5391 = vmax.f32 %v5159, %v5365
  %v5392 = vmax.f32 %v5368, %v5369
  %v5393 = vmax.f32 %v5370, %v5371
  %v5394 = vmax.f32 %v5372, %v5373
  %v5395 = vmax.f32 %v5374, %v5375
  %v5396 = vmax.f32 %v5376, %v5377
  %v5397 = vmax.f32 %v5378, %v5379
  %v5398 = vmax.f32 %v5380, %v5381
  %v5399 = vmax.f32 %v5382, %v5383
  %v5400 = vmax.f32 %v5384, %v5385
  %v5401 = vmax.f32 %v5386, %v5387
  %v5402 = vmax.f32 %v5388, %v5389
  %v5403 = vmax.f32 %v5390, %v5391
  %v5404 = vadd.f32 %v5392, %v87
  %v5405 = vadd.f32 %v5393, %v87
  %v5406 = vadd.f32 %v5394, %v87
  %v5407 = vadd.f32 %v5395, %v87
  %v5408 = vadd.f32 %v5396, %v87
  %v5409 = vadd.f32 %v5397, %v87
  %v5410 = vadd.f32 %v5398, %v87
  %v5411 = vadd.f32 %v5399, %v87
  %v5412 = vadd.f32 %v5400, %v87
  %v5413 = vadd.f32 %v5401, %v87
  %v5414 = vadd.f32 %v5402, %v87
  %v5415 = vadd.f32 %v5403, %v87
  %v5416 = vmax.f32 %v5404, 0.0
  %v5417 = vmax.f32 %v5405, 0.0
  %v5418 = vmax.f32 %v5406, 0.0
  %v5419 = vmax.f32 %v5407, 0.0
  %v5420 = vmax.f32 %v5408, 0.0
  %v5421 = vmax.f32 %v5409, 0.0
  %v5422 = vmax.f32 %v5410, 0.0
  %v5423 = vmax.f32 %v5411, 0.0
  %v5424 = vmax.f32 %v5412, 0.0
  %v5425 = vmax.f32 %v5413, 0.0
  %v5426 = vmax.f32 %v5414, 0.0
  %v5427 = vmax.f32 %v5415, 0.0
  %v5428 = vpack.c.bf16 %v5417, %v5416
  %v5429 = vpack.c.bf16 %v5419, %v5418
  %v5430 = vpack.c.bf16 %v5421, %v5420
  %v5431 = vpack.c.bf16 %v5423, %v5422
  %v5432 = vpack.c.bf16 %v5425, %v5424
  %v5433 = vpack.c.bf16 %v5427, %v5426
  %v5440 = vunpack.c.l.b16 %v5428
  %v5441 = vunpack.c.h.b16 %v5428
  %v5442 = vunpack.c.l.b16 %v5429
  %v5443 = vunpack.c.h.b16 %v5429
  %v5444 = vunpack.c.l.b16 %v5430
  %v5445 = vunpack.c.h.b16 %v5430
  %v5446 = vunpack.c.l.b16 %v5431
  %v5447 = vunpack.c.h.b16 %v5431
  %v5448 = vunpack.c.l.b16 %v5432
  %v5449 = vunpack.c.h.b16 %v5432
  %v5450 = vunpack.c.l.b16 %v5433
  %v5451 = vunpack.c.h.b16 %v5433
  %v5452 = vpack.c.b16 %v5440, %v5440
  %v5453 = vpack.c.b16 %v5441, %v5441
  %v5454 = vpack.c.b16 %v5442, %v5442
  %v5455 = vpack.c.b16 %v5443, %v5443
  %v5456 = vpack.c.b16 %v5444, %v5444
  %v5457 = vpack.c.b16 %v5445, %v5445
  %v5458 = vpack.c.b16 %v5446, %v5446
  %v5459 = vpack.c.b16 %v5447, %v5447
  %v5460 = vpack.c.b16 %v5448, %v5448
  %v5461 = vpack.c.b16 %v5449, %v5449
  %v5462 = vpack.c.b16 %v5450, %v5450
  %v5463 = vpack.c.b16 %v5451, %v5451
  %s5476 = scalar_lea.vmem [#allocation2], 432
  %5477 = vst [vmem:[%s5476] sm:$0xf] %v5452
  %5478 = vst [vmem:[%s5476 + $0x4] sm:$0xf] %v5453
  %5479 = vst [vmem:[%s5476 + $0x8] sm:$0xf] %v5454
  %5480 = vst [vmem:[%s5476 + $0xc] sm:$0xf] %v5455
  %5481 = vst [vmem:[%s5476 + $0x10] sm:$0xf] %v5456
  %5482 = vst [vmem:[%s5476 + $0x14] sm:$0xf] %v5457
  %5483 = vst [vmem:[%s5476 + $0x18] sm:$0xf] %v5458
  %5484 = vst [vmem:[%s5476 + $0x1c] sm:$0xf] %v5459
  %5485 = vst [vmem:[%s5476 + $0x20] sm:$0xf] %v5460
  %5486 = vst [vmem:[%s5476 + $0x24] sm:$0xf] %v5461
  %5487 = vst [vmem:[%s5476 + $0x28] sm:$0xf] %v5462
  %5488 = vst [vmem:[%s5476 + $0x2c] sm:$0xf] %v5463
  %s5489 = scalar_lea.vmem %s0, 640
  %v5490 = vld [vmem:[%s5489] sm:$0xff]
  %v5491 = vld [vmem:[%s5489 + $0x8] sm:$0xff]
  %v5492 = vld [vmem:[%s5489 + $0x10] sm:$0xff]
  %v5493 = vld [vmem:[%s5489 + $0x18] sm:$0xff]
  %v5494 = vld [vmem:[%s5489 + $0x20] sm:$0xff]
  %v5495 = vld [vmem:[%s5489 + $0x28] sm:$0xff]
  %v5496 = vld [vmem:[%s5489 + $0x30] sm:$0xff]
  %v5497 = vld [vmem:[%s5489 + $0x38] sm:$0xff]
  %v5498 = vld [vmem:[%s5489 + $0x40] sm:$0xff]
  %v5499 = vld [vmem:[%s5489 + $0x48] sm:$0xff]
  %v5500 = vld [vmem:[%s5489 + $0x50] sm:$0xff]
  %v5501 = vld [vmem:[%s5489 + $0x58] sm:$0xff]
  %v5502 = vld [vmem:[%s5489 + $0x60] sm:$0xff]
  %v5503 = vld [vmem:[%s5489 + $0x68] sm:$0xff]
  %v5504 = vld [vmem:[%s5489 + $0x70] sm:$0xff]
  %v5505 = vld [vmem:[%s5489 + $0x78] sm:$0xff]
  %v5506 = vld [vmem:[%s5489 + $0x80] sm:$0xff]
  %v5507 = vld [vmem:[%s5489 + $0x88] sm:$0xff]
  %v5508 = vld [vmem:[%s5489 + $0x90] sm:$0xff]
  %v5509 = vld [vmem:[%s5489 + $0x98] sm:$0xff]
  %5510 = vmatprep.subr.mxu0 0.0
  %5511 = vmatpush1.msra.mxu0 %v5505
  %5512 = vmatprep.subr.mxu0 0.0
  %5513 = vmatpush1.msra.mxu0 %v5504
  %5514 = vmatprep.subr.mxu0 0.0
  %5515 = vmatpush1.msra.mxu0 %v5503
  %5516 = vmatprep.subr.mxu0 0.0
  %5517 = vmatpush1.msra.mxu0 %v5502
  %5518 = vmatprep.subr.mxu0 0.0
  %5519 = vmatpush1.msra.mxu0 %v5501
  %5520 = vmatprep.subr.mxu0 0.0
  %5521 = vmatpush1.msra.mxu0 %v5500
  %5522 = vmatprep.subr.mxu0 0.0
  %5523 = vmatpush1.msra.mxu0 %v5499
  %5524 = vmatprep.subr.mxu0 0.0
  %5525 = vmatpush1.msra.mxu0 %v5498
  %5526 = vmatprep.subr.mxu0 0.0
  %5527 = vmatpush1.msra.mxu0 %v5497
  %5528 = vmatprep.subr.mxu0 0.0
  %5529 = vmatpush1.msra.mxu0 %v5496
  %5530 = vmatprep.subr.mxu0 0.0
  %5531 = vmatpush1.msra.mxu0 %v5495
  %5532 = vmatprep.subr.mxu0 0.0
  %5533 = vmatpush1.msra.mxu0 %v5494
  %5534 = vmatprep.subr.mxu0 0.0
  %5535 = vmatpush1.msra.mxu0 %v5493
  %5536 = vmatprep.subr.mxu0 0.0
  %5537 = vmatpush1.msra.mxu0 %v5492
  %5538 = vmatprep.subr.mxu0 0.0
  %5539 = vmatpush1.msra.mxu0 %v5491
  %5540 = vmatprep.subr.mxu0 0.0
  %5541 = vmatpush1.msra.mxu0 %v5490
  %5542 = vmatprep.subr.mxu0 0.0
  %5543 = vmatpush2.msra.mxu0 0.0
  %5544 = vmatprep.subr.mxu0 0.0
  %5545 = vmatpush2.msra.mxu0 0.0
  %5546 = vmatprep.subr.mxu0 0.0
  %5547 = vmatpush2.msra.mxu0 0.0
  %5548 = vmatprep.subr.mxu0 0.0
  %5549 = vmatpush2.msra.mxu0 0.0
  %5550 = vmatprep.subr.mxu0 0.0
  %5551 = vmatpush2.msra.mxu0 0.0
  %5552 = vmatprep.subr.mxu0 0.0
  %5553 = vmatpush2.msra.mxu0 0.0
  %5554 = vmatprep.subr.mxu0 0.0
  %5555 = vmatpush2.msra.mxu0 0.0
  %5556 = vmatprep.subr.mxu0 0.0
  %5557 = vmatpush2.msra.mxu0 0.0
  %5558 = vmatprep.subr.mxu0 0.0
  %5559 = vmatpush2.msra.mxu0 0.0
  %5560 = vmatprep.subr.mxu0 0.0
  %5561 = vmatpush2.msra.mxu0 0.0
  %5562 = vmatprep.subr.mxu0 0.0
  %5563 = vmatpush2.msra.mxu0 0.0
  %5564 = vmatprep.subr.mxu0 0.0
  %5565 = vmatpush2.msra.mxu0 0.0
  %5566 = vmatprep.subr.mxu0 0.0
  %5567 = vmatpush2.msra.mxu0 %v5509
  %5568 = vmatprep.subr.mxu0 0.0
  %5569 = vmatpush2.msra.mxu0 %v5508
  %5570 = vmatprep.subr.mxu0 0.0
  %5571 = vmatpush2.msra.mxu0 %v5507
  %5572 = vmatprep.subr.mxu0 0.0
  %5573 = vmatpush2.msra.mxu0 %v5506
  %5574 = vmatprep.mubr.f32.mxu0 %v110
  %5575 = vmatmul.mubr.f32.gmra.mxu0 %v39
  %v5576 = vpop.f32.mrf.mxu0
  %v5577 = vadd.f32 0.0, %v5576
  %v5578 = vpop.f32.mrf.mxu0
  %5579 = vmatprep.mubr.f32.mxu0 %v113
  %5580 = vmatmul.mubr.f32.gmra.mxu0 %v41
  %v5581 = vpop.f32.mrf.mxu0
  %v5582 = vadd.f32 0.0, %v5581
  %v5583 = vpop.f32.mrf.mxu0
  %5584 = vmatprep.mubr.f32.mxu0 %v116
  %5585 = vmatmul.mubr.f32.gmra.mxu0 %v43
  %v5586 = vpop.f32.mrf.mxu0
  %v5587 = vadd.f32 0.0, %v5586
  %v5588 = vpop.f32.mrf.mxu0
  %5589 = vmatprep.mubr.f32.mxu0 %v119
  %5590 = vmatmul.mubr.f32.gmra.mxu0 %v45
  %v5591 = vpop.f32.mrf.mxu0
  %v5592 = vadd.f32 0.0, %v5591
  %v5593 = vpop.f32.mrf.mxu0
  %5594 = vmatprep.mubr.f32.mxu0 %v122
  %5595 = vmatmul.mubr.f32.gmra.mxu0 %v47
  %v5596 = vpop.f32.mrf.mxu0
  %v5597 = vadd.f32 0.0, %v5596
  %v5598 = vpop.f32.mrf.mxu0
  %5599 = vmatprep.mubr.f32.mxu0 %v125
  %5600 = vmatmul.mubr.f32.gmra.mxu0 %v49
  %v5601 = vpop.f32.mrf.mxu0
  %v5602 = vadd.f32 0.0, %v5601
  %v5603 = vpop.f32.mrf.mxu0
  %5604 = vmatprep.mubr.f32.mxu0 %v128
  %5605 = vmatmul.mubr.f32.gmra.mxu0 %v51
  %v5606 = vpop.f32.mrf.mxu0
  %v5607 = vadd.f32 0.0, %v5606
  %v5608 = vpop.f32.mrf.mxu0
  %5609 = vmatprep.mubr.f32.mxu0 %v131
  %5610 = vmatmul.mubr.f32.gmra.mxu0 %v53
  %v5611 = vpop.f32.mrf.mxu0
  %v5612 = vadd.f32 0.0, %v5611
  %v5613 = vpop.f32.mrf.mxu0
  %5614 = vmatprep.mubr.f32.mxu0 %v134
  %5615 = vmatmul.mubr.f32.gmra.mxu0 %v55
  %v5616 = vpop.f32.mrf.mxu0
  %v5617 = vadd.f32 0.0, %v5616
  %v5618 = vpop.f32.mrf.mxu0
  %5619 = vmatprep.mubr.f32.mxu0 %v137
  %5620 = vmatmul.mubr.f32.gmra.mxu0 %v57
  %v5621 = vpop.f32.mrf.mxu0
  %v5622 = vadd.f32 0.0, %v5621
  %v5623 = vpop.f32.mrf.mxu0
  %5624 = vmatprep.mubr.f32.mxu0 %v140
  %5625 = vmatmul.mubr.f32.gmra.mxu0 %v59
  %v5626 = vpop.f32.mrf.mxu0
  %v5627 = vadd.f32 0.0, %v5626
  %v5628 = vpop.f32.mrf.mxu0
  %5629 = vmatprep.mubr.f32.mxu0 %v143
  %5630 = vmatmul.mubr.f32.gmra.mxu0 %v61
  %v5631 = vpop.f32.mrf.mxu0
  %v5632 = vadd.f32 0.0, %v5631
  %v5633 = vpop.f32.mrf.mxu0
  %5634 = vmatprep.mubr.f32.mxu0 %v146
  %5635 = vmatmul.mubr.f32.gmra.mxu0 %v63
  %v5636 = vpop.f32.mrf.mxu0
  %v5637 = vadd.f32 0.0, %v5636
  %v5638 = vpop.f32.mrf.mxu0
  %5639 = vmatprep.mubr.f32.mxu0 %v149
  %5640 = vmatmul.mubr.f32.gmra.mxu0 %v65
  %v5641 = vpop.f32.mrf.mxu0
  %v5642 = vadd.f32 0.0, %v5641
  %v5643 = vpop.f32.mrf.mxu0
  %5644 = vmatprep.mubr.f32.mxu0 %v152
  %5645 = vmatmul.mubr.f32.gmra.mxu0 %v67
  %v5646 = vpop.f32.mrf.mxu0
  %v5647 = vadd.f32 0.0, %v5646
  %v5648 = vpop.f32.mrf.mxu0
  %5649 = vmatprep.mubr.f32.mxu0 %v155
  %5650 = vmatmul.mubr.f32.gmra.mxu0 %v69
  %v5651 = vpop.f32.mrf.mxu0
  %v5652 = vadd.f32 0.0, %v5651
  %v5653 = vpop.f32.mrf.mxu0
  %5654 = vmatprep.mubr.f32.mxu0 %v158
  %5655 = vmatmul.mubr.f32.gmra.mxu0 %v71
  %v5656 = vpop.f32.mrf.mxu0
  %v5657 = vadd.f32 0.0, %v5656
  %v5658 = vpop.f32.mrf.mxu0
  %5659 = vmatprep.mubr.f32.mxu0 %v161
  %5660 = vmatmul.mubr.f32.gmra.mxu0 %v73
  %v5661 = vpop.f32.mrf.mxu0
  %v5662 = vadd.f32 0.0, %v5661
  %v5663 = vpop.f32.mrf.mxu0
  %5664 = vmatprep.mubr.f32.mxu0 %v164
  %5665 = vmatmul.mubr.f32.gmra.mxu0 %v75
  %v5666 = vpop.f32.mrf.mxu0
  %v5667 = vadd.f32 0.0, %v5666
  %v5668 = vpop.f32.mrf.mxu0
  %5669 = vmatprep.mubr.f32.mxu0 %v167
  %5670 = vmatmul.mubr.f32.gmra.mxu0 %v77
  %v5671 = vpop.f32.mrf.mxu0
  %v5672 = vadd.f32 0.0, %v5671
  %v5673 = vpop.f32.mrf.mxu0
  %5674 = vmatprep.mubr.f32.mxu0 %v170
  %5675 = vmatmul.mubr.f32.gmra.mxu0 %v79
  %v5676 = vpop.f32.mrf.mxu0
  %v5677 = vadd.f32 0.0, %v5676
  %v5678 = vpop.f32.mrf.mxu0
  %5679 = vmatprep.mubr.f32.mxu0 %v173
  %5680 = vmatmul.mubr.f32.gmra.mxu0 %v81
  %v5681 = vpop.f32.mrf.mxu0
  %v5682 = vadd.f32 0.0, %v5681
  %v5683 = vpop.f32.mrf.mxu0
  %5684 = vmatprep.mubr.f32.mxu0 %v176
  %5685 = vmatmul.mubr.f32.gmra.mxu0 %v83
  %v5686 = vpop.f32.mrf.mxu0
  %v5687 = vadd.f32 0.0, %v5686
  %v5688 = vpop.f32.mrf.mxu0
  %5689 = vmatprep.mubr.f32.mxu0 %v179
  %5690 = vmatmul.mubr.f32.gmra.mxu0 %v85
  %v5691 = vpop.f32.mrf.mxu0
  %v5692 = vadd.f32 0.0, %v5691
  %v5693 = vpop.f32.mrf.mxu0
  %5694 = vdwg.mxu0
  %s5695 = scalar_lea.vmem %s0, 672
  %v5696 = vld [vmem:[%s5695] sm:$0xff]
  %v5697 = vld [vmem:[%s5695 + $0x8] sm:$0xff]
  %v5698 = vld [vmem:[%s5695 + $0x10] sm:$0xff]
  %v5699 = vld [vmem:[%s5695 + $0x18] sm:$0xff]
  %v5700 = vld [vmem:[%s5695 + $0x20] sm:$0xff]
  %v5701 = vld [vmem:[%s5695 + $0x28] sm:$0xff]
  %v5702 = vld [vmem:[%s5695 + $0x30] sm:$0xff]
  %v5703 = vld [vmem:[%s5695 + $0x38] sm:$0xff]
  %v5704 = vld [vmem:[%s5695 + $0x40] sm:$0xff]
  %v5705 = vld [vmem:[%s5695 + $0x48] sm:$0xff]
  %v5706 = vld [vmem:[%s5695 + $0x50] sm:$0xff]
  %v5707 = vld [vmem:[%s5695 + $0x58] sm:$0xff]
  %v5708 = vld [vmem:[%s5695 + $0x60] sm:$0xff]
  %v5709 = vld [vmem:[%s5695 + $0x68] sm:$0xff]
  %v5710 = vld [vmem:[%s5695 + $0x70] sm:$0xff]
  %v5711 = vld [vmem:[%s5695 + $0x78] sm:$0xff]
  %v5712 = vld [vmem:[%s5695 + $0x80] sm:$0xff]
  %v5713 = vld [vmem:[%s5695 + $0x88] sm:$0xff]
  %v5714 = vld [vmem:[%s5695 + $0x90] sm:$0xff]
  %v5715 = vld [vmem:[%s5695 + $0x98] sm:$0xff]
  %5716 = vmatprep.subr.mxu0 0.0
  %5717 = vmatpush1.msra.mxu0 %v5711
  %5718 = vmatprep.subr.mxu0 0.0
  %5719 = vmatpush1.msra.mxu0 %v5710
  %5720 = vmatprep.subr.mxu0 0.0
  %5721 = vmatpush1.msra.mxu0 %v5709
  %5722 = vmatprep.subr.mxu0 0.0
  %5723 = vmatpush1.msra.mxu0 %v5708
  %5724 = vmatprep.subr.mxu0 0.0
  %5725 = vmatpush1.msra.mxu0 %v5707
  %5726 = vmatprep.subr.mxu0 0.0
  %5727 = vmatpush1.msra.mxu0 %v5706
  %5728 = vmatprep.subr.mxu0 0.0
  %5729 = vmatpush1.msra.mxu0 %v5705
  %5730 = vmatprep.subr.mxu0 0.0
  %5731 = vmatpush1.msra.mxu0 %v5704
  %5732 = vmatprep.subr.mxu0 0.0
  %5733 = vmatpush1.msra.mxu0 %v5703
  %5734 = vmatprep.subr.mxu0 0.0
  %5735 = vmatpush1.msra.mxu0 %v5702
  %5736 = vmatprep.subr.mxu0 0.0
  %5737 = vmatpush1.msra.mxu0 %v5701
  %5738 = vmatprep.subr.mxu0 0.0
  %5739 = vmatpush1.msra.mxu0 %v5700
  %5740 = vmatprep.subr.mxu0 0.0
  %5741 = vmatpush1.msra.mxu0 %v5699
  %5742 = vmatprep.subr.mxu0 0.0
  %5743 = vmatpush1.msra.mxu0 %v5698
  %5744 = vmatprep.subr.mxu0 0.0
  %5745 = vmatpush1.msra.mxu0 %v5697
  %5746 = vmatprep.subr.mxu0 0.0
  %5747 = vmatpush1.msra.mxu0 %v5696
  %5748 = vmatprep.subr.mxu0 0.0
  %5749 = vmatpush2.msra.mxu0 0.0
  %5750 = vmatprep.subr.mxu0 0.0
  %5751 = vmatpush2.msra.mxu0 0.0
  %5752 = vmatprep.subr.mxu0 0.0
  %5753 = vmatpush2.msra.mxu0 0.0
  %5754 = vmatprep.subr.mxu0 0.0
  %5755 = vmatpush2.msra.mxu0 0.0
  %5756 = vmatprep.subr.mxu0 0.0
  %5757 = vmatpush2.msra.mxu0 0.0
  %5758 = vmatprep.subr.mxu0 0.0
  %5759 = vmatpush2.msra.mxu0 0.0
  %5760 = vmatprep.subr.mxu0 0.0
  %5761 = vmatpush2.msra.mxu0 0.0
  %5762 = vmatprep.subr.mxu0 0.0
  %5763 = vmatpush2.msra.mxu0 0.0
  %5764 = vmatprep.subr.mxu0 0.0
  %5765 = vmatpush2.msra.mxu0 0.0
  %5766 = vmatprep.subr.mxu0 0.0
  %5767 = vmatpush2.msra.mxu0 0.0
  %5768 = vmatprep.subr.mxu0 0.0
  %5769 = vmatpush2.msra.mxu0 0.0
  %5770 = vmatprep.subr.mxu0 0.0
  %5771 = vmatpush2.msra.mxu0 0.0
  %5772 = vmatprep.subr.mxu0 0.0
  %5773 = vmatpush2.msra.mxu0 %v5715
  %5774 = vmatprep.subr.mxu0 0.0
  %5775 = vmatpush2.msra.mxu0 %v5714
  %5776 = vmatprep.subr.mxu0 0.0
  %5777 = vmatpush2.msra.mxu0 %v5713
  %5778 = vmatprep.subr.mxu0 0.0
  %5779 = vmatpush2.msra.mxu0 %v5712
  %5780 = vmatprep.mubr.f32.mxu0 %v110
  %5781 = vmatmul.mubr.f32.gmra.mxu0 %v39
  %v5782 = vpop.f32.mrf.mxu0
  %v5783 = vadd.f32 0.0, %v5782
  %v5784 = vpop.f32.mrf.mxu0
  %5785 = vmatprep.mubr.f32.mxu0 %v113
  %5786 = vmatmul.mubr.f32.gmra.mxu0 %v41
  %v5787 = vpop.f32.mrf.mxu0
  %v5788 = vadd.f32 0.0, %v5787
  %v5789 = vpop.f32.mrf.mxu0
  %5790 = vmatprep.mubr.f32.mxu0 %v116
  %5791 = vmatmul.mubr.f32.gmra.mxu0 %v43
  %v5792 = vpop.f32.mrf.mxu0
  %v5793 = vadd.f32 0.0, %v5792
  %v5794 = vpop.f32.mrf.mxu0
  %5795 = vmatprep.mubr.f32.mxu0 %v119
  %5796 = vmatmul.mubr.f32.gmra.mxu0 %v45
  %v5797 = vpop.f32.mrf.mxu0
  %v5798 = vadd.f32 0.0, %v5797
  %v5799 = vpop.f32.mrf.mxu0
  %5800 = vmatprep.mubr.f32.mxu0 %v122
  %5801 = vmatmul.mubr.f32.gmra.mxu0 %v47
  %v5802 = vpop.f32.mrf.mxu0
  %v5803 = vadd.f32 0.0, %v5802
  %v5804 = vpop.f32.mrf.mxu0
  %5805 = vmatprep.mubr.f32.mxu0 %v125
  %5806 = vmatmul.mubr.f32.gmra.mxu0 %v49
  %v5807 = vpop.f32.mrf.mxu0
  %v5808 = vadd.f32 0.0, %v5807
  %v5809 = vpop.f32.mrf.mxu0
  %5810 = vmatprep.mubr.f32.mxu0 %v128
  %5811 = vmatmul.mubr.f32.gmra.mxu0 %v51
  %v5812 = vpop.f32.mrf.mxu0
  %v5813 = vadd.f32 0.0, %v5812
  %v5814 = vpop.f32.mrf.mxu0
  %5815 = vmatprep.mubr.f32.mxu0 %v131
  %5816 = vmatmul.mubr.f32.gmra.mxu0 %v53
  %v5817 = vpop.f32.mrf.mxu0
  %v5818 = vadd.f32 0.0, %v5817
  %v5819 = vpop.f32.mrf.mxu0
  %5820 = vmatprep.mubr.f32.mxu0 %v134
  %5821 = vmatmul.mubr.f32.gmra.mxu0 %v55
  %v5822 = vpop.f32.mrf.mxu0
  %v5823 = vadd.f32 0.0, %v5822
  %v5824 = vpop.f32.mrf.mxu0
  %5825 = vmatprep.mubr.f32.mxu0 %v137
  %5826 = vmatmul.mubr.f32.gmra.mxu0 %v57
  %v5827 = vpop.f32.mrf.mxu0
  %v5828 = vadd.f32 0.0, %v5827
  %v5829 = vpop.f32.mrf.mxu0
  %5830 = vmatprep.mubr.f32.mxu0 %v140
  %5831 = vmatmul.mubr.f32.gmra.mxu0 %v59
  %v5832 = vpop.f32.mrf.mxu0
  %v5833 = vadd.f32 0.0, %v5832
  %v5834 = vpop.f32.mrf.mxu0
  %5835 = vmatprep.mubr.f32.mxu0 %v143
  %5836 = vmatmul.mubr.f32.gmra.mxu0 %v61
  %v5837 = vpop.f32.mrf.mxu0
  %v5838 = vadd.f32 0.0, %v5837
  %v5839 = vpop.f32.mrf.mxu0
  %5840 = vmatprep.mubr.f32.mxu0 %v146
  %5841 = vmatmul.mubr.f32.gmra.mxu0 %v63
  %v5842 = vpop.f32.mrf.mxu0
  %v5843 = vadd.f32 0.0, %v5842
  %v5844 = vpop.f32.mrf.mxu0
  %5845 = vmatprep.mubr.f32.mxu0 %v149
  %5846 = vmatmul.mubr.f32.gmra.mxu0 %v65
  %v5847 = vpop.f32.mrf.mxu0
  %v5848 = vadd.f32 0.0, %v5847
  %v5849 = vpop.f32.mrf.mxu0
  %5850 = vmatprep.mubr.f32.mxu0 %v152
  %5851 = vmatmul.mubr.f32.gmra.mxu0 %v67
  %v5852 = vpop.f32.mrf.mxu0
  %v5853 = vadd.f32 0.0, %v5852
  %v5854 = vpop.f32.mrf.mxu0
  %5855 = vmatprep.mubr.f32.mxu0 %v155
  %5856 = vmatmul.mubr.f32.gmra.mxu0 %v69
  %v5857 = vpop.f32.mrf.mxu0
  %v5858 = vadd.f32 0.0, %v5857
  %v5859 = vpop.f32.mrf.mxu0
  %5860 = vmatprep.mubr.f32.mxu0 %v158
  %5861 = vmatmul.mubr.f32.gmra.mxu0 %v71
  %v5862 = vpop.f32.mrf.mxu0
  %v5863 = vadd.f32 0.0, %v5862
  %v5864 = vpop.f32.mrf.mxu0
  %5865 = vmatprep.mubr.f32.mxu0 %v161
  %5866 = vmatmul.mubr.f32.gmra.mxu0 %v73
  %v5867 = vpop.f32.mrf.mxu0
  %v5868 = vadd.f32 0.0, %v5867
  %v5869 = vpop.f32.mrf.mxu0
  %5870 = vmatprep.mubr.f32.mxu0 %v164
  %5871 = vmatmul.mubr.f32.gmra.mxu0 %v75
  %v5872 = vpop.f32.mrf.mxu0
  %v5873 = vadd.f32 0.0, %v5872
  %v5874 = vpop.f32.mrf.mxu0
  %5875 = vmatprep.mubr.f32.mxu0 %v167
  %5876 = vmatmul.mubr.f32.gmra.mxu0 %v77
  %v5877 = vpop.f32.mrf.mxu0
  %v5878 = vadd.f32 0.0, %v5877
  %v5879 = vpop.f32.mrf.mxu0
  %5880 = vmatprep.mubr.f32.mxu0 %v170
  %5881 = vmatmul.mubr.f32.gmra.mxu0 %v79
  %v5882 = vpop.f32.mrf.mxu0
  %v5883 = vadd.f32 0.0, %v5882
  %v5884 = vpop.f32.mrf.mxu0
  %5885 = vmatprep.mubr.f32.mxu0 %v173
  %5886 = vmatmul.mubr.f32.gmra.mxu0 %v81
  %v5887 = vpop.f32.mrf.mxu0
  %v5888 = vadd.f32 0.0, %v5887
  %v5889 = vpop.f32.mrf.mxu0
  %5890 = vmatprep.mubr.f32.mxu0 %v176
  %5891 = vmatmul.mubr.f32.gmra.mxu0 %v83
  %v5892 = vpop.f32.mrf.mxu0
  %v5893 = vadd.f32 0.0, %v5892
  %v5894 = vpop.f32.mrf.mxu0
  %5895 = vmatprep.mubr.f32.mxu0 %v179
  %5896 = vmatmul.mubr.f32.gmra.mxu0 %v85
  %v5897 = vpop.f32.mrf.mxu0
  %v5898 = vadd.f32 0.0, %v5897
  %v5899 = vpop.f32.mrf.mxu0
  %5900 = vdwg.mxu0
  %v5901 = vmax.f32 %v5577, %v5783
  %v5902 = vmax.f32 %v5582, %v5788
  %v5903 = vmax.f32 %v5587, %v5793
  %v5904 = vmax.f32 %v5592, %v5798
  %v5905 = vmax.f32 %v5597, %v5803
  %v5906 = vmax.f32 %v5602, %v5808
  %v5907 = vmax.f32 %v5607, %v5813
  %v5908 = vmax.f32 %v5612, %v5818
  %v5909 = vmax.f32 %v5617, %v5823
  %v5910 = vmax.f32 %v5622, %v5828
  %v5911 = vmax.f32 %v5627, %v5833
  %v5912 = vmax.f32 %v5632, %v5838
  %v5913 = vmax.f32 %v5637, %v5843
  %v5914 = vmax.f32 %v5642, %v5848
  %v5915 = vmax.f32 %v5647, %v5853
  %v5916 = vmax.f32 %v5652, %v5858
  %v5917 = vmax.f32 %v5657, %v5863
  %v5918 = vmax.f32 %v5662, %v5868
  %v5919 = vmax.f32 %v5667, %v5873
  %v5920 = vmax.f32 %v5672, %v5878
  %v5921 = vmax.f32 %v5677, %v5883
  %v5922 = vmax.f32 %v5682, %v5888
  %v5923 = vmax.f32 %v5687, %v5893
  %v5924 = vmax.f32 %v5692, %v5898
  %v5925 = vmax.f32 %v5901, %v5902
  %v5926 = vmax.f32 %v5903, %v5904
  %v5927 = vmax.f32 %v5905, %v5906
  %v5928 = vmax.f32 %v5907, %v5908
  %v5929 = vmax.f32 %v5909, %v5910
  %v5930 = vmax.f32 %v5911, %v5912
  %v5931 = vmax.f32 %v5913, %v5914
  %v5932 = vmax.f32 %v5915, %v5916
  %v5933 = vmax.f32 %v5917, %v5918
  %v5934 = vmax.f32 %v5919, %v5920
  %v5935 = vmax.f32 %v5921, %v5922
  %v5936 = vmax.f32 %v5923, %v5924
  %v5937 = vadd.f32 %v5925, %v87
  %v5938 = vadd.f32 %v5926, %v87
  %v5939 = vadd.f32 %v5927, %v87
  %v5940 = vadd.f32 %v5928, %v87
  %v5941 = vadd.f32 %v5929, %v87
  %v5942 = vadd.f32 %v5930, %v87
  %v5943 = vadd.f32 %v5931, %v87
  %v5944 = vadd.f32 %v5932, %v87
  %v5945 = vadd.f32 %v5933, %v87
  %v5946 = vadd.f32 %v5934, %v87
  %v5947 = vadd.f32 %v5935, %v87
  %v5948 = vadd.f32 %v5936, %v87
  %v5949 = vmax.f32 %v5937, 0.0
  %v5950 = vmax.f32 %v5938, 0.0
  %v5951 = vmax.f32 %v5939, 0.0
  %v5952 = vmax.f32 %v5940, 0.0
  %v5953 = vmax.f32 %v5941, 0.0
  %v5954 = vmax.f32 %v5942, 0.0
  %v5955 = vmax.f32 %v5943, 0.0
  %v5956 = vmax.f32 %v5944, 0.0
  %v5957 = vmax.f32 %v5945, 0.0
  %v5958 = vmax.f32 %v5946, 0.0
  %v5959 = vmax.f32 %v5947, 0.0
  %v5960 = vmax.f32 %v5948, 0.0
  %v5961 = vpack.c.bf16 %v5950, %v5949
  %v5962 = vpack.c.bf16 %v5952, %v5951
  %v5963 = vpack.c.bf16 %v5954, %v5953
  %v5964 = vpack.c.bf16 %v5956, %v5955
  %v5965 = vpack.c.bf16 %v5958, %v5957
  %v5966 = vpack.c.bf16 %v5960, %v5959
  %v5973 = vunpack.c.l.b16 %v5961
  %v5974 = vunpack.c.h.b16 %v5961
  %v5975 = vunpack.c.l.b16 %v5962
  %v5976 = vunpack.c.h.b16 %v5962
  %v5977 = vunpack.c.l.b16 %v5963
  %v5978 = vunpack.c.h.b16 %v5963
  %v5979 = vunpack.c.l.b16 %v5964
  %v5980 = vunpack.c.h.b16 %v5964
  %v5981 = vunpack.c.l.b16 %v5965
  %v5982 = vunpack.c.h.b16 %v5965
  %v5983 = vunpack.c.l.b16 %v5966
  %v5984 = vunpack.c.h.b16 %v5966
  %v5985 = vpack.c.b16 %v5973, %v5973
  %v5986 = vpack.c.b16 %v5974, %v5974
  %v5987 = vpack.c.b16 %v5975, %v5975
  %v5988 = vpack.c.b16 %v5976, %v5976
  %v5989 = vpack.c.b16 %v5977, %v5977
  %v5990 = vpack.c.b16 %v5978, %v5978
  %v5991 = vpack.c.b16 %v5979, %v5979
  %v5992 = vpack.c.b16 %v5980, %v5980
  %v5993 = vpack.c.b16 %v5981, %v5981
  %v5994 = vpack.c.b16 %v5982, %v5982
  %v5995 = vpack.c.b16 %v5983, %v5983
  %v5996 = vpack.c.b16 %v5984, %v5984
  %s6009 = scalar_lea.vmem [#allocation2], 480
  %6010 = vst [vmem:[%s6009] sm:$0xf] %v5985
  %6011 = vst [vmem:[%s6009 + $0x4] sm:$0xf] %v5986
  %6012 = vst [vmem:[%s6009 + $0x8] sm:$0xf] %v5987
  %6013 = vst [vmem:[%s6009 + $0xc] sm:$0xf] %v5988
  %6014 = vst [vmem:[%s6009 + $0x10] sm:$0xf] %v5989
  %6015 = vst [vmem:[%s6009 + $0x14] sm:$0xf] %v5990
  %6016 = vst [vmem:[%s6009 + $0x18] sm:$0xf] %v5991
  %6017 = vst [vmem:[%s6009 + $0x1c] sm:$0xf] %v5992
  %6018 = vst [vmem:[%s6009 + $0x20] sm:$0xf] %v5993
  %6019 = vst [vmem:[%s6009 + $0x24] sm:$0xf] %v5994
  %6020 = vst [vmem:[%s6009 + $0x28] sm:$0xf] %v5995
  %6021 = vst [vmem:[%s6009 + $0x2c] sm:$0xf] %v5996
  %s6022 = scalar_lea.vmem %s0, 704
  %v6023 = vld [vmem:[%s6022] sm:$0xff]
  %v6024 = vld [vmem:[%s6022 + $0x8] sm:$0xff]
  %v6025 = vld [vmem:[%s6022 + $0x10] sm:$0xff]
  %v6026 = vld [vmem:[%s6022 + $0x18] sm:$0xff]
  %v6027 = vld [vmem:[%s6022 + $0x20] sm:$0xff]
  %v6028 = vld [vmem:[%s6022 + $0x28] sm:$0xff]
  %v6029 = vld [vmem:[%s6022 + $0x30] sm:$0xff]
  %v6030 = vld [vmem:[%s6022 + $0x38] sm:$0xff]
  %v6031 = vld [vmem:[%s6022 + $0x40] sm:$0xff]
  %v6032 = vld [vmem:[%s6022 + $0x48] sm:$0xff]
  %v6033 = vld [vmem:[%s6022 + $0x50] sm:$0xff]
  %v6034 = vld [vmem:[%s6022 + $0x58] sm:$0xff]
  %v6035 = vld [vmem:[%s6022 + $0x60] sm:$0xff]
  %v6036 = vld [vmem:[%s6022 + $0x68] sm:$0xff]
  %v6037 = vld [vmem:[%s6022 + $0x70] sm:$0xff]
  %v6038 = vld [vmem:[%s6022 + $0x78] sm:$0xff]
  %v6039 = vld [vmem:[%s6022 + $0x80] sm:$0xff]
  %v6040 = vld [vmem:[%s6022 + $0x88] sm:$0xff]
  %v6041 = vld [vmem:[%s6022 + $0x90] sm:$0xff]
  %v6042 = vld [vmem:[%s6022 + $0x98] sm:$0xff]
  %6043 = vmatprep.subr.mxu0 0.0
  %6044 = vmatpush1.msra.mxu0 %v6038
  %6045 = vmatprep.subr.mxu0 0.0
  %6046 = vmatpush1.msra.mxu0 %v6037
  %6047 = vmatprep.subr.mxu0 0.0
  %6048 = vmatpush1.msra.mxu0 %v6036
  %6049 = vmatprep.subr.mxu0 0.0
  %6050 = vmatpush1.msra.mxu0 %v6035
  %6051 = vmatprep.subr.mxu0 0.0
  %6052 = vmatpush1.msra.mxu0 %v6034
  %6053 = vmatprep.subr.mxu0 0.0
  %6054 = vmatpush1.msra.mxu0 %v6033
  %6055 = vmatprep.subr.mxu0 0.0
  %6056 = vmatpush1.msra.mxu0 %v6032
  %6057 = vmatprep.subr.mxu0 0.0
  %6058 = vmatpush1.msra.mxu0 %v6031
  %6059 = vmatprep.subr.mxu0 0.0
  %6060 = vmatpush1.msra.mxu0 %v6030
  %6061 = vmatprep.subr.mxu0 0.0
  %6062 = vmatpush1.msra.mxu0 %v6029
  %6063 = vmatprep.subr.mxu0 0.0
  %6064 = vmatpush1.msra.mxu0 %v6028
  %6065 = vmatprep.subr.mxu0 0.0
  %6066 = vmatpush1.msra.mxu0 %v6027
  %6067 = vmatprep.subr.mxu0 0.0
  %6068 = vmatpush1.msra.mxu0 %v6026
  %6069 = vmatprep.subr.mxu0 0.0
  %6070 = vmatpush1.msra.mxu0 %v6025
  %6071 = vmatprep.subr.mxu0 0.0
  %6072 = vmatpush1.msra.mxu0 %v6024
  %6073 = vmatprep.subr.mxu0 0.0
  %6074 = vmatpush1.msra.mxu0 %v6023
  %6075 = vmatprep.subr.mxu0 0.0
  %6076 = vmatpush2.msra.mxu0 0.0
  %6077 = vmatprep.subr.mxu0 0.0
  %6078 = vmatpush2.msra.mxu0 0.0
  %6079 = vmatprep.subr.mxu0 0.0
  %6080 = vmatpush2.msra.mxu0 0.0
  %6081 = vmatprep.subr.mxu0 0.0
  %6082 = vmatpush2.msra.mxu0 0.0
  %6083 = vmatprep.subr.mxu0 0.0
  %6084 = vmatpush2.msra.mxu0 0.0
  %6085 = vmatprep.subr.mxu0 0.0
  %6086 = vmatpush2.msra.mxu0 0.0
  %6087 = vmatprep.subr.mxu0 0.0
  %6088 = vmatpush2.msra.mxu0 0.0
  %6089 = vmatprep.subr.mxu0 0.0
  %6090 = vmatpush2.msra.mxu0 0.0
  %6091 = vmatprep.subr.mxu0 0.0
  %6092 = vmatpush2.msra.mxu0 0.0
  %6093 = vmatprep.subr.mxu0 0.0
  %6094 = vmatpush2.msra.mxu0 0.0
  %6095 = vmatprep.subr.mxu0 0.0
  %6096 = vmatpush2.msra.mxu0 0.0
  %6097 = vmatprep.subr.mxu0 0.0
  %6098 = vmatpush2.msra.mxu0 0.0
  %6099 = vmatprep.subr.mxu0 0.0
  %6100 = vmatpush2.msra.mxu0 %v6042
  %6101 = vmatprep.subr.mxu0 0.0
  %6102 = vmatpush2.msra.mxu0 %v6041
  %6103 = vmatprep.subr.mxu0 0.0
  %6104 = vmatpush2.msra.mxu0 %v6040
  %6105 = vmatprep.subr.mxu0 0.0
  %6106 = vmatpush2.msra.mxu0 %v6039
  %6107 = vmatprep.mubr.f32.mxu0 %v110
  %6108 = vmatmul.mubr.f32.gmra.mxu0 %v39
  %v6109 = vpop.f32.mrf.mxu0
  %v6110 = vadd.f32 0.0, %v6109
  %v6111 = vpop.f32.mrf.mxu0
  %6112 = vmatprep.mubr.f32.mxu0 %v113
  %6113 = vmatmul.mubr.f32.gmra.mxu0 %v41
  %v6114 = vpop.f32.mrf.mxu0
  %v6115 = vadd.f32 0.0, %v6114
  %v6116 = vpop.f32.mrf.mxu0
  %6117 = vmatprep.mubr.f32.mxu0 %v116
  %6118 = vmatmul.mubr.f32.gmra.mxu0 %v43
  %v6119 = vpop.f32.mrf.mxu0
  %v6120 = vadd.f32 0.0, %v6119
  %v6121 = vpop.f32.mrf.mxu0
  %6122 = vmatprep.mubr.f32.mxu0 %v119
  %6123 = vmatmul.mubr.f32.gmra.mxu0 %v45
  %v6124 = vpop.f32.mrf.mxu0
  %v6125 = vadd.f32 0.0, %v6124
  %v6126 = vpop.f32.mrf.mxu0
  %6127 = vmatprep.mubr.f32.mxu0 %v122
  %6128 = vmatmul.mubr.f32.gmra.mxu0 %v47
  %v6129 = vpop.f32.mrf.mxu0
  %v6130 = vadd.f32 0.0, %v6129
  %v6131 = vpop.f32.mrf.mxu0
  %6132 = vmatprep.mubr.f32.mxu0 %v125
  %6133 = vmatmul.mubr.f32.gmra.mxu0 %v49
  %v6134 = vpop.f32.mrf.mxu0
  %v6135 = vadd.f32 0.0, %v6134
  %v6136 = vpop.f32.mrf.mxu0
  %6137 = vmatprep.mubr.f32.mxu0 %v128
  %6138 = vmatmul.mubr.f32.gmra.mxu0 %v51
  %v6139 = vpop.f32.mrf.mxu0
  %v6140 = vadd.f32 0.0, %v6139
  %v6141 = vpop.f32.mrf.mxu0
  %6142 = vmatprep.mubr.f32.mxu0 %v131
  %6143 = vmatmul.mubr.f32.gmra.mxu0 %v53
  %v6144 = vpop.f32.mrf.mxu0
  %v6145 = vadd.f32 0.0, %v6144
  %v6146 = vpop.f32.mrf.mxu0
  %6147 = vmatprep.mubr.f32.mxu0 %v134
  %6148 = vmatmul.mubr.f32.gmra.mxu0 %v55
  %v6149 = vpop.f32.mrf.mxu0
  %v6150 = vadd.f32 0.0, %v6149
  %v6151 = vpop.f32.mrf.mxu0
  %6152 = vmatprep.mubr.f32.mxu0 %v137
  %6153 = vmatmul.mubr.f32.gmra.mxu0 %v57
  %v6154 = vpop.f32.mrf.mxu0
  %v6155 = vadd.f32 0.0, %v6154
  %v6156 = vpop.f32.mrf.mxu0
  %6157 = vmatprep.mubr.f32.mxu0 %v140
  %6158 = vmatmul.mubr.f32.gmra.mxu0 %v59
  %v6159 = vpop.f32.mrf.mxu0
  %v6160 = vadd.f32 0.0, %v6159
  %v6161 = vpop.f32.mrf.mxu0
  %6162 = vmatprep.mubr.f32.mxu0 %v143
  %6163 = vmatmul.mubr.f32.gmra.mxu0 %v61
  %v6164 = vpop.f32.mrf.mxu0
  %v6165 = vadd.f32 0.0, %v6164
  %v6166 = vpop.f32.mrf.mxu0
  %6167 = vmatprep.mubr.f32.mxu0 %v146
  %6168 = vmatmul.mubr.f32.gmra.mxu0 %v63
  %v6169 = vpop.f32.mrf.mxu0
  %v6170 = vadd.f32 0.0, %v6169
  %v6171 = vpop.f32.mrf.mxu0
  %6172 = vmatprep.mubr.f32.mxu0 %v149
  %6173 = vmatmul.mubr.f32.gmra.mxu0 %v65
  %v6174 = vpop.f32.mrf.mxu0
  %v6175 = vadd.f32 0.0, %v6174
  %v6176 = vpop.f32.mrf.mxu0
  %6177 = vmatprep.mubr.f32.mxu0 %v152
  %6178 = vmatmul.mubr.f32.gmra.mxu0 %v67
  %v6179 = vpop.f32.mrf.mxu0
  %v6180 = vadd.f32 0.0, %v6179
  %v6181 = vpop.f32.mrf.mxu0
  %6182 = vmatprep.mubr.f32.mxu0 %v155
  %6183 = vmatmul.mubr.f32.gmra.mxu0 %v69
  %v6184 = vpop.f32.mrf.mxu0
  %v6185 = vadd.f32 0.0, %v6184
  %v6186 = vpop.f32.mrf.mxu0
  %6187 = vmatprep.mubr.f32.mxu0 %v158
  %6188 = vmatmul.mubr.f32.gmra.mxu0 %v71
  %v6189 = vpop.f32.mrf.mxu0
  %v6190 = vadd.f32 0.0, %v6189
  %v6191 = vpop.f32.mrf.mxu0
  %6192 = vmatprep.mubr.f32.mxu0 %v161
  %6193 = vmatmul.mubr.f32.gmra.mxu0 %v73
  %v6194 = vpop.f32.mrf.mxu0
  %v6195 = vadd.f32 0.0, %v6194
  %v6196 = vpop.f32.mrf.mxu0
  %6197 = vmatprep.mubr.f32.mxu0 %v164
  %6198 = vmatmul.mubr.f32.gmra.mxu0 %v75
  %v6199 = vpop.f32.mrf.mxu0
  %v6200 = vadd.f32 0.0, %v6199
  %v6201 = vpop.f32.mrf.mxu0
  %6202 = vmatprep.mubr.f32.mxu0 %v167
  %6203 = vmatmul.mubr.f32.gmra.mxu0 %v77
  %v6204 = vpop.f32.mrf.mxu0
  %v6205 = vadd.f32 0.0, %v6204
  %v6206 = vpop.f32.mrf.mxu0
  %6207 = vmatprep.mubr.f32.mxu0 %v170
  %6208 = vmatmul.mubr.f32.gmra.mxu0 %v79
  %v6209 = vpop.f32.mrf.mxu0
  %v6210 = vadd.f32 0.0, %v6209
  %v6211 = vpop.f32.mrf.mxu0
  %6212 = vmatprep.mubr.f32.mxu0 %v173
  %6213 = vmatmul.mubr.f32.gmra.mxu0 %v81
  %v6214 = vpop.f32.mrf.mxu0
  %v6215 = vadd.f32 0.0, %v6214
  %v6216 = vpop.f32.mrf.mxu0
  %6217 = vmatprep.mubr.f32.mxu0 %v176
  %6218 = vmatmul.mubr.f32.gmra.mxu0 %v83
  %v6219 = vpop.f32.mrf.mxu0
  %v6220 = vadd.f32 0.0, %v6219
  %v6221 = vpop.f32.mrf.mxu0
  %6222 = vmatprep.mubr.f32.mxu0 %v179
  %6223 = vmatmul.mubr.f32.gmra.mxu0 %v85
  %v6224 = vpop.f32.mrf.mxu0
  %v6225 = vadd.f32 0.0, %v6224
  %v6226 = vpop.f32.mrf.mxu0
  %6227 = vdwg.mxu0
  %s6228 = scalar_lea.vmem %s0, 736
  %v6229 = vld [vmem:[%s6228] sm:$0xff]
  %v6230 = vld [vmem:[%s6228 + $0x8] sm:$0xff]
  %v6231 = vld [vmem:[%s6228 + $0x10] sm:$0xff]
  %v6232 = vld [vmem:[%s6228 + $0x18] sm:$0xff]
  %v6233 = vld [vmem:[%s6228 + $0x20] sm:$0xff]
  %v6234 = vld [vmem:[%s6228 + $0x28] sm:$0xff]
  %v6235 = vld [vmem:[%s6228 + $0x30] sm:$0xff]
  %v6236 = vld [vmem:[%s6228 + $0x38] sm:$0xff]
  %v6237 = vld [vmem:[%s6228 + $0x40] sm:$0xff]
  %v6238 = vld [vmem:[%s6228 + $0x48] sm:$0xff]
  %v6239 = vld [vmem:[%s6228 + $0x50] sm:$0xff]
  %v6240 = vld [vmem:[%s6228 + $0x58] sm:$0xff]
  %v6241 = vld [vmem:[%s6228 + $0x60] sm:$0xff]
  %v6242 = vld [vmem:[%s6228 + $0x68] sm:$0xff]
  %v6243 = vld [vmem:[%s6228 + $0x70] sm:$0xff]
  %v6244 = vld [vmem:[%s6228 + $0x78] sm:$0xff]
  %v6245 = vld [vmem:[%s6228 + $0x80] sm:$0xff]
  %v6246 = vld [vmem:[%s6228 + $0x88] sm:$0xff]
  %v6247 = vld [vmem:[%s6228 + $0x90] sm:$0xff]
  %v6248 = vld [vmem:[%s6228 + $0x98] sm:$0xff]
  %6249 = vmatprep.subr.mxu0 0.0
  %6250 = vmatpush1.msra.mxu0 %v6244
  %6251 = vmatprep.subr.mxu0 0.0
  %6252 = vmatpush1.msra.mxu0 %v6243
  %6253 = vmatprep.subr.mxu0 0.0
  %6254 = vmatpush1.msra.mxu0 %v6242
  %6255 = vmatprep.subr.mxu0 0.0
  %6256 = vmatpush1.msra.mxu0 %v6241
  %6257 = vmatprep.subr.mxu0 0.0
  %6258 = vmatpush1.msra.mxu0 %v6240
  %6259 = vmatprep.subr.mxu0 0.0
  %6260 = vmatpush1.msra.mxu0 %v6239
  %6261 = vmatprep.subr.mxu0 0.0
  %6262 = vmatpush1.msra.mxu0 %v6238
  %6263 = vmatprep.subr.mxu0 0.0
  %6264 = vmatpush1.msra.mxu0 %v6237
  %6265 = vmatprep.subr.mxu0 0.0
  %6266 = vmatpush1.msra.mxu0 %v6236
  %6267 = vmatprep.subr.mxu0 0.0
  %6268 = vmatpush1.msra.mxu0 %v6235
  %6269 = vmatprep.subr.mxu0 0.0
  %6270 = vmatpush1.msra.mxu0 %v6234
  %6271 = vmatprep.subr.mxu0 0.0
  %6272 = vmatpush1.msra.mxu0 %v6233
  %6273 = vmatprep.subr.mxu0 0.0
  %6274 = vmatpush1.msra.mxu0 %v6232
  %6275 = vmatprep.subr.mxu0 0.0
  %6276 = vmatpush1.msra.mxu0 %v6231
  %6277 = vmatprep.subr.mxu0 0.0
  %6278 = vmatpush1.msra.mxu0 %v6230
  %6279 = vmatprep.subr.mxu0 0.0
  %6280 = vmatpush1.msra.mxu0 %v6229
  %6281 = vmatprep.subr.mxu0 0.0
  %6282 = vmatpush2.msra.mxu0 0.0
  %6283 = vmatprep.subr.mxu0 0.0
  %6284 = vmatpush2.msra.mxu0 0.0
  %6285 = vmatprep.subr.mxu0 0.0
  %6286 = vmatpush2.msra.mxu0 0.0
  %6287 = vmatprep.subr.mxu0 0.0
  %6288 = vmatpush2.msra.mxu0 0.0
  %6289 = vmatprep.subr.mxu0 0.0
  %6290 = vmatpush2.msra.mxu0 0.0
  %6291 = vmatprep.subr.mxu0 0.0
  %6292 = vmatpush2.msra.mxu0 0.0
  %6293 = vmatprep.subr.mxu0 0.0
  %6294 = vmatpush2.msra.mxu0 0.0
  %6295 = vmatprep.subr.mxu0 0.0
  %6296 = vmatpush2.msra.mxu0 0.0
  %6297 = vmatprep.subr.mxu0 0.0
  %6298 = vmatpush2.msra.mxu0 0.0
  %6299 = vmatprep.subr.mxu0 0.0
  %6300 = vmatpush2.msra.mxu0 0.0
  %6301 = vmatprep.subr.mxu0 0.0
  %6302 = vmatpush2.msra.mxu0 0.0
  %6303 = vmatprep.subr.mxu0 0.0
  %6304 = vmatpush2.msra.mxu0 0.0
  %6305 = vmatprep.subr.mxu0 0.0
  %6306 = vmatpush2.msra.mxu0 %v6248
  %6307 = vmatprep.subr.mxu0 0.0
  %6308 = vmatpush2.msra.mxu0 %v6247
  %6309 = vmatprep.subr.mxu0 0.0
  %6310 = vmatpush2.msra.mxu0 %v6246
  %6311 = vmatprep.subr.mxu0 0.0
  %6312 = vmatpush2.msra.mxu0 %v6245
  %6313 = vmatprep.mubr.f32.mxu0 %v110
  %6314 = vmatmul.mubr.f32.gmra.mxu0 %v39
  %v6315 = vpop.f32.mrf.mxu0
  %v6316 = vadd.f32 0.0, %v6315
  %v6317 = vpop.f32.mrf.mxu0
  %6318 = vmatprep.mubr.f32.mxu0 %v113
  %6319 = vmatmul.mubr.f32.gmra.mxu0 %v41
  %v6320 = vpop.f32.mrf.mxu0
  %v6321 = vadd.f32 0.0, %v6320
  %v6322 = vpop.f32.mrf.mxu0
  %6323 = vmatprep.mubr.f32.mxu0 %v116
  %6324 = vmatmul.mubr.f32.gmra.mxu0 %v43
  %v6325 = vpop.f32.mrf.mxu0
  %v6326 = vadd.f32 0.0, %v6325
  %v6327 = vpop.f32.mrf.mxu0
  %6328 = vmatprep.mubr.f32.mxu0 %v119
  %6329 = vmatmul.mubr.f32.gmra.mxu0 %v45
  %v6330 = vpop.f32.mrf.mxu0
  %v6331 = vadd.f32 0.0, %v6330
  %v6332 = vpop.f32.mrf.mxu0
  %6333 = vmatprep.mubr.f32.mxu0 %v122
  %6334 = vmatmul.mubr.f32.gmra.mxu0 %v47
  %v6335 = vpop.f32.mrf.mxu0
  %v6336 = vadd.f32 0.0, %v6335
  %v6337 = vpop.f32.mrf.mxu0
  %6338 = vmatprep.mubr.f32.mxu0 %v125
  %6339 = vmatmul.mubr.f32.gmra.mxu0 %v49
  %v6340 = vpop.f32.mrf.mxu0
  %v6341 = vadd.f32 0.0, %v6340
  %v6342 = vpop.f32.mrf.mxu0
  %6343 = vmatprep.mubr.f32.mxu0 %v128
  %6344 = vmatmul.mubr.f32.gmra.mxu0 %v51
  %v6345 = vpop.f32.mrf.mxu0
  %v6346 = vadd.f32 0.0, %v6345
  %v6347 = vpop.f32.mrf.mxu0
  %6348 = vmatprep.mubr.f32.mxu0 %v131
  %6349 = vmatmul.mubr.f32.gmra.mxu0 %v53
  %v6350 = vpop.f32.mrf.mxu0
  %v6351 = vadd.f32 0.0, %v6350
  %v6352 = vpop.f32.mrf.mxu0
  %6353 = vmatprep.mubr.f32.mxu0 %v134
  %6354 = vmatmul.mubr.f32.gmra.mxu0 %v55
  %v6355 = vpop.f32.mrf.mxu0
  %v6356 = vadd.f32 0.0, %v6355
  %v6357 = vpop.f32.mrf.mxu0
  %6358 = vmatprep.mubr.f32.mxu0 %v137
  %6359 = vmatmul.mubr.f32.gmra.mxu0 %v57
  %v6360 = vpop.f32.mrf.mxu0
  %v6361 = vadd.f32 0.0, %v6360
  %v6362 = vpop.f32.mrf.mxu0
  %6363 = vmatprep.mubr.f32.mxu0 %v140
  %6364 = vmatmul.mubr.f32.gmra.mxu0 %v59
  %v6365 = vpop.f32.mrf.mxu0
  %v6366 = vadd.f32 0.0, %v6365
  %v6367 = vpop.f32.mrf.mxu0
  %6368 = vmatprep.mubr.f32.mxu0 %v143
  %6369 = vmatmul.mubr.f32.gmra.mxu0 %v61
  %v6370 = vpop.f32.mrf.mxu0
  %v6371 = vadd.f32 0.0, %v6370
  %v6372 = vpop.f32.mrf.mxu0
  %6373 = vmatprep.mubr.f32.mxu0 %v146
  %6374 = vmatmul.mubr.f32.gmra.mxu0 %v63
  %v6375 = vpop.f32.mrf.mxu0
  %v6376 = vadd.f32 0.0, %v6375
  %v6377 = vpop.f32.mrf.mxu0
  %6378 = vmatprep.mubr.f32.mxu0 %v149
  %6379 = vmatmul.mubr.f32.gmra.mxu0 %v65
  %v6380 = vpop.f32.mrf.mxu0
  %v6381 = vadd.f32 0.0, %v6380
  %v6382 = vpop.f32.mrf.mxu0
  %6383 = vmatprep.mubr.f32.mxu0 %v152
  %6384 = vmatmul.mubr.f32.gmra.mxu0 %v67
  %v6385 = vpop.f32.mrf.mxu0
  %v6386 = vadd.f32 0.0, %v6385
  %v6387 = vpop.f32.mrf.mxu0
  %6388 = vmatprep.mubr.f32.mxu0 %v155
  %6389 = vmatmul.mubr.f32.gmra.mxu0 %v69
  %v6390 = vpop.f32.mrf.mxu0
  %v6391 = vadd.f32 0.0, %v6390
  %v6392 = vpop.f32.mrf.mxu0
  %6393 = vmatprep.mubr.f32.mxu0 %v158
  %6394 = vmatmul.mubr.f32.gmra.mxu0 %v71
  %v6395 = vpop.f32.mrf.mxu0
  %v6396 = vadd.f32 0.0, %v6395
  %v6397 = vpop.f32.mrf.mxu0
  %6398 = vmatprep.mubr.f32.mxu0 %v161
  %6399 = vmatmul.mubr.f32.gmra.mxu0 %v73
  %v6400 = vpop.f32.mrf.mxu0
  %v6401 = vadd.f32 0.0, %v6400
  %v6402 = vpop.f32.mrf.mxu0
  %6403 = vmatprep.mubr.f32.mxu0 %v164
  %6404 = vmatmul.mubr.f32.gmra.mxu0 %v75
  %v6405 = vpop.f32.mrf.mxu0
  %v6406 = vadd.f32 0.0, %v6405
  %v6407 = vpop.f32.mrf.mxu0
  %6408 = vmatprep.mubr.f32.mxu0 %v167
  %6409 = vmatmul.mubr.f32.gmra.mxu0 %v77
  %v6410 = vpop.f32.mrf.mxu0
  %v6411 = vadd.f32 0.0, %v6410
  %v6412 = vpop.f32.mrf.mxu0
  %6413 = vmatprep.mubr.f32.mxu0 %v170
  %6414 = vmatmul.mubr.f32.gmra.mxu0 %v79
  %v6415 = vpop.f32.mrf.mxu0
  %v6416 = vadd.f32 0.0, %v6415
  %v6417 = vpop.f32.mrf.mxu0
  %6418 = vmatprep.mubr.f32.mxu0 %v173
  %6419 = vmatmul.mubr.f32.gmra.mxu0 %v81
  %v6420 = vpop.f32.mrf.mxu0
  %v6421 = vadd.f32 0.0, %v6420
  %v6422 = vpop.f32.mrf.mxu0
  %6423 = vmatprep.mubr.f32.mxu0 %v176
  %6424 = vmatmul.mubr.f32.gmra.mxu0 %v83
  %v6425 = vpop.f32.mrf.mxu0
  %v6426 = vadd.f32 0.0, %v6425
  %v6427 = vpop.f32.mrf.mxu0
  %6428 = vmatprep.mubr.f32.mxu0 %v179
  %6429 = vmatmul.mubr.f32.gmra.mxu0 %v85
  %v6430 = vpop.f32.mrf.mxu0
  %v6431 = vadd.f32 0.0, %v6430
  %v6432 = vpop.f32.mrf.mxu0
  %6433 = vdwg.mxu0
  %v6434 = vmax.f32 %v6110, %v6316
  %v6435 = vmax.f32 %v6115, %v6321
  %v6436 = vmax.f32 %v6120, %v6326
  %v6437 = vmax.f32 %v6125, %v6331
  %v6438 = vmax.f32 %v6130, %v6336
  %v6439 = vmax.f32 %v6135, %v6341
  %v6440 = vmax.f32 %v6140, %v6346
  %v6441 = vmax.f32 %v6145, %v6351
  %v6442 = vmax.f32 %v6150, %v6356
  %v6443 = vmax.f32 %v6155, %v6361
  %v6444 = vmax.f32 %v6160, %v6366
  %v6445 = vmax.f32 %v6165, %v6371
  %v6446 = vmax.f32 %v6170, %v6376
  %v6447 = vmax.f32 %v6175, %v6381
  %v6448 = vmax.f32 %v6180, %v6386
  %v6449 = vmax.f32 %v6185, %v6391
  %v6450 = vmax.f32 %v6190, %v6396
  %v6451 = vmax.f32 %v6195, %v6401
  %v6452 = vmax.f32 %v6200, %v6406
  %v6453 = vmax.f32 %v6205, %v6411
  %v6454 = vmax.f32 %v6210, %v6416
  %v6455 = vmax.f32 %v6215, %v6421
  %v6456 = vmax.f32 %v6220, %v6426
  %v6457 = vmax.f32 %v6225, %v6431
  %v6458 = vmax.f32 %v6434, %v6435
  %v6459 = vmax.f32 %v6436, %v6437
  %v6460 = vmax.f32 %v6438, %v6439
  %v6461 = vmax.f32 %v6440, %v6441
  %v6462 = vmax.f32 %v6442, %v6443
  %v6463 = vmax.f32 %v6444, %v6445
  %v6464 = vmax.f32 %v6446, %v6447
  %v6465 = vmax.f32 %v6448, %v6449
  %v6466 = vmax.f32 %v6450, %v6451
  %v6467 = vmax.f32 %v6452, %v6453
  %v6468 = vmax.f32 %v6454, %v6455
  %v6469 = vmax.f32 %v6456, %v6457
  %v6470 = vadd.f32 %v6458, %v87
  %v6471 = vadd.f32 %v6459, %v87
  %v6472 = vadd.f32 %v6460, %v87
  %v6473 = vadd.f32 %v6461, %v87
  %v6474 = vadd.f32 %v6462, %v87
  %v6475 = vadd.f32 %v6463, %v87
  %v6476 = vadd.f32 %v6464, %v87
  %v6477 = vadd.f32 %v6465, %v87
  %v6478 = vadd.f32 %v6466, %v87
  %v6479 = vadd.f32 %v6467, %v87
  %v6480 = vadd.f32 %v6468, %v87
  %v6481 = vadd.f32 %v6469, %v87
  %v6482 = vmax.f32 %v6470, 0.0
  %v6483 = vmax.f32 %v6471, 0.0
  %v6484 = vmax.f32 %v6472, 0.0
  %v6485 = vmax.f32 %v6473, 0.0
  %v6486 = vmax.f32 %v6474, 0.0
  %v6487 = vmax.f32 %v6475, 0.0
  %v6488 = vmax.f32 %v6476, 0.0
  %v6489 = vmax.f32 %v6477, 0.0
  %v6490 = vmax.f32 %v6478, 0.0
  %v6491 = vmax.f32 %v6479, 0.0
  %v6492 = vmax.f32 %v6480, 0.0
  %v6493 = vmax.f32 %v6481, 0.0
  %v6494 = vpack.c.bf16 %v6483, %v6482
  %v6495 = vpack.c.bf16 %v6485, %v6484
  %v6496 = vpack.c.bf16 %v6487, %v6486
  %v6497 = vpack.c.bf16 %v6489, %v6488
  %v6498 = vpack.c.bf16 %v6491, %v6490
  %v6499 = vpack.c.bf16 %v6493, %v6492
  %v6506 = vunpack.c.l.b16 %v6494
  %v6507 = vunpack.c.h.b16 %v6494
  %v6508 = vunpack.c.l.b16 %v6495
  %v6509 = vunpack.c.h.b16 %v6495
  %v6510 = vunpack.c.l.b16 %v6496
  %v6511 = vunpack.c.h.b16 %v6496
  %v6512 = vunpack.c.l.b16 %v6497
  %v6513 = vunpack.c.h.b16 %v6497
  %v6514 = vunpack.c.l.b16 %v6498
  %v6515 = vunpack.c.h.b16 %v6498
  %v6516 = vunpack.c.l.b16 %v6499
  %v6517 = vunpack.c.h.b16 %v6499
  %v6518 = vpack.c.b16 %v6506, %v6506
  %v6519 = vpack.c.b16 %v6507, %v6507
  %v6520 = vpack.c.b16 %v6508, %v6508
  %v6521 = vpack.c.b16 %v6509, %v6509
  %v6522 = vpack.c.b16 %v6510, %v6510
  %v6523 = vpack.c.b16 %v6511, %v6511
  %v6524 = vpack.c.b16 %v6512, %v6512
  %v6525 = vpack.c.b16 %v6513, %v6513
  %v6526 = vpack.c.b16 %v6514, %v6514
  %v6527 = vpack.c.b16 %v6515, %v6515
  %v6528 = vpack.c.b16 %v6516, %v6516
  %v6529 = vpack.c.b16 %v6517, %v6517
  %s6542 = scalar_lea.vmem [#allocation2], 528
  %6543 = vst [vmem:[%s6542] sm:$0xf] %v6518
  %6544 = vst [vmem:[%s6542 + $0x4] sm:$0xf] %v6519
  %6545 = vst [vmem:[%s6542 + $0x8] sm:$0xf] %v6520
  %6546 = vst [vmem:[%s6542 + $0xc] sm:$0xf] %v6521
  %6547 = vst [vmem:[%s6542 + $0x10] sm:$0xf] %v6522
  %6548 = vst [vmem:[%s6542 + $0x14] sm:$0xf] %v6523
  %6549 = vst [vmem:[%s6542 + $0x18] sm:$0xf] %v6524
  %6550 = vst [vmem:[%s6542 + $0x1c] sm:$0xf] %v6525
  %6551 = vst [vmem:[%s6542 + $0x20] sm:$0xf] %v6526
  %6552 = vst [vmem:[%s6542 + $0x24] sm:$0xf] %v6527
  %6553 = vst [vmem:[%s6542 + $0x28] sm:$0xf] %v6528
  %6554 = vst [vmem:[%s6542 + $0x2c] sm:$0xf] %v6529
  %v6555 = vld [vmem:[%s3] sm:$0xff]
  %v6556 = vld [vmem:[%s3 + $0x8] sm:$0xff]
  %v6557 = vld [vmem:[%s3 + $0x10] sm:$0xff]
  %v6558 = vld [vmem:[%s3 + $0x18] sm:$0xff]
  %v6559 = vld [vmem:[%s3 + $0x20] sm:$0xff]
  %v6560 = vld [vmem:[%s3 + $0x28] sm:$0xff]
  %v6561 = vld [vmem:[%s3 + $0x30] sm:$0xff]
  %v6562 = vld [vmem:[%s3 + $0x38] sm:$0xff]
  %v6563 = vld [vmem:[%s3 + $0x40] sm:$0xff]
  %v6564 = vld [vmem:[%s3 + $0x48] sm:$0xff]
  %v6565 = vld [vmem:[%s3 + $0x50] sm:$0xff]
  %v6566 = vld [vmem:[%s3 + $0x58] sm:$0xff]
  %v6567 = vld [vmem:[%s3 + $0x60] sm:$0xff]
  %v6568 = vld [vmem:[%s3 + $0x68] sm:$0xff]
  %v6569 = vld [vmem:[%s3 + $0x70] sm:$0xff]
  %v6570 = vld [vmem:[%s3 + $0x78] sm:$0xff]
  %v6571 = vld [vmem:[%s3 + $0x80] sm:$0xff]
  %v6572 = vld [vmem:[%s3 + $0x88] sm:$0xff]
  %v6573 = vld [vmem:[%s3 + $0x90] sm:$0xff]
  %v6574 = vld [vmem:[%s3 + $0x98] sm:$0xff]
  %v6575 = vld [vmem:[%s3 + $0xa0] sm:$0xff]
  %v6576 = vld [vmem:[%s3 + $0xa8] sm:$0xff]
  %v6577 = vld [vmem:[%s3 + $0xb0] sm:$0xff]
  %v6578 = vld [vmem:[%s3 + $0xb8] sm:$0xff]
  %v6579 = vld [vmem:[%s3 + $0xc0] sm:$0xff]
  %v6580 = vld [vmem:[%s3 + $0xc8] sm:$0xff]
  %v6581 = vld [vmem:[%s3 + $0xd0] sm:$0xff]
  %v6582 = vld [vmem:[%s3 + $0xd8] sm:$0xff]
  %v6583 = vld [vmem:[%s3 + $0xe0] sm:$0xff]
  %v6584 = vld [vmem:[%s3 + $0xe8] sm:$0xff]
  %v6585 = vld [vmem:[%s3 + $0xf0] sm:$0xff]
  %v6586 = vld [vmem:[%s3 + $0xf8] sm:$0xff]
  %v6587 = vld [vmem:[%s4] sm:$0xff]
  %v6588 = vld [vmem:[%s4 + $0x8] sm:$0xff]
  %v6589 = vld [vmem:[#allocation2] sm:$0xf]
  %v6590 = vld [vmem:[#allocation2 + $0x4] sm:$0xf]
  %v6591 = vld [vmem:[#allocation2 + $0x8] sm:$0xf]
  %v6592 = vld [vmem:[#allocation2 + $0xc] sm:$0xf]
  %v6593 = vld [vmem:[#allocation2 + $0x10] sm:$0xf]
  %v6594 = vld [vmem:[#allocation2 + $0x14] sm:$0xf]
  %v6595 = vld [vmem:[#allocation2 + $0x18] sm:$0xf]
  %v6596 = vld [vmem:[#allocation2 + $0x1c] sm:$0xf]
  %v6597 = vld [vmem:[#allocation2 + $0x20] sm:$0xf]
  %v6598 = vld [vmem:[#allocation2 + $0x24] sm:$0xf]
  %v6599 = vld [vmem:[#allocation2 + $0x28] sm:$0xf]
  %v6600 = vld [vmem:[#allocation2 + $0x2c] sm:$0xf]
  %v6601 = vld [vmem:[#allocation2 + $0x30] sm:$0xf]
  %v6602 = vld [vmem:[#allocation2 + $0x34] sm:$0xf]
  %v6603 = vld [vmem:[#allocation2 + $0x38] sm:$0xf]
  %v6604 = vld [vmem:[#allocation2 + $0x3c] sm:$0xf]
  %v6605 = vld [vmem:[#allocation2 + $0x40] sm:$0xf]
  %v6606 = vld [vmem:[#allocation2 + $0x44] sm:$0xf]
  %v6607 = vld [vmem:[#allocation2 + $0x48] sm:$0xf]
  %v6608 = vld [vmem:[#allocation2 + $0x4c] sm:$0xf]
  %v6609 = vld [vmem:[#allocation2 + $0x50] sm:$0xf]
  %v6610 = vld [vmem:[#allocation2 + $0x54] sm:$0xf]
  %v6611 = vld [vmem:[#allocation2 + $0x58] sm:$0xf]
  %v6612 = vld [vmem:[#allocation2 + $0x5c] sm:$0xf]
  %v6613 = vld [vmem:[#allocation2 + $0x60] sm:$0xf]
  %v6614 = vld [vmem:[#allocation2 + $0x64] sm:$0xf]
  %v6615 = vld [vmem:[#allocation2 + $0x68] sm:$0xf]
  %v6616 = vld [vmem:[#allocation2 + $0x6c] sm:$0xf]
  %v6617 = vld [vmem:[#allocation2 + $0x70] sm:$0xf]
  %v6618 = vld [vmem:[#allocation2 + $0x74] sm:$0xf]
  %v6619 = vld [vmem:[#allocation2 + $0x78] sm:$0xf]
  %v6620 = vld [vmem:[#allocation2 + $0x7c] sm:$0xf]
  %v6621 = vld [vmem:[#allocation2 + $0x80] sm:$0xf]
  %v6622 = vld [vmem:[#allocation2 + $0x84] sm:$0xf]
  %v6623 = vld [vmem:[#allocation2 + $0x88] sm:$0xf]
  %v6624 = vld [vmem:[#allocation2 + $0x8c] sm:$0xf]
  %v6625 = vld [vmem:[#allocation2 + $0x90] sm:$0xf]
  %v6626 = vld [vmem:[#allocation2 + $0x94] sm:$0xf]
  %v6627 = vld [vmem:[#allocation2 + $0x98] sm:$0xf]
  %v6628 = vld [vmem:[#allocation2 + $0x9c] sm:$0xf]
  %v6629 = vld [vmem:[#allocation2 + $0xa0] sm:$0xf]
  %v6630 = vld [vmem:[#allocation2 + $0xa4] sm:$0xf]
  %v6631 = vld [vmem:[#allocation2 + $0xa8] sm:$0xf]
  %v6632 = vld [vmem:[#allocation2 + $0xac] sm:$0xf]
  %v6633 = vld [vmem:[#allocation2 + $0xb0] sm:$0xf]
  %v6634 = vld [vmem:[#allocation2 + $0xb4] sm:$0xf]
  %v6635 = vld [vmem:[#allocation2 + $0xb8] sm:$0xf]
  %v6636 = vld [vmem:[#allocation2 + $0xbc] sm:$0xf]
  %v6637 = vld [vmem:[#allocation2 + $0xc0] sm:$0xf]
  %v6638 = vld [vmem:[#allocation2 + $0xc4] sm:$0xf]
  %v6639 = vld [vmem:[#allocation2 + $0xc8] sm:$0xf]
  %v6640 = vld [vmem:[#allocation2 + $0xcc] sm:$0xf]
  %v6641 = vld [vmem:[#allocation2 + $0xd0] sm:$0xf]
  %v6642 = vld [vmem:[#allocation2 + $0xd4] sm:$0xf]
  %v6643 = vld [vmem:[#allocation2 + $0xd8] sm:$0xf]
  %v6644 = vld [vmem:[#allocation2 + $0xdc] sm:$0xf]
  %v6645 = vld [vmem:[#allocation2 + $0xe0] sm:$0xf]
  %v6646 = vld [vmem:[#allocation2 + $0xe4] sm:$0xf]
  %v6647 = vld [vmem:[#allocation2 + $0xe8] sm:$0xf]
  %v6648 = vld [vmem:[#allocation2 + $0xec] sm:$0xf]
  %v6681 = vunpack.c.l.b16 %v6555
  %v6682 = vunpack.c.h.b16 %v6555
  %v6683 = vunpack.c.l.b16 %v6556
  %v6684 = vunpack.c.h.b16 %v6556
  %v6685 = vunpack.c.l.b16 %v6557
  %v6686 = vunpack.c.h.b16 %v6557
  %v6687 = vunpack.c.l.b16 %v6558
  %v6688 = vunpack.c.h.b16 %v6558
  %v6689 = vunpack.c.l.b16 %v6559
  %v6690 = vunpack.c.h.b16 %v6559
  %v6691 = vunpack.c.l.b16 %v6560
  %v6692 = vunpack.c.h.b16 %v6560
  %v6693 = vunpack.c.l.b16 %v6561
  %v6694 = vunpack.c.h.b16 %v6561
  %v6695 = vunpack.c.l.b16 %v6562
  %v6696 = vunpack.c.h.b16 %v6562
  %v6697 = vunpack.c.l.b16 %v6563
  %v6698 = vunpack.c.h.b16 %v6563
  %v6699 = vunpack.c.l.b16 %v6564
  %v6700 = vunpack.c.h.b16 %v6564
  %v6701 = vunpack.c.l.b16 %v6565
  %v6702 = vunpack.c.h.b16 %v6565
  %v6703 = vunpack.c.l.b16 %v6566
  %v6704 = vunpack.c.h.b16 %v6566
  %v6705 = vunpack.c.l.b16 %v6567
  %v6706 = vunpack.c.h.b16 %v6567
  %v6707 = vunpack.c.l.b16 %v6568
  %v6708 = vunpack.c.h.b16 %v6568
  %v6709 = vunpack.c.l.b16 %v6569
  %v6710 = vunpack.c.h.b16 %v6569
  %v6711 = vunpack.c.l.b16 %v6570
  %v6712 = vunpack.c.h.b16 %v6570
  %v6713 = vunpack.c.l.b16 %v6571
  %v6714 = vunpack.c.h.b16 %v6571
  %v6715 = vunpack.c.l.b16 %v6572
  %v6716 = vunpack.c.h.b16 %v6572
  %v6717 = vunpack.c.l.b16 %v6573
  %v6718 = vunpack.c.h.b16 %v6573
  %v6719 = vunpack.c.l.b16 %v6574
  %v6720 = vunpack.c.h.b16 %v6574
  %v6721 = vunpack.c.l.b16 %v6575
  %v6722 = vunpack.c.h.b16 %v6575
  %v6723 = vunpack.c.l.b16 %v6576
  %v6724 = vunpack.c.h.b16 %v6576
  %v6725 = vunpack.c.l.b16 %v6577
  %v6726 = vunpack.c.h.b16 %v6577
  %v6727 = vunpack.c.l.b16 %v6578
  %v6728 = vunpack.c.h.b16 %v6578
  %v6729 = vunpack.c.l.b16 %v6579
  %v6730 = vunpack.c.h.b16 %v6579
  %v6731 = vunpack.c.l.b16 %v6580
  %v6732 = vunpack.c.h.b16 %v6580
  %v6733 = vunpack.c.l.b16 %v6581
  %v6734 = vunpack.c.h.b16 %v6581
  %v6735 = vunpack.c.l.b16 %v6582
  %v6736 = vunpack.c.h.b16 %v6582
  %v6737 = vunpack.c.l.b16 %v6583
  %v6738 = vunpack.c.h.b16 %v6583
  %v6739 = vunpack.c.l.b16 %v6584
  %v6740 = vunpack.c.h.b16 %v6584
  %v6741 = vunpack.c.l.b16 %v6585
  %v6742 = vunpack.c.h.b16 %v6585
  %v6743 = vunpack.c.l.b16 %v6586
  %v6744 = vunpack.c.h.b16 %v6586
  %v6745 = vpack.c.b16 %v6685, %v6681
  %v6746 = vpack.c.b16 %v6686, %v6682
  %v6747 = vpack.c.b16 %v6687, %v6683
  %v6748 = vpack.c.b16 %v6688, %v6684
  %v6749 = vpack.c.b16 %v6693, %v6689
  %v6750 = vpack.c.b16 %v6694, %v6690
  %v6751 = vpack.c.b16 %v6695, %v6691
  %v6752 = vpack.c.b16 %v6696, %v6692
  %v6753 = vpack.c.b16 %v6701, %v6697
  %v6754 = vpack.c.b16 %v6702, %v6698
  %v6755 = vpack.c.b16 %v6703, %v6699
  %v6756 = vpack.c.b16 %v6704, %v6700
  %v6757 = vpack.c.b16 %v6709, %v6705
  %v6758 = vpack.c.b16 %v6710, %v6706
  %v6759 = vpack.c.b16 %v6711, %v6707
  %v6760 = vpack.c.b16 %v6712, %v6708
  %v6761 = vpack.c.b16 %v6717, %v6713
  %v6762 = vpack.c.b16 %v6718, %v6714
  %v6763 = vpack.c.b16 %v6719, %v6715
  %v6764 = vpack.c.b16 %v6720, %v6716
  %v6765 = vpack.c.b16 %v6725, %v6721
  %v6766 = vpack.c.b16 %v6726, %v6722
  %v6767 = vpack.c.b16 %v6727, %v6723
  %v6768 = vpack.c.b16 %v6728, %v6724
  %v6769 = vpack.c.b16 %v6733, %v6729
  %v6770 = vpack.c.b16 %v6734, %v6730
  %v6771 = vpack.c.b16 %v6735, %v6731
  %v6772 = vpack.c.b16 %v6736, %v6732
  %v6773 = vpack.c.b16 %v6741, %v6737
  %v6774 = vpack.c.b16 %v6742, %v6738
  %v6775 = vpack.c.b16 %v6743, %v6739
  %v6776 = vpack.c.b16 %v6744, %v6740
  %v6861 = vunpack.c.l.b16 %v6589
  %v6862 = vunpack.c.l.b16 %v6590
  %v6863 = vunpack.c.l.b16 %v6591
  %v6864 = vunpack.c.l.b16 %v6592
  %v6865 = vunpack.c.l.b16 %v6593
  %v6866 = vunpack.c.l.b16 %v6594
  %v6867 = vunpack.c.l.b16 %v6595
  %v6868 = vunpack.c.l.b16 %v6596
  %v6869 = vunpack.c.l.b16 %v6597
  %v6870 = vunpack.c.l.b16 %v6598
  %v6871 = vunpack.c.l.b16 %v6599
  %v6872 = vunpack.c.l.b16 %v6600
  %v6873 = vunpack.c.l.b16 %v6601
  %v6874 = vunpack.c.l.b16 %v6602
  %v6875 = vunpack.c.l.b16 %v6603
  %v6876 = vunpack.c.l.b16 %v6604
  %v6877 = vunpack.c.l.b16 %v6605
  %v6878 = vunpack.c.l.b16 %v6606
  %v6879 = vunpack.c.l.b16 %v6607
  %v6880 = vunpack.c.l.b16 %v6608
  %v6881 = vunpack.c.l.b16 %v6609
  %v6882 = vunpack.c.l.b16 %v6610
  %v6883 = vunpack.c.l.b16 %v6611
  %v6884 = vunpack.c.l.b16 %v6612
  %v6885 = vunpack.c.l.b16 %v6613
  %v6886 = vunpack.c.l.b16 %v6614
  %v6887 = vunpack.c.l.b16 %v6615
  %v6888 = vunpack.c.l.b16 %v6616
  %v6889 = vunpack.c.l.b16 %v6617
  %v6890 = vunpack.c.l.b16 %v6618
  %v6891 = vunpack.c.l.b16 %v6619
  %v6892 = vunpack.c.l.b16 %v6620
  %v6893 = vunpack.c.l.b16 %v6621
  %v6894 = vunpack.c.l.b16 %v6622
  %v6895 = vunpack.c.l.b16 %v6623
  %v6896 = vunpack.c.l.b16 %v6624
  %v6897 = vunpack.c.l.b16 %v6625
  %v6898 = vunpack.c.l.b16 %v6626
  %v6899 = vunpack.c.l.b16 %v6627
  %v6900 = vunpack.c.l.b16 %v6628
  %v6901 = vunpack.c.l.b16 %v6629
  %v6902 = vunpack.c.l.b16 %v6630
  %v6903 = vunpack.c.l.b16 %v6631
  %v6904 = vunpack.c.l.b16 %v6632
  %v6905 = vunpack.c.l.b16 %v6633
  %v6906 = vunpack.c.l.b16 %v6634
  %v6907 = vunpack.c.l.b16 %v6635
  %v6908 = vunpack.c.l.b16 %v6636
  %v6909 = vunpack.c.l.b16 %v6637
  %v6910 = vunpack.c.l.b16 %v6638
  %v6911 = vunpack.c.l.b16 %v6639
  %v6912 = vunpack.c.l.b16 %v6640
  %v6913 = vunpack.c.l.b16 %v6641
  %v6914 = vunpack.c.l.b16 %v6642
  %v6915 = vunpack.c.l.b16 %v6643
  %v6916 = vunpack.c.l.b16 %v6644
  %v6917 = vunpack.c.l.b16 %v6645
  %v6918 = vunpack.c.l.b16 %v6646
  %v6919 = vunpack.c.l.b16 %v6647
  %v6920 = vunpack.c.l.b16 %v6648
  %v6921 = vpack.c.b16 %v6862, %v6861
  %v6922 = vpack.c.b16 %v6864, %v6863
  %v6923 = vpack.c.b16 %v6866, %v6865
  %v6924 = vpack.c.b16 %v6868, %v6867
  %v6925 = vpack.c.b16 %v6870, %v6869
  %v6926 = vpack.c.b16 %v6872, %v6871
  %v6927 = vpack.c.b16 %v6874, %v6873
  %v6928 = vpack.c.b16 %v6876, %v6875
  %v6929 = vpack.c.b16 %v6878, %v6877
  %v6930 = vpack.c.b16 %v6880, %v6879
  %v6931 = vpack.c.b16 %v6882, %v6881
  %v6932 = vpack.c.b16 %v6884, %v6883
  %v6933 = vpack.c.b16 %v6886, %v6885
  %v6934 = vpack.c.b16 %v6888, %v6887
  %v6935 = vpack.c.b16 %v6890, %v6889
  %v6936 = vpack.c.b16 %v6892, %v6891
  %v6937 = vpack.c.b16 %v6894, %v6893
  %v6938 = vpack.c.b16 %v6896, %v6895
  %v6939 = vpack.c.b16 %v6898, %v6897
  %v6940 = vpack.c.b16 %v6900, %v6899
  %v6941 = vpack.c.b16 %v6902, %v6901
  %v6942 = vpack.c.b16 %v6904, %v6903
  %v6943 = vpack.c.b16 %v6906, %v6905
  %v6944 = vpack.c.b16 %v6908, %v6907
  %v6945 = vpack.c.b16 %v6910, %v6909
  %v6946 = vpack.c.b16 %v6912, %v6911
  %v6947 = vpack.c.b16 %v6914, %v6913
  %v6948 = vpack.c.b16 %v6916, %v6915
  %v6949 = vpack.c.b16 %v6918, %v6917
  %v6950 = vpack.c.b16 %v6920, %v6919
  %vm6981 = vcmask 785408
  %v6983 = vsel %vm6981, %v6748, 0
  %v6986 = vsel %vm6981, %v6752, 0
  %v6989 = vsel %vm6981, %v6756, 0
  %v6992 = vsel %vm6981, %v6760, 0
  %v6995 = vsel %vm6981, %v6764, 0
  %v6998 = vsel %vm6981, %v6768, 0
  %v7001 = vsel %vm6981, %v6772, 0
  %v7004 = vsel %vm6981, %v6776, 0
  %7006 = vmatprep.subr.bf16.mxu0 0
  %7007 = vmatpush1.bf16.msra.mxu0 %v6928
  %7008 = vmatprep.subr.bf16.mxu0 0
  %7009 = vmatpush1.bf16.msra.mxu0 %v6927
  %7010 = vmatprep.subr.bf16.mxu0 0
  %7011 = vmatpush1.bf16.msra.mxu0 %v6926
  %7012 = vmatprep.subr.bf16.mxu0 0
  %7013 = vmatpush1.bf16.msra.mxu0 %v6925
  %7014 = vmatprep.subr.bf16.mxu0 0
  %7015 = vmatpush1.bf16.msra.mxu0 %v6924
  %7016 = vmatprep.subr.bf16.mxu0 0
  %7017 = vmatpush1.bf16.msra.mxu0 %v6923
  %7018 = vmatprep.subr.bf16.mxu0 0
  %7019 = vmatpush1.bf16.msra.mxu0 %v6922
  %7020 = vmatprep.subr.bf16.mxu0 0
  %7021 = vmatpush1.bf16.msra.mxu0 %v6921
  %7022 = vmatprep.subr.bf16.mxu0 0
  %7023 = vmatpush2.bf16.msra.mxu0 %v6936
  %7024 = vmatprep.subr.bf16.mxu0 0
  %7025 = vmatpush2.bf16.msra.mxu0 %v6935
  %7026 = vmatprep.subr.bf16.mxu0 0
  %7027 = vmatpush2.bf16.msra.mxu0 %v6934
  %7028 = vmatprep.subr.bf16.mxu0 0
  %7029 = vmatpush2.bf16.msra.mxu0 %v6933
  %7030 = vmatprep.subr.bf16.mxu0 0
  %7031 = vmatpush2.bf16.msra.mxu0 %v6932
  %7032 = vmatprep.subr.bf16.mxu0 0
  %7033 = vmatpush2.bf16.msra.mxu0 %v6931
  %7034 = vmatprep.subr.bf16.mxu0 0
  %7035 = vmatpush2.bf16.msra.mxu0 %v6930
  %7036 = vmatprep.subr.bf16.mxu0 0
  %7037 = vmatpush2.bf16.msra.mxu0 %v6929
  %7038 = vmatprep.mubr.bf16.mxu0 %v6746
  %7039 = vmatmul.mubr.bf16.gmra.mxu0 %v6745
  %v7040 = vpop.f32.mrf.mxu0
  %v7041 = vadd.f32 0.0, %v7040
  %v7042 = vpop.f32.mrf.mxu0
  %v7043 = vpop.f32.mrf.mxu0
  %v7044 = vadd.f32 0.0, %v7043
  %v7045 = vpop.f32.mrf.mxu0
  %7046 = vmatprep.mubr.bf16.mxu0 %v6750
  %7047 = vmatmul.mubr.bf16.gmra.mxu0 %v6749
  %v7048 = vpop.f32.mrf.mxu0
  %v7049 = vadd.f32 0.0, %v7048
  %v7050 = vpop.f32.mrf.mxu0
  %v7051 = vpop.f32.mrf.mxu0
  %v7052 = vadd.f32 0.0, %v7051
  %v7053 = vpop.f32.mrf.mxu0
  %7054 = vmatprep.mubr.bf16.mxu0 %v6754
  %7055 = vmatmul.mubr.bf16.gmra.mxu0 %v6753
  %v7056 = vpop.f32.mrf.mxu0
  %v7057 = vadd.f32 0.0, %v7056
  %v7058 = vpop.f32.mrf.mxu0
  %v7059 = vpop.f32.mrf.mxu0
  %v7060 = vadd.f32 0.0, %v7059
  %v7061 = vpop.f32.mrf.mxu0
  %7062 = vmatprep.mubr.bf16.mxu0 %v6758
  %7063 = vmatmul.mubr.bf16.gmra.mxu0 %v6757
  %v7064 = vpop.f32.mrf.mxu0
  %v7065 = vadd.f32 0.0, %v7064
  %v7066 = vpop.f32.mrf.mxu0
  %v7067 = vpop.f32.mrf.mxu0
  %v7068 = vadd.f32 0.0, %v7067
  %v7069 = vpop.f32.mrf.mxu0
  %7070 = vmatprep.mubr.bf16.mxu0 %v6762
  %7071 = vmatmul.mubr.bf16.gmra.mxu0 %v6761
  %v7072 = vpop.f32.mrf.mxu0
  %v7073 = vadd.f32 0.0, %v7072
  %v7074 = vpop.f32.mrf.mxu0
  %v7075 = vpop.f32.mrf.mxu0
  %v7076 = vadd.f32 0.0, %v7075
  %v7077 = vpop.f32.mrf.mxu0
  %7078 = vmatprep.mubr.bf16.mxu0 %v6766
  %7079 = vmatmul.mubr.bf16.gmra.mxu0 %v6765
  %v7080 = vpop.f32.mrf.mxu0
  %v7081 = vadd.f32 0.0, %v7080
  %v7082 = vpop.f32.mrf.mxu0
  %v7083 = vpop.f32.mrf.mxu0
  %v7084 = vadd.f32 0.0, %v7083
  %v7085 = vpop.f32.mrf.mxu0
  %7086 = vmatprep.mubr.bf16.mxu0 %v6770
  %7087 = vmatmul.mubr.bf16.gmra.mxu0 %v6769
  %v7088 = vpop.f32.mrf.mxu0
  %v7089 = vadd.f32 0.0, %v7088
  %v7090 = vpop.f32.mrf.mxu0
  %v7091 = vpop.f32.mrf.mxu0
  %v7092 = vadd.f32 0.0, %v7091
  %v7093 = vpop.f32.mrf.mxu0
  %7094 = vmatprep.mubr.bf16.mxu0 %v6774
  %7095 = vmatmul.mubr.bf16.gmra.mxu0 %v6773
  %v7096 = vpop.f32.mrf.mxu0
  %v7097 = vadd.f32 0.0, %v7096
  %v7098 = vpop.f32.mrf.mxu0
  %v7099 = vpop.f32.mrf.mxu0
  %v7100 = vadd.f32 0.0, %v7099
  %v7101 = vpop.f32.mrf.mxu0
  %7102 = vdwg.mxu0
  %7103 = vmatprep.subr.bf16.mxu0 0
  %7104 = vmatpush1.bf16.msra.mxu0 %v6944
  %7105 = vmatprep.subr.bf16.mxu0 0
  %7106 = vmatpush1.bf16.msra.mxu0 %v6943
  %7107 = vmatprep.subr.bf16.mxu0 0
  %7108 = vmatpush1.bf16.msra.mxu0 %v6942
  %7109 = vmatprep.subr.bf16.mxu0 0
  %7110 = vmatpush1.bf16.msra.mxu0 %v6941
  %7111 = vmatprep.subr.bf16.mxu0 0
  %7112 = vmatpush1.bf16.msra.mxu0 %v6940
  %7113 = vmatprep.subr.bf16.mxu0 0
  %7114 = vmatpush1.bf16.msra.mxu0 %v6939
  %7115 = vmatprep.subr.bf16.mxu0 0
  %7116 = vmatpush1.bf16.msra.mxu0 %v6938
  %7117 = vmatprep.subr.bf16.mxu0 0
  %7118 = vmatpush1.bf16.msra.mxu0 %v6937
  %7119 = vmatprep.subr.bf16.mxu0 0
  %7120 = vmatpush2.bf16.msra.mxu0 0
  %7121 = vmatprep.subr.bf16.mxu0 0
  %7122 = vmatpush2.bf16.msra.mxu0 0
  %7123 = vmatprep.subr.bf16.mxu0 0
  %7124 = vmatpush2.bf16.msra.mxu0 %v6950
  %7125 = vmatprep.subr.bf16.mxu0 0
  %7126 = vmatpush2.bf16.msra.mxu0 %v6949
  %7127 = vmatprep.subr.bf16.mxu0 0
  %7128 = vmatpush2.bf16.msra.mxu0 %v6948
  %7129 = vmatprep.subr.bf16.mxu0 0
  %7130 = vmatpush2.bf16.msra.mxu0 %v6947
  %7131 = vmatprep.subr.bf16.mxu0 0
  %7132 = vmatpush2.bf16.msra.mxu0 %v6946
  %7133 = vmatprep.subr.bf16.mxu0 0
  %7134 = vmatpush2.bf16.msra.mxu0 %v6945
  %7135 = vmatprep.mubr.bf16.mxu0 %v6983
  %7136 = vmatmul.mubr.bf16.gmra.mxu0 %v6747
  %v7137 = vpop.f32.mrf.mxu0
  %v7138 = vadd.f32 %v7041, %v7137
  %v7139 = vpop.f32.mrf.mxu0
  %v7140 = vpop.f32.mrf.mxu0
  %v7141 = vadd.f32 %v7044, %v7140
  %v7142 = vpop.f32.mrf.mxu0
  %7143 = vmatprep.mubr.bf16.mxu0 %v6986
  %7144 = vmatmul.mubr.bf16.gmra.mxu0 %v6751
  %v7145 = vpop.f32.mrf.mxu0
  %v7146 = vadd.f32 %v7049, %v7145
  %v7147 = vpop.f32.mrf.mxu0
  %v7148 = vpop.f32.mrf.mxu0
  %v7149 = vadd.f32 %v7052, %v7148
  %v7150 = vpop.f32.mrf.mxu0
  %7151 = vmatprep.mubr.bf16.mxu0 %v6989
  %7152 = vmatmul.mubr.bf16.gmra.mxu0 %v6755
  %v7153 = vpop.f32.mrf.mxu0
  %v7154 = vadd.f32 %v7057, %v7153
  %v7155 = vpop.f32.mrf.mxu0
  %v7156 = vpop.f32.mrf.mxu0
  %v7157 = vadd.f32 %v7060, %v7156
  %v7158 = vpop.f32.mrf.mxu0
  %7159 = vmatprep.mubr.bf16.mxu0 %v6992
  %7160 = vmatmul.mubr.bf16.gmra.mxu0 %v6759
  %v7161 = vpop.f32.mrf.mxu0
  %v7162 = vadd.f32 %v7065, %v7161
  %v7163 = vpop.f32.mrf.mxu0
  %v7164 = vpop.f32.mrf.mxu0
  %v7165 = vadd.f32 %v7068, %v7164
  %v7166 = vpop.f32.mrf.mxu0
  %7167 = vmatprep.mubr.bf16.mxu0 %v6995
  %7168 = vmatmul.mubr.bf16.gmra.mxu0 %v6763
  %v7169 = vpop.f32.mrf.mxu0
  %v7170 = vadd.f32 %v7073, %v7169
  %v7171 = vpop.f32.mrf.mxu0
  %v7172 = vpop.f32.mrf.mxu0
  %v7173 = vadd.f32 %v7076, %v7172
  %v7174 = vpop.f32.mrf.mxu0
  %7175 = vmatprep.mubr.bf16.mxu0 %v6998
  %7176 = vmatmul.mubr.bf16.gmra.mxu0 %v6767
  %v7177 = vpop.f32.mrf.mxu0
  %v7178 = vadd.f32 %v7081, %v7177
  %v7179 = vpop.f32.mrf.mxu0
  %v7180 = vpop.f32.mrf.mxu0
  %v7181 = vadd.f32 %v7084, %v7180
  %v7182 = vpop.f32.mrf.mxu0
  %7183 = vmatprep.mubr.bf16.mxu0 %v7001
  %7184 = vmatmul.mubr.bf16.gmra.mxu0 %v6771
  %v7185 = vpop.f32.mrf.mxu0
  %v7186 = vadd.f32 %v7089, %v7185
  %v7187 = vpop.f32.mrf.mxu0
  %v7188 = vpop.f32.mrf.mxu0
  %v7189 = vadd.f32 %v7092, %v7188
  %v7190 = vpop.f32.mrf.mxu0
  %7191 = vmatprep.mubr.bf16.mxu0 %v7004
  %7192 = vmatmul.mubr.bf16.gmra.mxu0 %v6775
  %v7193 = vpop.f32.mrf.mxu0
  %v7194 = vadd.f32 %v7097, %v7193
  %v7195 = vpop.f32.mrf.mxu0
  %v7196 = vpop.f32.mrf.mxu0
  %v7197 = vadd.f32 %v7100, %v7196
  %v7198 = vpop.f32.mrf.mxu0
  %7199 = vdwg.mxu0
  %v7200 = vld [vmem:[%s1212] sm:$0xf]
  %v7201 = vld [vmem:[%s1212 + $0x4] sm:$0xf]
  %v7202 = vld [vmem:[%s1212 + $0x8] sm:$0xf]
  %v7203 = vld [vmem:[%s1212 + $0xc] sm:$0xf]
  %v7204 = vld [vmem:[%s1212 + $0x10] sm:$0xf]
  %v7205 = vld [vmem:[%s1212 + $0x14] sm:$0xf]
  %v7206 = vld [vmem:[%s1212 + $0x18] sm:$0xf]
  %v7207 = vld [vmem:[%s1212 + $0x1c] sm:$0xf]
  %v7208 = vld [vmem:[%s1212 + $0x20] sm:$0xf]
  %v7209 = vld [vmem:[%s1212 + $0x24] sm:$0xf]
  %v7210 = vld [vmem:[%s1212 + $0x28] sm:$0xf]
  %v7211 = vld [vmem:[%s1212 + $0x2c] sm:$0xf]
  %v7212 = vld [vmem:[%s1212 + $0x30] sm:$0xf]
  %v7213 = vld [vmem:[%s1212 + $0x34] sm:$0xf]
  %v7214 = vld [vmem:[%s1212 + $0x38] sm:$0xf]
  %v7215 = vld [vmem:[%s1212 + $0x3c] sm:$0xf]
  %v7216 = vld [vmem:[%s1212 + $0x40] sm:$0xf]
  %v7217 = vld [vmem:[%s1212 + $0x44] sm:$0xf]
  %v7218 = vld [vmem:[%s1212 + $0x48] sm:$0xf]
  %v7219 = vld [vmem:[%s1212 + $0x4c] sm:$0xf]
  %v7220 = vld [vmem:[%s1212 + $0x50] sm:$0xf]
  %v7221 = vld [vmem:[%s1212 + $0x54] sm:$0xf]
  %v7222 = vld [vmem:[%s1212 + $0x58] sm:$0xf]
  %v7223 = vld [vmem:[%s1212 + $0x5c] sm:$0xf]
  %v7224 = vld [vmem:[%s1212 + $0x60] sm:$0xf]
  %v7225 = vld [vmem:[%s1212 + $0x64] sm:$0xf]
  %v7226 = vld [vmem:[%s1212 + $0x68] sm:$0xf]
  %v7227 = vld [vmem:[%s1212 + $0x6c] sm:$0xf]
  %v7228 = vld [vmem:[%s1212 + $0x70] sm:$0xf]
  %v7229 = vld [vmem:[%s1212 + $0x74] sm:$0xf]
  %v7230 = vld [vmem:[%s1212 + $0x78] sm:$0xf]
  %v7231 = vld [vmem:[%s1212 + $0x7c] sm:$0xf]
  %v7232 = vld [vmem:[%s1212 + $0x80] sm:$0xf]
  %v7233 = vld [vmem:[%s1212 + $0x84] sm:$0xf]
  %v7234 = vld [vmem:[%s1212 + $0x88] sm:$0xf]
  %v7235 = vld [vmem:[%s1212 + $0x8c] sm:$0xf]
  %v7236 = vld [vmem:[%s1212 + $0x90] sm:$0xf]
  %v7237 = vld [vmem:[%s1212 + $0x94] sm:$0xf]
  %v7238 = vld [vmem:[%s1212 + $0x98] sm:$0xf]
  %v7239 = vld [vmem:[%s1212 + $0x9c] sm:$0xf]
  %v7240 = vld [vmem:[%s1212 + $0xa0] sm:$0xf]
  %v7241 = vld [vmem:[%s1212 + $0xa4] sm:$0xf]
  %v7242 = vld [vmem:[%s1212 + $0xa8] sm:$0xf]
  %v7243 = vld [vmem:[%s1212 + $0xac] sm:$0xf]
  %v7244 = vld [vmem:[%s1212 + $0xb0] sm:$0xf]
  %v7245 = vld [vmem:[%s1212 + $0xb4] sm:$0xf]
  %v7246 = vld [vmem:[%s1212 + $0xb8] sm:$0xf]
  %v7247 = vld [vmem:[%s1212 + $0xbc] sm:$0xf]
  %v7248 = vld [vmem:[%s1212 + $0xc0] sm:$0xf]
  %v7249 = vld [vmem:[%s1212 + $0xc4] sm:$0xf]
  %v7250 = vld [vmem:[%s1212 + $0xc8] sm:$0xf]
  %v7251 = vld [vmem:[%s1212 + $0xcc] sm:$0xf]
  %v7252 = vld [vmem:[%s1212 + $0xd0] sm:$0xf]
  %v7253 = vld [vmem:[%s1212 + $0xd4] sm:$0xf]
  %v7254 = vld [vmem:[%s1212 + $0xd8] sm:$0xf]
  %v7255 = vld [vmem:[%s1212 + $0xdc] sm:$0xf]
  %v7256 = vld [vmem:[%s1212 + $0xe0] sm:$0xf]
  %v7257 = vld [vmem:[%s1212 + $0xe4] sm:$0xf]
  %v7258 = vld [vmem:[%s1212 + $0xe8] sm:$0xf]
  %v7259 = vld [vmem:[%s1212 + $0xec] sm:$0xf]
  %v7320 = vunpack.c.l.b16 %v7200
  %v7321 = vunpack.c.l.b16 %v7201
  %v7322 = vunpack.c.l.b16 %v7202
  %v7323 = vunpack.c.l.b16 %v7203
  %v7324 = vunpack.c.l.b16 %v7204
  %v7325 = vunpack.c.l.b16 %v7205
  %v7326 = vunpack.c.l.b16 %v7206
  %v7327 = vunpack.c.l.b16 %v7207
  %v7328 = vunpack.c.l.b16 %v7208
  %v7329 = vunpack.c.l.b16 %v7209
  %v7330 = vunpack.c.l.b16 %v7210
  %v7331 = vunpack.c.l.b16 %v7211
  %v7332 = vunpack.c.l.b16 %v7212
  %v7333 = vunpack.c.l.b16 %v7213
  %v7334 = vunpack.c.l.b16 %v7214
  %v7335 = vunpack.c.l.b16 %v7215
  %v7336 = vunpack.c.l.b16 %v7216
  %v7337 = vunpack.c.l.b16 %v7217
  %v7338 = vunpack.c.l.b16 %v7218
  %v7339 = vunpack.c.l.b16 %v7219
  %v7340 = vunpack.c.l.b16 %v7220
  %v7341 = vunpack.c.l.b16 %v7221
  %v7342 = vunpack.c.l.b16 %v7222
  %v7343 = vunpack.c.l.b16 %v7223
  %v7344 = vunpack.c.l.b16 %v7224
  %v7345 = vunpack.c.l.b16 %v7225
  %v7346 = vunpack.c.l.b16 %v7226
  %v7347 = vunpack.c.l.b16 %v7227
  %v7348 = vunpack.c.l.b16 %v7228
  %v7349 = vunpack.c.l.b16 %v7229
  %v7350 = vunpack.c.l.b16 %v7230
  %v7351 = vunpack.c.l.b16 %v7231
  %v7352 = vunpack.c.l.b16 %v7232
  %v7353 = vunpack.c.l.b16 %v7233
  %v7354 = vunpack.c.l.b16 %v7234
  %v7355 = vunpack.c.l.b16 %v7235
  %v7356 = vunpack.c.l.b16 %v7236
  %v7357 = vunpack.c.l.b16 %v7237
  %v7358 = vunpack.c.l.b16 %v7238
  %v7359 = vunpack.c.l.b16 %v7239
  %v7360 = vunpack.c.l.b16 %v7240
  %v7361 = vunpack.c.l.b16 %v7241
  %v7362 = vunpack.c.l.b16 %v7242
  %v7363 = vunpack.c.l.b16 %v7243
  %v7364 = vunpack.c.l.b16 %v7244
  %v7365 = vunpack.c.l.b16 %v7245
  %v7366 = vunpack.c.l.b16 %v7246
  %v7367 = vunpack.c.l.b16 %v7247
  %v7368 = vunpack.c.l.b16 %v7248
  %v7369 = vunpack.c.l.b16 %v7249
  %v7370 = vunpack.c.l.b16 %v7250
  %v7371 = vunpack.c.l.b16 %v7251
  %v7372 = vunpack.c.l.b16 %v7252
  %v7373 = vunpack.c.l.b16 %v7253
  %v7374 = vunpack.c.l.b16 %v7254
  %v7375 = vunpack.c.l.b16 %v7255
  %v7376 = vunpack.c.l.b16 %v7256
  %v7377 = vunpack.c.l.b16 %v7257
  %v7378 = vunpack.c.l.b16 %v7258
  %v7379 = vunpack.c.l.b16 %v7259
  %v7380 = vpack.c.b16 %v7321, %v7320
  %v7381 = vpack.c.b16 %v7323, %v7322
  %v7382 = vpack.c.b16 %v7325, %v7324
  %v7383 = vpack.c.b16 %v7327, %v7326
  %v7384 = vpack.c.b16 %v7329, %v7328
  %v7385 = vpack.c.b16 %v7331, %v7330
  %v7386 = vpack.c.b16 %v7333, %v7332
  %v7387 = vpack.c.b16 %v7335, %v7334
  %v7388 = vpack.c.b16 %v7337, %v7336
  %v7389 = vpack.c.b16 %v7339, %v7338
  %v7390 = vpack.c.b16 %v7341, %v7340
  %v7391 = vpack.c.b16 %v7343, %v7342
  %v7392 = vpack.c.b16 %v7345, %v7344
  %v7393 = vpack.c.b16 %v7347, %v7346
  %v7394 = vpack.c.b16 %v7349, %v7348
  %v7395 = vpack.c.b16 %v7351, %v7350
  %v7396 = vpack.c.b16 %v7353, %v7352
  %v7397 = vpack.c.b16 %v7355, %v7354
  %v7398 = vpack.c.b16 %v7357, %v7356
  %v7399 = vpack.c.b16 %v7359, %v7358
  %v7400 = vpack.c.b16 %v7361, %v7360
  %v7401 = vpack.c.b16 %v7363, %v7362
  %v7402 = vpack.c.b16 %v7365, %v7364
  %v7403 = vpack.c.b16 %v7367, %v7366
  %v7404 = vpack.c.b16 %v7369, %v7368
  %v7405 = vpack.c.b16 %v7371, %v7370
  %v7406 = vpack.c.b16 %v7373, %v7372
  %v7407 = vpack.c.b16 %v7375, %v7374
  %v7408 = vpack.c.b16 %v7377, %v7376
  %v7409 = vpack.c.b16 %v7379, %v7378
  %7440 = vmatprep.subr.bf16.mxu0 0
  %7441 = vmatpush1.bf16.msra.mxu0 %v7387
  %7442 = vmatprep.subr.bf16.mxu0 0
  %7443 = vmatpush1.bf16.msra.mxu0 %v7386
  %7444 = vmatprep.subr.bf16.mxu0 0
  %7445 = vmatpush1.bf16.msra.mxu0 %v7385
  %7446 = vmatprep.subr.bf16.mxu0 0
  %7447 = vmatpush1.bf16.msra.mxu0 %v7384
  %7448 = vmatprep.subr.bf16.mxu0 0
  %7449 = vmatpush1.bf16.msra.mxu0 %v7383
  %7450 = vmatprep.subr.bf16.mxu0 0
  %7451 = vmatpush1.bf16.msra.mxu0 %v7382
  %7452 = vmatprep.subr.bf16.mxu0 0
  %7453 = vmatpush1.bf16.msra.mxu0 %v7381
  %7454 = vmatprep.subr.bf16.mxu0 0
  %7455 = vmatpush1.bf16.msra.mxu0 %v7380
  %7456 = vmatprep.subr.bf16.mxu0 0
  %7457 = vmatpush2.bf16.msra.mxu0 %v7395
  %7458 = vmatprep.subr.bf16.mxu0 0
  %7459 = vmatpush2.bf16.msra.mxu0 %v7394
  %7460 = vmatprep.subr.bf16.mxu0 0
  %7461 = vmatpush2.bf16.msra.mxu0 %v7393
  %7462 = vmatprep.subr.bf16.mxu0 0
  %7463 = vmatpush2.bf16.msra.mxu0 %v7392
  %7464 = vmatprep.subr.bf16.mxu0 0
  %7465 = vmatpush2.bf16.msra.mxu0 %v7391
  %7466 = vmatprep.subr.bf16.mxu0 0
  %7467 = vmatpush2.bf16.msra.mxu0 %v7390
  %7468 = vmatprep.subr.bf16.mxu0 0
  %7469 = vmatpush2.bf16.msra.mxu0 %v7389
  %7470 = vmatprep.subr.bf16.mxu0 0
  %7471 = vmatpush2.bf16.msra.mxu0 %v7388
  %7472 = vmatprep.mubr.bf16.mxu0 %v6746
  %7473 = vmatmul.mubr.bf16.gmra.mxu0 %v6745
  %v7474 = vpop.f32.mrf.mxu0
  %v7475 = vadd.f32 0.0, %v7474
  %v7476 = vpop.f32.mrf.mxu0
  %v7477 = vpop.f32.mrf.mxu0
  %v7478 = vadd.f32 0.0, %v7477
  %v7479 = vpop.f32.mrf.mxu0
  %7480 = vmatprep.mubr.bf16.mxu0 %v6750
  %7481 = vmatmul.mubr.bf16.gmra.mxu0 %v6749
  %v7482 = vpop.f32.mrf.mxu0
  %v7483 = vadd.f32 0.0, %v7482
  %v7484 = vpop.f32.mrf.mxu0
  %v7485 = vpop.f32.mrf.mxu0
  %v7486 = vadd.f32 0.0, %v7485
  %v7487 = vpop.f32.mrf.mxu0
  %7488 = vmatprep.mubr.bf16.mxu0 %v6754
  %7489 = vmatmul.mubr.bf16.gmra.mxu0 %v6753
  %v7490 = vpop.f32.mrf.mxu0
  %v7491 = vadd.f32 0.0, %v7490
  %v7492 = vpop.f32.mrf.mxu0
  %v7493 = vpop.f32.mrf.mxu0
  %v7494 = vadd.f32 0.0, %v7493
  %v7495 = vpop.f32.mrf.mxu0
  %7496 = vmatprep.mubr.bf16.mxu0 %v6758
  %7497 = vmatmul.mubr.bf16.gmra.mxu0 %v6757
  %v7498 = vpop.f32.mrf.mxu0
  %v7499 = vadd.f32 0.0, %v7498
  %v7500 = vpop.f32.mrf.mxu0
  %v7501 = vpop.f32.mrf.mxu0
  %v7502 = vadd.f32 0.0, %v7501
  %v7503 = vpop.f32.mrf.mxu0
  %7504 = vmatprep.mubr.bf16.mxu0 %v6762
  %7505 = vmatmul.mubr.bf16.gmra.mxu0 %v6761
  %v7506 = vpop.f32.mrf.mxu0
  %v7507 = vadd.f32 0.0, %v7506
  %v7508 = vpop.f32.mrf.mxu0
  %v7509 = vpop.f32.mrf.mxu0
  %v7510 = vadd.f32 0.0, %v7509
  %v7511 = vpop.f32.mrf.mxu0
  %7512 = vmatprep.mubr.bf16.mxu0 %v6766
  %7513 = vmatmul.mubr.bf16.gmra.mxu0 %v6765
  %v7514 = vpop.f32.mrf.mxu0
  %v7515 = vadd.f32 0.0, %v7514
  %v7516 = vpop.f32.mrf.mxu0
  %v7517 = vpop.f32.mrf.mxu0
  %v7518 = vadd.f32 0.0, %v7517
  %v7519 = vpop.f32.mrf.mxu0
  %7520 = vmatprep.mubr.bf16.mxu0 %v6770
  %7521 = vmatmul.mubr.bf16.gmra.mxu0 %v6769
  %v7522 = vpop.f32.mrf.mxu0
  %v7523 = vadd.f32 0.0, %v7522
  %v7524 = vpop.f32.mrf.mxu0
  %v7525 = vpop.f32.mrf.mxu0
  %v7526 = vadd.f32 0.0, %v7525
  %v7527 = vpop.f32.mrf.mxu0
  %7528 = vmatprep.mubr.bf16.mxu0 %v6774
  %7529 = vmatmul.mubr.bf16.gmra.mxu0 %v6773
  %v7530 = vpop.f32.mrf.mxu0
  %v7531 = vadd.f32 0.0, %v7530
  %v7532 = vpop.f32.mrf.mxu0
  %v7533 = vpop.f32.mrf.mxu0
  %v7534 = vadd.f32 0.0, %v7533
  %v7535 = vpop.f32.mrf.mxu0
  %7536 = vdwg.mxu0
  %7537 = vmatprep.subr.bf16.mxu0 0
  %7538 = vmatpush1.bf16.msra.mxu0 %v7403
  %7539 = vmatprep.subr.bf16.mxu0 0
  %7540 = vmatpush1.bf16.msra.mxu0 %v7402
  %7541 = vmatprep.subr.bf16.mxu0 0
  %7542 = vmatpush1.bf16.msra.mxu0 %v7401
  %7543 = vmatprep.subr.bf16.mxu0 0
  %7544 = vmatpush1.bf16.msra.mxu0 %v7400
  %7545 = vmatprep.subr.bf16.mxu0 0
  %7546 = vmatpush1.bf16.msra.mxu0 %v7399
  %7547 = vmatprep.subr.bf16.mxu0 0
  %7548 = vmatpush1.bf16.msra.mxu0 %v7398
  %7549 = vmatprep.subr.bf16.mxu0 0
  %7550 = vmatpush1.bf16.msra.mxu0 %v7397
  %7551 = vmatprep.subr.bf16.mxu0 0
  %7552 = vmatpush1.bf16.msra.mxu0 %v7396
  %7553 = vmatprep.subr.bf16.mxu0 0
  %7554 = vmatpush2.bf16.msra.mxu0 0
  %7555 = vmatprep.subr.bf16.mxu0 0
  %7556 = vmatpush2.bf16.msra.mxu0 0
  %7557 = vmatprep.subr.bf16.mxu0 0
  %7558 = vmatpush2.bf16.msra.mxu0 %v7409
  %7559 = vmatprep.subr.bf16.mxu0 0
  %7560 = vmatpush2.bf16.msra.mxu0 %v7408
  %7561 = vmatprep.subr.bf16.mxu0 0
  %7562 = vmatpush2.bf16.msra.mxu0 %v7407
  %7563 = vmatprep.subr.bf16.mxu0 0
  %7564 = vmatpush2.bf16.msra.mxu0 %v7406
  %7565 = vmatprep.subr.bf16.mxu0 0
  %7566 = vmatpush2.bf16.msra.mxu0 %v7405
  %7567 = vmatprep.subr.bf16.mxu0 0
  %7568 = vmatpush2.bf16.msra.mxu0 %v7404
  %7569 = vmatprep.mubr.bf16.mxu0 %v6983
  %7570 = vmatmul.mubr.bf16.gmra.mxu0 %v6747
  %v7571 = vpop.f32.mrf.mxu0
  %v7572 = vadd.f32 %v7475, %v7571
  %v7573 = vpop.f32.mrf.mxu0
  %v7574 = vpop.f32.mrf.mxu0
  %v7575 = vadd.f32 %v7478, %v7574
  %v7576 = vpop.f32.mrf.mxu0
  %7577 = vmatprep.mubr.bf16.mxu0 %v6986
  %7578 = vmatmul.mubr.bf16.gmra.mxu0 %v6751
  %v7579 = vpop.f32.mrf.mxu0
  %v7580 = vadd.f32 %v7483, %v7579
  %v7581 = vpop.f32.mrf.mxu0
  %v7582 = vpop.f32.mrf.mxu0
  %v7583 = vadd.f32 %v7486, %v7582
  %v7584 = vpop.f32.mrf.mxu0
  %7585 = vmatprep.mubr.bf16.mxu0 %v6989
  %7586 = vmatmul.mubr.bf16.gmra.mxu0 %v6755
  %v7587 = vpop.f32.mrf.mxu0
  %v7588 = vadd.f32 %v7491, %v7587
  %v7589 = vpop.f32.mrf.mxu0
  %v7590 = vpop.f32.mrf.mxu0
  %v7591 = vadd.f32 %v7494, %v7590
  %v7592 = vpop.f32.mrf.mxu0
  %7593 = vmatprep.mubr.bf16.mxu0 %v6992
  %7594 = vmatmul.mubr.bf16.gmra.mxu0 %v6759
  %v7595 = vpop.f32.mrf.mxu0
  %v7596 = vadd.f32 %v7499, %v7595
  %v7597 = vpop.f32.mrf.mxu0
  %v7598 = vpop.f32.mrf.mxu0
  %v7599 = vadd.f32 %v7502, %v7598
  %v7600 = vpop.f32.mrf.mxu0
  %7601 = vmatprep.mubr.bf16.mxu0 %v6995
  %7602 = vmatmul.mubr.bf16.gmra.mxu0 %v6763
  %v7603 = vpop.f32.mrf.mxu0
  %v7604 = vadd.f32 %v7507, %v7603
  %v7605 = vpop.f32.mrf.mxu0
  %v7606 = vpop.f32.mrf.mxu0
  %v7607 = vadd.f32 %v7510, %v7606
  %v7608 = vpop.f32.mrf.mxu0
  %7609 = vmatprep.mubr.bf16.mxu0 %v6998
  %7610 = vmatmul.mubr.bf16.gmra.mxu0 %v6767
  %v7611 = vpop.f32.mrf.mxu0
  %v7612 = vadd.f32 %v7515, %v7611
  %v7613 = vpop.f32.mrf.mxu0
  %v7614 = vpop.f32.mrf.mxu0
  %v7615 = vadd.f32 %v7518, %v7614
  %v7616 = vpop.f32.mrf.mxu0
  %7617 = vmatprep.mubr.bf16.mxu0 %v7001
  %7618 = vmatmul.mubr.bf16.gmra.mxu0 %v6771
  %v7619 = vpop.f32.mrf.mxu0
  %v7620 = vadd.f32 %v7523, %v7619
  %v7621 = vpop.f32.mrf.mxu0
  %v7622 = vpop.f32.mrf.mxu0
  %v7623 = vadd.f32 %v7526, %v7622
  %v7624 = vpop.f32.mrf.mxu0
  %7625 = vmatprep.mubr.bf16.mxu0 %v7004
  %7626 = vmatmul.mubr.bf16.gmra.mxu0 %v6775
  %v7627 = vpop.f32.mrf.mxu0
  %v7628 = vadd.f32 %v7531, %v7627
  %v7629 = vpop.f32.mrf.mxu0
  %v7630 = vpop.f32.mrf.mxu0
  %v7631 = vadd.f32 %v7534, %v7630
  %v7632 = vpop.f32.mrf.mxu0
  %7633 = vdwg.mxu0
  %v7634 = vmax.f32 %v7138, %v7572
  %v7635 = vmax.f32 %v7141, %v7575
  %v7636 = vmax.f32 %v7146, %v7580
  %v7637 = vmax.f32 %v7149, %v7583
  %v7638 = vmax.f32 %v7154, %v7588
  %v7639 = vmax.f32 %v7157, %v7591
  %v7640 = vmax.f32 %v7162, %v7596
  %v7641 = vmax.f32 %v7165, %v7599
  %v7642 = vmax.f32 %v7170, %v7604
  %v7643 = vmax.f32 %v7173, %v7607
  %v7644 = vmax.f32 %v7178, %v7612
  %v7645 = vmax.f32 %v7181, %v7615
  %v7646 = vmax.f32 %v7186, %v7620
  %v7647 = vmax.f32 %v7189, %v7623
  %v7648 = vmax.f32 %v7194, %v7628
  %v7649 = vmax.f32 %v7197, %v7631
  %v7650 = vmax.f32 %v7634, %v7636
  %v7651 = vmax.f32 %v7635, %v7637
  %v7652 = vmax.f32 %v7638, %v7640
  %v7653 = vmax.f32 %v7639, %v7641
  %v7654 = vmax.f32 %v7642, %v7644
  %v7655 = vmax.f32 %v7643, %v7645
  %v7656 = vmax.f32 %v7646, %v7648
  %v7657 = vmax.f32 %v7647, %v7649
  %v7658 = vadd.f32 %v7650, %v6587
  %v7659 = vadd.f32 %v7651, %v6588
  %v7660 = vadd.f32 %v7652, %v6587
  %v7661 = vadd.f32 %v7653, %v6588
  %v7662 = vadd.f32 %v7654, %v6587
  %v7663 = vadd.f32 %v7655, %v6588
  %v7664 = vadd.f32 %v7656, %v6587
  %v7665 = vadd.f32 %v7657, %v6588
  %v7666 = vmax.f32 %v7658, 0.0
  %v7667 = vmax.f32 %v7659, 0.0
  %v7668 = vmax.f32 %v7660, 0.0
  %v7669 = vmax.f32 %v7661, 0.0
  %v7670 = vmax.f32 %v7662, 0.0
  %v7671 = vmax.f32 %v7663, 0.0
  %v7672 = vmax.f32 %v7664, 0.0
  %v7673 = vmax.f32 %v7665, 0.0
  %v7674 = vpack.c.bf16 %v7667, %v7666
  %v7675 = vpack.c.bf16 %v7669, %v7668
  %v7676 = vpack.c.bf16 %v7671, %v7670
  %v7677 = vpack.c.bf16 %v7673, %v7672
  %v7682 = vunpack.c.l.b16 %v7674
  %v7683 = vunpack.c.h.b16 %v7674
  %v7684 = vunpack.c.l.b16 %v7675
  %v7685 = vunpack.c.h.b16 %v7675
  %v7686 = vunpack.c.l.b16 %v7676
  %v7687 = vunpack.c.h.b16 %v7676
  %v7688 = vunpack.c.l.b16 %v7677
  %v7689 = vunpack.c.h.b16 %v7677
  %v7690 = vpack.c.b16 %v7682, %v7682
  %v7691 = vpack.c.b16 %v7683, %v7683
  %v7692 = vpack.c.b16 %v7684, %v7684
  %v7693 = vpack.c.b16 %v7685, %v7685
  %v7694 = vpack.c.b16 %v7686, %v7686
  %v7695 = vpack.c.b16 %v7687, %v7687
  %v7696 = vpack.c.b16 %v7688, %v7688
  %v7697 = vpack.c.b16 %v7689, %v7689
  %7706 = vst [vmem:[#allocation3] sm:$0xf] %v7690
  %7707 = vst [vmem:[#allocation3 + $0x4] sm:$0xf] %v7691
  %7708 = vst [vmem:[#allocation3 + $0x8] sm:$0xf] %v7692
  %7709 = vst [vmem:[#allocation3 + $0xc] sm:$0xf] %v7693
  %7710 = vst [vmem:[#allocation3 + $0x10] sm:$0xf] %v7694
  %7711 = vst [vmem:[#allocation3 + $0x14] sm:$0xf] %v7695
  %7712 = vst [vmem:[#allocation3 + $0x18] sm:$0xf] %v7696
  %7713 = vst [vmem:[#allocation3 + $0x1c] sm:$0xf] %v7697
  %v7714 = vld [vmem:[%s1745] sm:$0xf]
  %v7715 = vld [vmem:[%s1745 + $0x4] sm:$0xf]
  %v7716 = vld [vmem:[%s1745 + $0x8] sm:$0xf]
  %v7717 = vld [vmem:[%s1745 + $0xc] sm:$0xf]
  %v7718 = vld [vmem:[%s1745 + $0x10] sm:$0xf]
  %v7719 = vld [vmem:[%s1745 + $0x14] sm:$0xf]
  %v7720 = vld [vmem:[%s1745 + $0x18] sm:$0xf]
  %v7721 = vld [vmem:[%s1745 + $0x1c] sm:$0xf]
  %v7722 = vld [vmem:[%s1745 + $0x20] sm:$0xf]
  %v7723 = vld [vmem:[%s1745 + $0x24] sm:$0xf]
  %v7724 = vld [vmem:[%s1745 + $0x28] sm:$0xf]
  %v7725 = vld [vmem:[%s1745 + $0x2c] sm:$0xf]
  %v7726 = vld [vmem:[%s1745 + $0x30] sm:$0xf]
  %v7727 = vld [vmem:[%s1745 + $0x34] sm:$0xf]
  %v7728 = vld [vmem:[%s1745 + $0x38] sm:$0xf]
  %v7729 = vld [vmem:[%s1745 + $0x3c] sm:$0xf]
  %v7730 = vld [vmem:[%s1745 + $0x40] sm:$0xf]
  %v7731 = vld [vmem:[%s1745 + $0x44] sm:$0xf]
  %v7732 = vld [vmem:[%s1745 + $0x48] sm:$0xf]
  %v7733 = vld [vmem:[%s1745 + $0x4c] sm:$0xf]
  %v7734 = vld [vmem:[%s1745 + $0x50] sm:$0xf]
  %v7735 = vld [vmem:[%s1745 + $0x54] sm:$0xf]
  %v7736 = vld [vmem:[%s1745 + $0x58] sm:$0xf]
  %v7737 = vld [vmem:[%s1745 + $0x5c] sm:$0xf]
  %v7738 = vld [vmem:[%s1745 + $0x60] sm:$0xf]
  %v7739 = vld [vmem:[%s1745 + $0x64] sm:$0xf]
  %v7740 = vld [vmem:[%s1745 + $0x68] sm:$0xf]
  %v7741 = vld [vmem:[%s1745 + $0x6c] sm:$0xf]
  %v7742 = vld [vmem:[%s1745 + $0x70] sm:$0xf]
  %v7743 = vld [vmem:[%s1745 + $0x74] sm:$0xf]
  %v7744 = vld [vmem:[%s1745 + $0x78] sm:$0xf]
  %v7745 = vld [vmem:[%s1745 + $0x7c] sm:$0xf]
  %v7746 = vld [vmem:[%s1745 + $0x80] sm:$0xf]
  %v7747 = vld [vmem:[%s1745 + $0x84] sm:$0xf]
  %v7748 = vld [vmem:[%s1745 + $0x88] sm:$0xf]
  %v7749 = vld [vmem:[%s1745 + $0x8c] sm:$0xf]
  %v7750 = vld [vmem:[%s1745 + $0x90] sm:$0xf]
  %v7751 = vld [vmem:[%s1745 + $0x94] sm:$0xf]
  %v7752 = vld [vmem:[%s1745 + $0x98] sm:$0xf]
  %v7753 = vld [vmem:[%s1745 + $0x9c] sm:$0xf]
  %v7754 = vld [vmem:[%s1745 + $0xa0] sm:$0xf]
  %v7755 = vld [vmem:[%s1745 + $0xa4] sm:$0xf]
  %v7756 = vld [vmem:[%s1745 + $0xa8] sm:$0xf]
  %v7757 = vld [vmem:[%s1745 + $0xac] sm:$0xf]
  %v7758 = vld [vmem:[%s1745 + $0xb0] sm:$0xf]
  %v7759 = vld [vmem:[%s1745 + $0xb4] sm:$0xf]
  %v7760 = vld [vmem:[%s1745 + $0xb8] sm:$0xf]
  %v7761 = vld [vmem:[%s1745 + $0xbc] sm:$0xf]
  %v7762 = vld [vmem:[%s1745 + $0xc0] sm:$0xf]
  %v7763 = vld [vmem:[%s1745 + $0xc4] sm:$0xf]
  %v7764 = vld [vmem:[%s1745 + $0xc8] sm:$0xf]
  %v7765 = vld [vmem:[%s1745 + $0xcc] sm:$0xf]
  %v7766 = vld [vmem:[%s1745 + $0xd0] sm:$0xf]
  %v7767 = vld [vmem:[%s1745 + $0xd4] sm:$0xf]
  %v7768 = vld [vmem:[%s1745 + $0xd8] sm:$0xf]
  %v7769 = vld [vmem:[%s1745 + $0xdc] sm:$0xf]
  %v7770 = vld [vmem:[%s1745 + $0xe0] sm:$0xf]
  %v7771 = vld [vmem:[%s1745 + $0xe4] sm:$0xf]
  %v7772 = vld [vmem:[%s1745 + $0xe8] sm:$0xf]
  %v7773 = vld [vmem:[%s1745 + $0xec] sm:$0xf]
  %v7834 = vunpack.c.l.b16 %v7714
  %v7835 = vunpack.c.l.b16 %v7715
  %v7836 = vunpack.c.l.b16 %v7716
  %v7837 = vunpack.c.l.b16 %v7717
  %v7838 = vunpack.c.l.b16 %v7718
  %v7839 = vunpack.c.l.b16 %v7719
  %v7840 = vunpack.c.l.b16 %v7720
  %v7841 = vunpack.c.l.b16 %v7721
  %v7842 = vunpack.c.l.b16 %v7722
  %v7843 = vunpack.c.l.b16 %v7723
  %v7844 = vunpack.c.l.b16 %v7724
  %v7845 = vunpack.c.l.b16 %v7725
  %v7846 = vunpack.c.l.b16 %v7726
  %v7847 = vunpack.c.l.b16 %v7727
  %v7848 = vunpack.c.l.b16 %v7728
  %v7849 = vunpack.c.l.b16 %v7729
  %v7850 = vunpack.c.l.b16 %v7730
  %v7851 = vunpack.c.l.b16 %v7731
  %v7852 = vunpack.c.l.b16 %v7732
  %v7853 = vunpack.c.l.b16 %v7733
  %v7854 = vunpack.c.l.b16 %v7734
  %v7855 = vunpack.c.l.b16 %v7735
  %v7856 = vunpack.c.l.b16 %v7736
  %v7857 = vunpack.c.l.b16 %v7737
  %v7858 = vunpack.c.l.b16 %v7738
  %v7859 = vunpack.c.l.b16 %v7739
  %v7860 = vunpack.c.l.b16 %v7740
  %v7861 = vunpack.c.l.b16 %v7741
  %v7862 = vunpack.c.l.b16 %v7742
  %v7863 = vunpack.c.l.b16 %v7743
  %v7864 = vunpack.c.l.b16 %v7744
  %v7865 = vunpack.c.l.b16 %v7745
  %v7866 = vunpack.c.l.b16 %v7746
  %v7867 = vunpack.c.l.b16 %v7747
  %v7868 = vunpack.c.l.b16 %v7748
  %v7869 = vunpack.c.l.b16 %v7749
  %v7870 = vunpack.c.l.b16 %v7750
  %v7871 = vunpack.c.l.b16 %v7751
  %v7872 = vunpack.c.l.b16 %v7752
  %v7873 = vunpack.c.l.b16 %v7753
  %v7874 = vunpack.c.l.b16 %v7754
  %v7875 = vunpack.c.l.b16 %v7755
  %v7876 = vunpack.c.l.b16 %v7756
  %v7877 = vunpack.c.l.b16 %v7757
  %v7878 = vunpack.c.l.b16 %v7758
  %v7879 = vunpack.c.l.b16 %v7759
  %v7880 = vunpack.c.l.b16 %v7760
  %v7881 = vunpack.c.l.b16 %v7761
  %v7882 = vunpack.c.l.b16 %v7762
  %v7883 = vunpack.c.l.b16 %v7763
  %v7884 = vunpack.c.l.b16 %v7764
  %v7885 = vunpack.c.l.b16 %v7765
  %v7886 = vunpack.c.l.b16 %v7766
  %v7887 = vunpack.c.l.b16 %v7767
  %v7888 = vunpack.c.l.b16 %v7768
  %v7889 = vunpack.c.l.b16 %v7769
  %v7890 = vunpack.c.l.b16 %v7770
  %v7891 = vunpack.c.l.b16 %v7771
  %v7892 = vunpack.c.l.b16 %v7772
  %v7893 = vunpack.c.l.b16 %v7773
  %v7894 = vpack.c.b16 %v7835, %v7834
  %v7895 = vpack.c.b16 %v7837, %v7836
  %v7896 = vpack.c.b16 %v7839, %v7838
  %v7897 = vpack.c.b16 %v7841, %v7840
  %v7898 = vpack.c.b16 %v7843, %v7842
  %v7899 = vpack.c.b16 %v7845, %v7844
  %v7900 = vpack.c.b16 %v7847, %v7846
  %v7901 = vpack.c.b16 %v7849, %v7848
  %v7902 = vpack.c.b16 %v7851, %v7850
  %v7903 = vpack.c.b16 %v7853, %v7852
  %v7904 = vpack.c.b16 %v7855, %v7854
  %v7905 = vpack.c.b16 %v7857, %v7856
  %v7906 = vpack.c.b16 %v7859, %v7858
  %v7907 = vpack.c.b16 %v7861, %v7860
  %v7908 = vpack.c.b16 %v7863, %v7862
  %v7909 = vpack.c.b16 %v7865, %v7864
  %v7910 = vpack.c.b16 %v7867, %v7866
  %v7911 = vpack.c.b16 %v7869, %v7868
  %v7912 = vpack.c.b16 %v7871, %v7870
  %v7913 = vpack.c.b16 %v7873, %v7872
  %v7914 = vpack.c.b16 %v7875, %v7874
  %v7915 = vpack.c.b16 %v7877, %v7876
  %v7916 = vpack.c.b16 %v7879, %v7878
  %v7917 = vpack.c.b16 %v7881, %v7880
  %v7918 = vpack.c.b16 %v7883, %v7882
  %v7919 = vpack.c.b16 %v7885, %v7884
  %v7920 = vpack.c.b16 %v7887, %v7886
  %v7921 = vpack.c.b16 %v7889, %v7888
  %v7922 = vpack.c.b16 %v7891, %v7890
  %v7923 = vpack.c.b16 %v7893, %v7892
  %7954 = vmatprep.subr.bf16.mxu0 0
  %7955 = vmatpush1.bf16.msra.mxu0 %v7901
  %7956 = vmatprep.subr.bf16.mxu0 0
  %7957 = vmatpush1.bf16.msra.mxu0 %v7900
  %7958 = vmatprep.subr.bf16.mxu0 0
  %7959 = vmatpush1.bf16.msra.mxu0 %v7899
  %7960 = vmatprep.subr.bf16.mxu0 0
  %7961 = vmatpush1.bf16.msra.mxu0 %v7898
  %7962 = vmatprep.subr.bf16.mxu0 0
  %7963 = vmatpush1.bf16.msra.mxu0 %v7897
  %7964 = vmatprep.subr.bf16.mxu0 0
  %7965 = vmatpush1.bf16.msra.mxu0 %v7896
  %7966 = vmatprep.subr.bf16.mxu0 0
  %7967 = vmatpush1.bf16.msra.mxu0 %v7895
  %7968 = vmatprep.subr.bf16.mxu0 0
  %7969 = vmatpush1.bf16.msra.mxu0 %v7894
  %7970 = vmatprep.subr.bf16.mxu0 0
  %7971 = vmatpush2.bf16.msra.mxu0 %v7909
  %7972 = vmatprep.subr.bf16.mxu0 0
  %7973 = vmatpush2.bf16.msra.mxu0 %v7908
  %7974 = vmatprep.subr.bf16.mxu0 0
  %7975 = vmatpush2.bf16.msra.mxu0 %v7907
  %7976 = vmatprep.subr.bf16.mxu0 0
  %7977 = vmatpush2.bf16.msra.mxu0 %v7906
  %7978 = vmatprep.subr.bf16.mxu0 0
  %7979 = vmatpush2.bf16.msra.mxu0 %v7905
  %7980 = vmatprep.subr.bf16.mxu0 0
  %7981 = vmatpush2.bf16.msra.mxu0 %v7904
  %7982 = vmatprep.subr.bf16.mxu0 0
  %7983 = vmatpush2.bf16.msra.mxu0 %v7903
  %7984 = vmatprep.subr.bf16.mxu0 0
  %7985 = vmatpush2.bf16.msra.mxu0 %v7902
  %7986 = vmatprep.mubr.bf16.mxu0 %v6746
  %7987 = vmatmul.mubr.bf16.gmra.mxu0 %v6745
  %v7988 = vpop.f32.mrf.mxu0
  %v7989 = vadd.f32 0.0, %v7988
  %v7990 = vpop.f32.mrf.mxu0
  %v7991 = vpop.f32.mrf.mxu0
  %v7992 = vadd.f32 0.0, %v7991
  %v7993 = vpop.f32.mrf.mxu0
  %7994 = vmatprep.mubr.bf16.mxu0 %v6750
  %7995 = vmatmul.mubr.bf16.gmra.mxu0 %v6749
  %v7996 = vpop.f32.mrf.mxu0
  %v7997 = vadd.f32 0.0, %v7996
  %v7998 = vpop.f32.mrf.mxu0
  %v7999 = vpop.f32.mrf.mxu0
  %v8000 = vadd.f32 0.0, %v7999
  %v8001 = vpop.f32.mrf.mxu0
  %8002 = vmatprep.mubr.bf16.mxu0 %v6754
  %8003 = vmatmul.mubr.bf16.gmra.mxu0 %v6753
  %v8004 = vpop.f32.mrf.mxu0
  %v8005 = vadd.f32 0.0, %v8004
  %v8006 = vpop.f32.mrf.mxu0
  %v8007 = vpop.f32.mrf.mxu0
  %v8008 = vadd.f32 0.0, %v8007
  %v8009 = vpop.f32.mrf.mxu0
  %8010 = vmatprep.mubr.bf16.mxu0 %v6758
  %8011 = vmatmul.mubr.bf16.gmra.mxu0 %v6757
  %v8012 = vpop.f32.mrf.mxu0
  %v8013 = vadd.f32 0.0, %v8012
  %v8014 = vpop.f32.mrf.mxu0
  %v8015 = vpop.f32.mrf.mxu0
  %v8016 = vadd.f32 0.0, %v8015
  %v8017 = vpop.f32.mrf.mxu0
  %8018 = vmatprep.mubr.bf16.mxu0 %v6762
  %8019 = vmatmul.mubr.bf16.gmra.mxu0 %v6761
  %v8020 = vpop.f32.mrf.mxu0
  %v8021 = vadd.f32 0.0, %v8020
  %v8022 = vpop.f32.mrf.mxu0
  %v8023 = vpop.f32.mrf.mxu0
  %v8024 = vadd.f32 0.0, %v8023
  %v8025 = vpop.f32.mrf.mxu0
  %8026 = vmatprep.mubr.bf16.mxu0 %v6766
  %8027 = vmatmul.mubr.bf16.gmra.mxu0 %v6765
  %v8028 = vpop.f32.mrf.mxu0
  %v8029 = vadd.f32 0.0, %v8028
  %v8030 = vpop.f32.mrf.mxu0
  %v8031 = vpop.f32.mrf.mxu0
  %v8032 = vadd.f32 0.0, %v8031
  %v8033 = vpop.f32.mrf.mxu0
  %8034 = vmatprep.mubr.bf16.mxu0 %v6770
  %8035 = vmatmul.mubr.bf16.gmra.mxu0 %v6769
  %v8036 = vpop.f32.mrf.mxu0
  %v8037 = vadd.f32 0.0, %v8036
  %v8038 = vpop.f32.mrf.mxu0
  %v8039 = vpop.f32.mrf.mxu0
  %v8040 = vadd.f32 0.0, %v8039
  %v8041 = vpop.f32.mrf.mxu0
  %8042 = vmatprep.mubr.bf16.mxu0 %v6774
  %8043 = vmatmul.mubr.bf16.gmra.mxu0 %v6773
  %v8044 = vpop.f32.mrf.mxu0
  %v8045 = vadd.f32 0.0, %v8044
  %v8046 = vpop.f32.mrf.mxu0
  %v8047 = vpop.f32.mrf.mxu0
  %v8048 = vadd.f32 0.0, %v8047
  %v8049 = vpop.f32.mrf.mxu0
  %8050 = vdwg.mxu0
  %8051 = vmatprep.subr.bf16.mxu0 0
  %8052 = vmatpush1.bf16.msra.mxu0 %v7917
  %8053 = vmatprep.subr.bf16.mxu0 0
  %8054 = vmatpush1.bf16.msra.mxu0 %v7916
  %8055 = vmatprep.subr.bf16.mxu0 0
  %8056 = vmatpush1.bf16.msra.mxu0 %v7915
  %8057 = vmatprep.subr.bf16.mxu0 0
  %8058 = vmatpush1.bf16.msra.mxu0 %v7914
  %8059 = vmatprep.subr.bf16.mxu0 0
  %8060 = vmatpush1.bf16.msra.mxu0 %v7913
  %8061 = vmatprep.subr.bf16.mxu0 0
  %8062 = vmatpush1.bf16.msra.mxu0 %v7912
  %8063 = vmatprep.subr.bf16.mxu0 0
  %8064 = vmatpush1.bf16.msra.mxu0 %v7911
  %8065 = vmatprep.subr.bf16.mxu0 0
  %8066 = vmatpush1.bf16.msra.mxu0 %v7910
  %8067 = vmatprep.subr.bf16.mxu0 0
  %8068 = vmatpush2.bf16.msra.mxu0 0
  %8069 = vmatprep.subr.bf16.mxu0 0
  %8070 = vmatpush2.bf16.msra.mxu0 0
  %8071 = vmatprep.subr.bf16.mxu0 0
  %8072 = vmatpush2.bf16.msra.mxu0 %v7923
  %8073 = vmatprep.subr.bf16.mxu0 0
  %8074 = vmatpush2.bf16.msra.mxu0 %v7922
  %8075 = vmatprep.subr.bf16.mxu0 0
  %8076 = vmatpush2.bf16.msra.mxu0 %v7921
  %8077 = vmatprep.subr.bf16.mxu0 0
  %8078 = vmatpush2.bf16.msra.mxu0 %v7920
  %8079 = vmatprep.subr.bf16.mxu0 0
  %8080 = vmatpush2.bf16.msra.mxu0 %v7919
  %8081 = vmatprep.subr.bf16.mxu0 0
  %8082 = vmatpush2.bf16.msra.mxu0 %v7918
  %8083 = vmatprep.mubr.bf16.mxu0 %v6983
  %8084 = vmatmul.mubr.bf16.gmra.mxu0 %v6747
  %v8085 = vpop.f32.mrf.mxu0
  %v8086 = vadd.f32 %v7989, %v8085
  %v8087 = vpop.f32.mrf.mxu0
  %v8088 = vpop.f32.mrf.mxu0
  %v8089 = vadd.f32 %v7992, %v8088
  %v8090 = vpop.f32.mrf.mxu0
  %8091 = vmatprep.mubr.bf16.mxu0 %v6986
  %8092 = vmatmul.mubr.bf16.gmra.mxu0 %v6751
  %v8093 = vpop.f32.mrf.mxu0
  %v8094 = vadd.f32 %v7997, %v8093
  %v8095 = vpop.f32.mrf.mxu0
  %v8096 = vpop.f32.mrf.mxu0
  %v8097 = vadd.f32 %v8000, %v8096
  %v8098 = vpop.f32.mrf.mxu0
  %8099 = vmatprep.mubr.bf16.mxu0 %v6989
  %8100 = vmatmul.mubr.bf16.gmra.mxu0 %v6755
  %v8101 = vpop.f32.mrf.mxu0
  %v8102 = vadd.f32 %v8005, %v8101
  %v8103 = vpop.f32.mrf.mxu0
  %v8104 = vpop.f32.mrf.mxu0
  %v8105 = vadd.f32 %v8008, %v8104
  %v8106 = vpop.f32.mrf.mxu0
  %8107 = vmatprep.mubr.bf16.mxu0 %v6992
  %8108 = vmatmul.mubr.bf16.gmra.mxu0 %v6759
  %v8109 = vpop.f32.mrf.mxu0
  %v8110 = vadd.f32 %v8013, %v8109
  %v8111 = vpop.f32.mrf.mxu0
  %v8112 = vpop.f32.mrf.mxu0
  %v8113 = vadd.f32 %v8016, %v8112
  %v8114 = vpop.f32.mrf.mxu0
  %8115 = vmatprep.mubr.bf16.mxu0 %v6995
  %8116 = vmatmul.mubr.bf16.gmra.mxu0 %v6763
  %v8117 = vpop.f32.mrf.mxu0
  %v8118 = vadd.f32 %v8021, %v8117
  %v8119 = vpop.f32.mrf.mxu0
  %v8120 = vpop.f32.mrf.mxu0
  %v8121 = vadd.f32 %v8024, %v8120
  %v8122 = vpop.f32.mrf.mxu0
  %8123 = vmatprep.mubr.bf16.mxu0 %v6998
  %8124 = vmatmul.mubr.bf16.gmra.mxu0 %v6767
  %v8125 = vpop.f32.mrf.mxu0
  %v8126 = vadd.f32 %v8029, %v8125
  %v8127 = vpop.f32.mrf.mxu0
  %v8128 = vpop.f32.mrf.mxu0
  %v8129 = vadd.f32 %v8032, %v8128
  %v8130 = vpop.f32.mrf.mxu0
  %8131 = vmatprep.mubr.bf16.mxu0 %v7001
  %8132 = vmatmul.mubr.bf16.gmra.mxu0 %v6771
  %v8133 = vpop.f32.mrf.mxu0
  %v8134 = vadd.f32 %v8037, %v8133
  %v8135 = vpop.f32.mrf.mxu0
  %v8136 = vpop.f32.mrf.mxu0
  %v8137 = vadd.f32 %v8040, %v8136
  %v8138 = vpop.f32.mrf.mxu0
  %8139 = vmatprep.mubr.bf16.mxu0 %v7004
  %8140 = vmatmul.mubr.bf16.gmra.mxu0 %v6775
  %v8141 = vpop.f32.mrf.mxu0
  %v8142 = vadd.f32 %v8045, %v8141
  %v8143 = vpop.f32.mrf.mxu0
  %v8144 = vpop.f32.mrf.mxu0
  %v8145 = vadd.f32 %v8048, %v8144
  %v8146 = vpop.f32.mrf.mxu0
  %8147 = vdwg.mxu0
  %v8148 = vld [vmem:[%s2278] sm:$0xf]
  %v8149 = vld [vmem:[%s2278 + $0x4] sm:$0xf]
  %v8150 = vld [vmem:[%s2278 + $0x8] sm:$0xf]
  %v8151 = vld [vmem:[%s2278 + $0xc] sm:$0xf]
  %v8152 = vld [vmem:[%s2278 + $0x10] sm:$0xf]
  %v8153 = vld [vmem:[%s2278 + $0x14] sm:$0xf]
  %v8154 = vld [vmem:[%s2278 + $0x18] sm:$0xf]
  %v8155 = vld [vmem:[%s2278 + $0x1c] sm:$0xf]
  %v8156 = vld [vmem:[%s2278 + $0x20] sm:$0xf]
  %v8157 = vld [vmem:[%s2278 + $0x24] sm:$0xf]
  %v8158 = vld [vmem:[%s2278 + $0x28] sm:$0xf]
  %v8159 = vld [vmem:[%s2278 + $0x2c] sm:$0xf]
  %v8160 = vld [vmem:[%s2278 + $0x30] sm:$0xf]
  %v8161 = vld [vmem:[%s2278 + $0x34] sm:$0xf]
  %v8162 = vld [vmem:[%s2278 + $0x38] sm:$0xf]
  %v8163 = vld [vmem:[%s2278 + $0x3c] sm:$0xf]
  %v8164 = vld [vmem:[%s2278 + $0x40] sm:$0xf]
  %v8165 = vld [vmem:[%s2278 + $0x44] sm:$0xf]
  %v8166 = vld [vmem:[%s2278 + $0x48] sm:$0xf]
  %v8167 = vld [vmem:[%s2278 + $0x4c] sm:$0xf]
  %v8168 = vld [vmem:[%s2278 + $0x50] sm:$0xf]
  %v8169 = vld [vmem:[%s2278 + $0x54] sm:$0xf]
  %v8170 = vld [vmem:[%s2278 + $0x58] sm:$0xf]
  %v8171 = vld [vmem:[%s2278 + $0x5c] sm:$0xf]
  %v8172 = vld [vmem:[%s2278 + $0x60] sm:$0xf]
  %v8173 = vld [vmem:[%s2278 + $0x64] sm:$0xf]
  %v8174 = vld [vmem:[%s2278 + $0x68] sm:$0xf]
  %v8175 = vld [vmem:[%s2278 + $0x6c] sm:$0xf]
  %v8176 = vld [vmem:[%s2278 + $0x70] sm:$0xf]
  %v8177 = vld [vmem:[%s2278 + $0x74] sm:$0xf]
  %v8178 = vld [vmem:[%s2278 + $0x78] sm:$0xf]
  %v8179 = vld [vmem:[%s2278 + $0x7c] sm:$0xf]
  %v8180 = vld [vmem:[%s2278 + $0x80] sm:$0xf]
  %v8181 = vld [vmem:[%s2278 + $0x84] sm:$0xf]
  %v8182 = vld [vmem:[%s2278 + $0x88] sm:$0xf]
  %v8183 = vld [vmem:[%s2278 + $0x8c] sm:$0xf]
  %v8184 = vld [vmem:[%s2278 + $0x90] sm:$0xf]
  %v8185 = vld [vmem:[%s2278 + $0x94] sm:$0xf]
  %v8186 = vld [vmem:[%s2278 + $0x98] sm:$0xf]
  %v8187 = vld [vmem:[%s2278 + $0x9c] sm:$0xf]
  %v8188 = vld [vmem:[%s2278 + $0xa0] sm:$0xf]
  %v8189 = vld [vmem:[%s2278 + $0xa4] sm:$0xf]
  %v8190 = vld [vmem:[%s2278 + $0xa8] sm:$0xf]
  %v8191 = vld [vmem:[%s2278 + $0xac] sm:$0xf]
  %v8192 = vld [vmem:[%s2278 + $0xb0] sm:$0xf]
  %v8193 = vld [vmem:[%s2278 + $0xb4] sm:$0xf]
  %v8194 = vld [vmem:[%s2278 + $0xb8] sm:$0xf]
  %v8195 = vld [vmem:[%s2278 + $0xbc] sm:$0xf]
  %v8196 = vld [vmem:[%s2278 + $0xc0] sm:$0xf]
  %v8197 = vld [vmem:[%s2278 + $0xc4] sm:$0xf]
  %v8198 = vld [vmem:[%s2278 + $0xc8] sm:$0xf]
  %v8199 = vld [vmem:[%s2278 + $0xcc] sm:$0xf]
  %v8200 = vld [vmem:[%s2278 + $0xd0] sm:$0xf]
  %v8201 = vld [vmem:[%s2278 + $0xd4] sm:$0xf]
  %v8202 = vld [vmem:[%s2278 + $0xd8] sm:$0xf]
  %v8203 = vld [vmem:[%s2278 + $0xdc] sm:$0xf]
  %v8204 = vld [vmem:[%s2278 + $0xe0] sm:$0xf]
  %v8205 = vld [vmem:[%s2278 + $0xe4] sm:$0xf]
  %v8206 = vld [vmem:[%s2278 + $0xe8] sm:$0xf]
  %v8207 = vld [vmem:[%s2278 + $0xec] sm:$0xf]
  %v8268 = vunpack.c.l.b16 %v8148
  %v8269 = vunpack.c.l.b16 %v8149
  %v8270 = vunpack.c.l.b16 %v8150
  %v8271 = vunpack.c.l.b16 %v8151
  %v8272 = vunpack.c.l.b16 %v8152
  %v8273 = vunpack.c.l.b16 %v8153
  %v8274 = vunpack.c.l.b16 %v8154
  %v8275 = vunpack.c.l.b16 %v8155
  %v8276 = vunpack.c.l.b16 %v8156
  %v8277 = vunpack.c.l.b16 %v8157
  %v8278 = vunpack.c.l.b16 %v8158
  %v8279 = vunpack.c.l.b16 %v8159
  %v8280 = vunpack.c.l.b16 %v8160
  %v8281 = vunpack.c.l.b16 %v8161
  %v8282 = vunpack.c.l.b16 %v8162
  %v8283 = vunpack.c.l.b16 %v8163
  %v8284 = vunpack.c.l.b16 %v8164
  %v8285 = vunpack.c.l.b16 %v8165
  %v8286 = vunpack.c.l.b16 %v8166
  %v8287 = vunpack.c.l.b16 %v8167
  %v8288 = vunpack.c.l.b16 %v8168
  %v8289 = vunpack.c.l.b16 %v8169
  %v8290 = vunpack.c.l.b16 %v8170
  %v8291 = vunpack.c.l.b16 %v8171
  %v8292 = vunpack.c.l.b16 %v8172
  %v8293 = vunpack.c.l.b16 %v8173
  %v8294 = vunpack.c.l.b16 %v8174
  %v8295 = vunpack.c.l.b16 %v8175
  %v8296 = vunpack.c.l.b16 %v8176
  %v8297 = vunpack.c.l.b16 %v8177
  %v8298 = vunpack.c.l.b16 %v8178
  %v8299 = vunpack.c.l.b16 %v8179
  %v8300 = vunpack.c.l.b16 %v8180
  %v8301 = vunpack.c.l.b16 %v8181
  %v8302 = vunpack.c.l.b16 %v8182
  %v8303 = vunpack.c.l.b16 %v8183
  %v8304 = vunpack.c.l.b16 %v8184
  %v8305 = vunpack.c.l.b16 %v8185
  %v8306 = vunpack.c.l.b16 %v8186
  %v8307 = vunpack.c.l.b16 %v8187
  %v8308 = vunpack.c.l.b16 %v8188
  %v8309 = vunpack.c.l.b16 %v8189
  %v8310 = vunpack.c.l.b16 %v8190
  %v8311 = vunpack.c.l.b16 %v8191
  %v8312 = vunpack.c.l.b16 %v8192
  %v8313 = vunpack.c.l.b16 %v8193
  %v8314 = vunpack.c.l.b16 %v8194
  %v8315 = vunpack.c.l.b16 %v8195
  %v8316 = vunpack.c.l.b16 %v8196
  %v8317 = vunpack.c.l.b16 %v8197
  %v8318 = vunpack.c.l.b16 %v8198
  %v8319 = vunpack.c.l.b16 %v8199
  %v8320 = vunpack.c.l.b16 %v8200
  %v8321 = vunpack.c.l.b16 %v8201
  %v8322 = vunpack.c.l.b16 %v8202
  %v8323 = vunpack.c.l.b16 %v8203
  %v8324 = vunpack.c.l.b16 %v8204
  %v8325 = vunpack.c.l.b16 %v8205
  %v8326 = vunpack.c.l.b16 %v8206
  %v8327 = vunpack.c.l.b16 %v8207
  %v8328 = vpack.c.b16 %v8269, %v8268
  %v8329 = vpack.c.b16 %v8271, %v8270
  %v8330 = vpack.c.b16 %v8273, %v8272
  %v8331 = vpack.c.b16 %v8275, %v8274
  %v8332 = vpack.c.b16 %v8277, %v8276
  %v8333 = vpack.c.b16 %v8279, %v8278
  %v8334 = vpack.c.b16 %v8281, %v8280
  %v8335 = vpack.c.b16 %v8283, %v8282
  %v8336 = vpack.c.b16 %v8285, %v8284
  %v8337 = vpack.c.b16 %v8287, %v8286
  %v8338 = vpack.c.b16 %v8289, %v8288
  %v8339 = vpack.c.b16 %v8291, %v8290
  %v8340 = vpack.c.b16 %v8293, %v8292
  %v8341 = vpack.c.b16 %v8295, %v8294
  %v8342 = vpack.c.b16 %v8297, %v8296
  %v8343 = vpack.c.b16 %v8299, %v8298
  %v8344 = vpack.c.b16 %v8301, %v8300
  %v8345 = vpack.c.b16 %v8303, %v8302
  %v8346 = vpack.c.b16 %v8305, %v8304
  %v8347 = vpack.c.b16 %v8307, %v8306
  %v8348 = vpack.c.b16 %v8309, %v8308
  %v8349 = vpack.c.b16 %v8311, %v8310
  %v8350 = vpack.c.b16 %v8313, %v8312
  %v8351 = vpack.c.b16 %v8315, %v8314
  %v8352 = vpack.c.b16 %v8317, %v8316
  %v8353 = vpack.c.b16 %v8319, %v8318
  %v8354 = vpack.c.b16 %v8321, %v8320
  %v8355 = vpack.c.b16 %v8323, %v8322
  %v8356 = vpack.c.b16 %v8325, %v8324
  %v8357 = vpack.c.b16 %v8327, %v8326
  %8388 = vmatprep.subr.bf16.mxu0 0
  %8389 = vmatpush1.bf16.msra.mxu0 %v8335
  %8390 = vmatprep.subr.bf16.mxu0 0
  %8391 = vmatpush1.bf16.msra.mxu0 %v8334
  %8392 = vmatprep.subr.bf16.mxu0 0
  %8393 = vmatpush1.bf16.msra.mxu0 %v8333
  %8394 = vmatprep.subr.bf16.mxu0 0
  %8395 = vmatpush1.bf16.msra.mxu0 %v8332
  %8396 = vmatprep.subr.bf16.mxu0 0
  %8397 = vmatpush1.bf16.msra.mxu0 %v8331
  %8398 = vmatprep.subr.bf16.mxu0 0
  %8399 = vmatpush1.bf16.msra.mxu0 %v8330
  %8400 = vmatprep.subr.bf16.mxu0 0
  %8401 = vmatpush1.bf16.msra.mxu0 %v8329
  %8402 = vmatprep.subr.bf16.mxu0 0
  %8403 = vmatpush1.bf16.msra.mxu0 %v8328
  %8404 = vmatprep.subr.bf16.mxu0 0
  %8405 = vmatpush2.bf16.msra.mxu0 %v8343
  %8406 = vmatprep.subr.bf16.mxu0 0
  %8407 = vmatpush2.bf16.msra.mxu0 %v8342
  %8408 = vmatprep.subr.bf16.mxu0 0
  %8409 = vmatpush2.bf16.msra.mxu0 %v8341
  %8410 = vmatprep.subr.bf16.mxu0 0
  %8411 = vmatpush2.bf16.msra.mxu0 %v8340
  %8412 = vmatprep.subr.bf16.mxu0 0
  %8413 = vmatpush2.bf16.msra.mxu0 %v8339
  %8414 = vmatprep.subr.bf16.mxu0 0
  %8415 = vmatpush2.bf16.msra.mxu0 %v8338
  %8416 = vmatprep.subr.bf16.mxu0 0
  %8417 = vmatpush2.bf16.msra.mxu0 %v8337
  %8418 = vmatprep.subr.bf16.mxu0 0
  %8419 = vmatpush2.bf16.msra.mxu0 %v8336
  %8420 = vmatprep.mubr.bf16.mxu0 %v6746
  %8421 = vmatmul.mubr.bf16.gmra.mxu0 %v6745
  %v8422 = vpop.f32.mrf.mxu0
  %v8423 = vadd.f32 0.0, %v8422
  %v8424 = vpop.f32.mrf.mxu0
  %v8425 = vpop.f32.mrf.mxu0
  %v8426 = vadd.f32 0.0, %v8425
  %v8427 = vpop.f32.mrf.mxu0
  %8428 = vmatprep.mubr.bf16.mxu0 %v6750
  %8429 = vmatmul.mubr.bf16.gmra.mxu0 %v6749
  %v8430 = vpop.f32.mrf.mxu0
  %v8431 = vadd.f32 0.0, %v8430
  %v8432 = vpop.f32.mrf.mxu0
  %v8433 = vpop.f32.mrf.mxu0
  %v8434 = vadd.f32 0.0, %v8433
  %v8435 = vpop.f32.mrf.mxu0
  %8436 = vmatprep.mubr.bf16.mxu0 %v6754
  %8437 = vmatmul.mubr.bf16.gmra.mxu0 %v6753
  %v8438 = vpop.f32.mrf.mxu0
  %v8439 = vadd.f32 0.0, %v8438
  %v8440 = vpop.f32.mrf.mxu0
  %v8441 = vpop.f32.mrf.mxu0
  %v8442 = vadd.f32 0.0, %v8441
  %v8443 = vpop.f32.mrf.mxu0
  %8444 = vmatprep.mubr.bf16.mxu0 %v6758
  %8445 = vmatmul.mubr.bf16.gmra.mxu0 %v6757
  %v8446 = vpop.f32.mrf.mxu0
  %v8447 = vadd.f32 0.0, %v8446
  %v8448 = vpop.f32.mrf.mxu0
  %v8449 = vpop.f32.mrf.mxu0
  %v8450 = vadd.f32 0.0, %v8449
  %v8451 = vpop.f32.mrf.mxu0
  %8452 = vmatprep.mubr.bf16.mxu0 %v6762
  %8453 = vmatmul.mubr.bf16.gmra.mxu0 %v6761
  %v8454 = vpop.f32.mrf.mxu0
  %v8455 = vadd.f32 0.0, %v8454
  %v8456 = vpop.f32.mrf.mxu0
  %v8457 = vpop.f32.mrf.mxu0
  %v8458 = vadd.f32 0.0, %v8457
  %v8459 = vpop.f32.mrf.mxu0
  %8460 = vmatprep.mubr.bf16.mxu0 %v6766
  %8461 = vmatmul.mubr.bf16.gmra.mxu0 %v6765
  %v8462 = vpop.f32.mrf.mxu0
  %v8463 = vadd.f32 0.0, %v8462
  %v8464 = vpop.f32.mrf.mxu0
  %v8465 = vpop.f32.mrf.mxu0
  %v8466 = vadd.f32 0.0, %v8465
  %v8467 = vpop.f32.mrf.mxu0
  %8468 = vmatprep.mubr.bf16.mxu0 %v6770
  %8469 = vmatmul.mubr.bf16.gmra.mxu0 %v6769
  %v8470 = vpop.f32.mrf.mxu0
  %v8471 = vadd.f32 0.0, %v8470
  %v8472 = vpop.f32.mrf.mxu0
  %v8473 = vpop.f32.mrf.mxu0
  %v8474 = vadd.f32 0.0, %v8473
  %v8475 = vpop.f32.mrf.mxu0
  %8476 = vmatprep.mubr.bf16.mxu0 %v6774
  %8477 = vmatmul.mubr.bf16.gmra.mxu0 %v6773
  %v8478 = vpop.f32.mrf.mxu0
  %v8479 = vadd.f32 0.0, %v8478
  %v8480 = vpop.f32.mrf.mxu0
  %v8481 = vpop.f32.mrf.mxu0
  %v8482 = vadd.f32 0.0, %v8481
  %v8483 = vpop.f32.mrf.mxu0
  %8484 = vdwg.mxu0
  %8485 = vmatprep.subr.bf16.mxu0 0
  %8486 = vmatpush1.bf16.msra.mxu0 %v8351
  %8487 = vmatprep.subr.bf16.mxu0 0
  %8488 = vmatpush1.bf16.msra.mxu0 %v8350
  %8489 = vmatprep.subr.bf16.mxu0 0
  %8490 = vmatpush1.bf16.msra.mxu0 %v8349
  %8491 = vmatprep.subr.bf16.mxu0 0
  %8492 = vmatpush1.bf16.msra.mxu0 %v8348
  %8493 = vmatprep.subr.bf16.mxu0 0
  %8494 = vmatpush1.bf16.msra.mxu0 %v8347
  %8495 = vmatprep.subr.bf16.mxu0 0
  %8496 = vmatpush1.bf16.msra.mxu0 %v8346
  %8497 = vmatprep.subr.bf16.mxu0 0
  %8498 = vmatpush1.bf16.msra.mxu0 %v8345
  %8499 = vmatprep.subr.bf16.mxu0 0
  %8500 = vmatpush1.bf16.msra.mxu0 %v8344
  %8501 = vmatprep.subr.bf16.mxu0 0
  %8502 = vmatpush2.bf16.msra.mxu0 0
  %8503 = vmatprep.subr.bf16.mxu0 0
  %8504 = vmatpush2.bf16.msra.mxu0 0
  %8505 = vmatprep.subr.bf16.mxu0 0
  %8506 = vmatpush2.bf16.msra.mxu0 %v8357
  %8507 = vmatprep.subr.bf16.mxu0 0
  %8508 = vmatpush2.bf16.msra.mxu0 %v8356
  %8509 = vmatprep.subr.bf16.mxu0 0
  %8510 = vmatpush2.bf16.msra.mxu0 %v8355
  %8511 = vmatprep.subr.bf16.mxu0 0
  %8512 = vmatpush2.bf16.msra.mxu0 %v8354
  %8513 = vmatprep.subr.bf16.mxu0 0
  %8514 = vmatpush2.bf16.msra.mxu0 %v8353
  %8515 = vmatprep.subr.bf16.mxu0 0
  %8516 = vmatpush2.bf16.msra.mxu0 %v8352
  %8517 = vmatprep.mubr.bf16.mxu0 %v6983
  %8518 = vmatmul.mubr.bf16.gmra.mxu0 %v6747
  %v8519 = vpop.f32.mrf.mxu0
  %v8520 = vadd.f32 %v8423, %v8519
  %v8521 = vpop.f32.mrf.mxu0
  %v8522 = vpop.f32.mrf.mxu0
  %v8523 = vadd.f32 %v8426, %v8522
  %v8524 = vpop.f32.mrf.mxu0
  %8525 = vmatprep.mubr.bf16.mxu0 %v6986
  %8526 = vmatmul.mubr.bf16.gmra.mxu0 %v6751
  %v8527 = vpop.f32.mrf.mxu0
  %v8528 = vadd.f32 %v8431, %v8527
  %v8529 = vpop.f32.mrf.mxu0
  %v8530 = vpop.f32.mrf.mxu0
  %v8531 = vadd.f32 %v8434, %v8530
  %v8532 = vpop.f32.mrf.mxu0
  %8533 = vmatprep.mubr.bf16.mxu0 %v6989
  %8534 = vmatmul.mubr.bf16.gmra.mxu0 %v6755
  %v8535 = vpop.f32.mrf.mxu0
  %v8536 = vadd.f32 %v8439, %v8535
  %v8537 = vpop.f32.mrf.mxu0
  %v8538 = vpop.f32.mrf.mxu0
  %v8539 = vadd.f32 %v8442, %v8538
  %v8540 = vpop.f32.mrf.mxu0
  %8541 = vmatprep.mubr.bf16.mxu0 %v6992
  %8542 = vmatmul.mubr.bf16.gmra.mxu0 %v6759
  %v8543 = vpop.f32.mrf.mxu0
  %v8544 = vadd.f32 %v8447, %v8543
  %v8545 = vpop.f32.mrf.mxu0
  %v8546 = vpop.f32.mrf.mxu0
  %v8547 = vadd.f32 %v8450, %v8546
  %v8548 = vpop.f32.mrf.mxu0
  %8549 = vmatprep.mubr.bf16.mxu0 %v6995
  %8550 = vmatmul.mubr.bf16.gmra.mxu0 %v6763
  %v8551 = vpop.f32.mrf.mxu0
  %v8552 = vadd.f32 %v8455, %v8551
  %v8553 = vpop.f32.mrf.mxu0
  %v8554 = vpop.f32.mrf.mxu0
  %v8555 = vadd.f32 %v8458, %v8554
  %v8556 = vpop.f32.mrf.mxu0
  %8557 = vmatprep.mubr.bf16.mxu0 %v6998
  %8558 = vmatmul.mubr.bf16.gmra.mxu0 %v6767
  %v8559 = vpop.f32.mrf.mxu0
  %v8560 = vadd.f32 %v8463, %v8559
  %v8561 = vpop.f32.mrf.mxu0
  %v8562 = vpop.f32.mrf.mxu0
  %v8563 = vadd.f32 %v8466, %v8562
  %v8564 = vpop.f32.mrf.mxu0
  %8565 = vmatprep.mubr.bf16.mxu0 %v7001
  %8566 = vmatmul.mubr.bf16.gmra.mxu0 %v6771
  %v8567 = vpop.f32.mrf.mxu0
  %v8568 = vadd.f32 %v8471, %v8567
  %v8569 = vpop.f32.mrf.mxu0
  %v8570 = vpop.f32.mrf.mxu0
  %v8571 = vadd.f32 %v8474, %v8570
  %v8572 = vpop.f32.mrf.mxu0
  %8573 = vmatprep.mubr.bf16.mxu0 %v7004
  %8574 = vmatmul.mubr.bf16.gmra.mxu0 %v6775
  %v8575 = vpop.f32.mrf.mxu0
  %v8576 = vadd.f32 %v8479, %v8575
  %v8577 = vpop.f32.mrf.mxu0
  %v8578 = vpop.f32.mrf.mxu0
  %v8579 = vadd.f32 %v8482, %v8578
  %v8580 = vpop.f32.mrf.mxu0
  %8581 = vdwg.mxu0
  %v8582 = vmax.f32 %v8086, %v8520
  %v8583 = vmax.f32 %v8089, %v8523
  %v8584 = vmax.f32 %v8094, %v8528
  %v8585 = vmax.f32 %v8097, %v8531
  %v8586 = vmax.f32 %v8102, %v8536
  %v8587 = vmax.f32 %v8105, %v8539
  %v8588 = vmax.f32 %v8110, %v8544
  %v8589 = vmax.f32 %v8113, %v8547
  %v8590 = vmax.f32 %v8118, %v8552
  %v8591 = vmax.f32 %v8121, %v8555
  %v8592 = vmax.f32 %v8126, %v8560
  %v8593 = vmax.f32 %v8129, %v8563
  %v8594 = vmax.f32 %v8134, %v8568
  %v8595 = vmax.f32 %v8137, %v8571
  %v8596 = vmax.f32 %v8142, %v8576
  %v8597 = vmax.f32 %v8145, %v8579
  %v8598 = vmax.f32 %v8582, %v8584
  %v8599 = vmax.f32 %v8583, %v8585
  %v8600 = vmax.f32 %v8586, %v8588
  %v8601 = vmax.f32 %v8587, %v8589
  %v8602 = vmax.f32 %v8590, %v8592
  %v8603 = vmax.f32 %v8591, %v8593
  %v8604 = vmax.f32 %v8594, %v8596
  %v8605 = vmax.f32 %v8595, %v8597
  %v8606 = vadd.f32 %v8598, %v6587
  %v8607 = vadd.f32 %v8599, %v6588
  %v8608 = vadd.f32 %v8600, %v6587
  %v8609 = vadd.f32 %v8601, %v6588
  %v8610 = vadd.f32 %v8602, %v6587
  %v8611 = vadd.f32 %v8603, %v6588
  %v8612 = vadd.f32 %v8604, %v6587
  %v8613 = vadd.f32 %v8605, %v6588
  %v8614 = vmax.f32 %v8606, 0.0
  %v8615 = vmax.f32 %v8607, 0.0
  %v8616 = vmax.f32 %v8608, 0.0
  %v8617 = vmax.f32 %v8609, 0.0
  %v8618 = vmax.f32 %v8610, 0.0
  %v8619 = vmax.f32 %v8611, 0.0
  %v8620 = vmax.f32 %v8612, 0.0
  %v8621 = vmax.f32 %v8613, 0.0
  %v8622 = vpack.c.bf16 %v8615, %v8614
  %v8623 = vpack.c.bf16 %v8617, %v8616
  %v8624 = vpack.c.bf16 %v8619, %v8618
  %v8625 = vpack.c.bf16 %v8621, %v8620
  %v8630 = vunpack.c.l.b16 %v8622
  %v8631 = vunpack.c.h.b16 %v8622
  %v8632 = vunpack.c.l.b16 %v8623
  %v8633 = vunpack.c.h.b16 %v8623
  %v8634 = vunpack.c.l.b16 %v8624
  %v8635 = vunpack.c.h.b16 %v8624
  %v8636 = vunpack.c.l.b16 %v8625
  %v8637 = vunpack.c.h.b16 %v8625
  %v8638 = vpack.c.b16 %v8630, %v8630
  %v8639 = vpack.c.b16 %v8631, %v8631
  %v8640 = vpack.c.b16 %v8632, %v8632
  %v8641 = vpack.c.b16 %v8633, %v8633
  %v8642 = vpack.c.b16 %v8634, %v8634
  %v8643 = vpack.c.b16 %v8635, %v8635
  %v8644 = vpack.c.b16 %v8636, %v8636
  %v8645 = vpack.c.b16 %v8637, %v8637
  %s8654 = scalar_lea.vmem [#allocation3], 32
  %8655 = vst [vmem:[%s8654] sm:$0xf] %v8638
  %8656 = vst [vmem:[%s8654 + $0x4] sm:$0xf] %v8639
  %8657 = vst [vmem:[%s8654 + $0x8] sm:$0xf] %v8640
  %8658 = vst [vmem:[%s8654 + $0xc] sm:$0xf] %v8641
  %8659 = vst [vmem:[%s8654 + $0x10] sm:$0xf] %v8642
  %8660 = vst [vmem:[%s8654 + $0x14] sm:$0xf] %v8643
  %8661 = vst [vmem:[%s8654 + $0x18] sm:$0xf] %v8644
  %8662 = vst [vmem:[%s8654 + $0x1c] sm:$0xf] %v8645
  %v8663 = vld [vmem:[%s2811] sm:$0xf]
  %v8664 = vld [vmem:[%s2811 + $0x4] sm:$0xf]
  %v8665 = vld [vmem:[%s2811 + $0x8] sm:$0xf]
  %v8666 = vld [vmem:[%s2811 + $0xc] sm:$0xf]
  %v8667 = vld [vmem:[%s2811 + $0x10] sm:$0xf]
  %v8668 = vld [vmem:[%s2811 + $0x14] sm:$0xf]
  %v8669 = vld [vmem:[%s2811 + $0x18] sm:$0xf]
  %v8670 = vld [vmem:[%s2811 + $0x1c] sm:$0xf]
  %v8671 = vld [vmem:[%s2811 + $0x20] sm:$0xf]
  %v8672 = vld [vmem:[%s2811 + $0x24] sm:$0xf]
  %v8673 = vld [vmem:[%s2811 + $0x28] sm:$0xf]
  %v8674 = vld [vmem:[%s2811 + $0x2c] sm:$0xf]
  %v8675 = vld [vmem:[%s2811 + $0x30] sm:$0xf]
  %v8676 = vld [vmem:[%s2811 + $0x34] sm:$0xf]
  %v8677 = vld [vmem:[%s2811 + $0x38] sm:$0xf]
  %v8678 = vld [vmem:[%s2811 + $0x3c] sm:$0xf]
  %v8679 = vld [vmem:[%s2811 + $0x40] sm:$0xf]
  %v8680 = vld [vmem:[%s2811 + $0x44] sm:$0xf]
  %v8681 = vld [vmem:[%s2811 + $0x48] sm:$0xf]
  %v8682 = vld [vmem:[%s2811 + $0x4c] sm:$0xf]
  %v8683 = vld [vmem:[%s2811 + $0x50] sm:$0xf]
  %v8684 = vld [vmem:[%s2811 + $0x54] sm:$0xf]
  %v8685 = vld [vmem:[%s2811 + $0x58] sm:$0xf]
  %v8686 = vld [vmem:[%s2811 + $0x5c] sm:$0xf]
  %v8687 = vld [vmem:[%s2811 + $0x60] sm:$0xf]
  %v8688 = vld [vmem:[%s2811 + $0x64] sm:$0xf]
  %v8689 = vld [vmem:[%s2811 + $0x68] sm:$0xf]
  %v8690 = vld [vmem:[%s2811 + $0x6c] sm:$0xf]
  %v8691 = vld [vmem:[%s2811 + $0x70] sm:$0xf]
  %v8692 = vld [vmem:[%s2811 + $0x74] sm:$0xf]
  %v8693 = vld [vmem:[%s2811 + $0x78] sm:$0xf]
  %v8694 = vld [vmem:[%s2811 + $0x7c] sm:$0xf]
  %v8695 = vld [vmem:[%s2811 + $0x80] sm:$0xf]
  %v8696 = vld [vmem:[%s2811 + $0x84] sm:$0xf]
  %v8697 = vld [vmem:[%s2811 + $0x88] sm:$0xf]
  %v8698 = vld [vmem:[%s2811 + $0x8c] sm:$0xf]
  %v8699 = vld [vmem:[%s2811 + $0x90] sm:$0xf]
  %v8700 = vld [vmem:[%s2811 + $0x94] sm:$0xf]
  %v8701 = vld [vmem:[%s2811 + $0x98] sm:$0xf]
  %v8702 = vld [vmem:[%s2811 + $0x9c] sm:$0xf]
  %v8703 = vld [vmem:[%s2811 + $0xa0] sm:$0xf]
  %v8704 = vld [vmem:[%s2811 + $0xa4] sm:$0xf]
  %v8705 = vld [vmem:[%s2811 + $0xa8] sm:$0xf]
  %v8706 = vld [vmem:[%s2811 + $0xac] sm:$0xf]
  %v8707 = vld [vmem:[%s2811 + $0xb0] sm:$0xf]
  %v8708 = vld [vmem:[%s2811 + $0xb4] sm:$0xf]
  %v8709 = vld [vmem:[%s2811 + $0xb8] sm:$0xf]
  %v8710 = vld [vmem:[%s2811 + $0xbc] sm:$0xf]
  %v8711 = vld [vmem:[%s2811 + $0xc0] sm:$0xf]
  %v8712 = vld [vmem:[%s2811 + $0xc4] sm:$0xf]
  %v8713 = vld [vmem:[%s2811 + $0xc8] sm:$0xf]
  %v8714 = vld [vmem:[%s2811 + $0xcc] sm:$0xf]
  %v8715 = vld [vmem:[%s2811 + $0xd0] sm:$0xf]
  %v8716 = vld [vmem:[%s2811 + $0xd4] sm:$0xf]
  %v8717 = vld [vmem:[%s2811 + $0xd8] sm:$0xf]
  %v8718 = vld [vmem:[%s2811 + $0xdc] sm:$0xf]
  %v8719 = vld [vmem:[%s2811 + $0xe0] sm:$0xf]
  %v8720 = vld [vmem:[%s2811 + $0xe4] sm:$0xf]
  %v8721 = vld [vmem:[%s2811 + $0xe8] sm:$0xf]
  %v8722 = vld [vmem:[%s2811 + $0xec] sm:$0xf]
  %v8783 = vunpack.c.l.b16 %v8663
  %v8784 = vunpack.c.l.b16 %v8664
  %v8785 = vunpack.c.l.b16 %v8665
  %v8786 = vunpack.c.l.b16 %v8666
  %v8787 = vunpack.c.l.b16 %v8667
  %v8788 = vunpack.c.l.b16 %v8668
  %v8789 = vunpack.c.l.b16 %v8669
  %v8790 = vunpack.c.l.b16 %v8670
  %v8791 = vunpack.c.l.b16 %v8671
  %v8792 = vunpack.c.l.b16 %v8672
  %v8793 = vunpack.c.l.b16 %v8673
  %v8794 = vunpack.c.l.b16 %v8674
  %v8795 = vunpack.c.l.b16 %v8675
  %v8796 = vunpack.c.l.b16 %v8676
  %v8797 = vunpack.c.l.b16 %v8677
  %v8798 = vunpack.c.l.b16 %v8678
  %v8799 = vunpack.c.l.b16 %v8679
  %v8800 = vunpack.c.l.b16 %v8680
  %v8801 = vunpack.c.l.b16 %v8681
  %v8802 = vunpack.c.l.b16 %v8682
  %v8803 = vunpack.c.l.b16 %v8683
  %v8804 = vunpack.c.l.b16 %v8684
  %v8805 = vunpack.c.l.b16 %v8685
  %v8806 = vunpack.c.l.b16 %v8686
  %v8807 = vunpack.c.l.b16 %v8687
  %v8808 = vunpack.c.l.b16 %v8688
  %v8809 = vunpack.c.l.b16 %v8689
  %v8810 = vunpack.c.l.b16 %v8690
  %v8811 = vunpack.c.l.b16 %v8691
  %v8812 = vunpack.c.l.b16 %v8692
  %v8813 = vunpack.c.l.b16 %v8693
  %v8814 = vunpack.c.l.b16 %v8694
  %v8815 = vunpack.c.l.b16 %v8695
  %v8816 = vunpack.c.l.b16 %v8696
  %v8817 = vunpack.c.l.b16 %v8697
  %v8818 = vunpack.c.l.b16 %v8698
  %v8819 = vunpack.c.l.b16 %v8699
  %v8820 = vunpack.c.l.b16 %v8700
  %v8821 = vunpack.c.l.b16 %v8701
  %v8822 = vunpack.c.l.b16 %v8702
  %v8823 = vunpack.c.l.b16 %v8703
  %v8824 = vunpack.c.l.b16 %v8704
  %v8825 = vunpack.c.l.b16 %v8705
  %v8826 = vunpack.c.l.b16 %v8706
  %v8827 = vunpack.c.l.b16 %v8707
  %v8828 = vunpack.c.l.b16 %v8708
  %v8829 = vunpack.c.l.b16 %v8709
  %v8830 = vunpack.c.l.b16 %v8710
  %v8831 = vunpack.c.l.b16 %v8711
  %v8832 = vunpack.c.l.b16 %v8712
  %v8833 = vunpack.c.l.b16 %v8713
  %v8834 = vunpack.c.l.b16 %v8714
  %v8835 = vunpack.c.l.b16 %v8715
  %v8836 = vunpack.c.l.b16 %v8716
  %v8837 = vunpack.c.l.b16 %v8717
  %v8838 = vunpack.c.l.b16 %v8718
  %v8839 = vunpack.c.l.b16 %v8719
  %v8840 = vunpack.c.l.b16 %v8720
  %v8841 = vunpack.c.l.b16 %v8721
  %v8842 = vunpack.c.l.b16 %v8722
  %v8843 = vpack.c.b16 %v8784, %v8783
  %v8844 = vpack.c.b16 %v8786, %v8785
  %v8845 = vpack.c.b16 %v8788, %v8787
  %v8846 = vpack.c.b16 %v8790, %v8789
  %v8847 = vpack.c.b16 %v8792, %v8791
  %v8848 = vpack.c.b16 %v8794, %v8793
  %v8849 = vpack.c.b16 %v8796, %v8795
  %v8850 = vpack.c.b16 %v8798, %v8797
  %v8851 = vpack.c.b16 %v8800, %v8799
  %v8852 = vpack.c.b16 %v8802, %v8801
  %v8853 = vpack.c.b16 %v8804, %v8803
  %v8854 = vpack.c.b16 %v8806, %v8805
  %v8855 = vpack.c.b16 %v8808, %v8807
  %v8856 = vpack.c.b16 %v8810, %v8809
  %v8857 = vpack.c.b16 %v8812, %v8811
  %v8858 = vpack.c.b16 %v8814, %v8813
  %v8859 = vpack.c.b16 %v8816, %v8815
  %v8860 = vpack.c.b16 %v8818, %v8817
  %v8861 = vpack.c.b16 %v8820, %v8819
  %v8862 = vpack.c.b16 %v8822, %v8821
  %v8863 = vpack.c.b16 %v8824, %v8823
  %v8864 = vpack.c.b16 %v8826, %v8825
  %v8865 = vpack.c.b16 %v8828, %v8827
  %v8866 = vpack.c.b16 %v8830, %v8829
  %v8867 = vpack.c.b16 %v8832, %v8831
  %v8868 = vpack.c.b16 %v8834, %v8833
  %v8869 = vpack.c.b16 %v8836, %v8835
  %v8870 = vpack.c.b16 %v8838, %v8837
  %v8871 = vpack.c.b16 %v8840, %v8839
  %v8872 = vpack.c.b16 %v8842, %v8841
  %8903 = vmatprep.subr.bf16.mxu0 0
  %8904 = vmatpush1.bf16.msra.mxu0 %v8850
  %8905 = vmatprep.subr.bf16.mxu0 0
  %8906 = vmatpush1.bf16.msra.mxu0 %v8849
  %8907 = vmatprep.subr.bf16.mxu0 0
  %8908 = vmatpush1.bf16.msra.mxu0 %v8848
  %8909 = vmatprep.subr.bf16.mxu0 0
  %8910 = vmatpush1.bf16.msra.mxu0 %v8847
  %8911 = vmatprep.subr.bf16.mxu0 0
  %8912 = vmatpush1.bf16.msra.mxu0 %v8846
  %8913 = vmatprep.subr.bf16.mxu0 0
  %8914 = vmatpush1.bf16.msra.mxu0 %v8845
  %8915 = vmatprep.subr.bf16.mxu0 0
  %8916 = vmatpush1.bf16.msra.mxu0 %v8844
  %8917 = vmatprep.subr.bf16.mxu0 0
  %8918 = vmatpush1.bf16.msra.mxu0 %v8843
  %8919 = vmatprep.subr.bf16.mxu0 0
  %8920 = vmatpush2.bf16.msra.mxu0 %v8858
  %8921 = vmatprep.subr.bf16.mxu0 0
  %8922 = vmatpush2.bf16.msra.mxu0 %v8857
  %8923 = vmatprep.subr.bf16.mxu0 0
  %8924 = vmatpush2.bf16.msra.mxu0 %v8856
  %8925 = vmatprep.subr.bf16.mxu0 0
  %8926 = vmatpush2.bf16.msra.mxu0 %v8855
  %8927 = vmatprep.subr.bf16.mxu0 0
  %8928 = vmatpush2.bf16.msra.mxu0 %v8854
  %8929 = vmatprep.subr.bf16.mxu0 0
  %8930 = vmatpush2.bf16.msra.mxu0 %v8853
  %8931 = vmatprep.subr.bf16.mxu0 0
  %8932 = vmatpush2.bf16.msra.mxu0 %v8852
  %8933 = vmatprep.subr.bf16.mxu0 0
  %8934 = vmatpush2.bf16.msra.mxu0 %v8851
  %8935 = vmatprep.mubr.bf16.mxu0 %v6746
  %8936 = vmatmul.mubr.bf16.gmra.mxu0 %v6745
  %v8937 = vpop.f32.mrf.mxu0
  %v8938 = vadd.f32 0.0, %v8937
  %v8939 = vpop.f32.mrf.mxu0
  %v8940 = vpop.f32.mrf.mxu0
  %v8941 = vadd.f32 0.0, %v8940
  %v8942 = vpop.f32.mrf.mxu0
  %8943 = vmatprep.mubr.bf16.mxu0 %v6750
  %8944 = vmatmul.mubr.bf16.gmra.mxu0 %v6749
  %v8945 = vpop.f32.mrf.mxu0
  %v8946 = vadd.f32 0.0, %v8945
  %v8947 = vpop.f32.mrf.mxu0
  %v8948 = vpop.f32.mrf.mxu0
  %v8949 = vadd.f32 0.0, %v8948
  %v8950 = vpop.f32.mrf.mxu0
  %8951 = vmatprep.mubr.bf16.mxu0 %v6754
  %8952 = vmatmul.mubr.bf16.gmra.mxu0 %v6753
  %v8953 = vpop.f32.mrf.mxu0
  %v8954 = vadd.f32 0.0, %v8953
  %v8955 = vpop.f32.mrf.mxu0
  %v8956 = vpop.f32.mrf.mxu0
  %v8957 = vadd.f32 0.0, %v8956
  %v8958 = vpop.f32.mrf.mxu0
  %8959 = vmatprep.mubr.bf16.mxu0 %v6758
  %8960 = vmatmul.mubr.bf16.gmra.mxu0 %v6757
  %v8961 = vpop.f32.mrf.mxu0
  %v8962 = vadd.f32 0.0, %v8961
  %v8963 = vpop.f32.mrf.mxu0
  %v8964 = vpop.f32.mrf.mxu0
  %v8965 = vadd.f32 0.0, %v8964
  %v8966 = vpop.f32.mrf.mxu0
  %8967 = vmatprep.mubr.bf16.mxu0 %v6762
  %8968 = vmatmul.mubr.bf16.gmra.mxu0 %v6761
  %v8969 = vpop.f32.mrf.mxu0
  %v8970 = vadd.f32 0.0, %v8969
  %v8971 = vpop.f32.mrf.mxu0
  %v8972 = vpop.f32.mrf.mxu0
  %v8973 = vadd.f32 0.0, %v8972
  %v8974 = vpop.f32.mrf.mxu0
  %8975 = vmatprep.mubr.bf16.mxu0 %v6766
  %8976 = vmatmul.mubr.bf16.gmra.mxu0 %v6765
  %v8977 = vpop.f32.mrf.mxu0
  %v8978 = vadd.f32 0.0, %v8977
  %v8979 = vpop.f32.mrf.mxu0
  %v8980 = vpop.f32.mrf.mxu0
  %v8981 = vadd.f32 0.0, %v8980
  %v8982 = vpop.f32.mrf.mxu0
  %8983 = vmatprep.mubr.bf16.mxu0 %v6770
  %8984 = vmatmul.mubr.bf16.gmra.mxu0 %v6769
  %v8985 = vpop.f32.mrf.mxu0
  %v8986 = vadd.f32 0.0, %v8985
  %v8987 = vpop.f32.mrf.mxu0
  %v8988 = vpop.f32.mrf.mxu0
  %v8989 = vadd.f32 0.0, %v8988
  %v8990 = vpop.f32.mrf.mxu0
  %8991 = vmatprep.mubr.bf16.mxu0 %v6774
  %8992 = vmatmul.mubr.bf16.gmra.mxu0 %v6773
  %v8993 = vpop.f32.mrf.mxu0
  %v8994 = vadd.f32 0.0, %v8993
  %v8995 = vpop.f32.mrf.mxu0
  %v8996 = vpop.f32.mrf.mxu0
  %v8997 = vadd.f32 0.0, %v8996
  %v8998 = vpop.f32.mrf.mxu0
  %8999 = vdwg.mxu0
  %9000 = vmatprep.subr.bf16.mxu0 0
  %9001 = vmatpush1.bf16.msra.mxu0 %v8866
  %9002 = vmatprep.subr.bf16.mxu0 0
  %9003 = vmatpush1.bf16.msra.mxu0 %v8865
  %9004 = vmatprep.subr.bf16.mxu0 0
  %9005 = vmatpush1.bf16.msra.mxu0 %v8864
  %9006 = vmatprep.subr.bf16.mxu0 0
  %9007 = vmatpush1.bf16.msra.mxu0 %v8863
  %9008 = vmatprep.subr.bf16.mxu0 0
  %9009 = vmatpush1.bf16.msra.mxu0 %v8862
  %9010 = vmatprep.subr.bf16.mxu0 0
  %9011 = vmatpush1.bf16.msra.mxu0 %v8861
  %9012 = vmatprep.subr.bf16.mxu0 0
  %9013 = vmatpush1.bf16.msra.mxu0 %v8860
  %9014 = vmatprep.subr.bf16.mxu0 0
  %9015 = vmatpush1.bf16.msra.mxu0 %v8859
  %9016 = vmatprep.subr.bf16.mxu0 0
  %9017 = vmatpush2.bf16.msra.mxu0 0
  %9018 = vmatprep.subr.bf16.mxu0 0
  %9019 = vmatpush2.bf16.msra.mxu0 0
  %9020 = vmatprep.subr.bf16.mxu0 0
  %9021 = vmatpush2.bf16.msra.mxu0 %v8872
  %9022 = vmatprep.subr.bf16.mxu0 0
  %9023 = vmatpush2.bf16.msra.mxu0 %v8871
  %9024 = vmatprep.subr.bf16.mxu0 0
  %9025 = vmatpush2.bf16.msra.mxu0 %v8870
  %9026 = vmatprep.subr.bf16.mxu0 0
  %9027 = vmatpush2.bf16.msra.mxu0 %v8869
  %9028 = vmatprep.subr.bf16.mxu0 0
  %9029 = vmatpush2.bf16.msra.mxu0 %v8868
  %9030 = vmatprep.subr.bf16.mxu0 0
  %9031 = vmatpush2.bf16.msra.mxu0 %v8867
  %9032 = vmatprep.mubr.bf16.mxu0 %v6983
  %9033 = vmatmul.mubr.bf16.gmra.mxu0 %v6747
  %v9034 = vpop.f32.mrf.mxu0
  %v9035 = vadd.f32 %v8938, %v9034
  %v9036 = vpop.f32.mrf.mxu0
  %v9037 = vpop.f32.mrf.mxu0
  %v9038 = vadd.f32 %v8941, %v9037
  %v9039 = vpop.f32.mrf.mxu0
  %9040 = vmatprep.mubr.bf16.mxu0 %v6986
  %9041 = vmatmul.mubr.bf16.gmra.mxu0 %v6751
  %v9042 = vpop.f32.mrf.mxu0
  %v9043 = vadd.f32 %v8946, %v9042
  %v9044 = vpop.f32.mrf.mxu0
  %v9045 = vpop.f32.mrf.mxu0
  %v9046 = vadd.f32 %v8949, %v9045
  %v9047 = vpop.f32.mrf.mxu0
  %9048 = vmatprep.mubr.bf16.mxu0 %v6989
  %9049 = vmatmul.mubr.bf16.gmra.mxu0 %v6755
  %v9050 = vpop.f32.mrf.mxu0
  %v9051 = vadd.f32 %v8954, %v9050
  %v9052 = vpop.f32.mrf.mxu0
  %v9053 = vpop.f32.mrf.mxu0
  %v9054 = vadd.f32 %v8957, %v9053
  %v9055 = vpop.f32.mrf.mxu0
  %9056 = vmatprep.mubr.bf16.mxu0 %v6992
  %9057 = vmatmul.mubr.bf16.gmra.mxu0 %v6759
  %v9058 = vpop.f32.mrf.mxu0
  %v9059 = vadd.f32 %v8962, %v9058
  %v9060 = vpop.f32.mrf.mxu0
  %v9061 = vpop.f32.mrf.mxu0
  %v9062 = vadd.f32 %v8965, %v9061
  %v9063 = vpop.f32.mrf.mxu0
  %9064 = vmatprep.mubr.bf16.mxu0 %v6995
  %9065 = vmatmul.mubr.bf16.gmra.mxu0 %v6763
  %v9066 = vpop.f32.mrf.mxu0
  %v9067 = vadd.f32 %v8970, %v9066
  %v9068 = vpop.f32.mrf.mxu0
  %v9069 = vpop.f32.mrf.mxu0
  %v9070 = vadd.f32 %v8973, %v9069
  %v9071 = vpop.f32.mrf.mxu0
  %9072 = vmatprep.mubr.bf16.mxu0 %v6998
  %9073 = vmatmul.mubr.bf16.gmra.mxu0 %v6767
  %v9074 = vpop.f32.mrf.mxu0
  %v9075 = vadd.f32 %v8978, %v9074
  %v9076 = vpop.f32.mrf.mxu0
  %v9077 = vpop.f32.mrf.mxu0
  %v9078 = vadd.f32 %v8981, %v9077
  %v9079 = vpop.f32.mrf.mxu0
  %9080 = vmatprep.mubr.bf16.mxu0 %v7001
  %9081 = vmatmul.mubr.bf16.gmra.mxu0 %v6771
  %v9082 = vpop.f32.mrf.mxu0
  %v9083 = vadd.f32 %v8986, %v9082
  %v9084 = vpop.f32.mrf.mxu0
  %v9085 = vpop.f32.mrf.mxu0
  %v9086 = vadd.f32 %v8989, %v9085
  %v9087 = vpop.f32.mrf.mxu0
  %9088 = vmatprep.mubr.bf16.mxu0 %v7004
  %9089 = vmatmul.mubr.bf16.gmra.mxu0 %v6775
  %v9090 = vpop.f32.mrf.mxu0
  %v9091 = vadd.f32 %v8994, %v9090
  %v9092 = vpop.f32.mrf.mxu0
  %v9093 = vpop.f32.mrf.mxu0
  %v9094 = vadd.f32 %v8997, %v9093
  %v9095 = vpop.f32.mrf.mxu0
  %9096 = vdwg.mxu0
  %v9097 = vld [vmem:[%s3344] sm:$0xf]
  %v9098 = vld [vmem:[%s3344 + $0x4] sm:$0xf]
  %v9099 = vld [vmem:[%s3344 + $0x8] sm:$0xf]
  %v9100 = vld [vmem:[%s3344 + $0xc] sm:$0xf]
  %v9101 = vld [vmem:[%s3344 + $0x10] sm:$0xf]
  %v9102 = vld [vmem:[%s3344 + $0x14] sm:$0xf]
  %v9103 = vld [vmem:[%s3344 + $0x18] sm:$0xf]
  %v9104 = vld [vmem:[%s3344 + $0x1c] sm:$0xf]
  %v9105 = vld [vmem:[%s3344 + $0x20] sm:$0xf]
  %v9106 = vld [vmem:[%s3344 + $0x24] sm:$0xf]
  %v9107 = vld [vmem:[%s3344 + $0x28] sm:$0xf]
  %v9108 = vld [vmem:[%s3344 + $0x2c] sm:$0xf]
  %v9109 = vld [vmem:[%s3344 + $0x30] sm:$0xf]
  %v9110 = vld [vmem:[%s3344 + $0x34] sm:$0xf]
  %v9111 = vld [vmem:[%s3344 + $0x38] sm:$0xf]
  %v9112 = vld [vmem:[%s3344 + $0x3c] sm:$0xf]
  %v9113 = vld [vmem:[%s3344 + $0x40] sm:$0xf]
  %v9114 = vld [vmem:[%s3344 + $0x44] sm:$0xf]
  %v9115 = vld [vmem:[%s3344 + $0x48] sm:$0xf]
  %v9116 = vld [vmem:[%s3344 + $0x4c] sm:$0xf]
  %v9117 = vld [vmem:[%s3344 + $0x50] sm:$0xf]
  %v9118 = vld [vmem:[%s3344 + $0x54] sm:$0xf]
  %v9119 = vld [vmem:[%s3344 + $0x58] sm:$0xf]
  %v9120 = vld [vmem:[%s3344 + $0x5c] sm:$0xf]
  %v9121 = vld [vmem:[%s3344 + $0x60] sm:$0xf]
  %v9122 = vld [vmem:[%s3344 + $0x64] sm:$0xf]
  %v9123 = vld [vmem:[%s3344 + $0x68] sm:$0xf]
  %v9124 = vld [vmem:[%s3344 + $0x6c] sm:$0xf]
  %v9125 = vld [vmem:[%s3344 + $0x70] sm:$0xf]
  %v9126 = vld [vmem:[%s3344 + $0x74] sm:$0xf]
  %v9127 = vld [vmem:[%s3344 + $0x78] sm:$0xf]
  %v9128 = vld [vmem:[%s3344 + $0x7c] sm:$0xf]
  %v9129 = vld [vmem:[%s3344 + $0x80] sm:$0xf]
  %v9130 = vld [vmem:[%s3344 + $0x84] sm:$0xf]
  %v9131 = vld [vmem:[%s3344 + $0x88] sm:$0xf]
  %v9132 = vld [vmem:[%s3344 + $0x8c] sm:$0xf]
  %v9133 = vld [vmem:[%s3344 + $0x90] sm:$0xf]
  %v9134 = vld [vmem:[%s3344 + $0x94] sm:$0xf]
  %v9135 = vld [vmem:[%s3344 + $0x98] sm:$0xf]
  %v9136 = vld [vmem:[%s3344 + $0x9c] sm:$0xf]
  %v9137 = vld [vmem:[%s3344 + $0xa0] sm:$0xf]
  %v9138 = vld [vmem:[%s3344 + $0xa4] sm:$0xf]
  %v9139 = vld [vmem:[%s3344 + $0xa8] sm:$0xf]
  %v9140 = vld [vmem:[%s3344 + $0xac] sm:$0xf]
  %v9141 = vld [vmem:[%s3344 + $0xb0] sm:$0xf]
  %v9142 = vld [vmem:[%s3344 + $0xb4] sm:$0xf]
  %v9143 = vld [vmem:[%s3344 + $0xb8] sm:$0xf]
  %v9144 = vld [vmem:[%s3344 + $0xbc] sm:$0xf]
  %v9145 = vld [vmem:[%s3344 + $0xc0] sm:$0xf]
  %v9146 = vld [vmem:[%s3344 + $0xc4] sm:$0xf]
  %v9147 = vld [vmem:[%s3344 + $0xc8] sm:$0xf]
  %v9148 = vld [vmem:[%s3344 + $0xcc] sm:$0xf]
  %v9149 = vld [vmem:[%s3344 + $0xd0] sm:$0xf]
  %v9150 = vld [vmem:[%s3344 + $0xd4] sm:$0xf]
  %v9151 = vld [vmem:[%s3344 + $0xd8] sm:$0xf]
  %v9152 = vld [vmem:[%s3344 + $0xdc] sm:$0xf]
  %v9153 = vld [vmem:[%s3344 + $0xe0] sm:$0xf]
  %v9154 = vld [vmem:[%s3344 + $0xe4] sm:$0xf]
  %v9155 = vld [vmem:[%s3344 + $0xe8] sm:$0xf]
  %v9156 = vld [vmem:[%s3344 + $0xec] sm:$0xf]
  %v9217 = vunpack.c.l.b16 %v9097
  %v9218 = vunpack.c.l.b16 %v9098
  %v9219 = vunpack.c.l.b16 %v9099
  %v9220 = vunpack.c.l.b16 %v9100
  %v9221 = vunpack.c.l.b16 %v9101
  %v9222 = vunpack.c.l.b16 %v9102
  %v9223 = vunpack.c.l.b16 %v9103
  %v9224 = vunpack.c.l.b16 %v9104
  %v9225 = vunpack.c.l.b16 %v9105
  %v9226 = vunpack.c.l.b16 %v9106
  %v9227 = vunpack.c.l.b16 %v9107
  %v9228 = vunpack.c.l.b16 %v9108
  %v9229 = vunpack.c.l.b16 %v9109
  %v9230 = vunpack.c.l.b16 %v9110
  %v9231 = vunpack.c.l.b16 %v9111
  %v9232 = vunpack.c.l.b16 %v9112
  %v9233 = vunpack.c.l.b16 %v9113
  %v9234 = vunpack.c.l.b16 %v9114
  %v9235 = vunpack.c.l.b16 %v9115
  %v9236 = vunpack.c.l.b16 %v9116
  %v9237 = vunpack.c.l.b16 %v9117
  %v9238 = vunpack.c.l.b16 %v9118
  %v9239 = vunpack.c.l.b16 %v9119
  %v9240 = vunpack.c.l.b16 %v9120
  %v9241 = vunpack.c.l.b16 %v9121
  %v9242 = vunpack.c.l.b16 %v9122
  %v9243 = vunpack.c.l.b16 %v9123
  %v9244 = vunpack.c.l.b16 %v9124
  %v9245 = vunpack.c.l.b16 %v9125
  %v9246 = vunpack.c.l.b16 %v9126
  %v9247 = vunpack.c.l.b16 %v9127
  %v9248 = vunpack.c.l.b16 %v9128
  %v9249 = vunpack.c.l.b16 %v9129
  %v9250 = vunpack.c.l.b16 %v9130
  %v9251 = vunpack.c.l.b16 %v9131
  %v9252 = vunpack.c.l.b16 %v9132
  %v9253 = vunpack.c.l.b16 %v9133
  %v9254 = vunpack.c.l.b16 %v9134
  %v9255 = vunpack.c.l.b16 %v9135
  %v9256 = vunpack.c.l.b16 %v9136
  %v9257 = vunpack.c.l.b16 %v9137
  %v9258 = vunpack.c.l.b16 %v9138
  %v9259 = vunpack.c.l.b16 %v9139
  %v9260 = vunpack.c.l.b16 %v9140
  %v9261 = vunpack.c.l.b16 %v9141
  %v9262 = vunpack.c.l.b16 %v9142
  %v9263 = vunpack.c.l.b16 %v9143
  %v9264 = vunpack.c.l.b16 %v9144
  %v9265 = vunpack.c.l.b16 %v9145
  %v9266 = vunpack.c.l.b16 %v9146
  %v9267 = vunpack.c.l.b16 %v9147
  %v9268 = vunpack.c.l.b16 %v9148
  %v9269 = vunpack.c.l.b16 %v9149
  %v9270 = vunpack.c.l.b16 %v9150
  %v9271 = vunpack.c.l.b16 %v9151
  %v9272 = vunpack.c.l.b16 %v9152
  %v9273 = vunpack.c.l.b16 %v9153
  %v9274 = vunpack.c.l.b16 %v9154
  %v9275 = vunpack.c.l.b16 %v9155
  %v9276 = vunpack.c.l.b16 %v9156
  %v9277 = vpack.c.b16 %v9218, %v9217
  %v9278 = vpack.c.b16 %v9220, %v9219
  %v9279 = vpack.c.b16 %v9222, %v9221
  %v9280 = vpack.c.b16 %v9224, %v9223
  %v9281 = vpack.c.b16 %v9226, %v9225
  %v9282 = vpack.c.b16 %v9228, %v9227
  %v9283 = vpack.c.b16 %v9230, %v9229
  %v9284 = vpack.c.b16 %v9232, %v9231
  %v9285 = vpack.c.b16 %v9234, %v9233
  %v9286 = vpack.c.b16 %v9236, %v9235
  %v9287 = vpack.c.b16 %v9238, %v9237
  %v9288 = vpack.c.b16 %v9240, %v9239
  %v9289 = vpack.c.b16 %v9242, %v9241
  %v9290 = vpack.c.b16 %v9244, %v9243
  %v9291 = vpack.c.b16 %v9246, %v9245
  %v9292 = vpack.c.b16 %v9248, %v9247
  %v9293 = vpack.c.b16 %v9250, %v9249
  %v9294 = vpack.c.b16 %v9252, %v9251
  %v9295 = vpack.c.b16 %v9254, %v9253
  %v9296 = vpack.c.b16 %v9256, %v9255
  %v9297 = vpack.c.b16 %v9258, %v9257
  %v9298 = vpack.c.b16 %v9260, %v9259
  %v9299 = vpack.c.b16 %v9262, %v9261
  %v9300 = vpack.c.b16 %v9264, %v9263
  %v9301 = vpack.c.b16 %v9266, %v9265
  %v9302 = vpack.c.b16 %v9268, %v9267
  %v9303 = vpack.c.b16 %v9270, %v9269
  %v9304 = vpack.c.b16 %v9272, %v9271
  %v9305 = vpack.c.b16 %v9274, %v9273
  %v9306 = vpack.c.b16 %v9276, %v9275
  %9337 = vmatprep.subr.bf16.mxu0 0
  %9338 = vmatpush1.bf16.msra.mxu0 %v9284
  %9339 = vmatprep.subr.bf16.mxu0 0
  %9340 = vmatpush1.bf16.msra.mxu0 %v9283
  %9341 = vmatprep.subr.bf16.mxu0 0
  %9342 = vmatpush1.bf16.msra.mxu0 %v9282
  %9343 = vmatprep.subr.bf16.mxu0 0
  %9344 = vmatpush1.bf16.msra.mxu0 %v9281
  %9345 = vmatprep.subr.bf16.mxu0 0
  %9346 = vmatpush1.bf16.msra.mxu0 %v9280
  %9347 = vmatprep.subr.bf16.mxu0 0
  %9348 = vmatpush1.bf16.msra.mxu0 %v9279
  %9349 = vmatprep.subr.bf16.mxu0 0
  %9350 = vmatpush1.bf16.msra.mxu0 %v9278
  %9351 = vmatprep.subr.bf16.mxu0 0
  %9352 = vmatpush1.bf16.msra.mxu0 %v9277
  %9353 = vmatprep.subr.bf16.mxu0 0
  %9354 = vmatpush2.bf16.msra.mxu0 %v9292
  %9355 = vmatprep.subr.bf16.mxu0 0
  %9356 = vmatpush2.bf16.msra.mxu0 %v9291
  %9357 = vmatprep.subr.bf16.mxu0 0
  %9358 = vmatpush2.bf16.msra.mxu0 %v9290
  %9359 = vmatprep.subr.bf16.mxu0 0
  %9360 = vmatpush2.bf16.msra.mxu0 %v9289
  %9361 = vmatprep.subr.bf16.mxu0 0
  %9362 = vmatpush2.bf16.msra.mxu0 %v9288
  %9363 = vmatprep.subr.bf16.mxu0 0
  %9364 = vmatpush2.bf16.msra.mxu0 %v9287
  %9365 = vmatprep.subr.bf16.mxu0 0
  %9366 = vmatpush2.bf16.msra.mxu0 %v9286
  %9367 = vmatprep.subr.bf16.mxu0 0
  %9368 = vmatpush2.bf16.msra.mxu0 %v9285
  %9369 = vmatprep.mubr.bf16.mxu0 %v6746
  %9370 = vmatmul.mubr.bf16.gmra.mxu0 %v6745
  %v9371 = vpop.f32.mrf.mxu0
  %v9372 = vadd.f32 0.0, %v9371
  %v9373 = vpop.f32.mrf.mxu0
  %v9374 = vpop.f32.mrf.mxu0
  %v9375 = vadd.f32 0.0, %v9374
  %v9376 = vpop.f32.mrf.mxu0
  %9377 = vmatprep.mubr.bf16.mxu0 %v6750
  %9378 = vmatmul.mubr.bf16.gmra.mxu0 %v6749
  %v9379 = vpop.f32.mrf.mxu0
  %v9380 = vadd.f32 0.0, %v9379
  %v9381 = vpop.f32.mrf.mxu0
  %v9382 = vpop.f32.mrf.mxu0
  %v9383 = vadd.f32 0.0, %v9382
  %v9384 = vpop.f32.mrf.mxu0
  %9385 = vmatprep.mubr.bf16.mxu0 %v6754
  %9386 = vmatmul.mubr.bf16.gmra.mxu0 %v6753
  %v9387 = vpop.f32.mrf.mxu0
  %v9388 = vadd.f32 0.0, %v9387
  %v9389 = vpop.f32.mrf.mxu0
  %v9390 = vpop.f32.mrf.mxu0
  %v9391 = vadd.f32 0.0, %v9390
  %v9392 = vpop.f32.mrf.mxu0
  %9393 = vmatprep.mubr.bf16.mxu0 %v6758
  %9394 = vmatmul.mubr.bf16.gmra.mxu0 %v6757
  %v9395 = vpop.f32.mrf.mxu0
  %v9396 = vadd.f32 0.0, %v9395
  %v9397 = vpop.f32.mrf.mxu0
  %v9398 = vpop.f32.mrf.mxu0
  %v9399 = vadd.f32 0.0, %v9398
  %v9400 = vpop.f32.mrf.mxu0
  %9401 = vmatprep.mubr.bf16.mxu0 %v6762
  %9402 = vmatmul.mubr.bf16.gmra.mxu0 %v6761
  %v9403 = vpop.f32.mrf.mxu0
  %v9404 = vadd.f32 0.0, %v9403
  %v9405 = vpop.f32.mrf.mxu0
  %v9406 = vpop.f32.mrf.mxu0
  %v9407 = vadd.f32 0.0, %v9406
  %v9408 = vpop.f32.mrf.mxu0
  %9409 = vmatprep.mubr.bf16.mxu0 %v6766
  %9410 = vmatmul.mubr.bf16.gmra.mxu0 %v6765
  %v9411 = vpop.f32.mrf.mxu0
  %v9412 = vadd.f32 0.0, %v9411
  %v9413 = vpop.f32.mrf.mxu0
  %v9414 = vpop.f32.mrf.mxu0
  %v9415 = vadd.f32 0.0, %v9414
  %v9416 = vpop.f32.mrf.mxu0
  %9417 = vmatprep.mubr.bf16.mxu0 %v6770
  %9418 = vmatmul.mubr.bf16.gmra.mxu0 %v6769
  %v9419 = vpop.f32.mrf.mxu0
  %v9420 = vadd.f32 0.0, %v9419
  %v9421 = vpop.f32.mrf.mxu0
  %v9422 = vpop.f32.mrf.mxu0
  %v9423 = vadd.f32 0.0, %v9422
  %v9424 = vpop.f32.mrf.mxu0
  %9425 = vmatprep.mubr.bf16.mxu0 %v6774
  %9426 = vmatmul.mubr.bf16.gmra.mxu0 %v6773
  %v9427 = vpop.f32.mrf.mxu0
  %v9428 = vadd.f32 0.0, %v9427
  %v9429 = vpop.f32.mrf.mxu0
  %v9430 = vpop.f32.mrf.mxu0
  %v9431 = vadd.f32 0.0, %v9430
  %v9432 = vpop.f32.mrf.mxu0
  %9433 = vdwg.mxu0
  %9434 = vmatprep.subr.bf16.mxu0 0
  %9435 = vmatpush1.bf16.msra.mxu0 %v9300
  %9436 = vmatprep.subr.bf16.mxu0 0
  %9437 = vmatpush1.bf16.msra.mxu0 %v9299
  %9438 = vmatprep.subr.bf16.mxu0 0
  %9439 = vmatpush1.bf16.msra.mxu0 %v9298
  %9440 = vmatprep.subr.bf16.mxu0 0
  %9441 = vmatpush1.bf16.msra.mxu0 %v9297
  %9442 = vmatprep.subr.bf16.mxu0 0
  %9443 = vmatpush1.bf16.msra.mxu0 %v9296
  %9444 = vmatprep.subr.bf16.mxu0 0
  %9445 = vmatpush1.bf16.msra.mxu0 %v9295
  %9446 = vmatprep.subr.bf16.mxu0 0
  %9447 = vmatpush1.bf16.msra.mxu0 %v9294
  %9448 = vmatprep.subr.bf16.mxu0 0
  %9449 = vmatpush1.bf16.msra.mxu0 %v9293
  %9450 = vmatprep.subr.bf16.mxu0 0
  %9451 = vmatpush2.bf16.msra.mxu0 0
  %9452 = vmatprep.subr.bf16.mxu0 0
  %9453 = vmatpush2.bf16.msra.mxu0 0
  %9454 = vmatprep.subr.bf16.mxu0 0
  %9455 = vmatpush2.bf16.msra.mxu0 %v9306
  %9456 = vmatprep.subr.bf16.mxu0 0
  %9457 = vmatpush2.bf16.msra.mxu0 %v9305
  %9458 = vmatprep.subr.bf16.mxu0 0
  %9459 = vmatpush2.bf16.msra.mxu0 %v9304
  %9460 = vmatprep.subr.bf16.mxu0 0
  %9461 = vmatpush2.bf16.msra.mxu0 %v9303
  %9462 = vmatprep.subr.bf16.mxu0 0
  %9463 = vmatpush2.bf16.msra.mxu0 %v9302
  %9464 = vmatprep.subr.bf16.mxu0 0
  %9465 = vmatpush2.bf16.msra.mxu0 %v9301
  %9466 = vmatprep.mubr.bf16.mxu0 %v6983
  %9467 = vmatmul.mubr.bf16.gmra.mxu0 %v6747
  %v9468 = vpop.f32.mrf.mxu0
  %v9469 = vadd.f32 %v9372, %v9468
  %v9470 = vpop.f32.mrf.mxu0
  %v9471 = vpop.f32.mrf.mxu0
  %v9472 = vadd.f32 %v9375, %v9471
  %v9473 = vpop.f32.mrf.mxu0
  %9474 = vmatprep.mubr.bf16.mxu0 %v6986
  %9475 = vmatmul.mubr.bf16.gmra.mxu0 %v6751
  %v9476 = vpop.f32.mrf.mxu0
  %v9477 = vadd.f32 %v9380, %v9476
  %v9478 = vpop.f32.mrf.mxu0
  %v9479 = vpop.f32.mrf.mxu0
  %v9480 = vadd.f32 %v9383, %v9479
  %v9481 = vpop.f32.mrf.mxu0
  %9482 = vmatprep.mubr.bf16.mxu0 %v6989
  %9483 = vmatmul.mubr.bf16.gmra.mxu0 %v6755
  %v9484 = vpop.f32.mrf.mxu0
  %v9485 = vadd.f32 %v9388, %v9484
  %v9486 = vpop.f32.mrf.mxu0
  %v9487 = vpop.f32.mrf.mxu0
  %v9488 = vadd.f32 %v9391, %v9487
  %v9489 = vpop.f32.mrf.mxu0
  %9490 = vmatprep.mubr.bf16.mxu0 %v6992
  %9491 = vmatmul.mubr.bf16.gmra.mxu0 %v6759
  %v9492 = vpop.f32.mrf.mxu0
  %v9493 = vadd.f32 %v9396, %v9492
  %v9494 = vpop.f32.mrf.mxu0
  %v9495 = vpop.f32.mrf.mxu0
  %v9496 = vadd.f32 %v9399, %v9495
  %v9497 = vpop.f32.mrf.mxu0
  %9498 = vmatprep.mubr.bf16.mxu0 %v6995
  %9499 = vmatmul.mubr.bf16.gmra.mxu0 %v6763
  %v9500 = vpop.f32.mrf.mxu0
  %v9501 = vadd.f32 %v9404, %v9500
  %v9502 = vpop.f32.mrf.mxu0
  %v9503 = vpop.f32.mrf.mxu0
  %v9504 = vadd.f32 %v9407, %v9503
  %v9505 = vpop.f32.mrf.mxu0
  %9506 = vmatprep.mubr.bf16.mxu0 %v6998
  %9507 = vmatmul.mubr.bf16.gmra.mxu0 %v6767
  %v9508 = vpop.f32.mrf.mxu0
  %v9509 = vadd.f32 %v9412, %v9508
  %v9510 = vpop.f32.mrf.mxu0
  %v9511 = vpop.f32.mrf.mxu0
  %v9512 = vadd.f32 %v9415, %v9511
  %v9513 = vpop.f32.mrf.mxu0
  %9514 = vmatprep.mubr.bf16.mxu0 %v7001
  %9515 = vmatmul.mubr.bf16.gmra.mxu0 %v6771
  %v9516 = vpop.f32.mrf.mxu0
  %v9517 = vadd.f32 %v9420, %v9516
  %v9518 = vpop.f32.mrf.mxu0
  %v9519 = vpop.f32.mrf.mxu0
  %v9520 = vadd.f32 %v9423, %v9519
  %v9521 = vpop.f32.mrf.mxu0
  %9522 = vmatprep.mubr.bf16.mxu0 %v7004
  %9523 = vmatmul.mubr.bf16.gmra.mxu0 %v6775
  %v9524 = vpop.f32.mrf.mxu0
  %v9525 = vadd.f32 %v9428, %v9524
  %v9526 = vpop.f32.mrf.mxu0
  %v9527 = vpop.f32.mrf.mxu0
  %v9528 = vadd.f32 %v9431, %v9527
  %v9529 = vpop.f32.mrf.mxu0
  %9530 = vdwg.mxu0
  %v9531 = vmax.f32 %v9035, %v9469
  %v9532 = vmax.f32 %v9038, %v9472
  %v9533 = vmax.f32 %v9043, %v9477
  %v9534 = vmax.f32 %v9046, %v9480
  %v9535 = vmax.f32 %v9051, %v9485
  %v9536 = vmax.f32 %v9054, %v9488
  %v9537 = vmax.f32 %v9059, %v9493
  %v9538 = vmax.f32 %v9062, %v9496
  %v9539 = vmax.f32 %v9067, %v9501
  %v9540 = vmax.f32 %v9070, %v9504
  %v9541 = vmax.f32 %v9075, %v9509
  %v9542 = vmax.f32 %v9078, %v9512
  %v9543 = vmax.f32 %v9083, %v9517
  %v9544 = vmax.f32 %v9086, %v9520
  %v9545 = vmax.f32 %v9091, %v9525
  %v9546 = vmax.f32 %v9094, %v9528
  %v9547 = vmax.f32 %v9531, %v9533
  %v9548 = vmax.f32 %v9532, %v9534
  %v9549 = vmax.f32 %v9535, %v9537
  %v9550 = vmax.f32 %v9536, %v9538
  %v9551 = vmax.f32 %v9539, %v9541
  %v9552 = vmax.f32 %v9540, %v9542
  %v9553 = vmax.f32 %v9543, %v9545
  %v9554 = vmax.f32 %v9544, %v9546
  %v9555 = vadd.f32 %v9547, %v6587
  %v9556 = vadd.f32 %v9548, %v6588
  %v9557 = vadd.f32 %v9549, %v6587
  %v9558 = vadd.f32 %v9550, %v6588
  %v9559 = vadd.f32 %v9551, %v6587
  %v9560 = vadd.f32 %v9552, %v6588
  %v9561 = vadd.f32 %v9553, %v6587
  %v9562 = vadd.f32 %v9554, %v6588
  %v9563 = vmax.f32 %v9555, 0.0
  %v9564 = vmax.f32 %v9556, 0.0
  %v9565 = vmax.f32 %v9557, 0.0
  %v9566 = vmax.f32 %v9558, 0.0
  %v9567 = vmax.f32 %v9559, 0.0
  %v9568 = vmax.f32 %v9560, 0.0
  %v9569 = vmax.f32 %v9561, 0.0
  %v9570 = vmax.f32 %v9562, 0.0
  %v9571 = vpack.c.bf16 %v9564, %v9563
  %v9572 = vpack.c.bf16 %v9566, %v9565
  %v9573 = vpack.c.bf16 %v9568, %v9567
  %v9574 = vpack.c.bf16 %v9570, %v9569
  %v9579 = vunpack.c.l.b16 %v9571
  %v9580 = vunpack.c.h.b16 %v9571
  %v9581 = vunpack.c.l.b16 %v9572
  %v9582 = vunpack.c.h.b16 %v9572
  %v9583 = vunpack.c.l.b16 %v9573
  %v9584 = vunpack.c.h.b16 %v9573
  %v9585 = vunpack.c.l.b16 %v9574
  %v9586 = vunpack.c.h.b16 %v9574
  %v9587 = vpack.c.b16 %v9579, %v9579
  %v9588 = vpack.c.b16 %v9580, %v9580
  %v9589 = vpack.c.b16 %v9581, %v9581
  %v9590 = vpack.c.b16 %v9582, %v9582
  %v9591 = vpack.c.b16 %v9583, %v9583
  %v9592 = vpack.c.b16 %v9584, %v9584
  %v9593 = vpack.c.b16 %v9585, %v9585
  %v9594 = vpack.c.b16 %v9586, %v9586
  %s9603 = scalar_lea.vmem [#allocation3], 64
  %9604 = vst [vmem:[%s9603] sm:$0xf] %v9587
  %9605 = vst [vmem:[%s9603 + $0x4] sm:$0xf] %v9588
  %9606 = vst [vmem:[%s9603 + $0x8] sm:$0xf] %v9589
  %9607 = vst [vmem:[%s9603 + $0xc] sm:$0xf] %v9590
  %9608 = vst [vmem:[%s9603 + $0x10] sm:$0xf] %v9591
  %9609 = vst [vmem:[%s9603 + $0x14] sm:$0xf] %v9592
  %9610 = vst [vmem:[%s9603 + $0x18] sm:$0xf] %v9593
  %9611 = vst [vmem:[%s9603 + $0x1c] sm:$0xf] %v9594
  %v9612 = vld [vmem:[%s3877] sm:$0xf]
  %v9613 = vld [vmem:[%s3877 + $0x4] sm:$0xf]
  %v9614 = vld [vmem:[%s3877 + $0x8] sm:$0xf]
  %v9615 = vld [vmem:[%s3877 + $0xc] sm:$0xf]
  %v9616 = vld [vmem:[%s3877 + $0x10] sm:$0xf]
  %v9617 = vld [vmem:[%s3877 + $0x14] sm:$0xf]
  %v9618 = vld [vmem:[%s3877 + $0x18] sm:$0xf]
  %v9619 = vld [vmem:[%s3877 + $0x1c] sm:$0xf]
  %v9620 = vld [vmem:[%s3877 + $0x20] sm:$0xf]
  %v9621 = vld [vmem:[%s3877 + $0x24] sm:$0xf]
  %v9622 = vld [vmem:[%s3877 + $0x28] sm:$0xf]
  %v9623 = vld [vmem:[%s3877 + $0x2c] sm:$0xf]
  %v9624 = vld [vmem:[%s3877 + $0x30] sm:$0xf]
  %v9625 = vld [vmem:[%s3877 + $0x34] sm:$0xf]
  %v9626 = vld [vmem:[%s3877 + $0x38] sm:$0xf]
  %v9627 = vld [vmem:[%s3877 + $0x3c] sm:$0xf]
  %v9628 = vld [vmem:[%s3877 + $0x40] sm:$0xf]
  %v9629 = vld [vmem:[%s3877 + $0x44] sm:$0xf]
  %v9630 = vld [vmem:[%s3877 + $0x48] sm:$0xf]
  %v9631 = vld [vmem:[%s3877 + $0x4c] sm:$0xf]
  %v9632 = vld [vmem:[%s3877 + $0x50] sm:$0xf]
  %v9633 = vld [vmem:[%s3877 + $0x54] sm:$0xf]
  %v9634 = vld [vmem:[%s3877 + $0x58] sm:$0xf]
  %v9635 = vld [vmem:[%s3877 + $0x5c] sm:$0xf]
  %v9636 = vld [vmem:[%s3877 + $0x60] sm:$0xf]
  %v9637 = vld [vmem:[%s3877 + $0x64] sm:$0xf]
  %v9638 = vld [vmem:[%s3877 + $0x68] sm:$0xf]
  %v9639 = vld [vmem:[%s3877 + $0x6c] sm:$0xf]
  %v9640 = vld [vmem:[%s3877 + $0x70] sm:$0xf]
  %v9641 = vld [vmem:[%s3877 + $0x74] sm:$0xf]
  %v9642 = vld [vmem:[%s3877 + $0x78] sm:$0xf]
  %v9643 = vld [vmem:[%s3877 + $0x7c] sm:$0xf]
  %v9644 = vld [vmem:[%s3877 + $0x80] sm:$0xf]
  %v9645 = vld [vmem:[%s3877 + $0x84] sm:$0xf]
  %v9646 = vld [vmem:[%s3877 + $0x88] sm:$0xf]
  %v9647 = vld [vmem:[%s3877 + $0x8c] sm:$0xf]
  %v9648 = vld [vmem:[%s3877 + $0x90] sm:$0xf]
  %v9649 = vld [vmem:[%s3877 + $0x94] sm:$0xf]
  %v9650 = vld [vmem:[%s3877 + $0x98] sm:$0xf]
  %v9651 = vld [vmem:[%s3877 + $0x9c] sm:$0xf]
  %v9652 = vld [vmem:[%s3877 + $0xa0] sm:$0xf]
  %v9653 = vld [vmem:[%s3877 + $0xa4] sm:$0xf]
  %v9654 = vld [vmem:[%s3877 + $0xa8] sm:$0xf]
  %v9655 = vld [vmem:[%s3877 + $0xac] sm:$0xf]
  %v9656 = vld [vmem:[%s3877 + $0xb0] sm:$0xf]
  %v9657 = vld [vmem:[%s3877 + $0xb4] sm:$0xf]
  %v9658 = vld [vmem:[%s3877 + $0xb8] sm:$0xf]
  %v9659 = vld [vmem:[%s3877 + $0xbc] sm:$0xf]
  %v9660 = vld [vmem:[%s3877 + $0xc0] sm:$0xf]
  %v9661 = vld [vmem:[%s3877 + $0xc4] sm:$0xf]
  %v9662 = vld [vmem:[%s3877 + $0xc8] sm:$0xf]
  %v9663 = vld [vmem:[%s3877 + $0xcc] sm:$0xf]
  %v9664 = vld [vmem:[%s3877 + $0xd0] sm:$0xf]
  %v9665 = vld [vmem:[%s3877 + $0xd4] sm:$0xf]
  %v9666 = vld [vmem:[%s3877 + $0xd8] sm:$0xf]
  %v9667 = vld [vmem:[%s3877 + $0xdc] sm:$0xf]
  %v9668 = vld [vmem:[%s3877 + $0xe0] sm:$0xf]
  %v9669 = vld [vmem:[%s3877 + $0xe4] sm:$0xf]
  %v9670 = vld [vmem:[%s3877 + $0xe8] sm:$0xf]
  %v9671 = vld [vmem:[%s3877 + $0xec] sm:$0xf]
  %v9732 = vunpack.c.l.b16 %v9612
  %v9733 = vunpack.c.l.b16 %v9613
  %v9734 = vunpack.c.l.b16 %v9614
  %v9735 = vunpack.c.l.b16 %v9615
  %v9736 = vunpack.c.l.b16 %v9616
  %v9737 = vunpack.c.l.b16 %v9617
  %v9738 = vunpack.c.l.b16 %v9618
  %v9739 = vunpack.c.l.b16 %v9619
  %v9740 = vunpack.c.l.b16 %v9620
  %v9741 = vunpack.c.l.b16 %v9621
  %v9742 = vunpack.c.l.b16 %v9622
  %v9743 = vunpack.c.l.b16 %v9623
  %v9744 = vunpack.c.l.b16 %v9624
  %v9745 = vunpack.c.l.b16 %v9625
  %v9746 = vunpack.c.l.b16 %v9626
  %v9747 = vunpack.c.l.b16 %v9627
  %v9748 = vunpack.c.l.b16 %v9628
  %v9749 = vunpack.c.l.b16 %v9629
  %v9750 = vunpack.c.l.b16 %v9630
  %v9751 = vunpack.c.l.b16 %v9631
  %v9752 = vunpack.c.l.b16 %v9632
  %v9753 = vunpack.c.l.b16 %v9633
  %v9754 = vunpack.c.l.b16 %v9634
  %v9755 = vunpack.c.l.b16 %v9635
  %v9756 = vunpack.c.l.b16 %v9636
  %v9757 = vunpack.c.l.b16 %v9637
  %v9758 = vunpack.c.l.b16 %v9638
  %v9759 = vunpack.c.l.b16 %v9639
  %v9760 = vunpack.c.l.b16 %v9640
  %v9761 = vunpack.c.l.b16 %v9641
  %v9762 = vunpack.c.l.b16 %v9642
  %v9763 = vunpack.c.l.b16 %v9643
  %v9764 = vunpack.c.l.b16 %v9644
  %v9765 = vunpack.c.l.b16 %v9645
  %v9766 = vunpack.c.l.b16 %v9646
  %v9767 = vunpack.c.l.b16 %v9647
  %v9768 = vunpack.c.l.b16 %v9648
  %v9769 = vunpack.c.l.b16 %v9649
  %v9770 = vunpack.c.l.b16 %v9650
  %v9771 = vunpack.c.l.b16 %v9651
  %v9772 = vunpack.c.l.b16 %v9652
  %v9773 = vunpack.c.l.b16 %v9653
  %v9774 = vunpack.c.l.b16 %v9654
  %v9775 = vunpack.c.l.b16 %v9655
  %v9776 = vunpack.c.l.b16 %v9656
  %v9777 = vunpack.c.l.b16 %v9657
  %v9778 = vunpack.c.l.b16 %v9658
  %v9779 = vunpack.c.l.b16 %v9659
  %v9780 = vunpack.c.l.b16 %v9660
  %v9781 = vunpack.c.l.b16 %v9661
  %v9782 = vunpack.c.l.b16 %v9662
  %v9783 = vunpack.c.l.b16 %v9663
  %v9784 = vunpack.c.l.b16 %v9664
  %v9785 = vunpack.c.l.b16 %v9665
  %v9786 = vunpack.c.l.b16 %v9666
  %v9787 = vunpack.c.l.b16 %v9667
  %v9788 = vunpack.c.l.b16 %v9668
  %v9789 = vunpack.c.l.b16 %v9669
  %v9790 = vunpack.c.l.b16 %v9670
  %v9791 = vunpack.c.l.b16 %v9671
  %v9792 = vpack.c.b16 %v9733, %v9732
  %v9793 = vpack.c.b16 %v9735, %v9734
  %v9794 = vpack.c.b16 %v9737, %v9736
  %v9795 = vpack.c.b16 %v9739, %v9738
  %v9796 = vpack.c.b16 %v9741, %v9740
  %v9797 = vpack.c.b16 %v9743, %v9742
  %v9798 = vpack.c.b16 %v9745, %v9744
  %v9799 = vpack.c.b16 %v9747, %v9746
  %v9800 = vpack.c.b16 %v9749, %v9748
  %v9801 = vpack.c.b16 %v9751, %v9750
  %v9802 = vpack.c.b16 %v9753, %v9752
  %v9803 = vpack.c.b16 %v9755, %v9754
  %v9804 = vpack.c.b16 %v9757, %v9756
  %v9805 = vpack.c.b16 %v9759, %v9758
  %v9806 = vpack.c.b16 %v9761, %v9760
  %v9807 = vpack.c.b16 %v9763, %v9762
  %v9808 = vpack.c.b16 %v9765, %v9764
  %v9809 = vpack.c.b16 %v9767, %v9766
  %v9810 = vpack.c.b16 %v9769, %v9768
  %v9811 = vpack.c.b16 %v9771, %v9770
  %v9812 = vpack.c.b16 %v9773, %v9772
  %v9813 = vpack.c.b16 %v9775, %v9774
  %v9814 = vpack.c.b16 %v9777, %v9776
  %v9815 = vpack.c.b16 %v9779, %v9778
  %v9816 = vpack.c.b16 %v9781, %v9780
  %v9817 = vpack.c.b16 %v9783, %v9782
  %v9818 = vpack.c.b16 %v9785, %v9784
  %v9819 = vpack.c.b16 %v9787, %v9786
  %v9820 = vpack.c.b16 %v9789, %v9788
  %v9821 = vpack.c.b16 %v9791, %v9790
  %9852 = vmatprep.subr.bf16.mxu0 0
  %9853 = vmatpush1.bf16.msra.mxu0 %v9799
  %9854 = vmatprep.subr.bf16.mxu0 0
  %9855 = vmatpush1.bf16.msra.mxu0 %v9798
  %9856 = vmatprep.subr.bf16.mxu0 0
  %9857 = vmatpush1.bf16.msra.mxu0 %v9797
  %9858 = vmatprep.subr.bf16.mxu0 0
  %9859 = vmatpush1.bf16.msra.mxu0 %v9796
  %9860 = vmatprep.subr.bf16.mxu0 0
  %9861 = vmatpush1.bf16.msra.mxu0 %v9795
  %9862 = vmatprep.subr.bf16.mxu0 0
  %9863 = vmatpush1.bf16.msra.mxu0 %v9794
  %9864 = vmatprep.subr.bf16.mxu0 0
  %9865 = vmatpush1.bf16.msra.mxu0 %v9793
  %9866 = vmatprep.subr.bf16.mxu0 0
  %9867 = vmatpush1.bf16.msra.mxu0 %v9792
  %9868 = vmatprep.subr.bf16.mxu0 0
  %9869 = vmatpush2.bf16.msra.mxu0 %v9807
  %9870 = vmatprep.subr.bf16.mxu0 0
  %9871 = vmatpush2.bf16.msra.mxu0 %v9806
  %9872 = vmatprep.subr.bf16.mxu0 0
  %9873 = vmatpush2.bf16.msra.mxu0 %v9805
  %9874 = vmatprep.subr.bf16.mxu0 0
  %9875 = vmatpush2.bf16.msra.mxu0 %v9804
  %9876 = vmatprep.subr.bf16.mxu0 0
  %9877 = vmatpush2.bf16.msra.mxu0 %v9803
  %9878 = vmatprep.subr.bf16.mxu0 0
  %9879 = vmatpush2.bf16.msra.mxu0 %v9802
  %9880 = vmatprep.subr.bf16.mxu0 0
  %9881 = vmatpush2.bf16.msra.mxu0 %v9801
  %9882 = vmatprep.subr.bf16.mxu0 0
  %9883 = vmatpush2.bf16.msra.mxu0 %v9800
  %9884 = vmatprep.mubr.bf16.mxu0 %v6746
  %9885 = vmatmul.mubr.bf16.gmra.mxu0 %v6745
  %v9886 = vpop.f32.mrf.mxu0
  %v9887 = vadd.f32 0.0, %v9886
  %v9888 = vpop.f32.mrf.mxu0
  %v9889 = vpop.f32.mrf.mxu0
  %v9890 = vadd.f32 0.0, %v9889
  %v9891 = vpop.f32.mrf.mxu0
  %9892 = vmatprep.mubr.bf16.mxu0 %v6750
  %9893 = vmatmul.mubr.bf16.gmra.mxu0 %v6749
  %v9894 = vpop.f32.mrf.mxu0
  %v9895 = vadd.f32 0.0, %v9894
  %v9896 = vpop.f32.mrf.mxu0
  %v9897 = vpop.f32.mrf.mxu0
  %v9898 = vadd.f32 0.0, %v9897
  %v9899 = vpop.f32.mrf.mxu0
  %9900 = vmatprep.mubr.bf16.mxu0 %v6754
  %9901 = vmatmul.mubr.bf16.gmra.mxu0 %v6753
  %v9902 = vpop.f32.mrf.mxu0
  %v9903 = vadd.f32 0.0, %v9902
  %v9904 = vpop.f32.mrf.mxu0
  %v9905 = vpop.f32.mrf.mxu0
  %v9906 = vadd.f32 0.0, %v9905
  %v9907 = vpop.f32.mrf.mxu0
  %9908 = vmatprep.mubr.bf16.mxu0 %v6758
  %9909 = vmatmul.mubr.bf16.gmra.mxu0 %v6757
  %v9910 = vpop.f32.mrf.mxu0
  %v9911 = vadd.f32 0.0, %v9910
  %v9912 = vpop.f32.mrf.mxu0
  %v9913 = vpop.f32.mrf.mxu0
  %v9914 = vadd.f32 0.0, %v9913
  %v9915 = vpop.f32.mrf.mxu0
  %9916 = vmatprep.mubr.bf16.mxu0 %v6762
  %9917 = vmatmul.mubr.bf16.gmra.mxu0 %v6761
  %v9918 = vpop.f32.mrf.mxu0
  %v9919 = vadd.f32 0.0, %v9918
  %v9920 = vpop.f32.mrf.mxu0
  %v9921 = vpop.f32.mrf.mxu0
  %v9922 = vadd.f32 0.0, %v9921
  %v9923 = vpop.f32.mrf.mxu0
  %9924 = vmatprep.mubr.bf16.mxu0 %v6766
  %9925 = vmatmul.mubr.bf16.gmra.mxu0 %v6765
  %v9926 = vpop.f32.mrf.mxu0
  %v9927 = vadd.f32 0.0, %v9926
  %v9928 = vpop.f32.mrf.mxu0
  %v9929 = vpop.f32.mrf.mxu0
  %v9930 = vadd.f32 0.0, %v9929
  %v9931 = vpop.f32.mrf.mxu0
  %9932 = vmatprep.mubr.bf16.mxu0 %v6770
  %9933 = vmatmul.mubr.bf16.gmra.mxu0 %v6769
  %v9934 = vpop.f32.mrf.mxu0
  %v9935 = vadd.f32 0.0, %v9934
  %v9936 = vpop.f32.mrf.mxu0
  %v9937 = vpop.f32.mrf.mxu0
  %v9938 = vadd.f32 0.0, %v9937
  %v9939 = vpop.f32.mrf.mxu0
  %9940 = vmatprep.mubr.bf16.mxu0 %v6774
  %9941 = vmatmul.mubr.bf16.gmra.mxu0 %v6773
  %v9942 = vpop.f32.mrf.mxu0
  %v9943 = vadd.f32 0.0, %v9942
  %v9944 = vpop.f32.mrf.mxu0
  %v9945 = vpop.f32.mrf.mxu0
  %v9946 = vadd.f32 0.0, %v9945
  %v9947 = vpop.f32.mrf.mxu0
  %9948 = vdwg.mxu0
  %9949 = vmatprep.subr.bf16.mxu0 0
  %9950 = vmatpush1.bf16.msra.mxu0 %v9815
  %9951 = vmatprep.subr.bf16.mxu0 0
  %9952 = vmatpush1.bf16.msra.mxu0 %v9814
  %9953 = vmatprep.subr.bf16.mxu0 0
  %9954 = vmatpush1.bf16.msra.mxu0 %v9813
  %9955 = vmatprep.subr.bf16.mxu0 0
  %9956 = vmatpush1.bf16.msra.mxu0 %v9812
  %9957 = vmatprep.subr.bf16.mxu0 0
  %9958 = vmatpush1.bf16.msra.mxu0 %v9811
  %9959 = vmatprep.subr.bf16.mxu0 0
  %9960 = vmatpush1.bf16.msra.mxu0 %v9810
  %9961 = vmatprep.subr.bf16.mxu0 0
  %9962 = vmatpush1.bf16.msra.mxu0 %v9809
  %9963 = vmatprep.subr.bf16.mxu0 0
  %9964 = vmatpush1.bf16.msra.mxu0 %v9808
  %9965 = vmatprep.subr.bf16.mxu0 0
  %9966 = vmatpush2.bf16.msra.mxu0 0
  %9967 = vmatprep.subr.bf16.mxu0 0
  %9968 = vmatpush2.bf16.msra.mxu0 0
  %9969 = vmatprep.subr.bf16.mxu0 0
  %9970 = vmatpush2.bf16.msra.mxu0 %v9821
  %9971 = vmatprep.subr.bf16.mxu0 0
  %9972 = vmatpush2.bf16.msra.mxu0 %v9820
  %9973 = vmatprep.subr.bf16.mxu0 0
  %9974 = vmatpush2.bf16.msra.mxu0 %v9819
  %9975 = vmatprep.subr.bf16.mxu0 0
  %9976 = vmatpush2.bf16.msra.mxu0 %v9818
  %9977 = vmatprep.subr.bf16.mxu0 0
  %9978 = vmatpush2.bf16.msra.mxu0 %v9817
  %9979 = vmatprep.subr.bf16.mxu0 0
  %9980 = vmatpush2.bf16.msra.mxu0 %v9816
  %9981 = vmatprep.mubr.bf16.mxu0 %v6983
  %9982 = vmatmul.mubr.bf16.gmra.mxu0 %v6747
  %v9983 = vpop.f32.mrf.mxu0
  %v9984 = vadd.f32 %v9887, %v9983
  %v9985 = vpop.f32.mrf.mxu0
  %v9986 = vpop.f32.mrf.mxu0
  %v9987 = vadd.f32 %v9890, %v9986
  %v9988 = vpop.f32.mrf.mxu0
  %9989 = vmatprep.mubr.bf16.mxu0 %v6986
  %9990 = vmatmul.mubr.bf16.gmra.mxu0 %v6751
  %v9991 = vpop.f32.mrf.mxu0
  %v9992 = vadd.f32 %v9895, %v9991
  %v9993 = vpop.f32.mrf.mxu0
  %v9994 = vpop.f32.mrf.mxu0
  %v9995 = vadd.f32 %v9898, %v9994
  %v9996 = vpop.f32.mrf.mxu0
  %9997 = vmatprep.mubr.bf16.mxu0 %v6989
  %9998 = vmatmul.mubr.bf16.gmra.mxu0 %v6755
  %v9999 = vpop.f32.mrf.mxu0
  %v10000 = vadd.f32 %v9903, %v9999
  %v10001 = vpop.f32.mrf.mxu0
  %v10002 = vpop.f32.mrf.mxu0
  %v10003 = vadd.f32 %v9906, %v10002
  %v10004 = vpop.f32.mrf.mxu0
  %10005 = vmatprep.mubr.bf16.mxu0 %v6992
  %10006 = vmatmul.mubr.bf16.gmra.mxu0 %v6759
  %v10007 = vpop.f32.mrf.mxu0
  %v10008 = vadd.f32 %v9911, %v10007
  %v10009 = vpop.f32.mrf.mxu0
  %v10010 = vpop.f32.mrf.mxu0
  %v10011 = vadd.f32 %v9914, %v10010
  %v10012 = vpop.f32.mrf.mxu0
  %10013 = vmatprep.mubr.bf16.mxu0 %v6995
  %10014 = vmatmul.mubr.bf16.gmra.mxu0 %v6763
  %v10015 = vpop.f32.mrf.mxu0
  %v10016 = vadd.f32 %v9919, %v10015
  %v10017 = vpop.f32.mrf.mxu0
  %v10018 = vpop.f32.mrf.mxu0
  %v10019 = vadd.f32 %v9922, %v10018
  %v10020 = vpop.f32.mrf.mxu0
  %10021 = vmatprep.mubr.bf16.mxu0 %v6998
  %10022 = vmatmul.mubr.bf16.gmra.mxu0 %v6767
  %v10023 = vpop.f32.mrf.mxu0
  %v10024 = vadd.f32 %v9927, %v10023
  %v10025 = vpop.f32.mrf.mxu0
  %v10026 = vpop.f32.mrf.mxu0
  %v10027 = vadd.f32 %v9930, %v10026
  %v10028 = vpop.f32.mrf.mxu0
  %10029 = vmatprep.mubr.bf16.mxu0 %v7001
  %10030 = vmatmul.mubr.bf16.gmra.mxu0 %v6771
  %v10031 = vpop.f32.mrf.mxu0
  %v10032 = vadd.f32 %v9935, %v10031
  %v10033 = vpop.f32.mrf.mxu0
  %v10034 = vpop.f32.mrf.mxu0
  %v10035 = vadd.f32 %v9938, %v10034
  %v10036 = vpop.f32.mrf.mxu0
  %10037 = vmatprep.mubr.bf16.mxu0 %v7004
  %10038 = vmatmul.mubr.bf16.gmra.mxu0 %v6775
  %v10039 = vpop.f32.mrf.mxu0
  %v10040 = vadd.f32 %v9943, %v10039
  %v10041 = vpop.f32.mrf.mxu0
  %v10042 = vpop.f32.mrf.mxu0
  %v10043 = vadd.f32 %v9946, %v10042
  %v10044 = vpop.f32.mrf.mxu0
  %10045 = vdwg.mxu0
  %v10046 = vld [vmem:[%s4410] sm:$0xf]
  %v10047 = vld [vmem:[%s4410 + $0x4] sm:$0xf]
  %v10048 = vld [vmem:[%s4410 + $0x8] sm:$0xf]
  %v10049 = vld [vmem:[%s4410 + $0xc] sm:$0xf]
  %v10050 = vld [vmem:[%s4410 + $0x10] sm:$0xf]
  %v10051 = vld [vmem:[%s4410 + $0x14] sm:$0xf]
  %v10052 = vld [vmem:[%s4410 + $0x18] sm:$0xf]
  %v10053 = vld [vmem:[%s4410 + $0x1c] sm:$0xf]
  %v10054 = vld [vmem:[%s4410 + $0x20] sm:$0xf]
  %v10055 = vld [vmem:[%s4410 + $0x24] sm:$0xf]
  %v10056 = vld [vmem:[%s4410 + $0x28] sm:$0xf]
  %v10057 = vld [vmem:[%s4410 + $0x2c] sm:$0xf]
  %v10058 = vld [vmem:[%s4410 + $0x30] sm:$0xf]
  %v10059 = vld [vmem:[%s4410 + $0x34] sm:$0xf]
  %v10060 = vld [vmem:[%s4410 + $0x38] sm:$0xf]
  %v10061 = vld [vmem:[%s4410 + $0x3c] sm:$0xf]
  %v10062 = vld [vmem:[%s4410 + $0x40] sm:$0xf]
  %v10063 = vld [vmem:[%s4410 + $0x44] sm:$0xf]
  %v10064 = vld [vmem:[%s4410 + $0x48] sm:$0xf]
  %v10065 = vld [vmem:[%s4410 + $0x4c] sm:$0xf]
  %v10066 = vld [vmem:[%s4410 + $0x50] sm:$0xf]
  %v10067 = vld [vmem:[%s4410 + $0x54] sm:$0xf]
  %v10068 = vld [vmem:[%s4410 + $0x58] sm:$0xf]
  %v10069 = vld [vmem:[%s4410 + $0x5c] sm:$0xf]
  %v10070 = vld [vmem:[%s4410 + $0x60] sm:$0xf]
  %v10071 = vld [vmem:[%s4410 + $0x64] sm:$0xf]
  %v10072 = vld [vmem:[%s4410 + $0x68] sm:$0xf]
  %v10073 = vld [vmem:[%s4410 + $0x6c] sm:$0xf]
  %v10074 = vld [vmem:[%s4410 + $0x70] sm:$0xf]
  %v10075 = vld [vmem:[%s4410 + $0x74] sm:$0xf]
  %v10076 = vld [vmem:[%s4410 + $0x78] sm:$0xf]
  %v10077 = vld [vmem:[%s4410 + $0x7c] sm:$0xf]
  %v10078 = vld [vmem:[%s4410 + $0x80] sm:$0xf]
  %v10079 = vld [vmem:[%s4410 + $0x84] sm:$0xf]
  %v10080 = vld [vmem:[%s4410 + $0x88] sm:$0xf]
  %v10081 = vld [vmem:[%s4410 + $0x8c] sm:$0xf]
  %v10082 = vld [vmem:[%s4410 + $0x90] sm:$0xf]
  %v10083 = vld [vmem:[%s4410 + $0x94] sm:$0xf]
  %v10084 = vld [vmem:[%s4410 + $0x98] sm:$0xf]
  %v10085 = vld [vmem:[%s4410 + $0x9c] sm:$0xf]
  %v10086 = vld [vmem:[%s4410 + $0xa0] sm:$0xf]
  %v10087 = vld [vmem:[%s4410 + $0xa4] sm:$0xf]
  %v10088 = vld [vmem:[%s4410 + $0xa8] sm:$0xf]
  %v10089 = vld [vmem:[%s4410 + $0xac] sm:$0xf]
  %v10090 = vld [vmem:[%s4410 + $0xb0] sm:$0xf]
  %v10091 = vld [vmem:[%s4410 + $0xb4] sm:$0xf]
  %v10092 = vld [vmem:[%s4410 + $0xb8] sm:$0xf]
  %v10093 = vld [vmem:[%s4410 + $0xbc] sm:$0xf]
  %v10094 = vld [vmem:[%s4410 + $0xc0] sm:$0xf]
  %v10095 = vld [vmem:[%s4410 + $0xc4] sm:$0xf]
  %v10096 = vld [vmem:[%s4410 + $0xc8] sm:$0xf]
  %v10097 = vld [vmem:[%s4410 + $0xcc] sm:$0xf]
  %v10098 = vld [vmem:[%s4410 + $0xd0] sm:$0xf]
  %v10099 = vld [vmem:[%s4410 + $0xd4] sm:$0xf]
  %v10100 = vld [vmem:[%s4410 + $0xd8] sm:$0xf]
  %v10101 = vld [vmem:[%s4410 + $0xdc] sm:$0xf]
  %v10102 = vld [vmem:[%s4410 + $0xe0] sm:$0xf]
  %v10103 = vld [vmem:[%s4410 + $0xe4] sm:$0xf]
  %v10104 = vld [vmem:[%s4410 + $0xe8] sm:$0xf]
  %v10105 = vld [vmem:[%s4410 + $0xec] sm:$0xf]
  %v10166 = vunpack.c.l.b16 %v10046
  %v10167 = vunpack.c.l.b16 %v10047
  %v10168 = vunpack.c.l.b16 %v10048
  %v10169 = vunpack.c.l.b16 %v10049
  %v10170 = vunpack.c.l.b16 %v10050
  %v10171 = vunpack.c.l.b16 %v10051
  %v10172 = vunpack.c.l.b16 %v10052
  %v10173 = vunpack.c.l.b16 %v10053
  %v10174 = vunpack.c.l.b16 %v10054
  %v10175 = vunpack.c.l.b16 %v10055
  %v10176 = vunpack.c.l.b16 %v10056
  %v10177 = vunpack.c.l.b16 %v10057
  %v10178 = vunpack.c.l.b16 %v10058
  %v10179 = vunpack.c.l.b16 %v10059
  %v10180 = vunpack.c.l.b16 %v10060
  %v10181 = vunpack.c.l.b16 %v10061
  %v10182 = vunpack.c.l.b16 %v10062
  %v10183 = vunpack.c.l.b16 %v10063
  %v10184 = vunpack.c.l.b16 %v10064
  %v10185 = vunpack.c.l.b16 %v10065
  %v10186 = vunpack.c.l.b16 %v10066
  %v10187 = vunpack.c.l.b16 %v10067
  %v10188 = vunpack.c.l.b16 %v10068
  %v10189 = vunpack.c.l.b16 %v10069
  %v10190 = vunpack.c.l.b16 %v10070
  %v10191 = vunpack.c.l.b16 %v10071
  %v10192 = vunpack.c.l.b16 %v10072
  %v10193 = vunpack.c.l.b16 %v10073
  %v10194 = vunpack.c.l.b16 %v10074
  %v10195 = vunpack.c.l.b16 %v10075
  %v10196 = vunpack.c.l.b16 %v10076
  %v10197 = vunpack.c.l.b16 %v10077
  %v10198 = vunpack.c.l.b16 %v10078
  %v10199 = vunpack.c.l.b16 %v10079
  %v10200 = vunpack.c.l.b16 %v10080
  %v10201 = vunpack.c.l.b16 %v10081
  %v10202 = vunpack.c.l.b16 %v10082
  %v10203 = vunpack.c.l.b16 %v10083
  %v10204 = vunpack.c.l.b16 %v10084
  %v10205 = vunpack.c.l.b16 %v10085
  %v10206 = vunpack.c.l.b16 %v10086
  %v10207 = vunpack.c.l.b16 %v10087
  %v10208 = vunpack.c.l.b16 %v10088
  %v10209 = vunpack.c.l.b16 %v10089
  %v10210 = vunpack.c.l.b16 %v10090
  %v10211 = vunpack.c.l.b16 %v10091
  %v10212 = vunpack.c.l.b16 %v10092
  %v10213 = vunpack.c.l.b16 %v10093
  %v10214 = vunpack.c.l.b16 %v10094
  %v10215 = vunpack.c.l.b16 %v10095
  %v10216 = vunpack.c.l.b16 %v10096
  %v10217 = vunpack.c.l.b16 %v10097
  %v10218 = vunpack.c.l.b16 %v10098
  %v10219 = vunpack.c.l.b16 %v10099
  %v10220 = vunpack.c.l.b16 %v10100
  %v10221 = vunpack.c.l.b16 %v10101
  %v10222 = vunpack.c.l.b16 %v10102
  %v10223 = vunpack.c.l.b16 %v10103
  %v10224 = vunpack.c.l.b16 %v10104
  %v10225 = vunpack.c.l.b16 %v10105
  %v10226 = vpack.c.b16 %v10167, %v10166
  %v10227 = vpack.c.b16 %v10169, %v10168
  %v10228 = vpack.c.b16 %v10171, %v10170
  %v10229 = vpack.c.b16 %v10173, %v10172
  %v10230 = vpack.c.b16 %v10175, %v10174
  %v10231 = vpack.c.b16 %v10177, %v10176
  %v10232 = vpack.c.b16 %v10179, %v10178
  %v10233 = vpack.c.b16 %v10181, %v10180
  %v10234 = vpack.c.b16 %v10183, %v10182
  %v10235 = vpack.c.b16 %v10185, %v10184
  %v10236 = vpack.c.b16 %v10187, %v10186
  %v10237 = vpack.c.b16 %v10189, %v10188
  %v10238 = vpack.c.b16 %v10191, %v10190
  %v10239 = vpack.c.b16 %v10193, %v10192
  %v10240 = vpack.c.b16 %v10195, %v10194
  %v10241 = vpack.c.b16 %v10197, %v10196
  %v10242 = vpack.c.b16 %v10199, %v10198
  %v10243 = vpack.c.b16 %v10201, %v10200
  %v10244 = vpack.c.b16 %v10203, %v10202
  %v10245 = vpack.c.b16 %v10205, %v10204
  %v10246 = vpack.c.b16 %v10207, %v10206
  %v10247 = vpack.c.b16 %v10209, %v10208
  %v10248 = vpack.c.b16 %v10211, %v10210
  %v10249 = vpack.c.b16 %v10213, %v10212
  %v10250 = vpack.c.b16 %v10215, %v10214
  %v10251 = vpack.c.b16 %v10217, %v10216
  %v10252 = vpack.c.b16 %v10219, %v10218
  %v10253 = vpack.c.b16 %v10221, %v10220
  %v10254 = vpack.c.b16 %v10223, %v10222
  %v10255 = vpack.c.b16 %v10225, %v10224
  %10286 = vmatprep.subr.bf16.mxu0 0
  %10287 = vmatpush1.bf16.msra.mxu0 %v10233
  %10288 = vmatprep.subr.bf16.mxu0 0
  %10289 = vmatpush1.bf16.msra.mxu0 %v10232
  %10290 = vmatprep.subr.bf16.mxu0 0
  %10291 = vmatpush1.bf16.msra.mxu0 %v10231
  %10292 = vmatprep.subr.bf16.mxu0 0
  %10293 = vmatpush1.bf16.msra.mxu0 %v10230
  %10294 = vmatprep.subr.bf16.mxu0 0
  %10295 = vmatpush1.bf16.msra.mxu0 %v10229
  %10296 = vmatprep.subr.bf16.mxu0 0
  %10297 = vmatpush1.bf16.msra.mxu0 %v10228
  %10298 = vmatprep.subr.bf16.mxu0 0
  %10299 = vmatpush1.bf16.msra.mxu0 %v10227
  %10300 = vmatprep.subr.bf16.mxu0 0
  %10301 = vmatpush1.bf16.msra.mxu0 %v10226
  %10302 = vmatprep.subr.bf16.mxu0 0
  %10303 = vmatpush2.bf16.msra.mxu0 %v10241
  %10304 = vmatprep.subr.bf16.mxu0 0
  %10305 = vmatpush2.bf16.msra.mxu0 %v10240
  %10306 = vmatprep.subr.bf16.mxu0 0
  %10307 = vmatpush2.bf16.msra.mxu0 %v10239
  %10308 = vmatprep.subr.bf16.mxu0 0
  %10309 = vmatpush2.bf16.msra.mxu0 %v10238
  %10310 = vmatprep.subr.bf16.mxu0 0
  %10311 = vmatpush2.bf16.msra.mxu0 %v10237
  %10312 = vmatprep.subr.bf16.mxu0 0
  %10313 = vmatpush2.bf16.msra.mxu0 %v10236
  %10314 = vmatprep.subr.bf16.mxu0 0
  %10315 = vmatpush2.bf16.msra.mxu0 %v10235
  %10316 = vmatprep.subr.bf16.mxu0 0
  %10317 = vmatpush2.bf16.msra.mxu0 %v10234
  %10318 = vmatprep.mubr.bf16.mxu0 %v6746
  %10319 = vmatmul.mubr.bf16.gmra.mxu0 %v6745
  %v10320 = vpop.f32.mrf.mxu0
  %v10321 = vadd.f32 0.0, %v10320
  %v10322 = vpop.f32.mrf.mxu0
  %v10323 = vpop.f32.mrf.mxu0
  %v10324 = vadd.f32 0.0, %v10323
  %v10325 = vpop.f32.mrf.mxu0
  %10326 = vmatprep.mubr.bf16.mxu0 %v6750
  %10327 = vmatmul.mubr.bf16.gmra.mxu0 %v6749
  %v10328 = vpop.f32.mrf.mxu0
  %v10329 = vadd.f32 0.0, %v10328
  %v10330 = vpop.f32.mrf.mxu0
  %v10331 = vpop.f32.mrf.mxu0
  %v10332 = vadd.f32 0.0, %v10331
  %v10333 = vpop.f32.mrf.mxu0
  %10334 = vmatprep.mubr.bf16.mxu0 %v6754
  %10335 = vmatmul.mubr.bf16.gmra.mxu0 %v6753
  %v10336 = vpop.f32.mrf.mxu0
  %v10337 = vadd.f32 0.0, %v10336
  %v10338 = vpop.f32.mrf.mxu0
  %v10339 = vpop.f32.mrf.mxu0
  %v10340 = vadd.f32 0.0, %v10339
  %v10341 = vpop.f32.mrf.mxu0
  %10342 = vmatprep.mubr.bf16.mxu0 %v6758
  %10343 = vmatmul.mubr.bf16.gmra.mxu0 %v6757
  %v10344 = vpop.f32.mrf.mxu0
  %v10345 = vadd.f32 0.0, %v10344
  %v10346 = vpop.f32.mrf.mxu0
  %v10347 = vpop.f32.mrf.mxu0
  %v10348 = vadd.f32 0.0, %v10347
  %v10349 = vpop.f32.mrf.mxu0
  %10350 = vmatprep.mubr.bf16.mxu0 %v6762
  %10351 = vmatmul.mubr.bf16.gmra.mxu0 %v6761
  %v10352 = vpop.f32.mrf.mxu0
  %v10353 = vadd.f32 0.0, %v10352
  %v10354 = vpop.f32.mrf.mxu0
  %v10355 = vpop.f32.mrf.mxu0
  %v10356 = vadd.f32 0.0, %v10355
  %v10357 = vpop.f32.mrf.mxu0
  %10358 = vmatprep.mubr.bf16.mxu0 %v6766
  %10359 = vmatmul.mubr.bf16.gmra.mxu0 %v6765
  %v10360 = vpop.f32.mrf.mxu0
  %v10361 = vadd.f32 0.0, %v10360
  %v10362 = vpop.f32.mrf.mxu0
  %v10363 = vpop.f32.mrf.mxu0
  %v10364 = vadd.f32 0.0, %v10363
  %v10365 = vpop.f32.mrf.mxu0
  %10366 = vmatprep.mubr.bf16.mxu0 %v6770
  %10367 = vmatmul.mubr.bf16.gmra.mxu0 %v6769
  %v10368 = vpop.f32.mrf.mxu0
  %v10369 = vadd.f32 0.0, %v10368
  %v10370 = vpop.f32.mrf.mxu0
  %v10371 = vpop.f32.mrf.mxu0
  %v10372 = vadd.f32 0.0, %v10371
  %v10373 = vpop.f32.mrf.mxu0
  %10374 = vmatprep.mubr.bf16.mxu0 %v6774
  %10375 = vmatmul.mubr.bf16.gmra.mxu0 %v6773
  %v10376 = vpop.f32.mrf.mxu0
  %v10377 = vadd.f32 0.0, %v10376
  %v10378 = vpop.f32.mrf.mxu0
  %v10379 = vpop.f32.mrf.mxu0
  %v10380 = vadd.f32 0.0, %v10379
  %v10381 = vpop.f32.mrf.mxu0
  %10382 = vdwg.mxu0
  %10383 = vmatprep.subr.bf16.mxu0 0
  %10384 = vmatpush1.bf16.msra.mxu0 %v10249
  %10385 = vmatprep.subr.bf16.mxu0 0
  %10386 = vmatpush1.bf16.msra.mxu0 %v10248
  %10387 = vmatprep.subr.bf16.mxu0 0
  %10388 = vmatpush1.bf16.msra.mxu0 %v10247
  %10389 = vmatprep.subr.bf16.mxu0 0
  %10390 = vmatpush1.bf16.msra.mxu0 %v10246
  %10391 = vmatprep.subr.bf16.mxu0 0
  %10392 = vmatpush1.bf16.msra.mxu0 %v10245
  %10393 = vmatprep.subr.bf16.mxu0 0
  %10394 = vmatpush1.bf16.msra.mxu0 %v10244
  %10395 = vmatprep.subr.bf16.mxu0 0
  %10396 = vmatpush1.bf16.msra.mxu0 %v10243
  %10397 = vmatprep.subr.bf16.mxu0 0
  %10398 = vmatpush1.bf16.msra.mxu0 %v10242
  %10399 = vmatprep.subr.bf16.mxu0 0
  %10400 = vmatpush2.bf16.msra.mxu0 0
  %10401 = vmatprep.subr.bf16.mxu0 0
  %10402 = vmatpush2.bf16.msra.mxu0 0
  %10403 = vmatprep.subr.bf16.mxu0 0
  %10404 = vmatpush2.bf16.msra.mxu0 %v10255
  %10405 = vmatprep.subr.bf16.mxu0 0
  %10406 = vmatpush2.bf16.msra.mxu0 %v10254
  %10407 = vmatprep.subr.bf16.mxu0 0
  %10408 = vmatpush2.bf16.msra.mxu0 %v10253
  %10409 = vmatprep.subr.bf16.mxu0 0
  %10410 = vmatpush2.bf16.msra.mxu0 %v10252
  %10411 = vmatprep.subr.bf16.mxu0 0
  %10412 = vmatpush2.bf16.msra.mxu0 %v10251
  %10413 = vmatprep.subr.bf16.mxu0 0
  %10414 = vmatpush2.bf16.msra.mxu0 %v10250
  %10415 = vmatprep.mubr.bf16.mxu0 %v6983
  %10416 = vmatmul.mubr.bf16.gmra.mxu0 %v6747
  %v10417 = vpop.f32.mrf.mxu0
  %v10418 = vadd.f32 %v10321, %v10417
  %v10419 = vpop.f32.mrf.mxu0
  %v10420 = vpop.f32.mrf.mxu0
  %v10421 = vadd.f32 %v10324, %v10420
  %v10422 = vpop.f32.mrf.mxu0
  %10423 = vmatprep.mubr.bf16.mxu0 %v6986
  %10424 = vmatmul.mubr.bf16.gmra.mxu0 %v6751
  %v10425 = vpop.f32.mrf.mxu0
  %v10426 = vadd.f32 %v10329, %v10425
  %v10427 = vpop.f32.mrf.mxu0
  %v10428 = vpop.f32.mrf.mxu0
  %v10429 = vadd.f32 %v10332, %v10428
  %v10430 = vpop.f32.mrf.mxu0
  %10431 = vmatprep.mubr.bf16.mxu0 %v6989
  %10432 = vmatmul.mubr.bf16.gmra.mxu0 %v6755
  %v10433 = vpop.f32.mrf.mxu0
  %v10434 = vadd.f32 %v10337, %v10433
  %v10435 = vpop.f32.mrf.mxu0
  %v10436 = vpop.f32.mrf.mxu0
  %v10437 = vadd.f32 %v10340, %v10436
  %v10438 = vpop.f32.mrf.mxu0
  %10439 = vmatprep.mubr.bf16.mxu0 %v6992
  %10440 = vmatmul.mubr.bf16.gmra.mxu0 %v6759
  %v10441 = vpop.f32.mrf.mxu0
  %v10442 = vadd.f32 %v10345, %v10441
  %v10443 = vpop.f32.mrf.mxu0
  %v10444 = vpop.f32.mrf.mxu0
  %v10445 = vadd.f32 %v10348, %v10444
  %v10446 = vpop.f32.mrf.mxu0
  %10447 = vmatprep.mubr.bf16.mxu0 %v6995
  %10448 = vmatmul.mubr.bf16.gmra.mxu0 %v6763
  %v10449 = vpop.f32.mrf.mxu0
  %v10450 = vadd.f32 %v10353, %v10449
  %v10451 = vpop.f32.mrf.mxu0
  %v10452 = vpop.f32.mrf.mxu0
  %v10453 = vadd.f32 %v10356, %v10452
  %v10454 = vpop.f32.mrf.mxu0
  %10455 = vmatprep.mubr.bf16.mxu0 %v6998
  %10456 = vmatmul.mubr.bf16.gmra.mxu0 %v6767
  %v10457 = vpop.f32.mrf.mxu0
  %v10458 = vadd.f32 %v10361, %v10457
  %v10459 = vpop.f32.mrf.mxu0
  %v10460 = vpop.f32.mrf.mxu0
  %v10461 = vadd.f32 %v10364, %v10460
  %v10462 = vpop.f32.mrf.mxu0
  %10463 = vmatprep.mubr.bf16.mxu0 %v7001
  %10464 = vmatmul.mubr.bf16.gmra.mxu0 %v6771
  %v10465 = vpop.f32.mrf.mxu0
  %v10466 = vadd.f32 %v10369, %v10465
  %v10467 = vpop.f32.mrf.mxu0
  %v10468 = vpop.f32.mrf.mxu0
  %v10469 = vadd.f32 %v10372, %v10468
  %v10470 = vpop.f32.mrf.mxu0
  %10471 = vmatprep.mubr.bf16.mxu0 %v7004
  %10472 = vmatmul.mubr.bf16.gmra.mxu0 %v6775
  %v10473 = vpop.f32.mrf.mxu0
  %v10474 = vadd.f32 %v10377, %v10473
  %v10475 = vpop.f32.mrf.mxu0
  %v10476 = vpop.f32.mrf.mxu0
  %v10477 = vadd.f32 %v10380, %v10476
  %v10478 = vpop.f32.mrf.mxu0
  %10479 = vdwg.mxu0
  %v10480 = vmax.f32 %v9984, %v10418
  %v10481 = vmax.f32 %v9987, %v10421
  %v10482 = vmax.f32 %v9992, %v10426
  %v10483 = vmax.f32 %v9995, %v10429
  %v10484 = vmax.f32 %v10000, %v10434
  %v10485 = vmax.f32 %v10003, %v10437
  %v10486 = vmax.f32 %v10008, %v10442
  %v10487 = vmax.f32 %v10011, %v10445
  %v10488 = vmax.f32 %v10016, %v10450
  %v10489 = vmax.f32 %v10019, %v10453
  %v10490 = vmax.f32 %v10024, %v10458
  %v10491 = vmax.f32 %v10027, %v10461
  %v10492 = vmax.f32 %v10032, %v10466
  %v10493 = vmax.f32 %v10035, %v10469
  %v10494 = vmax.f32 %v10040, %v10474
  %v10495 = vmax.f32 %v10043, %v10477
  %v10496 = vmax.f32 %v10480, %v10482
  %v10497 = vmax.f32 %v10481, %v10483
  %v10498 = vmax.f32 %v10484, %v10486
  %v10499 = vmax.f32 %v10485, %v10487
  %v10500 = vmax.f32 %v10488, %v10490
  %v10501 = vmax.f32 %v10489, %v10491
  %v10502 = vmax.f32 %v10492, %v10494
  %v10503 = vmax.f32 %v10493, %v10495
  %v10504 = vadd.f32 %v10496, %v6587
  %v10505 = vadd.f32 %v10497, %v6588
  %v10506 = vadd.f32 %v10498, %v6587
  %v10507 = vadd.f32 %v10499, %v6588
  %v10508 = vadd.f32 %v10500, %v6587
  %v10509 = vadd.f32 %v10501, %v6588
  %v10510 = vadd.f32 %v10502, %v6587
  %v10511 = vadd.f32 %v10503, %v6588
  %v10512 = vmax.f32 %v10504, 0.0
  %v10513 = vmax.f32 %v10505, 0.0
  %v10514 = vmax.f32 %v10506, 0.0
  %v10515 = vmax.f32 %v10507, 0.0
  %v10516 = vmax.f32 %v10508, 0.0
  %v10517 = vmax.f32 %v10509, 0.0
  %v10518 = vmax.f32 %v10510, 0.0
  %v10519 = vmax.f32 %v10511, 0.0
  %v10520 = vpack.c.bf16 %v10513, %v10512
  %v10521 = vpack.c.bf16 %v10515, %v10514
  %v10522 = vpack.c.bf16 %v10517, %v10516
  %v10523 = vpack.c.bf16 %v10519, %v10518
  %v10528 = vunpack.c.l.b16 %v10520
  %v10529 = vunpack.c.h.b16 %v10520
  %v10530 = vunpack.c.l.b16 %v10521
  %v10531 = vunpack.c.h.b16 %v10521
  %v10532 = vunpack.c.l.b16 %v10522
  %v10533 = vunpack.c.h.b16 %v10522
  %v10534 = vunpack.c.l.b16 %v10523
  %v10535 = vunpack.c.h.b16 %v10523
  %v10536 = vpack.c.b16 %v10528, %v10528
  %v10537 = vpack.c.b16 %v10529, %v10529
  %v10538 = vpack.c.b16 %v10530, %v10530
  %v10539 = vpack.c.b16 %v10531, %v10531
  %v10540 = vpack.c.b16 %v10532, %v10532
  %v10541 = vpack.c.b16 %v10533, %v10533
  %v10542 = vpack.c.b16 %v10534, %v10534
  %v10543 = vpack.c.b16 %v10535, %v10535
  %s10552 = scalar_lea.vmem [#allocation3], 96
  %10553 = vst [vmem:[%s10552] sm:$0xf] %v10536
  %10554 = vst [vmem:[%s10552 + $0x4] sm:$0xf] %v10537
  %10555 = vst [vmem:[%s10552 + $0x8] sm:$0xf] %v10538
  %10556 = vst [vmem:[%s10552 + $0xc] sm:$0xf] %v10539
  %10557 = vst [vmem:[%s10552 + $0x10] sm:$0xf] %v10540
  %10558 = vst [vmem:[%s10552 + $0x14] sm:$0xf] %v10541
  %10559 = vst [vmem:[%s10552 + $0x18] sm:$0xf] %v10542
  %10560 = vst [vmem:[%s10552 + $0x1c] sm:$0xf] %v10543
  %v10561 = vld [vmem:[#allocation3] sm:$0xf]
  %v10562 = vld [vmem:[#allocation3 + $0x4] sm:$0xf]
  %v10563 = vld [vmem:[#allocation3 + $0x8] sm:$0xf]
  %v10564 = vld [vmem:[#allocation3 + $0xc] sm:$0xf]
  %v10565 = vld [vmem:[#allocation3 + $0x10] sm:$0xf]
  %v10566 = vld [vmem:[#allocation3 + $0x14] sm:$0xf]
  %v10567 = vld [vmem:[#allocation3 + $0x18] sm:$0xf]
  %v10568 = vld [vmem:[#allocation3 + $0x1c] sm:$0xf]
  %v10569 = vld [vmem:[#allocation3 + $0x20] sm:$0xf]
  %v10570 = vld [vmem:[#allocation3 + $0x24] sm:$0xf]
  %v10571 = vld [vmem:[#allocation3 + $0x28] sm:$0xf]
  %v10572 = vld [vmem:[#allocation3 + $0x2c] sm:$0xf]
  %v10573 = vld [vmem:[#allocation3 + $0x30] sm:$0xf]
  %v10574 = vld [vmem:[#allocation3 + $0x34] sm:$0xf]
  %v10575 = vld [vmem:[#allocation3 + $0x38] sm:$0xf]
  %v10576 = vld [vmem:[#allocation3 + $0x3c] sm:$0xf]
  %v10577 = vld [vmem:[#allocation3 + $0x40] sm:$0xf]
  %v10578 = vld [vmem:[#allocation3 + $0x44] sm:$0xf]
  %v10579 = vld [vmem:[#allocation3 + $0x48] sm:$0xf]
  %v10580 = vld [vmem:[#allocation3 + $0x4c] sm:$0xf]
  %v10581 = vld [vmem:[#allocation3 + $0x50] sm:$0xf]
  %v10582 = vld [vmem:[#allocation3 + $0x54] sm:$0xf]
  %v10583 = vld [vmem:[#allocation3 + $0x58] sm:$0xf]
  %v10584 = vld [vmem:[#allocation3 + $0x5c] sm:$0xf]
  %v10585 = vld [vmem:[#allocation3 + $0x60] sm:$0xf]
  %v10586 = vld [vmem:[#allocation3 + $0x64] sm:$0xf]
  %v10587 = vld [vmem:[#allocation3 + $0x68] sm:$0xf]
  %v10588 = vld [vmem:[#allocation3 + $0x6c] sm:$0xf]
  %v10589 = vld [vmem:[#allocation3 + $0x70] sm:$0xf]
  %v10590 = vld [vmem:[#allocation3 + $0x74] sm:$0xf]
  %v10591 = vld [vmem:[#allocation3 + $0x78] sm:$0xf]
  %v10592 = vld [vmem:[#allocation3 + $0x7c] sm:$0xf]
  %v10593 = vld [vmem:[%s5] sm:$0xff]
  %v10594 = vld [vmem:[%s5 + $0x8] sm:$0xff]
  %v10595 = vld [vmem:[%s5 + $0x10] sm:$0xff]
  %v10596 = vld [vmem:[%s5 + $0x18] sm:$0xff]
  %v10597 = vld [vmem:[%s5 + $0x20] sm:$0xff]
  %v10598 = vld [vmem:[%s5 + $0x28] sm:$0xff]
  %v10599 = vld [vmem:[%s5 + $0x30] sm:$0xff]
  %v10600 = vld [vmem:[%s5 + $0x38] sm:$0xff]
  %v10601 = vld [vmem:[%s5 + $0x40] sm:$0xff]
  %v10602 = vld [vmem:[%s5 + $0x48] sm:$0xff]
  %v10603 = vld [vmem:[%s5 + $0x50] sm:$0xff]
  %v10604 = vld [vmem:[%s5 + $0x58] sm:$0xff]
  %v10605 = vld [vmem:[%s5 + $0x60] sm:$0xff]
  %v10606 = vld [vmem:[%s5 + $0x68] sm:$0xff]
  %v10607 = vld [vmem:[%s5 + $0x70] sm:$0xff]
  %v10608 = vld [vmem:[%s5 + $0x78] sm:$0xff]
  %v10609 = vld [vmem:[%s6] sm:$0xff]
  %v10610 = vld [vmem:[%s6 + $0x8] sm:$0xff]
  %v10611 = vld [vmem:[%s6 + $0x10] sm:$0xff]
  %v10612 = vld [vmem:[%s6 + $0x18] sm:$0xff]
  %v10613 = vld [vmem:[%s6 + $0x20] sm:$0xff]
  %v10614 = vld [vmem:[%s6 + $0x28] sm:$0xff]
  %v10615 = vld [vmem:[%s6 + $0x30] sm:$0xff]
  %v10616 = vld [vmem:[%s6 + $0x38] sm:$0xff]
  %v10617 = vld [vmem:[%s6 + $0x40] sm:$0xff]
  %v10618 = vld [vmem:[%s6 + $0x48] sm:$0xff]
  %v10619 = vld [vmem:[%s6 + $0x50] sm:$0xff]
  %v10620 = vld [vmem:[%s6 + $0x58] sm:$0xff]
  %v10621 = vld [vmem:[%s6 + $0x60] sm:$0xff]
  %v10622 = vld [vmem:[%s6 + $0x68] sm:$0xff]
  %v10623 = vld [vmem:[%s6 + $0x70] sm:$0xff]
  %v10624 = vld [vmem:[%s6 + $0x78] sm:$0xff]
  %v10641 = vunpack.c.l.b16 %v10593
  %v10642 = vunpack.c.h.b16 %v10593
  %v10643 = vunpack.c.l.b16 %v10594
  %v10644 = vunpack.c.h.b16 %v10594
  %v10645 = vunpack.c.l.b16 %v10595
  %v10646 = vunpack.c.h.b16 %v10595
  %v10647 = vunpack.c.l.b16 %v10596
  %v10648 = vunpack.c.h.b16 %v10596
  %v10649 = vunpack.c.l.b16 %v10597
  %v10650 = vunpack.c.h.b16 %v10597
  %v10651 = vunpack.c.l.b16 %v10598
  %v10652 = vunpack.c.h.b16 %v10598
  %v10653 = vunpack.c.l.b16 %v10599
  %v10654 = vunpack.c.h.b16 %v10599
  %v10655 = vunpack.c.l.b16 %v10600
  %v10656 = vunpack.c.h.b16 %v10600
  %v10657 = vunpack.c.l.b16 %v10601
  %v10658 = vunpack.c.h.b16 %v10601
  %v10659 = vunpack.c.l.b16 %v10602
  %v10660 = vunpack.c.h.b16 %v10602
  %v10661 = vunpack.c.l.b16 %v10603
  %v10662 = vunpack.c.h.b16 %v10603
  %v10663 = vunpack.c.l.b16 %v10604
  %v10664 = vunpack.c.h.b16 %v10604
  %v10665 = vunpack.c.l.b16 %v10605
  %v10666 = vunpack.c.h.b16 %v10605
  %v10667 = vunpack.c.l.b16 %v10606
  %v10668 = vunpack.c.h.b16 %v10606
  %v10669 = vunpack.c.l.b16 %v10607
  %v10670 = vunpack.c.h.b16 %v10607
  %v10671 = vunpack.c.l.b16 %v10608
  %v10672 = vunpack.c.h.b16 %v10608
  %v10673 = vpack.c.b16 %v10643, %v10641
  %v10674 = vpack.c.b16 %v10644, %v10642
  %v10675 = vpack.c.b16 %v10647, %v10645
  %v10676 = vpack.c.b16 %v10648, %v10646
  %v10677 = vpack.c.b16 %v10651, %v10649
  %v10678 = vpack.c.b16 %v10652, %v10650
  %v10679 = vpack.c.b16 %v10655, %v10653
  %v10680 = vpack.c.b16 %v10656, %v10654
  %v10681 = vpack.c.b16 %v10659, %v10657
  %v10682 = vpack.c.b16 %v10660, %v10658
  %v10683 = vpack.c.b16 %v10663, %v10661
  %v10684 = vpack.c.b16 %v10664, %v10662
  %v10685 = vpack.c.b16 %v10667, %v10665
  %v10686 = vpack.c.b16 %v10668, %v10666
  %v10687 = vpack.c.b16 %v10671, %v10669
  %v10688 = vpack.c.b16 %v10672, %v10670
  %v10737 = vunpack.c.l.b16 %v10561
  %v10738 = vunpack.c.l.b16 %v10562
  %v10739 = vunpack.c.l.b16 %v10563
  %v10740 = vunpack.c.l.b16 %v10564
  %v10741 = vunpack.c.l.b16 %v10565
  %v10742 = vunpack.c.l.b16 %v10566
  %v10743 = vunpack.c.l.b16 %v10567
  %v10744 = vunpack.c.l.b16 %v10568
  %v10745 = vunpack.c.l.b16 %v10569
  %v10746 = vunpack.c.l.b16 %v10570
  %v10747 = vunpack.c.l.b16 %v10571
  %v10748 = vunpack.c.l.b16 %v10572
  %v10749 = vunpack.c.l.b16 %v10573
  %v10750 = vunpack.c.l.b16 %v10574
  %v10751 = vunpack.c.l.b16 %v10575
  %v10752 = vunpack.c.l.b16 %v10576
  %v10753 = vunpack.c.l.b16 %v10577
  %v10754 = vunpack.c.l.b16 %v10578
  %v10755 = vunpack.c.l.b16 %v10579
  %v10756 = vunpack.c.l.b16 %v10580
  %v10757 = vunpack.c.l.b16 %v10581
  %v10758 = vunpack.c.l.b16 %v10582
  %v10759 = vunpack.c.l.b16 %v10583
  %v10760 = vunpack.c.l.b16 %v10584
  %v10761 = vunpack.c.l.b16 %v10585
  %v10762 = vunpack.c.l.b16 %v10586
  %v10763 = vunpack.c.l.b16 %v10587
  %v10764 = vunpack.c.l.b16 %v10588
  %v10765 = vunpack.c.l.b16 %v10589
  %v10766 = vunpack.c.l.b16 %v10590
  %v10767 = vunpack.c.l.b16 %v10591
  %v10768 = vunpack.c.l.b16 %v10592
  %v10769 = vpack.c.b16 %v10738, %v10737
  %v10770 = vpack.c.b16 %v10740, %v10739
  %v10771 = vpack.c.b16 %v10742, %v10741
  %v10772 = vpack.c.b16 %v10744, %v10743
  %v10773 = vpack.c.b16 %v10746, %v10745
  %v10774 = vpack.c.b16 %v10748, %v10747
  %v10775 = vpack.c.b16 %v10750, %v10749
  %v10776 = vpack.c.b16 %v10752, %v10751
  %v10777 = vpack.c.b16 %v10754, %v10753
  %v10778 = vpack.c.b16 %v10756, %v10755
  %v10779 = vpack.c.b16 %v10758, %v10757
  %v10780 = vpack.c.b16 %v10760, %v10759
  %v10781 = vpack.c.b16 %v10762, %v10761
  %v10782 = vpack.c.b16 %v10764, %v10763
  %v10783 = vpack.c.b16 %v10766, %v10765
  %v10784 = vpack.c.b16 %v10768, %v10767
  %10801 = vmatprep.subr.bf16.mxu0 0
  %10802 = vmatpush1.bf16.msra.mxu0 %v10776
  %10803 = vmatprep.subr.bf16.mxu0 0
  %10804 = vmatpush1.bf16.msra.mxu0 %v10775
  %10805 = vmatprep.subr.bf16.mxu0 0
  %10806 = vmatpush1.bf16.msra.mxu0 %v10774
  %10807 = vmatprep.subr.bf16.mxu0 0
  %10808 = vmatpush1.bf16.msra.mxu0 %v10773
  %10809 = vmatprep.subr.bf16.mxu0 0
  %10810 = vmatpush1.bf16.msra.mxu0 %v10772
  %10811 = vmatprep.subr.bf16.mxu0 0
  %10812 = vmatpush1.bf16.msra.mxu0 %v10771
  %10813 = vmatprep.subr.bf16.mxu0 0
  %10814 = vmatpush1.bf16.msra.mxu0 %v10770
  %10815 = vmatprep.subr.bf16.mxu0 0
  %10816 = vmatpush1.bf16.msra.mxu0 %v10769
  %10817 = vmatprep.subr.bf16.mxu0 0
  %10818 = vmatpush2.bf16.msra.mxu0 %v10784
  %10819 = vmatprep.subr.bf16.mxu0 0
  %10820 = vmatpush2.bf16.msra.mxu0 %v10783
  %10821 = vmatprep.subr.bf16.mxu0 0
  %10822 = vmatpush2.bf16.msra.mxu0 %v10782
  %10823 = vmatprep.subr.bf16.mxu0 0
  %10824 = vmatpush2.bf16.msra.mxu0 %v10781
  %10825 = vmatprep.subr.bf16.mxu0 0
  %10826 = vmatpush2.bf16.msra.mxu0 %v10780
  %10827 = vmatprep.subr.bf16.mxu0 0
  %10828 = vmatpush2.bf16.msra.mxu0 %v10779
  %10829 = vmatprep.subr.bf16.mxu0 0
  %10830 = vmatpush2.bf16.msra.mxu0 %v10778
  %10831 = vmatprep.subr.bf16.mxu0 0
  %10832 = vmatpush2.bf16.msra.mxu0 %v10777
  %10833 = vmatprep.mubr.bf16.mxu0 %v10674
  %10834 = vmatmul.mubr.bf16.gmra.mxu0 %v10673
  %v10835 = vpop.f32.mrf.mxu0
  %v10836 = vadd.f32 %v10609, %v10835
  %v10837 = vpop.f32.mrf.mxu0
  %v10838 = vpop.f32.mrf.mxu0
  %v10839 = vadd.f32 %v10610, %v10838
  %v10840 = vpop.f32.mrf.mxu0
  %10841 = vmatprep.mubr.bf16.mxu0 %v10676
  %10842 = vmatmul.mubr.bf16.gmra.mxu0 %v10675
  %v10843 = vpop.f32.mrf.mxu0
  %v10844 = vadd.f32 %v10611, %v10843
  %v10845 = vpop.f32.mrf.mxu0
  %v10846 = vpop.f32.mrf.mxu0
  %v10847 = vadd.f32 %v10612, %v10846
  %v10848 = vpop.f32.mrf.mxu0
  %10849 = vmatprep.mubr.bf16.mxu0 %v10678
  %10850 = vmatmul.mubr.bf16.gmra.mxu0 %v10677
  %v10851 = vpop.f32.mrf.mxu0
  %v10852 = vadd.f32 %v10613, %v10851
  %v10853 = vpop.f32.mrf.mxu0
  %v10854 = vpop.f32.mrf.mxu0
  %v10855 = vadd.f32 %v10614, %v10854
  %v10856 = vpop.f32.mrf.mxu0
  %10857 = vmatprep.mubr.bf16.mxu0 %v10680
  %10858 = vmatmul.mubr.bf16.gmra.mxu0 %v10679
  %v10859 = vpop.f32.mrf.mxu0
  %v10860 = vadd.f32 %v10615, %v10859
  %v10861 = vpop.f32.mrf.mxu0
  %v10862 = vpop.f32.mrf.mxu0
  %v10863 = vadd.f32 %v10616, %v10862
  %v10864 = vpop.f32.mrf.mxu0
  %10865 = vmatprep.mubr.bf16.mxu0 %v10682
  %10866 = vmatmul.mubr.bf16.gmra.mxu0 %v10681
  %v10867 = vpop.f32.mrf.mxu0
  %v10868 = vadd.f32 %v10617, %v10867
  %v10869 = vpop.f32.mrf.mxu0
  %v10870 = vpop.f32.mrf.mxu0
  %v10871 = vadd.f32 %v10618, %v10870
  %v10872 = vpop.f32.mrf.mxu0
  %10873 = vmatprep.mubr.bf16.mxu0 %v10684
  %10874 = vmatmul.mubr.bf16.gmra.mxu0 %v10683
  %v10875 = vpop.f32.mrf.mxu0
  %v10876 = vadd.f32 %v10619, %v10875
  %v10877 = vpop.f32.mrf.mxu0
  %v10878 = vpop.f32.mrf.mxu0
  %v10879 = vadd.f32 %v10620, %v10878
  %v10880 = vpop.f32.mrf.mxu0
  %10881 = vmatprep.mubr.bf16.mxu0 %v10686
  %10882 = vmatmul.mubr.bf16.gmra.mxu0 %v10685
  %v10883 = vpop.f32.mrf.mxu0
  %v10884 = vadd.f32 %v10621, %v10883
  %v10885 = vpop.f32.mrf.mxu0
  %v10886 = vpop.f32.mrf.mxu0
  %v10887 = vadd.f32 %v10622, %v10886
  %v10888 = vpop.f32.mrf.mxu0
  %10889 = vmatprep.mubr.bf16.mxu0 %v10688
  %10890 = vmatmul.mubr.bf16.gmra.mxu0 %v10687
  %v10891 = vpop.f32.mrf.mxu0
  %v10892 = vadd.f32 %v10623, %v10891
  %v10893 = vpop.f32.mrf.mxu0
  %v10894 = vpop.f32.mrf.mxu0
  %v10895 = vadd.f32 %v10624, %v10894
  %v10896 = vpop.f32.mrf.mxu0
  %10897 = vdwg.mxu0
  %v10898 = vmax.f32 %v10836, 0.0
  %v10899 = vmax.f32 %v10839, 0.0
  %v10900 = vmax.f32 %v10844, 0.0
  %v10901 = vmax.f32 %v10847, 0.0
  %v10902 = vmax.f32 %v10852, 0.0
  %v10903 = vmax.f32 %v10855, 0.0
  %v10904 = vmax.f32 %v10860, 0.0
  %v10905 = vmax.f32 %v10863, 0.0
  %v10906 = vmax.f32 %v10868, 0.0
  %v10907 = vmax.f32 %v10871, 0.0
  %v10908 = vmax.f32 %v10876, 0.0
  %v10909 = vmax.f32 %v10879, 0.0
  %v10910 = vmax.f32 %v10884, 0.0
  %v10911 = vmax.f32 %v10887, 0.0
  %v10912 = vmax.f32 %v10892, 0.0
  %v10913 = vmax.f32 %v10895, 0.0
  %v10914 = vpack.c.bf16 %v10899, %v10898
  %v10915 = vpack.c.bf16 %v10901, %v10900
  %v10916 = vpack.c.bf16 %v10903, %v10902
  %v10917 = vpack.c.bf16 %v10905, %v10904
  %v10918 = vpack.c.bf16 %v10907, %v10906
  %v10919 = vpack.c.bf16 %v10909, %v10908
  %v10920 = vpack.c.bf16 %v10911, %v10910
  %v10921 = vpack.c.bf16 %v10913, %v10912
  %v10922 = vld [vmem:[%s7] sm:$0xf]
  %v10923 = vld [vmem:[%s7 + $0x4] sm:$0xf]
  %v10924 = vld [vmem:[%s7 + $0x8] sm:$0xf]
  %v10925 = vld [vmem:[%s7 + $0xc] sm:$0xf]
  %v10926 = vld [vmem:[%s7 + $0x10] sm:$0xf]
  %v10927 = vld [vmem:[%s7 + $0x14] sm:$0xf]
  %v10928 = vld [vmem:[%s7 + $0x18] sm:$0xf]
  %v10929 = vld [vmem:[%s7 + $0x1c] sm:$0xf]
  %v10930 = vld [vmem:[%s8] sm:$0xff]
  %v10931 = vld [vmem:[%s8 + $0x8] sm:$0xff]
  %v10932 = vld [vmem:[%s8 + $0x10] sm:$0xff]
  %v10933 = vld [vmem:[%s8 + $0x18] sm:$0xff]
  %v10934 = vld [vmem:[%s8 + $0x20] sm:$0xff]
  %v10935 = vld [vmem:[%s8 + $0x28] sm:$0xff]
  %v10936 = vld [vmem:[%s8 + $0x30] sm:$0xff]
  %v10937 = vld [vmem:[%s8 + $0x38] sm:$0xff]
  %v10946 = vunpack.c.l.b16 %v10922
  %v10947 = vunpack.c.l.b16 %v10923
  %v10948 = vunpack.c.l.b16 %v10924
  %v10949 = vunpack.c.l.b16 %v10925
  %v10950 = vunpack.c.l.b16 %v10926
  %v10951 = vunpack.c.l.b16 %v10927
  %v10952 = vunpack.c.l.b16 %v10928
  %v10953 = vunpack.c.l.b16 %v10929
  %v10954 = vpack.c.b16 %v10947, %v10946
  %v10955 = vpack.c.b16 %v10949, %v10948
  %v10956 = vpack.c.b16 %v10951, %v10950
  %v10957 = vpack.c.b16 %v10953, %v10952
  %10962 = vmatprep.subr.bf16.mxu0 0
  %10963 = vmatpush1.bf16.msra.mxu0 %v10921
  %10964 = vmatprep.subr.bf16.mxu0 0
  %10965 = vmatpush1.bf16.msra.mxu0 %v10920
  %10966 = vmatprep.subr.bf16.mxu0 0
  %10967 = vmatpush1.bf16.msra.mxu0 %v10919
  %10968 = vmatprep.subr.bf16.mxu0 0
  %10969 = vmatpush1.bf16.msra.mxu0 %v10918
  %10970 = vmatprep.subr.bf16.mxu0 0
  %10971 = vmatpush1.bf16.msra.mxu0 %v10917
  %10972 = vmatprep.subr.bf16.mxu0 0
  %10973 = vmatpush1.bf16.msra.mxu0 %v10916
  %10974 = vmatprep.subr.bf16.mxu0 0
  %10975 = vmatpush1.bf16.msra.mxu0 %v10915
  %10976 = vmatprep.subr.bf16.mxu0 0
  %10977 = vmatpush1.bf16.msra.mxu0 %v10914
  %10978 = vmatprep.subr.bf16.mxu0 0
  %10979 = vmatpush2.bf16.msra.mxu0 0
  %10980 = vmatprep.subr.bf16.mxu0 0
  %10981 = vmatpush2.bf16.msra.mxu0 0
  %10982 = vmatprep.subr.bf16.mxu0 0
  %10983 = vmatpush2.bf16.msra.mxu0 0
  %10984 = vmatprep.subr.bf16.mxu0 0
  %10985 = vmatpush2.bf16.msra.mxu0 0
  %10986 = vmatprep.subr.bf16.mxu0 0
  %10987 = vmatpush2.bf16.msra.mxu0 0
  %10988 = vmatprep.subr.bf16.mxu0 0
  %10989 = vmatpush2.bf16.msra.mxu0 0
  %10990 = vmatprep.subr.bf16.mxu0 0
  %10991 = vmatpush2.bf16.msra.mxu0 0
  %10992 = vmatprep.subr.bf16.mxu0 0
  %10993 = vmatpush2.bf16.msra.mxu0 0
  %10994 = vmatprep.mubr.bf16.mxu0 0
  %10995 = vmatmul.mubr.bf16.gmra.mxu0 %v10954
  %v10996 = vpop.f32.mrf.mxu0
  %v10997 = vadd.f32 %v10930, %v10996
  %v10998 = vpop.f32.mrf.mxu0
  %v10999 = vpop.f32.mrf.mxu0
  %v11000 = vadd.f32 %v10931, %v10999
  %v11001 = vpop.f32.mrf.mxu0
  %11002 = vmatprep.mubr.bf16.mxu0 0
  %11003 = vmatmul.mubr.bf16.gmra.mxu0 %v10955
  %v11004 = vpop.f32.mrf.mxu0
  %v11005 = vadd.f32 %v10932, %v11004
  %v11006 = vpop.f32.mrf.mxu0
  %v11007 = vpop.f32.mrf.mxu0
  %v11008 = vadd.f32 %v10933, %v11007
  %v11009 = vpop.f32.mrf.mxu0
  %11010 = vmatprep.mubr.bf16.mxu0 0
  %11011 = vmatmul.mubr.bf16.gmra.mxu0 %v10956
  %v11012 = vpop.f32.mrf.mxu0
  %v11013 = vadd.f32 %v10934, %v11012
  %v11014 = vpop.f32.mrf.mxu0
  %v11015 = vpop.f32.mrf.mxu0
  %v11016 = vadd.f32 %v10935, %v11015
  %v11017 = vpop.f32.mrf.mxu0
  %11018 = vmatprep.mubr.bf16.mxu0 0
  %11019 = vmatmul.mubr.bf16.gmra.mxu0 %v10957
  %v11020 = vpop.f32.mrf.mxu0
  %v11021 = vadd.f32 %v10936, %v11020
  %v11022 = vpop.f32.mrf.mxu0
  %v11023 = vpop.f32.mrf.mxu0
  %v11024 = vadd.f32 %v10937, %v11023
  %v11025 = vpop.f32.mrf.mxu0
  %11026 = vdwg.mxu0
  %v11027 = vmax.f32 %v10997, 0.0
  %v11028 = vmax.f32 %v11000, 0.0
  %v11029 = vmax.f32 %v11005, 0.0
  %v11030 = vmax.f32 %v11008, 0.0
  %v11031 = vmax.f32 %v11013, 0.0
  %v11032 = vmax.f32 %v11016, 0.0
  %v11033 = vmax.f32 %v11021, 0.0
  %v11034 = vmax.f32 %v11024, 0.0
  %v11035 = vpack.c.bf16 %v11028, %v11027
  %v11036 = vpack.c.bf16 %v11030, %v11029
  %v11037 = vpack.c.bf16 %v11032, %v11031
  %v11038 = vpack.c.bf16 %v11034, %v11033
  %v11039 = vld [vmem:[%s9] sm:$0xf]
  %v11040 = vld [vmem:[%s9 + $0x4] sm:$0xf]
  %v11041 = vld [vmem:[%s10] sm:$0xff]
  %v11042 = vld [vmem:[%s10 + $0x8] sm:$0xff]
  %v11045 = vunpack.c.l.b16 %v11039
  %v11046 = vunpack.c.l.b16 %v11040
  %v11047 = vpack.c.b16 %v11046, %v11045
  %vm11048 = vcmask 523264
  %v11050 = vsel %vm11048, %v11047, 0
  %11052 = vmatprep.subr.bf16.mxu0 0
  %11053 = vmatpush1.bf16.msra.mxu0 0
  %11054 = vmatprep.subr.bf16.mxu0 0
  %11055 = vmatpush1.bf16.msra.mxu0 0
  %11056 = vmatprep.subr.bf16.mxu0 0
  %11057 = vmatpush1.bf16.msra.mxu0 0
  %11058 = vmatprep.subr.bf16.mxu0 0
  %11059 = vmatpush1.bf16.msra.mxu0 0
  %11060 = vmatprep.subr.bf16.mxu0 0
  %11061 = vmatpush1.bf16.msra.mxu0 %v11038
  %11062 = vmatprep.subr.bf16.mxu0 0
  %11063 = vmatpush1.bf16.msra.mxu0 %v11037
  %11064 = vmatprep.subr.bf16.mxu0 0
  %11065 = vmatpush1.bf16.msra.mxu0 %v11036
  %11066 = vmatprep.subr.bf16.mxu0 0
  %11067 = vmatpush1.bf16.msra.mxu0 %v11035
  %11068 = vmatprep.subr.bf16.mxu0 0
  %11069 = vmatpush2.bf16.msra.mxu0 0
  %11070 = vmatprep.subr.bf16.mxu0 0
  %11071 = vmatpush2.bf16.msra.mxu0 0
  %11072 = vmatprep.subr.bf16.mxu0 0
  %11073 = vmatpush2.bf16.msra.mxu0 0
  %11074 = vmatprep.subr.bf16.mxu0 0
  %11075 = vmatpush2.bf16.msra.mxu0 0
  %11076 = vmatprep.subr.bf16.mxu0 0
  %11077 = vmatpush2.bf16.msra.mxu0 0
  %11078 = vmatprep.subr.bf16.mxu0 0
  %11079 = vmatpush2.bf16.msra.mxu0 0
  %11080 = vmatprep.subr.bf16.mxu0 0
  %11081 = vmatpush2.bf16.msra.mxu0 0
  %11082 = vmatprep.subr.bf16.mxu0 0
  %11083 = vmatpush2.bf16.msra.mxu0 0
  %11084 = vmatprep.mubr.bf16.mxu0 0
  %11085 = vmatmul.mubr.bf16.gmra.mxu0 %v11050
  %v11086 = vpop.f32.mrf.mxu0
  %v11087 = vadd.f32 %v11041, %v11086
  %v11088 = vpop.f32.mrf.mxu0
  %v11089 = vpop.f32.mrf.mxu0
  %v11090 = vadd.f32 %v11042, %v11089
  %v11091 = vpop.f32.mrf.mxu0
  %11092 = vdwg.mxu0
  %11093 = vst [vmem:[%s11] sm:$0xff] %v11087
  %11094 = vst [vmem:[%s11 + $0x8] sm:$0xff] %v11090
  // Predicated region
  $region46: #{lenet_forward.1} parent=0 // pred_check
    _
  $region47: #{lenet_forward.1} parent=0 // pred_check_branch
    %11096 = sbr.rel (0) target = $region49
  $region48: #{lenet_forward.1} parent=0 // pred_region
    _
  $region49: #{lenet_forward.1} parent=0 // pred_fallthru
    _
  // Predicated region
  $region50: #{lenet_forward.1} parent=0 // pred_check
    _
  $region51: #{lenet_forward.1} parent=0 // pred_check_branch
    %11098 = sbr.rel (0) target = $region53
  $region52: #{lenet_forward.1} parent=0 // pred_region
    _
  $region53: #{lenet_forward.1} parent=0 // pred_fallthru
    _

</llo_original>
